<compile_context>
chip_gen: v7x
topology: tpu7x:2x2x1
jax: 0.10.0
libtpu: 0.0.40
codegen_flags: <defaults>
</compile_context>

<pallas_src>
import functools

import jax
import jax.numpy as jnp
from jax import lax
from jax.experimental import pallas as pl
from jax.experimental.pallas import tpu as pltpu

Z_DIM = 32
NC = 10
L = 100            # sequence length
PADL = 128         # length padded to a full lane tile
CE = 64            # final encoder channels
FLAT = CE * PADL   # padded flatten width (torch flatten width is 64*100=6400)
BN_EPS = 1e-5


# ---------------- in-kernel helpers (operate on traced values) ----------------

def _conv3(x, w_ref):
    """Conv1d / ConvTranspose1d (k=3, s=1, p=1, bias=False) on (Cin, B*PADL).

    w_ref: (3, Cout, Cin); tap 0/1/2 multiplies x[l-1] / x[l] / x[l+1].
    Pad lanes (l >= L) of x are zero, so the circular lane roll wraps batch /
    sequence boundaries onto zeros == the conv's zero padding.
    """
    n = x.shape[-1]
    xp = pltpu.roll(x, shift=1, axis=1)        # value at l-1
    xn = pltpu.roll(x, shift=n - 1, axis=1)    # value at l+1
    y = jnp.dot(w_ref[0], xp, preferred_element_type=jnp.float32)
    y = y + jnp.dot(w_ref[1], x, preferred_element_type=jnp.float32)
    y = y + jnp.dot(w_ref[2], xn, preferred_element_type=jnp.float32)
    return y


def _bn_relu(y, mask, batch):
    """View((-1, 100)) + BatchNorm1d(100) (training stats, affine=(1,0)) + ReLU.

    y: (C, B*PADL). Stats are per length position, reduced over batch AND
    channels (biased variance): per-lane sums folded across batch blocks.
    """
    n = y.shape[0] * batch
    s = jnp.sum(y, axis=0, keepdims=True)                      # (1, B*PADL)
    tot = s
    for b in range(1, batch):
        tot = tot + pltpu.roll(s, shift=b * PADL, axis=1)
    mean = tot * (1.0 / n)
    d = y - mean                                               # reused below
    sq = jnp.sum(d * d, axis=0, keepdims=True)
    tot2 = sq
    for b in range(1, batch):
        tot2 = tot2 + pltpu.roll(sq, shift=b * PADL, axis=1)
    inv = lax.rsqrt(tot2 * (1.0 / n) + BN_EPS)
    # ReLU, then re-zero pad lanes so the next conv sees proper zero padding.
    return jnp.maximum(d * inv, 0.0) * mask


# ---------------------------------- kernel ----------------------------------

def _vae_kernel(x_ref, e1_ref, e2_ref, e3_ref, wmulv_ref, bmulv_ref, eps_ref,
                wdec_ref, bdec_ref, d1_ref, d2_ref, d3_ref,
                xr_ref, z_ref, mu_ref, lv_ref, *, batch):
    npad = batch * PADL
    lane = lax.broadcasted_iota(jnp.int32, (1, npad), 1)
    mask = (jnp.bitwise_and(lane, PADL - 1) < L).astype(jnp.float32)

    # ------------------- encoder: (conv -> BN -> ReLU) x 3 -------------------
    h = x_ref[...]                                             # (NC, B*PADL)
    h = _bn_relu(_conv3(h, e1_ref), mask, batch)               # (16, .)
    h = _bn_relu(_conv3(h, e2_ref), mask, batch)               # (32, .)
    h = _bn_relu(_conv3(h, e3_ref), mask, batch)               # (64, .)

    # ------- flatten: aligned 128-lane blocks -> (B, 8192), torch order -------
    rows = []
    for b in range(batch):
        rows.append(jnp.concatenate(
            [h[c:c + 1, b * PADL:(b + 1) * PADL] for c in range(CE)], axis=1))
    flat = jnp.concatenate(rows, axis=0)                       # (B, FLAT)

    # ------- fc_mu | fc_logvar (fused), reparameterize, decoder Linear -------
    mulv = jnp.dot(flat.astype(jnp.bfloat16), wmulv_ref[...],
                   preferred_element_type=jnp.float32) + bmulv_ref[...]
    mu = mulv[:, :Z_DIM]
    lv = mulv[:, Z_DIM:2 * Z_DIM]
    z = eps_ref[...] * jnp.exp(0.5 * lv) + mu                  # (B, Z)

    hdec = jnp.dot(z.astype(jnp.bfloat16), wdec_ref[...],
                   preferred_element_type=jnp.float32) + bdec_ref[...]  # (B, FLAT)

    # -------- unflatten: (B, 8192) -> (64, B*PADL) decoder activation --------
    blocks = []
    for b in range(batch):
        blocks.append(jnp.concatenate(
            [hdec[b:b + 1, c * PADL:(c + 1) * PADL] for c in range(CE)], axis=0))
    a = jnp.concatenate(blocks, axis=1)                        # (64, B*PADL)

    # --------------- decoder: (convT -> BN -> ReLU) x 2 -> convT ---------------
    a = _bn_relu(_conv3(a, d1_ref), mask, batch)               # (32, .)
    a = _bn_relu(_conv3(a, d2_ref), mask, batch)               # (16, .)
    y = _conv3(a, d3_ref)                                      # (NC, .) no BN/ReLU

    xr_ref[...] = y
    z_ref[...] = z
    mu_ref[...] = mu
    lv_ref[...] = lv


# ------------------------------ params / wrapper ------------------------------

def init_params(key):
    keys = jax.random.split(key, 9)

    def kaiming(k, shape, fan_in):
        return jax.random.normal(k, shape, jnp.float32) * jnp.sqrt(2.0 / fan_in)

    # PyTorch-layout weights (deterministic synthetic init).
    e1 = kaiming(keys[0], (16, NC, 3), NC * 3)        # Conv1d(nc, 16, 3)
    e2 = kaiming(keys[1], (32, 16, 3), 16 * 3)        # Conv1d(16, 32, 3)
    e3 = kaiming(keys[2], (64, 32, 3), 32 * 3)        # Conv1d(32, 64, 3)
    wmu = kaiming(keys[3], (Z_DIM, CE * L), CE * L)   # Linear(6400, z)
    wlv = kaiming(keys[4], (Z_DIM, CE * L), CE * L)
    wd = kaiming(keys[5], (CE * L, Z_DIM), Z_DIM)     # Linear(z, 6400)
    d1 = kaiming(keys[6], (64, 32, 3), 64 * 3)        # ConvT1d(64, 32, 3): (Cin, Cout, K)
    d2 = kaiming(keys[7], (32, 16, 3), 32 * 3)
    d3 = kaiming(keys[8], (16, NC, 3), 16 * 3)
    bmu = jnp.zeros((Z_DIM,), jnp.float32)
    blv = jnp.zeros((Z_DIM,), jnp.float32)
    bd = jnp.zeros((CE * L,), jnp.float32)

    def conv_w(w):    # Conv1d (Cout, Cin, K) -> (K, Cout, Cin); tap k hits x[l+k-1]
        return jnp.transpose(w, (2, 0, 1))

    def convT_w(w):   # ConvT1d(s=1, p=1) == conv with flipped, channel-swapped kernel
        return jnp.transpose(jnp.flip(w, axis=2), (2, 1, 0))   # (K, Cout, Cin)

    def pad_l(w3):    # (..., L) -> (..., PADL) zero-padded
        return jnp.pad(w3, [(0, 0)] * (w3.ndim - 1) + [(0, PADL - L)])

    # Fused [fc_mu ; fc_logvar]: torch (2Z, 6400) -> padded lane-block layout (8192, 2Z).
    wcat = jnp.concatenate([wmu, wlv], axis=0).reshape(2 * Z_DIM, CE, L)
    wmulv = pad_l(wcat).reshape(2 * Z_DIM, FLAT).T              # (FLAT, 2Z)
    bmulv = jnp.concatenate([bmu, blv]).reshape(1, 2 * Z_DIM)

    # Decoder fc: torch weight (6400, Z), bias (6400,) -> (Z, 8192) / (1, 8192).
    wdec = pad_l(wd.T.reshape(Z_DIM, CE, L)).reshape(Z_DIM, FLAT)
    bdec = pad_l(bd.reshape(CE, L)).reshape(1, FLAT)

    return dict(
        e1=conv_w(e1), e2=conv_w(e2), e3=conv_w(e3),
        wmulv=wmulv.astype(jnp.bfloat16), bmulv=bmulv,
        wdec=wdec.astype(jnp.bfloat16), bdec=bdec,
        d1=convT_w(d1), d2=convT_w(d2), d3=convT_w(d3),
    )


def vae_forward(params, x, eps):
    """x: (B, NC, L) float32 (torch NCL). eps: (B, Z_DIM) ~ N(0, 1)."""
    B = x.shape[0]
    vmem = pl.BlockSpec(memory_space=pltpu.MemorySpace.VMEM)

    # Pad length 100 -> 128 and put (batch, length) on the lane axis: (NC, B*128).
    x_pad = jnp.pad(x, ((0, 0), (0, 0), (0, PADL - L)))
    x_k = jnp.transpose(x_pad, (1, 0, 2)).reshape(NC, B * PADL)

    xr_pad, z, mu, logvar = pl.pallas_call(
        functools.partial(_vae_kernel, batch=B),
        out_shape=(
            jax.ShapeDtypeStruct((NC, B * PADL), jnp.float32),
            jax.ShapeDtypeStruct((B, Z_DIM), jnp.float32),
            jax.ShapeDtypeStruct((B, Z_DIM), jnp.float32),
            jax.ShapeDtypeStruct((B, Z_DIM), jnp.float32),
        ),
        in_specs=[vmem] * 12,
        out_specs=(vmem, vmem, vmem, vmem),
    )(x_k, params["e1"], params["e2"], params["e3"],
      params["wmulv"], params["bmulv"], eps,
      params["wdec"], params["bdec"],
      params["d1"], params["d2"], params["d3"])

    x_recon = jnp.transpose(xr_pad.reshape(NC, B, PADL), (1, 0, 2))[:, :, :L]
    return x_recon, z, mu, logvar


if __name__ == "__main__":
    key = jax.random.PRNGKey(0)
    pkey, xkey, ekey = jax.random.split(key, 3)
    params = init_params(pkey)

    B = 2
    x = jax.random.normal(xkey, (B, NC, L), jnp.float32)
    # torch.randn epsilon of the reparameterization is generated here and
    # passed into the kernel (deterministic).
    eps = jax.random.normal(ekey, (B, Z_DIM), jnp.float32)

    x_recon, z, mu, logvar = jax.jit(vae_forward)(params, x, eps)
    jax.block_until_ready((x_recon, z, mu, logvar))

    assert x_recon.shape == (B, NC, L)
    assert z.shape == (B, Z_DIM) and mu.shape == (B, Z_DIM) and logvar.shape == (B, Z_DIM)
    assert bool(jnp.all(jnp.isfinite(x_recon))) and bool(jnp.all(jnp.isfinite(z)))
    print("KERNEL_OK")
</pallas_src>

<mosaic_0001>
module attributes {stable_mosaic.version = 11 : i64} {
  func.func @_vae_kernel(%arg0: memref<10x256xf32, #tpu.memory_space<vmem>>, %arg1: memref<3x16x10xf32, #tpu.memory_space<vmem>>, %arg2: memref<3x32x16xf32, #tpu.memory_space<vmem>>, %arg3: memref<3x64x32xf32, #tpu.memory_space<vmem>>, %arg4: memref<8192x64xbf16, #tpu.memory_space<vmem>>, %arg5: memref<1x64xf32, #tpu.memory_space<vmem>>, %arg6: memref<2x32xf32, #tpu.memory_space<vmem>>, %arg7: memref<32x8192xbf16, #tpu.memory_space<vmem>>, %arg8: memref<1x8192xf32, #tpu.memory_space<vmem>>, %arg9: memref<3x32x64xf32, #tpu.memory_space<vmem>>, %arg10: memref<3x16x32xf32, #tpu.memory_space<vmem>>, %arg11: memref<3x10x16xf32, #tpu.memory_space<vmem>>, %arg12: memref<10x256xf32, #tpu.memory_space<vmem>>, %arg13: memref<2x32xf32, #tpu.memory_space<vmem>>, %arg14: memref<2x32xf32, #tpu.memory_space<vmem>>, %arg15: memref<2x32xf32, #tpu.memory_space<vmem>>) attributes {dimension_semantics = [], scalar_prefetch = 0 : i64, scratch_operands = 0 : i64, tpu.core_type = #tpu.core_type<tc>} {
    %0 = tpu.iota {dimensions = array<i32: 1>} : vector<1x256xi32>
    %c127_i32 = arith.constant 127 : i32
    %1 = vector.broadcast %c127_i32 : i32 to vector<1x256xi32>
    %2 = arith.andi %0, %1 : vector<1x256xi32>
    %c100_i32 = arith.constant 100 : i32
    %3 = vector.broadcast %c100_i32 : i32 to vector<1x256xi32>
    %4 = arith.cmpi slt, %2, %3 : vector<1x256xi32>
    %5 = arith.extui %4 : vector<1x256xi1> to vector<1x256xi32>
    %6 = arith.sitofp %5 : vector<1x256xi32> to vector<1x256xf32>
    %c0 = arith.constant 0 : index
    %c0_0 = arith.constant 0 : index
    %7 = vector.load %arg0[%c0, %c0_0] : memref<10x256xf32, #tpu.memory_space<vmem>>, vector<10x256xf32>
    %c1_i32 = arith.constant 1 : i32
    %8 = tpu.dynamic_rotate %7 by %c1_i32 dim 1 : vector<10x256xf32>, i32 -> vector<10x256xf32>
    %c255_i32 = arith.constant 255 : i32
    %9 = tpu.dynamic_rotate %7 by %c255_i32 dim 1 : vector<10x256xf32>, i32 -> vector<10x256xf32>
    %c0_1 = arith.constant 0 : index
    %c0_2 = arith.constant 0 : index
    %c0_3 = arith.constant 0 : index
    %10 = vector.load %arg1[%c0_1, %c0_2, %c0_3] : memref<3x16x10xf32, #tpu.memory_space<vmem>>, vector<1x16x10xf32>
    %11 = vector.shape_cast %10 : vector<1x16x10xf32> to vector<16x10xf32>
    %cst = arith.constant dense<0.000000e+00> : vector<16x256xf32>
    %12 = tpu.matmul %11, %8, %cst {dimension_numbers = #tpu.dot_dimension_numbers<[1], [0], [0], [1], [0, 0, 1, 1], [], []>} : vector<16x10xf32>, vector<10x256xf32>, vector<16x256xf32> -> vector<16x256xf32>
    %c1 = arith.constant 1 : index
    %c0_4 = arith.constant 0 : index
    %c0_5 = arith.constant 0 : index
    %13 = vector.load %arg1[%c1, %c0_4, %c0_5] : memref<3x16x10xf32, #tpu.memory_space<vmem>>, vector<1x16x10xf32>
    %14 = vector.shape_cast %13 : vector<1x16x10xf32> to vector<16x10xf32>
    %cst_6 = arith.constant dense<0.000000e+00> : vector<16x256xf32>
    %15 = tpu.matmul %14, %7, %cst_6 {dimension_numbers = #tpu.dot_dimension_numbers<[1], [0], [0], [1], [0, 0, 1, 1], [], []>} : vector<16x10xf32>, vector<10x256xf32>, vector<16x256xf32> -> vector<16x256xf32>
    %16 = arith.addf %12, %15 : vector<16x256xf32>
    %c2 = arith.constant 2 : index
    %c0_7 = arith.constant 0 : index
    %c0_8 = arith.constant 0 : index
    %17 = vector.load %arg1[%c2, %c0_7, %c0_8] : memref<3x16x10xf32, #tpu.memory_space<vmem>>, vector<1x16x10xf32>
    %18 = vector.shape_cast %17 : vector<1x16x10xf32> to vector<16x10xf32>
    %cst_9 = arith.constant dense<0.000000e+00> : vector<16x256xf32>
    %19 = tpu.matmul %18, %9, %cst_9 {dimension_numbers = #tpu.dot_dimension_numbers<[1], [0], [0], [1], [0, 0, 1, 1], [], []>} : vector<16x10xf32>, vector<10x256xf32>, vector<16x256xf32> -> vector<16x256xf32>
    %20 = arith.addf %16, %19 : vector<16x256xf32>
    %cst_10 = arith.constant dense<0.000000e+00> : vector<256xf32>
    %21 = vector.multi_reduction <add>, %20, %cst_10 [0] : vector<16x256xf32> to vector<256xf32>
    %22 = vector.shape_cast %21 : vector<256xf32> to vector<1x256xf32>
    %c128_i32 = arith.constant 128 : i32
    %23 = tpu.dynamic_rotate %22 by %c128_i32 dim 1 : vector<1x256xf32>, i32 -> vector<1x256xf32>
    %24 = arith.addf %22, %23 : vector<1x256xf32>
    %cst_11 = arith.constant 3.125000e-02 : f32
    %25 = vector.broadcast %cst_11 : f32 to vector<1x256xf32>
    %26 = arith.mulf %24, %25 : vector<1x256xf32>
    %27 = vector.broadcast %26 : vector<1x256xf32> to vector<16x256xf32>
    %28 = arith.subf %20, %27 : vector<16x256xf32>
    %29 = arith.mulf %28, %28 : vector<16x256xf32>
    %cst_12 = arith.constant dense<0.000000e+00> : vector<256xf32>
    %30 = vector.multi_reduction <add>, %29, %cst_12 [0] : vector<16x256xf32> to vector<256xf32>
    %31 = vector.shape_cast %30 : vector<256xf32> to vector<1x256xf32>
    %c128_i32_13 = arith.constant 128 : i32
    %32 = tpu.dynamic_rotate %31 by %c128_i32_13 dim 1 : vector<1x256xf32>, i32 -> vector<1x256xf32>
    %33 = arith.addf %31, %32 : vector<1x256xf32>
    %cst_14 = arith.constant 3.125000e-02 : f32
    %34 = vector.broadcast %cst_14 : f32 to vector<1x256xf32>
    %35 = arith.mulf %33, %34 : vector<1x256xf32>
    %cst_15 = arith.constant 9.99999974E-6 : f32
    %36 = vector.broadcast %cst_15 : f32 to vector<1x256xf32>
    %37 = arith.addf %35, %36 : vector<1x256xf32>
    %38 = math.rsqrt %37 : vector<1x256xf32>
    %39 = vector.broadcast %38 : vector<1x256xf32> to vector<16x256xf32>
    %40 = arith.mulf %28, %39 : vector<16x256xf32>
    %cst_16 = arith.constant 0.000000e+00 : f32
    %41 = vector.broadcast %cst_16 : f32 to vector<16x256xf32>
    %42 = arith.maximumf %40, %41 : vector<16x256xf32>
    %43 = vector.broadcast %6 : vector<1x256xf32> to vector<16x256xf32>
    %44 = arith.mulf %42, %43 : vector<16x256xf32>
    %c1_i32_17 = arith.constant 1 : i32
    %45 = tpu.dynamic_rotate %44 by %c1_i32_17 dim 1 : vector<16x256xf32>, i32 -> vector<16x256xf32>
    %c255_i32_18 = arith.constant 255 : i32
    %46 = tpu.dynamic_rotate %44 by %c255_i32_18 dim 1 : vector<16x256xf32>, i32 -> vector<16x256xf32>
    %c0_19 = arith.constant 0 : index
    %c0_20 = arith.constant 0 : index
    %c0_21 = arith.constant 0 : index
    %47 = vector.load %arg2[%c0_19, %c0_20, %c0_21] : memref<3x32x16xf32, #tpu.memory_space<vmem>>, vector<1x32x16xf32>
    %48 = vector.shape_cast %47 : vector<1x32x16xf32> to vector<32x16xf32>
    %cst_22 = arith.constant dense<0.000000e+00> : vector<32x256xf32>
    %49 = tpu.matmul %48, %45, %cst_22 {dimension_numbers = #tpu.dot_dimension_numbers<[1], [0], [0], [1], [0, 0, 1, 1], [], []>} : vector<32x16xf32>, vector<16x256xf32>, vector<32x256xf32> -> vector<32x256xf32>
    %c1_23 = arith.constant 1 : index
    %c0_24 = arith.constant 0 : index
    %c0_25 = arith.constant 0 : index
    %50 = vector.load %arg2[%c1_23, %c0_24, %c0_25] : memref<3x32x16xf32, #tpu.memory_space<vmem>>, vector<1x32x16xf32>
    %51 = vector.shape_cast %50 : vector<1x32x16xf32> to vector<32x16xf32>
    %cst_26 = arith.constant dense<0.000000e+00> : vector<32x256xf32>
    %52 = tpu.matmul %51, %44, %cst_26 {dimension_numbers = #tpu.dot_dimension_numbers<[1], [0], [0], [1], [0, 0, 1, 1], [], []>} : vector<32x16xf32>, vector<16x256xf32>, vector<32x256xf32> -> vector<32x256xf32>
    %53 = arith.addf %49, %52 : vector<32x256xf32>
    %c2_27 = arith.constant 2 : index
    %c0_28 = arith.constant 0 : index
    %c0_29 = arith.constant 0 : index
    %54 = vector.load %arg2[%c2_27, %c0_28, %c0_29] : memref<3x32x16xf32, #tpu.memory_space<vmem>>, vector<1x32x16xf32>
    %55 = vector.shape_cast %54 : vector<1x32x16xf32> to vector<32x16xf32>
    %cst_30 = arith.constant dense<0.000000e+00> : vector<32x256xf32>
    %56 = tpu.matmul %55, %46, %cst_30 {dimension_numbers = #tpu.dot_dimension_numbers<[1], [0], [0], [1], [0, 0, 1, 1], [], []>} : vector<32x16xf32>, vector<16x256xf32>, vector<32x256xf32> -> vector<32x256xf32>
    %57 = arith.addf %53, %56 : vector<32x256xf32>
    %cst_31 = arith.constant dense<0.000000e+00> : vector<256xf32>
    %58 = vector.multi_reduction <add>, %57, %cst_31 [0] : vector<32x256xf32> to vector<256xf32>
    %59 = vector.shape_cast %58 : vector<256xf32> to vector<1x256xf32>
    %c128_i32_32 = arith.constant 128 : i32
    %60 = tpu.dynamic_rotate %59 by %c128_i32_32 dim 1 : vector<1x256xf32>, i32 -> vector<1x256xf32>
    %61 = arith.addf %59, %60 : vector<1x256xf32>
    %cst_33 = arith.constant 1.562500e-02 : f32
    %62 = vector.broadcast %cst_33 : f32 to vector<1x256xf32>
    %63 = arith.mulf %61, %62 : vector<1x256xf32>
    %64 = vector.broadcast %63 : vector<1x256xf32> to vector<32x256xf32>
    %65 = arith.subf %57, %64 : vector<32x256xf32>
    %66 = arith.mulf %65, %65 : vector<32x256xf32>
    %cst_34 = arith.constant dense<0.000000e+00> : vector<256xf32>
    %67 = vector.multi_reduction <add>, %66, %cst_34 [0] : vector<32x256xf32> to vector<256xf32>
    %68 = vector.shape_cast %67 : vector<256xf32> to vector<1x256xf32>
    %c128_i32_35 = arith.constant 128 : i32
    %69 = tpu.dynamic_rotate %68 by %c128_i32_35 dim 1 : vector<1x256xf32>, i32 -> vector<1x256xf32>
    %70 = arith.addf %68, %69 : vector<1x256xf32>
    %cst_36 = arith.constant 1.562500e-02 : f32
    %71 = vector.broadcast %cst_36 : f32 to vector<1x256xf32>
    %72 = arith.mulf %70, %71 : vector<1x256xf32>
    %cst_37 = arith.constant 9.99999974E-6 : f32
    %73 = vector.broadcast %cst_37 : f32 to vector<1x256xf32>
    %74 = arith.addf %72, %73 : vector<1x256xf32>
    %75 = math.rsqrt %74 : vector<1x256xf32>
    %76 = vector.broadcast %75 : vector<1x256xf32> to vector<32x256xf32>
    %77 = arith.mulf %65, %76 : vector<32x256xf32>
    %cst_38 = arith.constant 0.000000e+00 : f32
    %78 = vector.broadcast %cst_38 : f32 to vector<32x256xf32>
    %79 = arith.maximumf %77, %78 : vector<32x256xf32>
    %80 = vector.broadcast %6 : vector<1x256xf32> to vector<32x256xf32>
    %81 = arith.mulf %79, %80 : vector<32x256xf32>
    %c1_i32_39 = arith.constant 1 : i32
    %82 = tpu.dynamic_rotate %81 by %c1_i32_39 dim 1 : vector<32x256xf32>, i32 -> vector<32x256xf32>
    %c255_i32_40 = arith.constant 255 : i32
    %83 = tpu.dynamic_rotate %81 by %c255_i32_40 dim 1 : vector<32x256xf32>, i32 -> vector<32x256xf32>
    %c0_41 = arith.constant 0 : index
    %c0_42 = arith.constant 0 : index
    %c0_43 = arith.constant 0 : index
    %84 = vector.load %arg3[%c0_41, %c0_42, %c0_43] : memref<3x64x32xf32, #tpu.memory_space<vmem>>, vector<1x64x32xf32>
    %85 = vector.shape_cast %84 : vector<1x64x32xf32> to vector<64x32xf32>
    %cst_44 = arith.constant dense<0.000000e+00> : vector<64x256xf32>
    %86 = tpu.matmul %85, %82, %cst_44 {dimension_numbers = #tpu.dot_dimension_numbers<[1], [0], [0], [1], [0, 0, 1, 1], [], []>} : vector<64x32xf32>, vector<32x256xf32>, vector<64x256xf32> -> vector<64x256xf32>
    %c1_45 = arith.constant 1 : index
    %c0_46 = arith.constant 0 : index
    %c0_47 = arith.constant 0 : index
    %87 = vector.load %arg3[%c1_45, %c0_46, %c0_47] : memref<3x64x32xf32, #tpu.memory_space<vmem>>, vector<1x64x32xf32>
    %88 = vector.shape_cast %87 : vector<1x64x32xf32> to vector<64x32xf32>
    %cst_48 = arith.constant dense<0.000000e+00> : vector<64x256xf32>
    %89 = tpu.matmul %88, %81, %cst_48 {dimension_numbers = #tpu.dot_dimension_numbers<[1], [0], [0], [1], [0, 0, 1, 1], [], []>} : vector<64x32xf32>, vector<32x256xf32>, vector<64x256xf32> -> vector<64x256xf32>
    %90 = arith.addf %86, %89 : vector<64x256xf32>
    %c2_49 = arith.constant 2 : index
    %c0_50 = arith.constant 0 : index
    %c0_51 = arith.constant 0 : index
    %91 = vector.load %arg3[%c2_49, %c0_50, %c0_51] : memref<3x64x32xf32, #tpu.memory_space<vmem>>, vector<1x64x32xf32>
    %92 = vector.shape_cast %91 : vector<1x64x32xf32> to vector<64x32xf32>
    %cst_52 = arith.constant dense<0.000000e+00> : vector<64x256xf32>
    %93 = tpu.matmul %92, %83, %cst_52 {dimension_numbers = #tpu.dot_dimension_numbers<[1], [0], [0], [1], [0, 0, 1, 1], [], []>} : vector<64x32xf32>, vector<32x256xf32>, vector<64x256xf32> -> vector<64x256xf32>
    %94 = arith.addf %90, %93 : vector<64x256xf32>
    %cst_53 = arith.constant dense<0.000000e+00> : vector<256xf32>
    %95 = vector.multi_reduction <add>, %94, %cst_53 [0] : vector<64x256xf32> to vector<256xf32>
    %96 = vector.shape_cast %95 : vector<256xf32> to vector<1x256xf32>
    %c128_i32_54 = arith.constant 128 : i32
    %97 = tpu.dynamic_rotate %96 by %c128_i32_54 dim 1 : vector<1x256xf32>, i32 -> vector<1x256xf32>
    %98 = arith.addf %96, %97 : vector<1x256xf32>
    %cst_55 = arith.constant 7.812500e-03 : f32
    %99 = vector.broadcast %cst_55 : f32 to vector<1x256xf32>
    %100 = arith.mulf %98, %99 : vector<1x256xf32>
    %101 = vector.broadcast %100 : vector<1x256xf32> to vector<64x256xf32>
    %102 = arith.subf %94, %101 : vector<64x256xf32>
    %103 = arith.mulf %102, %102 : vector<64x256xf32>
    %cst_56 = arith.constant dense<0.000000e+00> : vector<256xf32>
    %104 = vector.multi_reduction <add>, %103, %cst_56 [0] : vector<64x256xf32> to vector<256xf32>
    %105 = vector.shape_cast %104 : vector<256xf32> to vector<1x256xf32>
    %c128_i32_57 = arith.constant 128 : i32
    %106 = tpu.dynamic_rotate %105 by %c128_i32_57 dim 1 : vector<1x256xf32>, i32 -> vector<1x256xf32>
    %107 = arith.addf %105, %106 : vector<1x256xf32>
    %cst_58 = arith.constant 7.812500e-03 : f32
    %108 = vector.broadcast %cst_58 : f32 to vector<1x256xf32>
    %109 = arith.mulf %107, %108 : vector<1x256xf32>
    %cst_59 = arith.constant 9.99999974E-6 : f32
    %110 = vector.broadcast %cst_59 : f32 to vector<1x256xf32>
    %111 = arith.addf %109, %110 : vector<1x256xf32>
    %112 = math.rsqrt %111 : vector<1x256xf32>
    %113 = vector.broadcast %112 : vector<1x256xf32> to vector<64x256xf32>
    %114 = arith.mulf %102, %113 : vector<64x256xf32>
    %cst_60 = arith.constant 0.000000e+00 : f32
    %115 = vector.broadcast %cst_60 : f32 to vector<64x256xf32>
    %116 = arith.maximumf %114, %115 : vector<64x256xf32>
    %117 = vector.broadcast %6 : vector<1x256xf32> to vector<64x256xf32>
    %118 = arith.mulf %116, %117 : vector<64x256xf32>
    %119 = vector.extract_strided_slice %118 {offsets = [0, 0], sizes = [1, 128], strides = [1, 1]} : vector<64x256xf32> to vector<1x128xf32>
    %120 = vector.extract_strided_slice %118 {offsets = [1, 0], sizes = [1, 128], strides = [1, 1]} : vector<64x256xf32> to vector<1x128xf32>
    %121 = vector.extract_strided_slice %118 {offsets = [2, 0], sizes = [1, 128], strides = [1, 1]} : vector<64x256xf32> to vector<1x128xf32>
    %122 = vector.extract_strided_slice %118 {offsets = [3, 0], sizes = [1, 128], strides = [1, 1]} : vector<64x256xf32> to vector<1x128xf32>
    %123 = vector.extract_strided_slice %118 {offsets = [4, 0], sizes = [1, 128], strides = [1, 1]} : vector<64x256xf32> to vector<1x128xf32>
    %124 = vector.extract_strided_slice %118 {offsets = [5, 0], sizes = [1, 128], strides = [1, 1]} : vector<64x256xf32> to vector<1x128xf32>
    %125 = vector.extract_strided_slice %118 {offsets = [6, 0], sizes = [1, 128], strides = [1, 1]} : vector<64x256xf32> to vector<1x128xf32>
    %126 = vector.extract_strided_slice %118 {offsets = [7, 0], sizes = [1, 128], strides = [1, 1]} : vector<64x256xf32> to vector<1x128xf32>
    %127 = vector.extract_strided_slice %118 {offsets = [8, 0], sizes = [1, 128], strides = [1, 1]} : vector<64x256xf32> to vector<1x128xf32>
    %128 = vector.extract_strided_slice %118 {offsets = [9, 0], sizes = [1, 128], strides = [1, 1]} : vector<64x256xf32> to vector<1x128xf32>
    %129 = vector.extract_strided_slice %118 {offsets = [10, 0], sizes = [1, 128], strides = [1, 1]} : vector<64x256xf32> to vector<1x128xf32>
    %130 = vector.extract_strided_slice %118 {offsets = [11, 0], sizes = [1, 128], strides = [1, 1]} : vector<64x256xf32> to vector<1x128xf32>
    %131 = vector.extract_strided_slice %118 {offsets = [12, 0], sizes = [1, 128], strides = [1, 1]} : vector<64x256xf32> to vector<1x128xf32>
    %132 = vector.extract_strided_slice %118 {offsets = [13, 0], sizes = [1, 128], strides = [1, 1]} : vector<64x256xf32> to vector<1x128xf32>
    %133 = vector.extract_strided_slice %118 {offsets = [14, 0], sizes = [1, 128], strides = [1, 1]} : vector<64x256xf32> to vector<1x128xf32>
    %134 = vector.extract_strided_slice %118 {offsets = [15, 0], sizes = [1, 128], strides = [1, 1]} : vector<64x256xf32> to vector<1x128xf32>
    %135 = vector.extract_strided_slice %118 {offsets = [16, 0], sizes = [1, 128], strides = [1, 1]} : vector<64x256xf32> to vector<1x128xf32>
    %136 = vector.extract_strided_slice %118 {offsets = [17, 0], sizes = [1, 128], strides = [1, 1]} : vector<64x256xf32> to vector<1x128xf32>
    %137 = vector.extract_strided_slice %118 {offsets = [18, 0], sizes = [1, 128], strides = [1, 1]} : vector<64x256xf32> to vector<1x128xf32>
    %138 = vector.extract_strided_slice %118 {offsets = [19, 0], sizes = [1, 128], strides = [1, 1]} : vector<64x256xf32> to vector<1x128xf32>
    %139 = vector.extract_strided_slice %118 {offsets = [20, 0], sizes = [1, 128], strides = [1, 1]} : vector<64x256xf32> to vector<1x128xf32>
    %140 = vector.extract_strided_slice %118 {offsets = [21, 0], sizes = [1, 128], strides = [1, 1]} : vector<64x256xf32> to vector<1x128xf32>
    %141 = vector.extract_strided_slice %118 {offsets = [22, 0], sizes = [1, 128], strides = [1, 1]} : vector<64x256xf32> to vector<1x128xf32>
    %142 = vector.extract_strided_slice %118 {offsets = [23, 0], sizes = [1, 128], strides = [1, 1]} : vector<64x256xf32> to vector<1x128xf32>
    %143 = vector.extract_strided_slice %118 {offsets = [24, 0], sizes = [1, 128], strides = [1, 1]} : vector<64x256xf32> to vector<1x128xf32>
    %144 = vector.extract_strided_slice %118 {offsets = [25, 0], sizes = [1, 128], strides = [1, 1]} : vector<64x256xf32> to vector<1x128xf32>
    %145 = vector.extract_strided_slice %118 {offsets = [26, 0], sizes = [1, 128], strides = [1, 1]} : vector<64x256xf32> to vector<1x128xf32>
    %146 = vector.extract_strided_slice %118 {offsets = [27, 0], sizes = [1, 128], strides = [1, 1]} : vector<64x256xf32> to vector<1x128xf32>
    %147 = vector.extract_strided_slice %118 {offsets = [28, 0], sizes = [1, 128], strides = [1, 1]} : vector<64x256xf32> to vector<1x128xf32>
    %148 = vector.extract_strided_slice %118 {offsets = [29, 0], sizes = [1, 128], strides = [1, 1]} : vector<64x256xf32> to vector<1x128xf32>
    %149 = vector.extract_strided_slice %118 {offsets = [30, 0], sizes = [1, 128], strides = [1, 1]} : vector<64x256xf32> to vector<1x128xf32>
    %150 = vector.extract_strided_slice %118 {offsets = [31, 0], sizes = [1, 128], strides = [1, 1]} : vector<64x256xf32> to vector<1x128xf32>
    %151 = vector.extract_strided_slice %118 {offsets = [32, 0], sizes = [1, 128], strides = [1, 1]} : vector<64x256xf32> to vector<1x128xf32>
    %152 = vector.extract_strided_slice %118 {offsets = [33, 0], sizes = [1, 128], strides = [1, 1]} : vector<64x256xf32> to vector<1x128xf32>
    %153 = vector.extract_strided_slice %118 {offsets = [34, 0], sizes = [1, 128], strides = [1, 1]} : vector<64x256xf32> to vector<1x128xf32>
    %154 = vector.extract_strided_slice %118 {offsets = [35, 0], sizes = [1, 128], strides = [1, 1]} : vector<64x256xf32> to vector<1x128xf32>
    %155 = vector.extract_strided_slice %118 {offsets = [36, 0], sizes = [1, 128], strides = [1, 1]} : vector<64x256xf32> to vector<1x128xf32>
    %156 = vector.extract_strided_slice %118 {offsets = [37, 0], sizes = [1, 128], strides = [1, 1]} : vector<64x256xf32> to vector<1x128xf32>
    %157 = vector.extract_strided_slice %118 {offsets = [38, 0], sizes = [1, 128], strides = [1, 1]} : vector<64x256xf32> to vector<1x128xf32>
    %158 = vector.extract_strided_slice %118 {offsets = [39, 0], sizes = [1, 128], strides = [1, 1]} : vector<64x256xf32> to vector<1x128xf32>
    %159 = vector.extract_strided_slice %118 {offsets = [40, 0], sizes = [1, 128], strides = [1, 1]} : vector<64x256xf32> to vector<1x128xf32>
    %160 = vector.extract_strided_slice %118 {offsets = [41, 0], sizes = [1, 128], strides = [1, 1]} : vector<64x256xf32> to vector<1x128xf32>
    %161 = vector.extract_strided_slice %118 {offsets = [42, 0], sizes = [1, 128], strides = [1, 1]} : vector<64x256xf32> to vector<1x128xf32>
    %162 = vector.extract_strided_slice %118 {offsets = [43, 0], sizes = [1, 128], strides = [1, 1]} : vector<64x256xf32> to vector<1x128xf32>
    %163 = vector.extract_strided_slice %118 {offsets = [44, 0], sizes = [1, 128], strides = [1, 1]} : vector<64x256xf32> to vector<1x128xf32>
    %164 = vector.extract_strided_slice %118 {offsets = [45, 0], sizes = [1, 128], strides = [1, 1]} : vector<64x256xf32> to vector<1x128xf32>
    %165 = vector.extract_strided_slice %118 {offsets = [46, 0], sizes = [1, 128], strides = [1, 1]} : vector<64x256xf32> to vector<1x128xf32>
    %166 = vector.extract_strided_slice %118 {offsets = [47, 0], sizes = [1, 128], strides = [1, 1]} : vector<64x256xf32> to vector<1x128xf32>
    %167 = vector.extract_strided_slice %118 {offsets = [48, 0], sizes = [1, 128], strides = [1, 1]} : vector<64x256xf32> to vector<1x128xf32>
    %168 = vector.extract_strided_slice %118 {offsets = [49, 0], sizes = [1, 128], strides = [1, 1]} : vector<64x256xf32> to vector<1x128xf32>
    %169 = vector.extract_strided_slice %118 {offsets = [50, 0], sizes = [1, 128], strides = [1, 1]} : vector<64x256xf32> to vector<1x128xf32>
    %170 = vector.extract_strided_slice %118 {offsets = [51, 0], sizes = [1, 128], strides = [1, 1]} : vector<64x256xf32> to vector<1x128xf32>
    %171 = vector.extract_strided_slice %118 {offsets = [52, 0], sizes = [1, 128], strides = [1, 1]} : vector<64x256xf32> to vector<1x128xf32>
    %172 = vector.extract_strided_slice %118 {offsets = [53, 0], sizes = [1, 128], strides = [1, 1]} : vector<64x256xf32> to vector<1x128xf32>
    %173 = vector.extract_strided_slice %118 {offsets = [54, 0], sizes = [1, 128], strides = [1, 1]} : vector<64x256xf32> to vector<1x128xf32>
    %174 = vector.extract_strided_slice %118 {offsets = [55, 0], sizes = [1, 128], strides = [1, 1]} : vector<64x256xf32> to vector<1x128xf32>
    %175 = vector.extract_strided_slice %118 {offsets = [56, 0], sizes = [1, 128], strides = [1, 1]} : vector<64x256xf32> to vector<1x128xf32>
    %176 = vector.extract_strided_slice %118 {offsets = [57, 0], sizes = [1, 128], strides = [1, 1]} : vector<64x256xf32> to vector<1x128xf32>
    %177 = vector.extract_strided_slice %118 {offsets = [58, 0], sizes = [1, 128], strides = [1, 1]} : vector<64x256xf32> to vector<1x128xf32>
    %178 = vector.extract_strided_slice %118 {offsets = [59, 0], sizes = [1, 128], strides = [1, 1]} : vector<64x256xf32> to vector<1x128xf32>
    %179 = vector.extract_strided_slice %118 {offsets = [60, 0], sizes = [1, 128], strides = [1, 1]} : vector<64x256xf32> to vector<1x128xf32>
    %180 = vector.extract_strided_slice %118 {offsets = [61, 0], sizes = [1, 128], strides = [1, 1]} : vector<64x256xf32> to vector<1x128xf32>
    %181 = vector.extract_strided_slice %118 {offsets = [62, 0], sizes = [1, 128], strides = [1, 1]} : vector<64x256xf32> to vector<1x128xf32>
    %182 = vector.extract_strided_slice %118 {offsets = [63, 0], sizes = [1, 128], strides = [1, 1]} : vector<64x256xf32> to vector<1x128xf32>
    %183 = tpu.concatenate %119, %120, %121, %122, %123, %124, %125, %126, %127, %128, %129, %130, %131, %132, %133, %134 in 1 : vector<1x128xf32>, vector<1x128xf32>, vector<1x128xf32>, vector<1x128xf32>, vector<1x128xf32>, vector<1x128xf32>, vector<1x128xf32>, vector<1x128xf32>, vector<1x128xf32>, vector<1x128xf32>, vector<1x128xf32>, vector<1x128xf32>, vector<1x128xf32>, vector<1x128xf32>, vector<1x128xf32>, vector<1x128xf32> -> vector<1x2048xf32>
    %184 = tpu.concatenate %135, %136, %137, %138, %139, %140, %141, %142, %143, %144, %145, %146, %147, %148, %149, %150 in 1 : vector<1x128xf32>, vector<1x128xf32>, vector<1x128xf32>, vector<1x128xf32>, vector<1x128xf32>, vector<1x128xf32>, vector<1x128xf32>, vector<1x128xf32>, vector<1x128xf32>, vector<1x128xf32>, vector<1x128xf32>, vector<1x128xf32>, vector<1x128xf32>, vector<1x128xf32>, vector<1x128xf32>, vector<1x128xf32> -> vector<1x2048xf32>
    %185 = tpu.concatenate %151, %152, %153, %154, %155, %156, %157, %158, %159, %160, %161, %162, %163, %164, %165, %166 in 1 : vector<1x128xf32>, vector<1x128xf32>, vector<1x128xf32>, vector<1x128xf32>, vector<1x128xf32>, vector<1x128xf32>, vector<1x128xf32>, vector<1x128xf32>, vector<1x128xf32>, vector<1x128xf32>, vector<1x128xf32>, vector<1x128xf32>, vector<1x128xf32>, vector<1x128xf32>, vector<1x128xf32>, vector<1x128xf32> -> vector<1x2048xf32>
    %186 = tpu.concatenate %167, %168, %169, %170, %171, %172, %173, %174, %175, %176, %177, %178, %179, %180, %181, %182 in 1 : vector<1x128xf32>, vector<1x128xf32>, vector<1x128xf32>, vector<1x128xf32>, vector<1x128xf32>, vector<1x128xf32>, vector<1x128xf32>, vector<1x128xf32>, vector<1x128xf32>, vector<1x128xf32>, vector<1x128xf32>, vector<1x128xf32>, vector<1x128xf32>, vector<1x128xf32>, vector<1x128xf32>, vector<1x128xf32> -> vector<1x2048xf32>
    %187 = tpu.concatenate %183, %184, %185, %186 in 1 : vector<1x2048xf32>, vector<1x2048xf32>, vector<1x2048xf32>, vector<1x2048xf32> -> vector<1x8192xf32>
    %188 = vector.extract_strided_slice %118 {offsets = [0, 128], sizes = [1, 128], strides = [1, 1]} : vector<64x256xf32> to vector<1x128xf32>
    %189 = vector.extract_strided_slice %118 {offsets = [1, 128], sizes = [1, 128], strides = [1, 1]} : vector<64x256xf32> to vector<1x128xf32>
    %190 = vector.extract_strided_slice %118 {offsets = [2, 128], sizes = [1, 128], strides = [1, 1]} : vector<64x256xf32> to vector<1x128xf32>
    %191 = vector.extract_strided_slice %118 {offsets = [3, 128], sizes = [1, 128], strides = [1, 1]} : vector<64x256xf32> to vector<1x128xf32>
    %192 = vector.extract_strided_slice %118 {offsets = [4, 128], sizes = [1, 128], strides = [1, 1]} : vector<64x256xf32> to vector<1x128xf32>
    %193 = vector.extract_strided_slice %118 {offsets = [5, 128], sizes = [1, 128], strides = [1, 1]} : vector<64x256xf32> to vector<1x128xf32>
    %194 = vector.extract_strided_slice %118 {offsets = [6, 128], sizes = [1, 128], strides = [1, 1]} : vector<64x256xf32> to vector<1x128xf32>
    %195 = vector.extract_strided_slice %118 {offsets = [7, 128], sizes = [1, 128], strides = [1, 1]} : vector<64x256xf32> to vector<1x128xf32>
    %196 = vector.extract_strided_slice %118 {offsets = [8, 128], sizes = [1, 128], strides = [1, 1]} : vector<64x256xf32> to vector<1x128xf32>
    %197 = vector.extract_strided_slice %118 {offsets = [9, 128], sizes = [1, 128], strides = [1, 1]} : vector<64x256xf32> to vector<1x128xf32>
    %198 = vector.extract_strided_slice %118 {offsets = [10, 128], sizes = [1, 128], strides = [1, 1]} : vector<64x256xf32> to vector<1x128xf32>
    %199 = vector.extract_strided_slice %118 {offsets = [11, 128], sizes = [1, 128], strides = [1, 1]} : vector<64x256xf32> to vector<1x128xf32>
    %200 = vector.extract_strided_slice %118 {offsets = [12, 128], sizes = [1, 128], strides = [1, 1]} : vector<64x256xf32> to vector<1x128xf32>
    %201 = vector.extract_strided_slice %118 {offsets = [13, 128], sizes = [1, 128], strides = [1, 1]} : vector<64x256xf32> to vector<1x128xf32>
    %202 = vector.extract_strided_slice %118 {offsets = [14, 128], sizes = [1, 128], strides = [1, 1]} : vector<64x256xf32> to vector<1x128xf32>
    %203 = vector.extract_strided_slice %118 {offsets = [15, 128], sizes = [1, 128], strides = [1, 1]} : vector<64x256xf32> to vector<1x128xf32>
    %204 = vector.extract_strided_slice %118 {offsets = [16, 128], sizes = [1, 128], strides = [1, 1]} : vector<64x256xf32> to vector<1x128xf32>
    %205 = vector.extract_strided_slice %118 {offsets = [17, 128], sizes = [1, 128], strides = [1, 1]} : vector<64x256xf32> to vector<1x128xf32>
    %206 = vector.extract_strided_slice %118 {offsets = [18, 128], sizes = [1, 128], strides = [1, 1]} : vector<64x256xf32> to vector<1x128xf32>
    %207 = vector.extract_strided_slice %118 {offsets = [19, 128], sizes = [1, 128], strides = [1, 1]} : vector<64x256xf32> to vector<1x128xf32>
    %208 = vector.extract_strided_slice %118 {offsets = [20, 128], sizes = [1, 128], strides = [1, 1]} : vector<64x256xf32> to vector<1x128xf32>
    %209 = vector.extract_strided_slice %118 {offsets = [21, 128], sizes = [1, 128], strides = [1, 1]} : vector<64x256xf32> to vector<1x128xf32>
    %210 = vector.extract_strided_slice %118 {offsets = [22, 128], sizes = [1, 128], strides = [1, 1]} : vector<64x256xf32> to vector<1x128xf32>
    %211 = vector.extract_strided_slice %118 {offsets = [23, 128], sizes = [1, 128], strides = [1, 1]} : vector<64x256xf32> to vector<1x128xf32>
    %212 = vector.extract_strided_slice %118 {offsets = [24, 128], sizes = [1, 128], strides = [1, 1]} : vector<64x256xf32> to vector<1x128xf32>
    %213 = vector.extract_strided_slice %118 {offsets = [25, 128], sizes = [1, 128], strides = [1, 1]} : vector<64x256xf32> to vector<1x128xf32>
    %214 = vector.extract_strided_slice %118 {offsets = [26, 128], sizes = [1, 128], strides = [1, 1]} : vector<64x256xf32> to vector<1x128xf32>
    %215 = vector.extract_strided_slice %118 {offsets = [27, 128], sizes = [1, 128], strides = [1, 1]} : vector<64x256xf32> to vector<1x128xf32>
    %216 = vector.extract_strided_slice %118 {offsets = [28, 128], sizes = [1, 128], strides = [1, 1]} : vector<64x256xf32> to vector<1x128xf32>
    %217 = vector.extract_strided_slice %118 {offsets = [29, 128], sizes = [1, 128], strides = [1, 1]} : vector<64x256xf32> to vector<1x128xf32>
    %218 = vector.extract_strided_slice %118 {offsets = [30, 128], sizes = [1, 128], strides = [1, 1]} : vector<64x256xf32> to vector<1x128xf32>
    %219 = vector.extract_strided_slice %118 {offsets = [31, 128], sizes = [1, 128], strides = [1, 1]} : vector<64x256xf32> to vector<1x128xf32>
    %220 = vector.extract_strided_slice %118 {offsets = [32, 128], sizes = [1, 128], strides = [1, 1]} : vector<64x256xf32> to vector<1x128xf32>
    %221 = vector.extract_strided_slice %118 {offsets = [33, 128], sizes = [1, 128], strides = [1, 1]} : vector<64x256xf32> to vector<1x128xf32>
    %222 = vector.extract_strided_slice %118 {offsets = [34, 128], sizes = [1, 128], strides = [1, 1]} : vector<64x256xf32> to vector<1x128xf32>
    %223 = vector.extract_strided_slice %118 {offsets = [35, 128], sizes = [1, 128], strides = [1, 1]} : vector<64x256xf32> to vector<1x128xf32>
    %224 = vector.extract_strided_slice %118 {offsets = [36, 128], sizes = [1, 128], strides = [1, 1]} : vector<64x256xf32> to vector<1x128xf32>
    %225 = vector.extract_strided_slice %118 {offsets = [37, 128], sizes = [1, 128], strides = [1, 1]} : vector<64x256xf32> to vector<1x128xf32>
    %226 = vector.extract_strided_slice %118 {offsets = [38, 128], sizes = [1, 128], strides = [1, 1]} : vector<64x256xf32> to vector<1x128xf32>
    %227 = vector.extract_strided_slice %118 {offsets = [39, 128], sizes = [1, 128], strides = [1, 1]} : vector<64x256xf32> to vector<1x128xf32>
    %228 = vector.extract_strided_slice %118 {offsets = [40, 128], sizes = [1, 128], strides = [1, 1]} : vector<64x256xf32> to vector<1x128xf32>
    %229 = vector.extract_strided_slice %118 {offsets = [41, 128], sizes = [1, 128], strides = [1, 1]} : vector<64x256xf32> to vector<1x128xf32>
    %230 = vector.extract_strided_slice %118 {offsets = [42, 128], sizes = [1, 128], strides = [1, 1]} : vector<64x256xf32> to vector<1x128xf32>
    %231 = vector.extract_strided_slice %118 {offsets = [43, 128], sizes = [1, 128], strides = [1, 1]} : vector<64x256xf32> to vector<1x128xf32>
    %232 = vector.extract_strided_slice %118 {offsets = [44, 128], sizes = [1, 128], strides = [1, 1]} : vector<64x256xf32> to vector<1x128xf32>
    %233 = vector.extract_strided_slice %118 {offsets = [45, 128], sizes = [1, 128], strides = [1, 1]} : vector<64x256xf32> to vector<1x128xf32>
    %234 = vector.extract_strided_slice %118 {offsets = [46, 128], sizes = [1, 128], strides = [1, 1]} : vector<64x256xf32> to vector<1x128xf32>
    %235 = vector.extract_strided_slice %118 {offsets = [47, 128], sizes = [1, 128], strides = [1, 1]} : vector<64x256xf32> to vector<1x128xf32>
    %236 = vector.extract_strided_slice %118 {offsets = [48, 128], sizes = [1, 128], strides = [1, 1]} : vector<64x256xf32> to vector<1x128xf32>
    %237 = vector.extract_strided_slice %118 {offsets = [49, 128], sizes = [1, 128], strides = [1, 1]} : vector<64x256xf32> to vector<1x128xf32>
    %238 = vector.extract_strided_slice %118 {offsets = [50, 128], sizes = [1, 128], strides = [1, 1]} : vector<64x256xf32> to vector<1x128xf32>
    %239 = vector.extract_strided_slice %118 {offsets = [51, 128], sizes = [1, 128], strides = [1, 1]} : vector<64x256xf32> to vector<1x128xf32>
    %240 = vector.extract_strided_slice %118 {offsets = [52, 128], sizes = [1, 128], strides = [1, 1]} : vector<64x256xf32> to vector<1x128xf32>
    %241 = vector.extract_strided_slice %118 {offsets = [53, 128], sizes = [1, 128], strides = [1, 1]} : vector<64x256xf32> to vector<1x128xf32>
    %242 = vector.extract_strided_slice %118 {offsets = [54, 128], sizes = [1, 128], strides = [1, 1]} : vector<64x256xf32> to vector<1x128xf32>
    %243 = vector.extract_strided_slice %118 {offsets = [55, 128], sizes = [1, 128], strides = [1, 1]} : vector<64x256xf32> to vector<1x128xf32>
    %244 = vector.extract_strided_slice %118 {offsets = [56, 128], sizes = [1, 128], strides = [1, 1]} : vector<64x256xf32> to vector<1x128xf32>
    %245 = vector.extract_strided_slice %118 {offsets = [57, 128], sizes = [1, 128], strides = [1, 1]} : vector<64x256xf32> to vector<1x128xf32>
    %246 = vector.extract_strided_slice %118 {offsets = [58, 128], sizes = [1, 128], strides = [1, 1]} : vector<64x256xf32> to vector<1x128xf32>
    %247 = vector.extract_strided_slice %118 {offsets = [59, 128], sizes = [1, 128], strides = [1, 1]} : vector<64x256xf32> to vector<1x128xf32>
    %248 = vector.extract_strided_slice %118 {offsets = [60, 128], sizes = [1, 128], strides = [1, 1]} : vector<64x256xf32> to vector<1x128xf32>
    %249 = vector.extract_strided_slice %118 {offsets = [61, 128], sizes = [1, 128], strides = [1, 1]} : vector<64x256xf32> to vector<1x128xf32>
    %250 = vector.extract_strided_slice %118 {offsets = [62, 128], sizes = [1, 128], strides = [1, 1]} : vector<64x256xf32> to vector<1x128xf32>
    %251 = vector.extract_strided_slice %118 {offsets = [63, 128], sizes = [1, 128], strides = [1, 1]} : vector<64x256xf32> to vector<1x128xf32>
    %252 = tpu.concatenate %188, %189, %190, %191, %192, %193, %194, %195, %196, %197, %198, %199, %200, %201, %202, %203 in 1 : vector<1x128xf32>, vector<1x128xf32>, vector<1x128xf32>, vector<1x128xf32>, vector<1x128xf32>, vector<1x128xf32>, vector<1x128xf32>, vector<1x128xf32>, vector<1x128xf32>, vector<1x128xf32>, vector<1x128xf32>, vector<1x128xf32>, vector<1x128xf32>, vector<1x128xf32>, vector<1x128xf32>, vector<1x128xf32> -> vector<1x2048xf32>
    %253 = tpu.concatenate %204, %205, %206, %207, %208, %209, %210, %211, %212, %213, %214, %215, %216, %217, %218, %219 in 1 : vector<1x128xf32>, vector<1x128xf32>, vector<1x128xf32>, vector<1x128xf32>, vector<1x128xf32>, vector<1x128xf32>, vector<1x128xf32>, vector<1x128xf32>, vector<1x128xf32>, vector<1x128xf32>, vector<1x128xf32>, vector<1x128xf32>, vector<1x128xf32>, vector<1x128xf32>, vector<1x128xf32>, vector<1x128xf32> -> vector<1x2048xf32>
    %254 = tpu.concatenate %220, %221, %222, %223, %224, %225, %226, %227, %228, %229, %230, %231, %232, %233, %234, %235 in 1 : vector<1x128xf32>, vector<1x128xf32>, vector<1x128xf32>, vector<1x128xf32>, vector<1x128xf32>, vector<1x128xf32>, vector<1x128xf32>, vector<1x128xf32>, vector<1x128xf32>, vector<1x128xf32>, vector<1x128xf32>, vector<1x128xf32>, vector<1x128xf32>, vector<1x128xf32>, vector<1x128xf32>, vector<1x128xf32> -> vector<1x2048xf32>
    %255 = tpu.concatenate %236, %237, %238, %239, %240, %241, %242, %243, %244, %245, %246, %247, %248, %249, %250, %251 in 1 : vector<1x128xf32>, vector<1x128xf32>, vector<1x128xf32>, vector<1x128xf32>, vector<1x128xf32>, vector<1x128xf32>, vector<1x128xf32>, vector<1x128xf32>, vector<1x128xf32>, vector<1x128xf32>, vector<1x128xf32>, vector<1x128xf32>, vector<1x128xf32>, vector<1x128xf32>, vector<1x128xf32>, vector<1x128xf32> -> vector<1x2048xf32>
    %256 = tpu.concatenate %252, %253, %254, %255 in 1 : vector<1x2048xf32>, vector<1x2048xf32>, vector<1x2048xf32>, vector<1x2048xf32> -> vector<1x8192xf32>
    %257 = tpu.concatenate %187, %256 in 0 : vector<1x8192xf32>, vector<1x8192xf32> -> vector<2x8192xf32>
    %258 = arith.truncf %257 : vector<2x8192xf32> to vector<2x8192xbf16>
    %c0_61 = arith.constant 0 : index
    %c0_62 = arith.constant 0 : index
    %259 = vector.load %arg4[%c0_61, %c0_62] : memref<8192x64xbf16, #tpu.memory_space<vmem>>, vector<8192x64xbf16>
    %cst_63 = arith.constant dense<0.000000e+00> : vector<2x64xf32>
    %260 = tpu.matmul %258, %259, %cst_63 {dimension_numbers = #tpu.dot_dimension_numbers<[1], [0], [0], [1], [0, 0, 1, 1], [], []>} : vector<2x8192xbf16>, vector<8192x64xbf16>, vector<2x64xf32> -> vector<2x64xf32>
    %c0_64 = arith.constant 0 : index
    %c0_65 = arith.constant 0 : index
    %261 = vector.load %arg5[%c0_64, %c0_65] : memref<1x64xf32, #tpu.memory_space<vmem>>, vector<1x64xf32>
    %262 = vector.broadcast %261 : vector<1x64xf32> to vector<2x64xf32>
    %263 = arith.addf %260, %262 : vector<2x64xf32>
    %264 = vector.extract_strided_slice %263 {offsets = [0, 0], sizes = [2, 32], strides = [1, 1]} : vector<2x64xf32> to vector<2x32xf32>
    %265 = vector.extract_strided_slice %263 {offsets = [0, 32], sizes = [2, 32], strides = [1, 1]} : vector<2x64xf32> to vector<2x32xf32>
    %c0_66 = arith.constant 0 : index
    %c0_67 = arith.constant 0 : index
    %266 = vector.load %arg6[%c0_66, %c0_67] : memref<2x32xf32, #tpu.memory_space<vmem>>, vector<2x32xf32>
    %cst_68 = arith.constant 5.000000e-01 : f32
    %267 = vector.broadcast %cst_68 : f32 to vector<2x32xf32>
    %268 = arith.mulf %267, %265 : vector<2x32xf32>
    %269 = math.exp %268 : vector<2x32xf32>
    %270 = arith.mulf %266, %269 : vector<2x32xf32>
    %271 = arith.addf %270, %264 : vector<2x32xf32>
    %272 = arith.truncf %271 : vector<2x32xf32> to vector<2x32xbf16>
    %c0_69 = arith.constant 0 : index
    %c0_70 = arith.constant 0 : index
    %273 = vector.load %arg7[%c0_69, %c0_70] : memref<32x8192xbf16, #tpu.memory_space<vmem>>, vector<32x8192xbf16>
    %cst_71 = arith.constant dense<0.000000e+00> : vector<2x8192xf32>
    %274 = tpu.matmul %272, %273, %cst_71 {dimension_numbers = #tpu.dot_dimension_numbers<[1], [0], [0], [1], [0, 0, 1, 1], [], []>} : vector<2x32xbf16>, vector<32x8192xbf16>, vector<2x8192xf32> -> vector<2x8192xf32>
    %c0_72 = arith.constant 0 : index
    %c0_73 = arith.constant 0 : index
    %275 = vector.load %arg8[%c0_72, %c0_73] : memref<1x8192xf32, #tpu.memory_space<vmem>>, vector<1x8192xf32>
    %276 = vector.broadcast %275 : vector<1x8192xf32> to vector<2x8192xf32>
    %277 = arith.addf %274, %276 : vector<2x8192xf32>
    %278 = vector.extract_strided_slice %277 {offsets = [0, 0], sizes = [1, 128], strides = [1, 1]} : vector<2x8192xf32> to vector<1x128xf32>
    %279 = vector.extract_strided_slice %277 {offsets = [0, 128], sizes = [1, 128], strides = [1, 1]} : vector<2x8192xf32> to vector<1x128xf32>
    %280 = vector.extract_strided_slice %277 {offsets = [0, 256], sizes = [1, 128], strides = [1, 1]} : vector<2x8192xf32> to vector<1x128xf32>
    %281 = vector.extract_strided_slice %277 {offsets = [0, 384], sizes = [1, 128], strides = [1, 1]} : vector<2x8192xf32> to vector<1x128xf32>
    %282 = vector.extract_strided_slice %277 {offsets = [0, 512], sizes = [1, 128], strides = [1, 1]} : vector<2x8192xf32> to vector<1x128xf32>
    %283 = vector.extract_strided_slice %277 {offsets = [0, 640], sizes = [1, 128], strides = [1, 1]} : vector<2x8192xf32> to vector<1x128xf32>
    %284 = vector.extract_strided_slice %277 {offsets = [0, 768], sizes = [1, 128], strides = [1, 1]} : vector<2x8192xf32> to vector<1x128xf32>
    %285 = vector.extract_strided_slice %277 {offsets = [0, 896], sizes = [1, 128], strides = [1, 1]} : vector<2x8192xf32> to vector<1x128xf32>
    %286 = vector.extract_strided_slice %277 {offsets = [0, 1024], sizes = [1, 128], strides = [1, 1]} : vector<2x8192xf32> to vector<1x128xf32>
    %287 = vector.extract_strided_slice %277 {offsets = [0, 1152], sizes = [1, 128], strides = [1, 1]} : vector<2x8192xf32> to vector<1x128xf32>
    %288 = vector.extract_strided_slice %277 {offsets = [0, 1280], sizes = [1, 128], strides = [1, 1]} : vector<2x8192xf32> to vector<1x128xf32>
    %289 = vector.extract_strided_slice %277 {offsets = [0, 1408], sizes = [1, 128], strides = [1, 1]} : vector<2x8192xf32> to vector<1x128xf32>
    %290 = vector.extract_strided_slice %277 {offsets = [0, 1536], sizes = [1, 128], strides = [1, 1]} : vector<2x8192xf32> to vector<1x128xf32>
    %291 = vector.extract_strided_slice %277 {offsets = [0, 1664], sizes = [1, 128], strides = [1, 1]} : vector<2x8192xf32> to vector<1x128xf32>
    %292 = vector.extract_strided_slice %277 {offsets = [0, 1792], sizes = [1, 128], strides = [1, 1]} : vector<2x8192xf32> to vector<1x128xf32>
    %293 = vector.extract_strided_slice %277 {offsets = [0, 1920], sizes = [1, 128], strides = [1, 1]} : vector<2x8192xf32> to vector<1x128xf32>
    %294 = vector.extract_strided_slice %277 {offsets = [0, 2048], sizes = [1, 128], strides = [1, 1]} : vector<2x8192xf32> to vector<1x128xf32>
    %295 = vector.extract_strided_slice %277 {offsets = [0, 2176], sizes = [1, 128], strides = [1, 1]} : vector<2x8192xf32> to vector<1x128xf32>
    %296 = vector.extract_strided_slice %277 {offsets = [0, 2304], sizes = [1, 128], strides = [1, 1]} : vector<2x8192xf32> to vector<1x128xf32>
    %297 = vector.extract_strided_slice %277 {offsets = [0, 2432], sizes = [1, 128], strides = [1, 1]} : vector<2x8192xf32> to vector<1x128xf32>
    %298 = vector.extract_strided_slice %277 {offsets = [0, 2560], sizes = [1, 128], strides = [1, 1]} : vector<2x8192xf32> to vector<1x128xf32>
    %299 = vector.extract_strided_slice %277 {offsets = [0, 2688], sizes = [1, 128], strides = [1, 1]} : vector<2x8192xf32> to vector<1x128xf32>
    %300 = vector.extract_strided_slice %277 {offsets = [0, 2816], sizes = [1, 128], strides = [1, 1]} : vector<2x8192xf32> to vector<1x128xf32>
    %301 = vector.extract_strided_slice %277 {offsets = [0, 2944], sizes = [1, 128], strides = [1, 1]} : vector<2x8192xf32> to vector<1x128xf32>
    %302 = vector.extract_strided_slice %277 {offsets = [0, 3072], sizes = [1, 128], strides = [1, 1]} : vector<2x8192xf32> to vector<1x128xf32>
    %303 = vector.extract_strided_slice %277 {offsets = [0, 3200], sizes = [1, 128], strides = [1, 1]} : vector<2x8192xf32> to vector<1x128xf32>
    %304 = vector.extract_strided_slice %277 {offsets = [0, 3328], sizes = [1, 128], strides = [1, 1]} : vector<2x8192xf32> to vector<1x128xf32>
    %305 = vector.extract_strided_slice %277 {offsets = [0, 3456], sizes = [1, 128], strides = [1, 1]} : vector<2x8192xf32> to vector<1x128xf32>
    %306 = vector.extract_strided_slice %277 {offsets = [0, 3584], sizes = [1, 128], strides = [1, 1]} : vector<2x8192xf32> to vector<1x128xf32>
    %307 = vector.extract_strided_slice %277 {offsets = [0, 3712], sizes = [1, 128], strides = [1, 1]} : vector<2x8192xf32> to vector<1x128xf32>
    %308 = vector.extract_strided_slice %277 {offsets = [0, 3840], sizes = [1, 128], strides = [1, 1]} : vector<2x8192xf32> to vector<1x128xf32>
    %309 = vector.extract_strided_slice %277 {offsets = [0, 3968], sizes = [1, 128], strides = [1, 1]} : vector<2x8192xf32> to vector<1x128xf32>
    %310 = vector.extract_strided_slice %277 {offsets = [0, 4096], sizes = [1, 128], strides = [1, 1]} : vector<2x8192xf32> to vector<1x128xf32>
    %311 = vector.extract_strided_slice %277 {offsets = [0, 4224], sizes = [1, 128], strides = [1, 1]} : vector<2x8192xf32> to vector<1x128xf32>
    %312 = vector.extract_strided_slice %277 {offsets = [0, 4352], sizes = [1, 128], strides = [1, 1]} : vector<2x8192xf32> to vector<1x128xf32>
    %313 = vector.extract_strided_slice %277 {offsets = [0, 4480], sizes = [1, 128], strides = [1, 1]} : vector<2x8192xf32> to vector<1x128xf32>
    %314 = vector.extract_strided_slice %277 {offsets = [0, 4608], sizes = [1, 128], strides = [1, 1]} : vector<2x8192xf32> to vector<1x128xf32>
    %315 = vector.extract_strided_slice %277 {offsets = [0, 4736], sizes = [1, 128], strides = [1, 1]} : vector<2x8192xf32> to vector<1x128xf32>
    %316 = vector.extract_strided_slice %277 {offsets = [0, 4864], sizes = [1, 128], strides = [1, 1]} : vector<2x8192xf32> to vector<1x128xf32>
    %317 = vector.extract_strided_slice %277 {offsets = [0, 4992], sizes = [1, 128], strides = [1, 1]} : vector<2x8192xf32> to vector<1x128xf32>
    %318 = vector.extract_strided_slice %277 {offsets = [0, 5120], sizes = [1, 128], strides = [1, 1]} : vector<2x8192xf32> to vector<1x128xf32>
    %319 = vector.extract_strided_slice %277 {offsets = [0, 5248], sizes = [1, 128], strides = [1, 1]} : vector<2x8192xf32> to vector<1x128xf32>
    %320 = vector.extract_strided_slice %277 {offsets = [0, 5376], sizes = [1, 128], strides = [1, 1]} : vector<2x8192xf32> to vector<1x128xf32>
    %321 = vector.extract_strided_slice %277 {offsets = [0, 5504], sizes = [1, 128], strides = [1, 1]} : vector<2x8192xf32> to vector<1x128xf32>
    %322 = vector.extract_strided_slice %277 {offsets = [0, 5632], sizes = [1, 128], strides = [1, 1]} : vector<2x8192xf32> to vector<1x128xf32>
    %323 = vector.extract_strided_slice %277 {offsets = [0, 5760], sizes = [1, 128], strides = [1, 1]} : vector<2x8192xf32> to vector<1x128xf32>
    %324 = vector.extract_strided_slice %277 {offsets = [0, 5888], sizes = [1, 128], strides = [1, 1]} : vector<2x8192xf32> to vector<1x128xf32>
    %325 = vector.extract_strided_slice %277 {offsets = [0, 6016], sizes = [1, 128], strides = [1, 1]} : vector<2x8192xf32> to vector<1x128xf32>
    %326 = vector.extract_strided_slice %277 {offsets = [0, 6144], sizes = [1, 128], strides = [1, 1]} : vector<2x8192xf32> to vector<1x128xf32>
    %327 = vector.extract_strided_slice %277 {offsets = [0, 6272], sizes = [1, 128], strides = [1, 1]} : vector<2x8192xf32> to vector<1x128xf32>
    %328 = vector.extract_strided_slice %277 {offsets = [0, 6400], sizes = [1, 128], strides = [1, 1]} : vector<2x8192xf32> to vector<1x128xf32>
    %329 = vector.extract_strided_slice %277 {offsets = [0, 6528], sizes = [1, 128], strides = [1, 1]} : vector<2x8192xf32> to vector<1x128xf32>
    %330 = vector.extract_strided_slice %277 {offsets = [0, 6656], sizes = [1, 128], strides = [1, 1]} : vector<2x8192xf32> to vector<1x128xf32>
    %331 = vector.extract_strided_slice %277 {offsets = [0, 6784], sizes = [1, 128], strides = [1, 1]} : vector<2x8192xf32> to vector<1x128xf32>
    %332 = vector.extract_strided_slice %277 {offsets = [0, 6912], sizes = [1, 128], strides = [1, 1]} : vector<2x8192xf32> to vector<1x128xf32>
    %333 = vector.extract_strided_slice %277 {offsets = [0, 7040], sizes = [1, 128], strides = [1, 1]} : vector<2x8192xf32> to vector<1x128xf32>
    %334 = vector.extract_strided_slice %277 {offsets = [0, 7168], sizes = [1, 128], strides = [1, 1]} : vector<2x8192xf32> to vector<1x128xf32>
    %335 = vector.extract_strided_slice %277 {offsets = [0, 7296], sizes = [1, 128], strides = [1, 1]} : vector<2x8192xf32> to vector<1x128xf32>
    %336 = vector.extract_strided_slice %277 {offsets = [0, 7424], sizes = [1, 128], strides = [1, 1]} : vector<2x8192xf32> to vector<1x128xf32>
    %337 = vector.extract_strided_slice %277 {offsets = [0, 7552], sizes = [1, 128], strides = [1, 1]} : vector<2x8192xf32> to vector<1x128xf32>
    %338 = vector.extract_strided_slice %277 {offsets = [0, 7680], sizes = [1, 128], strides = [1, 1]} : vector<2x8192xf32> to vector<1x128xf32>
    %339 = vector.extract_strided_slice %277 {offsets = [0, 7808], sizes = [1, 128], strides = [1, 1]} : vector<2x8192xf32> to vector<1x128xf32>
    %340 = vector.extract_strided_slice %277 {offsets = [0, 7936], sizes = [1, 128], strides = [1, 1]} : vector<2x8192xf32> to vector<1x128xf32>
    %341 = vector.extract_strided_slice %277 {offsets = [0, 8064], sizes = [1, 128], strides = [1, 1]} : vector<2x8192xf32> to vector<1x128xf32>
    %342 = tpu.concatenate %278, %279, %280, %281, %282, %283, %284, %285, %286, %287, %288, %289, %290, %291, %292, %293 in 0 : vector<1x128xf32>, vector<1x128xf32>, vector<1x128xf32>, vector<1x128xf32>, vector<1x128xf32>, vector<1x128xf32>, vector<1x128xf32>, vector<1x128xf32>, vector<1x128xf32>, vector<1x128xf32>, vector<1x128xf32>, vector<1x128xf32>, vector<1x128xf32>, vector<1x128xf32>, vector<1x128xf32>, vector<1x128xf32> -> vector<16x128xf32>
    %343 = tpu.concatenate %294, %295, %296, %297, %298, %299, %300, %301, %302, %303, %304, %305, %306, %307, %308, %309 in 0 : vector<1x128xf32>, vector<1x128xf32>, vector<1x128xf32>, vector<1x128xf32>, vector<1x128xf32>, vector<1x128xf32>, vector<1x128xf32>, vector<1x128xf32>, vector<1x128xf32>, vector<1x128xf32>, vector<1x128xf32>, vector<1x128xf32>, vector<1x128xf32>, vector<1x128xf32>, vector<1x128xf32>, vector<1x128xf32> -> vector<16x128xf32>
    %344 = tpu.concatenate %310, %311, %312, %313, %314, %315, %316, %317, %318, %319, %320, %321, %322, %323, %324, %325 in 0 : vector<1x128xf32>, vector<1x128xf32>, vector<1x128xf32>, vector<1x128xf32>, vector<1x128xf32>, vector<1x128xf32>, vector<1x128xf32>, vector<1x128xf32>, vector<1x128xf32>, vector<1x128xf32>, vector<1x128xf32>, vector<1x128xf32>, vector<1x128xf32>, vector<1x128xf32>, vector<1x128xf32>, vector<1x128xf32> -> vector<16x128xf32>
    %345 = tpu.concatenate %326, %327, %328, %329, %330, %331, %332, %333, %334, %335, %336, %337, %338, %339, %340, %341 in 0 : vector<1x128xf32>, vector<1x128xf32>, vector<1x128xf32>, vector<1x128xf32>, vector<1x128xf32>, vector<1x128xf32>, vector<1x128xf32>, vector<1x128xf32>, vector<1x128xf32>, vector<1x128xf32>, vector<1x128xf32>, vector<1x128xf32>, vector<1x128xf32>, vector<1x128xf32>, vector<1x128xf32>, vector<1x128xf32> -> vector<16x128xf32>
    %346 = tpu.concatenate %342, %343, %344, %345 in 0 : vector<16x128xf32>, vector<16x128xf32>, vector<16x128xf32>, vector<16x128xf32> -> vector<64x128xf32>
    %347 = vector.extract_strided_slice %277 {offsets = [1, 0], sizes = [1, 128], strides = [1, 1]} : vector<2x8192xf32> to vector<1x128xf32>
    %348 = vector.extract_strided_slice %277 {offsets = [1, 128], sizes = [1, 128], strides = [1, 1]} : vector<2x8192xf32> to vector<1x128xf32>
    %349 = vector.extract_strided_slice %277 {offsets = [1, 256], sizes = [1, 128], strides = [1, 1]} : vector<2x8192xf32> to vector<1x128xf32>
    %350 = vector.extract_strided_slice %277 {offsets = [1, 384], sizes = [1, 128], strides = [1, 1]} : vector<2x8192xf32> to vector<1x128xf32>
    %351 = vector.extract_strided_slice %277 {offsets = [1, 512], sizes = [1, 128], strides = [1, 1]} : vector<2x8192xf32> to vector<1x128xf32>
    %352 = vector.extract_strided_slice %277 {offsets = [1, 640], sizes = [1, 128], strides = [1, 1]} : vector<2x8192xf32> to vector<1x128xf32>
    %353 = vector.extract_strided_slice %277 {offsets = [1, 768], sizes = [1, 128], strides = [1, 1]} : vector<2x8192xf32> to vector<1x128xf32>
    %354 = vector.extract_strided_slice %277 {offsets = [1, 896], sizes = [1, 128], strides = [1, 1]} : vector<2x8192xf32> to vector<1x128xf32>
    %355 = vector.extract_strided_slice %277 {offsets = [1, 1024], sizes = [1, 128], strides = [1, 1]} : vector<2x8192xf32> to vector<1x128xf32>
    %356 = vector.extract_strided_slice %277 {offsets = [1, 1152], sizes = [1, 128], strides = [1, 1]} : vector<2x8192xf32> to vector<1x128xf32>
    %357 = vector.extract_strided_slice %277 {offsets = [1, 1280], sizes = [1, 128], strides = [1, 1]} : vector<2x8192xf32> to vector<1x128xf32>
    %358 = vector.extract_strided_slice %277 {offsets = [1, 1408], sizes = [1, 128], strides = [1, 1]} : vector<2x8192xf32> to vector<1x128xf32>
    %359 = vector.extract_strided_slice %277 {offsets = [1, 1536], sizes = [1, 128], strides = [1, 1]} : vector<2x8192xf32> to vector<1x128xf32>
    %360 = vector.extract_strided_slice %277 {offsets = [1, 1664], sizes = [1, 128], strides = [1, 1]} : vector<2x8192xf32> to vector<1x128xf32>
    %361 = vector.extract_strided_slice %277 {offsets = [1, 1792], sizes = [1, 128], strides = [1, 1]} : vector<2x8192xf32> to vector<1x128xf32>
    %362 = vector.extract_strided_slice %277 {offsets = [1, 1920], sizes = [1, 128], strides = [1, 1]} : vector<2x8192xf32> to vector<1x128xf32>
    %363 = vector.extract_strided_slice %277 {offsets = [1, 2048], sizes = [1, 128], strides = [1, 1]} : vector<2x8192xf32> to vector<1x128xf32>
    %364 = vector.extract_strided_slice %277 {offsets = [1, 2176], sizes = [1, 128], strides = [1, 1]} : vector<2x8192xf32> to vector<1x128xf32>
    %365 = vector.extract_strided_slice %277 {offsets = [1, 2304], sizes = [1, 128], strides = [1, 1]} : vector<2x8192xf32> to vector<1x128xf32>
    %366 = vector.extract_strided_slice %277 {offsets = [1, 2432], sizes = [1, 128], strides = [1, 1]} : vector<2x8192xf32> to vector<1x128xf32>
    %367 = vector.extract_strided_slice %277 {offsets = [1, 2560], sizes = [1, 128], strides = [1, 1]} : vector<2x8192xf32> to vector<1x128xf32>
    %368 = vector.extract_strided_slice %277 {offsets = [1, 2688], sizes = [1, 128], strides = [1, 1]} : vector<2x8192xf32> to vector<1x128xf32>
    %369 = vector.extract_strided_slice %277 {offsets = [1, 2816], sizes = [1, 128], strides = [1, 1]} : vector<2x8192xf32> to vector<1x128xf32>
    %370 = vector.extract_strided_slice %277 {offsets = [1, 2944], sizes = [1, 128], strides = [1, 1]} : vector<2x8192xf32> to vector<1x128xf32>
    %371 = vector.extract_strided_slice %277 {offsets = [1, 3072], sizes = [1, 128], strides = [1, 1]} : vector<2x8192xf32> to vector<1x128xf32>
    %372 = vector.extract_strided_slice %277 {offsets = [1, 3200], sizes = [1, 128], strides = [1, 1]} : vector<2x8192xf32> to vector<1x128xf32>
    %373 = vector.extract_strided_slice %277 {offsets = [1, 3328], sizes = [1, 128], strides = [1, 1]} : vector<2x8192xf32> to vector<1x128xf32>
    %374 = vector.extract_strided_slice %277 {offsets = [1, 3456], sizes = [1, 128], strides = [1, 1]} : vector<2x8192xf32> to vector<1x128xf32>
    %375 = vector.extract_strided_slice %277 {offsets = [1, 3584], sizes = [1, 128], strides = [1, 1]} : vector<2x8192xf32> to vector<1x128xf32>
    %376 = vector.extract_strided_slice %277 {offsets = [1, 3712], sizes = [1, 128], strides = [1, 1]} : vector<2x8192xf32> to vector<1x128xf32>
    %377 = vector.extract_strided_slice %277 {offsets = [1, 3840], sizes = [1, 128], strides = [1, 1]} : vector<2x8192xf32> to vector<1x128xf32>
    %378 = vector.extract_strided_slice %277 {offsets = [1, 3968], sizes = [1, 128], strides = [1, 1]} : vector<2x8192xf32> to vector<1x128xf32>
    %379 = vector.extract_strided_slice %277 {offsets = [1, 4096], sizes = [1, 128], strides = [1, 1]} : vector<2x8192xf32> to vector<1x128xf32>
    %380 = vector.extract_strided_slice %277 {offsets = [1, 4224], sizes = [1, 128], strides = [1, 1]} : vector<2x8192xf32> to vector<1x128xf32>
    %381 = vector.extract_strided_slice %277 {offsets = [1, 4352], sizes = [1, 128], strides = [1, 1]} : vector<2x8192xf32> to vector<1x128xf32>
    %382 = vector.extract_strided_slice %277 {offsets = [1, 4480], sizes = [1, 128], strides = [1, 1]} : vector<2x8192xf32> to vector<1x128xf32>
    %383 = vector.extract_strided_slice %277 {offsets = [1, 4608], sizes = [1, 128], strides = [1, 1]} : vector<2x8192xf32> to vector<1x128xf32>
    %384 = vector.extract_strided_slice %277 {offsets = [1, 4736], sizes = [1, 128], strides = [1, 1]} : vector<2x8192xf32> to vector<1x128xf32>
    %385 = vector.extract_strided_slice %277 {offsets = [1, 4864], sizes = [1, 128], strides = [1, 1]} : vector<2x8192xf32> to vector<1x128xf32>
    %386 = vector.extract_strided_slice %277 {offsets = [1, 4992], sizes = [1, 128], strides = [1, 1]} : vector<2x8192xf32> to vector<1x128xf32>
    %387 = vector.extract_strided_slice %277 {offsets = [1, 5120], sizes = [1, 128], strides = [1, 1]} : vector<2x8192xf32> to vector<1x128xf32>
    %388 = vector.extract_strided_slice %277 {offsets = [1, 5248], sizes = [1, 128], strides = [1, 1]} : vector<2x8192xf32> to vector<1x128xf32>
    %389 = vector.extract_strided_slice %277 {offsets = [1, 5376], sizes = [1, 128], strides = [1, 1]} : vector<2x8192xf32> to vector<1x128xf32>
    %390 = vector.extract_strided_slice %277 {offsets = [1, 5504], sizes = [1, 128], strides = [1, 1]} : vector<2x8192xf32> to vector<1x128xf32>
    %391 = vector.extract_strided_slice %277 {offsets = [1, 5632], sizes = [1, 128], strides = [1, 1]} : vector<2x8192xf32> to vector<1x128xf32>
    %392 = vector.extract_strided_slice %277 {offsets = [1, 5760], sizes = [1, 128], strides = [1, 1]} : vector<2x8192xf32> to vector<1x128xf32>
    %393 = vector.extract_strided_slice %277 {offsets = [1, 5888], sizes = [1, 128], strides = [1, 1]} : vector<2x8192xf32> to vector<1x128xf32>
    %394 = vector.extract_strided_slice %277 {offsets = [1, 6016], sizes = [1, 128], strides = [1, 1]} : vector<2x8192xf32> to vector<1x128xf32>
    %395 = vector.extract_strided_slice %277 {offsets = [1, 6144], sizes = [1, 128], strides = [1, 1]} : vector<2x8192xf32> to vector<1x128xf32>
    %396 = vector.extract_strided_slice %277 {offsets = [1, 6272], sizes = [1, 128], strides = [1, 1]} : vector<2x8192xf32> to vector<1x128xf32>
    %397 = vector.extract_strided_slice %277 {offsets = [1, 6400], sizes = [1, 128], strides = [1, 1]} : vector<2x8192xf32> to vector<1x128xf32>
    %398 = vector.extract_strided_slice %277 {offsets = [1, 6528], sizes = [1, 128], strides = [1, 1]} : vector<2x8192xf32> to vector<1x128xf32>
    %399 = vector.extract_strided_slice %277 {offsets = [1, 6656], sizes = [1, 128], strides = [1, 1]} : vector<2x8192xf32> to vector<1x128xf32>
    %400 = vector.extract_strided_slice %277 {offsets = [1, 6784], sizes = [1, 128], strides = [1, 1]} : vector<2x8192xf32> to vector<1x128xf32>
    %401 = vector.extract_strided_slice %277 {offsets = [1, 6912], sizes = [1, 128], strides = [1, 1]} : vector<2x8192xf32> to vector<1x128xf32>
    %402 = vector.extract_strided_slice %277 {offsets = [1, 7040], sizes = [1, 128], strides = [1, 1]} : vector<2x8192xf32> to vector<1x128xf32>
    %403 = vector.extract_strided_slice %277 {offsets = [1, 7168], sizes = [1, 128], strides = [1, 1]} : vector<2x8192xf32> to vector<1x128xf32>
    %404 = vector.extract_strided_slice %277 {offsets = [1, 7296], sizes = [1, 128], strides = [1, 1]} : vector<2x8192xf32> to vector<1x128xf32>
    %405 = vector.extract_strided_slice %277 {offsets = [1, 7424], sizes = [1, 128], strides = [1, 1]} : vector<2x8192xf32> to vector<1x128xf32>
    %406 = vector.extract_strided_slice %277 {offsets = [1, 7552], sizes = [1, 128], strides = [1, 1]} : vector<2x8192xf32> to vector<1x128xf32>
    %407 = vector.extract_strided_slice %277 {offsets = [1, 7680], sizes = [1, 128], strides = [1, 1]} : vector<2x8192xf32> to vector<1x128xf32>
    %408 = vector.extract_strided_slice %277 {offsets = [1, 7808], sizes = [1, 128], strides = [1, 1]} : vector<2x8192xf32> to vector<1x128xf32>
    %409 = vector.extract_strided_slice %277 {offsets = [1, 7936], sizes = [1, 128], strides = [1, 1]} : vector<2x8192xf32> to vector<1x128xf32>
    %410 = vector.extract_strided_slice %277 {offsets = [1, 8064], sizes = [1, 128], strides = [1, 1]} : vector<2x8192xf32> to vector<1x128xf32>
    %411 = tpu.concatenate %347, %348, %349, %350, %351, %352, %353, %354, %355, %356, %357, %358, %359, %360, %361, %362 in 0 : vector<1x128xf32>, vector<1x128xf32>, vector<1x128xf32>, vector<1x128xf32>, vector<1x128xf32>, vector<1x128xf32>, vector<1x128xf32>, vector<1x128xf32>, vector<1x128xf32>, vector<1x128xf32>, vector<1x128xf32>, vector<1x128xf32>, vector<1x128xf32>, vector<1x128xf32>, vector<1x128xf32>, vector<1x128xf32> -> vector<16x128xf32>
    %412 = tpu.concatenate %363, %364, %365, %366, %367, %368, %369, %370, %371, %372, %373, %374, %375, %376, %377, %378 in 0 : vector<1x128xf32>, vector<1x128xf32>, vector<1x128xf32>, vector<1x128xf32>, vector<1x128xf32>, vector<1x128xf32>, vector<1x128xf32>, vector<1x128xf32>, vector<1x128xf32>, vector<1x128xf32>, vector<1x128xf32>, vector<1x128xf32>, vector<1x128xf32>, vector<1x128xf32>, vector<1x128xf32>, vector<1x128xf32> -> vector<16x128xf32>
    %413 = tpu.concatenate %379, %380, %381, %382, %383, %384, %385, %386, %387, %388, %389, %390, %391, %392, %393, %394 in 0 : vector<1x128xf32>, vector<1x128xf32>, vector<1x128xf32>, vector<1x128xf32>, vector<1x128xf32>, vector<1x128xf32>, vector<1x128xf32>, vector<1x128xf32>, vector<1x128xf32>, vector<1x128xf32>, vector<1x128xf32>, vector<1x128xf32>, vector<1x128xf32>, vector<1x128xf32>, vector<1x128xf32>, vector<1x128xf32> -> vector<16x128xf32>
    %414 = tpu.concatenate %395, %396, %397, %398, %399, %400, %401, %402, %403, %404, %405, %406, %407, %408, %409, %410 in 0 : vector<1x128xf32>, vector<1x128xf32>, vector<1x128xf32>, vector<1x128xf32>, vector<1x128xf32>, vector<1x128xf32>, vector<1x128xf32>, vector<1x128xf32>, vector<1x128xf32>, vector<1x128xf32>, vector<1x128xf32>, vector<1x128xf32>, vector<1x128xf32>, vector<1x128xf32>, vector<1x128xf32>, vector<1x128xf32> -> vector<16x128xf32>
    %415 = tpu.concatenate %411, %412, %413, %414 in 0 : vector<16x128xf32>, vector<16x128xf32>, vector<16x128xf32>, vector<16x128xf32> -> vector<64x128xf32>
    %416 = tpu.concatenate %346, %415 in 1 : vector<64x128xf32>, vector<64x128xf32> -> vector<64x256xf32>
    %c1_i32_74 = arith.constant 1 : i32
    %417 = tpu.dynamic_rotate %416 by %c1_i32_74 dim 1 : vector<64x256xf32>, i32 -> vector<64x256xf32>
    %c255_i32_75 = arith.constant 255 : i32
    %418 = tpu.dynamic_rotate %416 by %c255_i32_75 dim 1 : vector<64x256xf32>, i32 -> vector<64x256xf32>
    %c0_76 = arith.constant 0 : index
    %c0_77 = arith.constant 0 : index
    %c0_78 = arith.constant 0 : index
    %419 = vector.load %arg9[%c0_76, %c0_77, %c0_78] : memref<3x32x64xf32, #tpu.memory_space<vmem>>, vector<1x32x64xf32>
    %420 = vector.shape_cast %419 : vector<1x32x64xf32> to vector<32x64xf32>
    %cst_79 = arith.constant dense<0.000000e+00> : vector<32x256xf32>
    %421 = tpu.matmul %420, %417, %cst_79 {dimension_numbers = #tpu.dot_dimension_numbers<[1], [0], [0], [1], [0, 0, 1, 1], [], []>} : vector<32x64xf32>, vector<64x256xf32>, vector<32x256xf32> -> vector<32x256xf32>
    %c1_80 = arith.constant 1 : index
    %c0_81 = arith.constant 0 : index
    %c0_82 = arith.constant 0 : index
    %422 = vector.load %arg9[%c1_80, %c0_81, %c0_82] : memref<3x32x64xf32, #tpu.memory_space<vmem>>, vector<1x32x64xf32>
    %423 = vector.shape_cast %422 : vector<1x32x64xf32> to vector<32x64xf32>
    %cst_83 = arith.constant dense<0.000000e+00> : vector<32x256xf32>
    %424 = tpu.matmul %423, %416, %cst_83 {dimension_numbers = #tpu.dot_dimension_numbers<[1], [0], [0], [1], [0, 0, 1, 1], [], []>} : vector<32x64xf32>, vector<64x256xf32>, vector<32x256xf32> -> vector<32x256xf32>
    %425 = arith.addf %421, %424 : vector<32x256xf32>
    %c2_84 = arith.constant 2 : index
    %c0_85 = arith.constant 0 : index
    %c0_86 = arith.constant 0 : index
    %426 = vector.load %arg9[%c2_84, %c0_85, %c0_86] : memref<3x32x64xf32, #tpu.memory_space<vmem>>, vector<1x32x64xf32>
    %427 = vector.shape_cast %426 : vector<1x32x64xf32> to vector<32x64xf32>
    %cst_87 = arith.constant dense<0.000000e+00> : vector<32x256xf32>
    %428 = tpu.matmul %427, %418, %cst_87 {dimension_numbers = #tpu.dot_dimension_numbers<[1], [0], [0], [1], [0, 0, 1, 1], [], []>} : vector<32x64xf32>, vector<64x256xf32>, vector<32x256xf32> -> vector<32x256xf32>
    %429 = arith.addf %425, %428 : vector<32x256xf32>
    %cst_88 = arith.constant dense<0.000000e+00> : vector<256xf32>
    %430 = vector.multi_reduction <add>, %429, %cst_88 [0] : vector<32x256xf32> to vector<256xf32>
    %431 = vector.shape_cast %430 : vector<256xf32> to vector<1x256xf32>
    %c128_i32_89 = arith.constant 128 : i32
    %432 = tpu.dynamic_rotate %431 by %c128_i32_89 dim 1 : vector<1x256xf32>, i32 -> vector<1x256xf32>
    %433 = arith.addf %431, %432 : vector<1x256xf32>
    %cst_90 = arith.constant 1.562500e-02 : f32
    %434 = vector.broadcast %cst_90 : f32 to vector<1x256xf32>
    %435 = arith.mulf %433, %434 : vector<1x256xf32>
    %436 = vector.broadcast %435 : vector<1x256xf32> to vector<32x256xf32>
    %437 = arith.subf %429, %436 : vector<32x256xf32>
    %438 = arith.mulf %437, %437 : vector<32x256xf32>
    %cst_91 = arith.constant dense<0.000000e+00> : vector<256xf32>
    %439 = vector.multi_reduction <add>, %438, %cst_91 [0] : vector<32x256xf32> to vector<256xf32>
    %440 = vector.shape_cast %439 : vector<256xf32> to vector<1x256xf32>
    %c128_i32_92 = arith.constant 128 : i32
    %441 = tpu.dynamic_rotate %440 by %c128_i32_92 dim 1 : vector<1x256xf32>, i32 -> vector<1x256xf32>
    %442 = arith.addf %440, %441 : vector<1x256xf32>
    %cst_93 = arith.constant 1.562500e-02 : f32
    %443 = vector.broadcast %cst_93 : f32 to vector<1x256xf32>
    %444 = arith.mulf %442, %443 : vector<1x256xf32>
    %cst_94 = arith.constant 9.99999974E-6 : f32
    %445 = vector.broadcast %cst_94 : f32 to vector<1x256xf32>
    %446 = arith.addf %444, %445 : vector<1x256xf32>
    %447 = math.rsqrt %446 : vector<1x256xf32>
    %448 = vector.broadcast %447 : vector<1x256xf32> to vector<32x256xf32>
    %449 = arith.mulf %437, %448 : vector<32x256xf32>
    %cst_95 = arith.constant 0.000000e+00 : f32
    %450 = vector.broadcast %cst_95 : f32 to vector<32x256xf32>
    %451 = arith.maximumf %449, %450 : vector<32x256xf32>
    %452 = vector.broadcast %6 : vector<1x256xf32> to vector<32x256xf32>
    %453 = arith.mulf %451, %452 : vector<32x256xf32>
    %c1_i32_96 = arith.constant 1 : i32
    %454 = tpu.dynamic_rotate %453 by %c1_i32_96 dim 1 : vector<32x256xf32>, i32 -> vector<32x256xf32>
    %c255_i32_97 = arith.constant 255 : i32
    %455 = tpu.dynamic_rotate %453 by %c255_i32_97 dim 1 : vector<32x256xf32>, i32 -> vector<32x256xf32>
    %c0_98 = arith.constant 0 : index
    %c0_99 = arith.constant 0 : index
    %c0_100 = arith.constant 0 : index
    %456 = vector.load %arg10[%c0_98, %c0_99, %c0_100] : memref<3x16x32xf32, #tpu.memory_space<vmem>>, vector<1x16x32xf32>
    %457 = vector.shape_cast %456 : vector<1x16x32xf32> to vector<16x32xf32>
    %cst_101 = arith.constant dense<0.000000e+00> : vector<16x256xf32>
    %458 = tpu.matmul %457, %454, %cst_101 {dimension_numbers = #tpu.dot_dimension_numbers<[1], [0], [0], [1], [0, 0, 1, 1], [], []>} : vector<16x32xf32>, vector<32x256xf32>, vector<16x256xf32> -> vector<16x256xf32>
    %c1_102 = arith.constant 1 : index
    %c0_103 = arith.constant 0 : index
    %c0_104 = arith.constant 0 : index
    %459 = vector.load %arg10[%c1_102, %c0_103, %c0_104] : memref<3x16x32xf32, #tpu.memory_space<vmem>>, vector<1x16x32xf32>
    %460 = vector.shape_cast %459 : vector<1x16x32xf32> to vector<16x32xf32>
    %cst_105 = arith.constant dense<0.000000e+00> : vector<16x256xf32>
    %461 = tpu.matmul %460, %453, %cst_105 {dimension_numbers = #tpu.dot_dimension_numbers<[1], [0], [0], [1], [0, 0, 1, 1], [], []>} : vector<16x32xf32>, vector<32x256xf32>, vector<16x256xf32> -> vector<16x256xf32>
    %462 = arith.addf %458, %461 : vector<16x256xf32>
    %c2_106 = arith.constant 2 : index
    %c0_107 = arith.constant 0 : index
    %c0_108 = arith.constant 0 : index
    %463 = vector.load %arg10[%c2_106, %c0_107, %c0_108] : memref<3x16x32xf32, #tpu.memory_space<vmem>>, vector<1x16x32xf32>
    %464 = vector.shape_cast %463 : vector<1x16x32xf32> to vector<16x32xf32>
    %cst_109 = arith.constant dense<0.000000e+00> : vector<16x256xf32>
    %465 = tpu.matmul %464, %455, %cst_109 {dimension_numbers = #tpu.dot_dimension_numbers<[1], [0], [0], [1], [0, 0, 1, 1], [], []>} : vector<16x32xf32>, vector<32x256xf32>, vector<16x256xf32> -> vector<16x256xf32>
    %466 = arith.addf %462, %465 : vector<16x256xf32>
    %cst_110 = arith.constant dense<0.000000e+00> : vector<256xf32>
    %467 = vector.multi_reduction <add>, %466, %cst_110 [0] : vector<16x256xf32> to vector<256xf32>
    %468 = vector.shape_cast %467 : vector<256xf32> to vector<1x256xf32>
    %c128_i32_111 = arith.constant 128 : i32
    %469 = tpu.dynamic_rotate %468 by %c128_i32_111 dim 1 : vector<1x256xf32>, i32 -> vector<1x256xf32>
    %470 = arith.addf %468, %469 : vector<1x256xf32>
    %cst_112 = arith.constant 3.125000e-02 : f32
    %471 = vector.broadcast %cst_112 : f32 to vector<1x256xf32>
    %472 = arith.mulf %470, %471 : vector<1x256xf32>
    %473 = vector.broadcast %472 : vector<1x256xf32> to vector<16x256xf32>
    %474 = arith.subf %466, %473 : vector<16x256xf32>
    %475 = arith.mulf %474, %474 : vector<16x256xf32>
    %cst_113 = arith.constant dense<0.000000e+00> : vector<256xf32>
    %476 = vector.multi_reduction <add>, %475, %cst_113 [0] : vector<16x256xf32> to vector<256xf32>
    %477 = vector.shape_cast %476 : vector<256xf32> to vector<1x256xf32>
    %c128_i32_114 = arith.constant 128 : i32
    %478 = tpu.dynamic_rotate %477 by %c128_i32_114 dim 1 : vector<1x256xf32>, i32 -> vector<1x256xf32>
    %479 = arith.addf %477, %478 : vector<1x256xf32>
    %cst_115 = arith.constant 3.125000e-02 : f32
    %480 = vector.broadcast %cst_115 : f32 to vector<1x256xf32>
    %481 = arith.mulf %479, %480 : vector<1x256xf32>
    %cst_116 = arith.constant 9.99999974E-6 : f32
    %482 = vector.broadcast %cst_116 : f32 to vector<1x256xf32>
    %483 = arith.addf %481, %482 : vector<1x256xf32>
    %484 = math.rsqrt %483 : vector<1x256xf32>
    %485 = vector.broadcast %484 : vector<1x256xf32> to vector<16x256xf32>
    %486 = arith.mulf %474, %485 : vector<16x256xf32>
    %cst_117 = arith.constant 0.000000e+00 : f32
    %487 = vector.broadcast %cst_117 : f32 to vector<16x256xf32>
    %488 = arith.maximumf %486, %487 : vector<16x256xf32>
    %489 = vector.broadcast %6 : vector<1x256xf32> to vector<16x256xf32>
    %490 = arith.mulf %488, %489 : vector<16x256xf32>
    %c1_i32_118 = arith.constant 1 : i32
    %491 = tpu.dynamic_rotate %490 by %c1_i32_118 dim 1 : vector<16x256xf32>, i32 -> vector<16x256xf32>
    %c255_i32_119 = arith.constant 255 : i32
    %492 = tpu.dynamic_rotate %490 by %c255_i32_119 dim 1 : vector<16x256xf32>, i32 -> vector<16x256xf32>
    %c0_120 = arith.constant 0 : index
    %c0_121 = arith.constant 0 : index
    %c0_122 = arith.constant 0 : index
    %493 = vector.load %arg11[%c0_120, %c0_121, %c0_122] : memref<3x10x16xf32, #tpu.memory_space<vmem>>, vector<1x10x16xf32>
    %494 = vector.shape_cast %493 : vector<1x10x16xf32> to vector<10x16xf32>
    %cst_123 = arith.constant dense<0.000000e+00> : vector<10x256xf32>
    %495 = tpu.matmul %494, %491, %cst_123 {dimension_numbers = #tpu.dot_dimension_numbers<[1], [0], [0], [1], [0, 0, 1, 1], [], []>} : vector<10x16xf32>, vector<16x256xf32>, vector<10x256xf32> -> vector<10x256xf32>
    %c1_124 = arith.constant 1 : index
    %c0_125 = arith.constant 0 : index
    %c0_126 = arith.constant 0 : index
    %496 = vector.load %arg11[%c1_124, %c0_125, %c0_126] : memref<3x10x16xf32, #tpu.memory_space<vmem>>, vector<1x10x16xf32>
    %497 = vector.shape_cast %496 : vector<1x10x16xf32> to vector<10x16xf32>
    %cst_127 = arith.constant dense<0.000000e+00> : vector<10x256xf32>
    %498 = tpu.matmul %497, %490, %cst_127 {dimension_numbers = #tpu.dot_dimension_numbers<[1], [0], [0], [1], [0, 0, 1, 1], [], []>} : vector<10x16xf32>, vector<16x256xf32>, vector<10x256xf32> -> vector<10x256xf32>
    %499 = arith.addf %495, %498 : vector<10x256xf32>
    %c2_128 = arith.constant 2 : index
    %c0_129 = arith.constant 0 : index
    %c0_130 = arith.constant 0 : index
    %500 = vector.load %arg11[%c2_128, %c0_129, %c0_130] : memref<3x10x16xf32, #tpu.memory_space<vmem>>, vector<1x10x16xf32>
    %501 = vector.shape_cast %500 : vector<1x10x16xf32> to vector<10x16xf32>
    %cst_131 = arith.constant dense<0.000000e+00> : vector<10x256xf32>
    %502 = tpu.matmul %501, %492, %cst_131 {dimension_numbers = #tpu.dot_dimension_numbers<[1], [0], [0], [1], [0, 0, 1, 1], [], []>} : vector<10x16xf32>, vector<16x256xf32>, vector<10x256xf32> -> vector<10x256xf32>
    %503 = arith.addf %499, %502 : vector<10x256xf32>
    %c0_132 = arith.constant 0 : index
    %c0_133 = arith.constant 0 : index
    %504 = vector.load %arg12[%c0_132, %c0_133] : memref<10x256xf32, #tpu.memory_space<vmem>>, vector<10x256xf32>
    tpu.vector_store %arg12[%c0_132, %c0_133], %503 {strides = array<i32>} : memref<10x256xf32, #tpu.memory_space<vmem>>, vector<10x256xf32>,
    %c0_134 = arith.constant 0 : index
    %c0_135 = arith.constant 0 : index
    %505 = vector.load %arg13[%c0_134, %c0_135] : memref<2x32xf32, #tpu.memory_space<vmem>>, vector<2x32xf32>
    tpu.vector_store %arg13[%c0_134, %c0_135], %271 {strides = array<i32>} : memref<2x32xf32, #tpu.memory_space<vmem>>, vector<2x32xf32>,
    %c0_136 = arith.constant 0 : index
    %c0_137 = arith.constant 0 : index
    %506 = vector.load %arg14[%c0_136, %c0_137] : memref<2x32xf32, #tpu.memory_space<vmem>>, vector<2x32xf32>
    tpu.vector_store %arg14[%c0_136, %c0_137], %264 {strides = array<i32>} : memref<2x32xf32, #tpu.memory_space<vmem>>, vector<2x32xf32>,
    %c0_138 = arith.constant 0 : index
    %c0_139 = arith.constant 0 : index
    %507 = vector.load %arg15[%c0_138, %c0_139] : memref<2x32xf32, #tpu.memory_space<vmem>>, vector<2x32xf32>
    tpu.vector_store %arg15[%c0_138, %c0_139], %265 {strides = array<i32>} : memref<2x32xf32, #tpu.memory_space<vmem>>, vector<2x32xf32>,
    return
  }
}

</mosaic_0001>

<llo_original>
// kernel: vae_forward.1
$region0: #{vae_forward.1}
  #allocation0 [shape = 'u32[]', space=smem, size = 0x4, offset = 0x4, fixed_abs, tag = 'smem constant byte address 0x4 - core index']
  #allocation1 [shape = 'u32[144,128]{1,0:T(1,128)}', space=vmem, size = 0x12000, scoped, tag = 'internal scratch']
  %s0 = inlined_call_operand.vmem [shape: f32[10,256], index: 0, kind: input, shape index: {}]
  %s1 = inlined_call_operand.vmem [shape: f32[3,16,10], index: 1, kind: input, shape index: {}]
  %s2 = inlined_call_operand.vmem [shape: f32[3,32,16], index: 2, kind: input, shape index: {}]
  %s3 = inlined_call_operand.vmem [shape: f32[3,64,32], index: 3, kind: input, shape index: {}]
  %s4 = inlined_call_operand.vmem [shape: bf16[8192,64], index: 4, kind: input, shape index: {}]
  %s5 = inlined_call_operand.vmem [shape: f32[1,64], index: 5, kind: input, shape index: {}]
  %s6 = inlined_call_operand.vmem [shape: f32[2,32], index: 6, kind: input, shape index: {}]
  %s7 = inlined_call_operand.vmem [shape: bf16[32,8192], index: 7, kind: input, shape index: {}]
  %s8 = inlined_call_operand.vmem [shape: f32[1,8192], index: 8, kind: input, shape index: {}]
  %s9 = inlined_call_operand.vmem [shape: f32[3,32,64], index: 9, kind: input, shape index: {}]
  %s10 = inlined_call_operand.vmem [shape: f32[3,16,32], index: 10, kind: input, shape index: {}]
  %s11 = inlined_call_operand.vmem [shape: f32[3,10,16], index: 11, kind: input, shape index: {}]
  %s12 = inlined_call_operand.vmem [shape: f32[10,256], index: 12, kind: output, shape index: {0}]
  %s13 = inlined_call_operand.hbm [shape: f32[2,32], index: 13, kind: output, shape index: {1}]
  %s14 = inlined_call_operand.hbm [shape: f32[2,32], index: 14, kind: output, shape index: {2}]
  %s15 = inlined_call_operand.hbm [shape: f32[2,32], index: 15, kind: output, shape index: {3}]
  %16 = xla_tuple %s12, %s13, %s14, %s15
  %s17 = sld [smem:[#allocation0]]
  $region82: #{vae_forward.1} parent=0
    _
  %s19 = ssub.s32 1, %s17
  %s20 = scalar_select 0, %s19, %s17
  $region1: #{vae_forward.1} parent=0
    #allocation2 [shape = 'u8[1024]{0}', space=vmem, size = 0x400, scoped, tag = 'output window, operand 1, single buffered']
    #allocation3 [shape = 's32[1]{0}', space=sflag, size = 0x4, scoped, tag = 'scoped memory for vae_forward.1']
    #allocation4 [shape = 'u8[1024]{0}', space=vmem, size = 0x400, scoped, tag = 'output window, operand 2, single buffered']
    #allocation5 [shape = 's32[1]{0}', space=sflag, size = 0x4, scoped, tag = 'scoped memory for vae_forward.1']
    #allocation6 [shape = 'u8[1024]{0}', space=vmem, size = 0x400, scoped, tag = 'output window, operand 3, single buffered']
    %21 = vsyncpa [#allocation3], 0
    %22 = vsyncpa [#allocation5], 0
    // Predicated region
    $region2: #{vae_forward.1} parent=1 // pred_check
      _
    $region3: #{vae_forward.1} parent=1 // pred_check_branch
      %24 = sbr.rel (0) target = $region5
    $region4: #{vae_forward.1} parent=1 // pred_region
      _
    $region5: #{vae_forward.1} parent=1 // pred_fallthru
      _
    // Predicated region
    $region6: #{vae_forward.1} parent=1 // pred_check
      _
    $region7: #{vae_forward.1} parent=1 // pred_check_branch
      %26 = sbr.rel (0) target = $region9
    $region8: #{vae_forward.1} parent=1 // pred_region
      _
    $region9: #{vae_forward.1} parent=1 // pred_fallthru
      _
    // Predicated region
    $region10: #{vae_forward.1} parent=1 // pred_check
      _
    $region11: #{vae_forward.1} parent=1 // pred_check_branch
      %28 = sbr.rel (0) target = $region13
    $region12: #{vae_forward.1} parent=1 // pred_region
      _
    $region13: #{vae_forward.1} parent=1 // pred_fallthru
      _
    // Predicated region
    $region14: #{vae_forward.1} parent=1 // pred_check
      _
    $region15: #{vae_forward.1} parent=1 // pred_check_branch
      %30 = sbr.rel (0) target = $region17
    $region16: #{vae_forward.1} parent=1 // pred_region
      _
    $region17: #{vae_forward.1} parent=1 // pred_fallthru
      _
    // Predicated region
    $region18: #{vae_forward.1} parent=1 // pred_check
      _
    $region19: #{vae_forward.1} parent=1 // pred_check_branch
      %32 = sbr.rel (0) target = $region21
    $region20: #{vae_forward.1} parent=1 // pred_region
      _
    $region21: #{vae_forward.1} parent=1 // pred_fallthru
      _
    // Predicated region
    $region22: #{vae_forward.1} parent=1 // pred_check
      _
    $region23: #{vae_forward.1} parent=1 // pred_check_branch
      %34 = sbr.rel (0) target = $region25
    $region24: #{vae_forward.1} parent=1 // pred_region
      _
    $region25: #{vae_forward.1} parent=1 // pred_fallthru
      _
    // Predicated region
    $region26: #{vae_forward.1} parent=1 // pred_check
      _
    $region27: #{vae_forward.1} parent=1 // pred_check_branch
      %36 = sbr.rel (0) target = $region29
    $region28: #{vae_forward.1} parent=1 // pred_region
      _
    $region29: #{vae_forward.1} parent=1 // pred_fallthru
      _
    // Predicated region
    $region30: #{vae_forward.1} parent=1 // pred_check
      _
    $region31: #{vae_forward.1} parent=1 // pred_check_branch
      %38 = sbr.rel (0) target = $region33
    $region32: #{vae_forward.1} parent=1 // pred_region
      _
    $region33: #{vae_forward.1} parent=1 // pred_fallthru
      _
    // Predicated region
    $region34: #{vae_forward.1} parent=1 // pred_check
      _
    $region35: #{vae_forward.1} parent=1 // pred_check_branch
      %40 = sbr.rel (0) target = $region37
    $region36: #{vae_forward.1} parent=1 // pred_region
      _
    $region37: #{vae_forward.1} parent=1 // pred_fallthru
      _
    // Predicated region
    $region38: #{vae_forward.1} parent=1 // pred_check
      _
    $region39: #{vae_forward.1} parent=1 // pred_check_branch
      %42 = sbr.rel (0) target = $region41
    $region40: #{vae_forward.1} parent=1 // pred_region
      _
    $region41: #{vae_forward.1} parent=1 // pred_fallthru
      _
    // Predicated region
    $region42: #{vae_forward.1} parent=1 // pred_check
      _
    $region43: #{vae_forward.1} parent=1 // pred_check_branch
      %44 = sbr.rel (0) target = $region45
    $region44: #{vae_forward.1} parent=1 // pred_region
      _
    $region45: #{vae_forward.1} parent=1 // pred_fallthru
      _
    // Predicated region
    $region46: #{vae_forward.1} parent=1 // pred_check
      _
    $region47: #{vae_forward.1} parent=1 // pred_check_branch
      %46 = sbr.rel (0) target = $region49
    $region48: #{vae_forward.1} parent=1 // pred_region
      _
    $region49: #{vae_forward.1} parent=1 // pred_fallthru
      _
    %v48 = vlaneseq
    %v49 = vand.u32 %v48, 127
    %v50 = vadd.s32 %v49, 128
    %v51 = vand.u32 %v49, 127
    %v52 = vand.u32 %v50, 127
    %vm53 = vcmp.lt.s32.totalorder %v51, 100
    %vm54 = vcmp.lt.s32.totalorder %v52, 100
    %v55 = vsel %vm53, 1, 0
    %v56 = vsel %vm54, 1, 0
    %v57 = vcvt.s32.f32 %v55
    %v58 = vcvt.s32.f32 %v56
    %v59 = vld [vmem:[%s0] sm:$0xff]
    %v60 = vld [vmem:[%s0 + $0x8] sm:$0xff]
    %v61 = vld [vmem:[%s0 + $0x10] sm:$0x3]
    %v62 = vld [vmem:[%s0 + $0x18] sm:$0x3]
    %63 = vrot.lane.b32.xlu0 %v59, 1
    %v64 = vpop.permute.xlu0 %63
    %65 = vrot.lane.b32.xlu0 %v61, 1
    %v66 = vpop.permute.xlu0 %65
    %67 = vrot.lane.b32.xlu0 %v60, 1
    %v68 = vpop.permute.xlu0 %67
    %69 = vrot.lane.b32.xlu0 %v62, 1
    %v70 = vpop.permute.xlu0 %69
    %vm71 = vcmp.lt.s32.totalorder %v49, 1
    %v72 = vsel %vm71, %v64, %v68
    %v73 = vsel %vm71, %v66, %v70
    %v74 = vsel %vm71, %v68, %v64
    %v75 = vsel %vm71, %v70, %v66
    %76 = vrot.lane.b32.xlu0 %v59, 127
    %v77 = vpop.permute.xlu0 %76
    %78 = vrot.lane.b32.xlu0 %v61, 127
    %v79 = vpop.permute.xlu0 %78
    %80 = vrot.lane.b32.xlu0 %v60, 127
    %v81 = vpop.permute.xlu0 %80
    %82 = vrot.lane.b32.xlu0 %v62, 127
    %v83 = vpop.permute.xlu0 %82
    %vm84 = vcmp.lt.s32.totalorder %v49, 127
    %v85 = vsel %vm84, %v77, %v81
    %v86 = vsel %vm84, %v79, %v83
    %v87 = vsel %vm84, %v81, %v77
    %v88 = vsel %vm84, %v83, %v79
    %v89 = vld [vmem:[%s1] sm:$0xff]
    %v90 = vld [vmem:[%s1 + $0x8] sm:$0xff]
    %s91 = scalar_lea.vmem %s1, 16
    %v92 = vld [vmem:[%s91] sm:$0xff]
    %v93 = vld [vmem:[%s91 + $0x8] sm:$0xff]
    %vm94 = vcmask 80896
    %v96 = vsel %vm94, %v92, 0
    %v99 = vsel %vm94, %v93, 0
    %vm101 = vcmask 1041408
    %v103 = vsel %vm101, %v61, 0
    %v106 = vsel %vm101, %v62, 0
    %108 = vmatprep.subr.mxu0 %v60
    %109 = vmatpush1.msra.mxu0 %v59
    %110 = vmatprep.subr.mxu0 %v106
    %111 = vmatpush1.msra.mxu0 %v103
    %112 = vmatprep.subr.mxu0 0.0
    %113 = vmatpush1.msra.mxu0 0.0
    %114 = vmatprep.subr.mxu0 0.0
    %115 = vmatpush1.msra.mxu0 0.0
    %116 = vmatprep.subr.mxu0 0.0
    %117 = vmatpush1.msra.mxu0 0.0
    %118 = vmatprep.subr.mxu0 0.0
    %119 = vmatpush1.msra.mxu0 0.0
    %120 = vmatprep.subr.mxu0 0.0
    %121 = vmatpush1.msra.mxu0 0.0
    %122 = vmatprep.subr.mxu0 0.0
    %123 = vmatpush1.msra.mxu0 0.0
    %124 = vmatprep.subr.mxu0 0.0
    %125 = vmatpush1.msra.mxu0 0.0
    %126 = vmatprep.subr.mxu0 0.0
    %127 = vmatpush1.msra.mxu0 0.0
    %128 = vmatprep.subr.mxu0 0.0
    %129 = vmatpush1.msra.mxu0 0.0
    %130 = vmatprep.subr.mxu0 0.0
    %131 = vmatpush1.msra.mxu0 0.0
    %132 = vmatprep.subr.mxu0 0.0
    %133 = vmatpush1.msra.mxu0 0.0
    %134 = vmatprep.subr.mxu0 0.0
    %135 = vmatpush1.msra.mxu0 0.0
    %136 = vmatprep.subr.mxu0 0.0
    %137 = vmatpush1.msra.mxu0 0.0
    %138 = vmatprep.subr.mxu0 0.0
    %139 = vmatpush1.msra.mxu0 0.0
    %140 = vmatprep.subr.mxu0 0.0
    %141 = vmatpush1.msra.mxu0 0.0
    %142 = vmatprep.subr.mxu0 0.0
    %143 = vmatpush1.msra.mxu0 0.0
    %144 = vmatprep.subr.mxu0 0.0
    %145 = vmatpush1.msra.mxu0 0.0
    %146 = vmatprep.subr.mxu0 0.0
    %147 = vmatpush1.msra.mxu0 0.0
    %148 = vmatprep.subr.mxu0 0.0
    %149 = vmatpush1.msra.mxu0 0.0
    %150 = vmatprep.subr.mxu0 0.0
    %151 = vmatpush1.msra.mxu0 0.0
    %152 = vmatprep.subr.mxu0 0.0
    %153 = vmatpush1.msra.mxu0 0.0
    %154 = vmatprep.subr.mxu0 0.0
    %155 = vmatpush1.msra.mxu0 0.0
    %156 = vmatprep.subr.mxu0 0.0
    %157 = vmatpush1.msra.mxu0 0.0
    %158 = vmatprep.subr.mxu0 0.0
    %159 = vmatpush1.msra.mxu0 0.0
    %160 = vmatprep.subr.mxu0 0.0
    %161 = vmatpush1.msra.mxu0 0.0
    %162 = vmatprep.subr.mxu0 0.0
    %163 = vmatpush1.msra.mxu0 0.0
    %164 = vmatprep.subr.mxu0 0.0
    %165 = vmatpush1.msra.mxu0 0.0
    %166 = vmatprep.subr.mxu0 0.0
    %167 = vmatpush1.msra.mxu0 0.0
    %168 = vmatprep.subr.mxu0 0.0
    %169 = vmatpush1.msra.mxu0 0.0
    %170 = vmatprep.subr.mxu0 0.0
    %171 = vmatpush1.msra.mxu0 0.0
    %172 = vmatprep.mubr.f32.mxu0 0.0
    %173 = vmatmul.mubr.f32.gmra.mrb[0].mxu0 %v96
    %v174 = vpop.f32.mrb[0].mxu0
    %v175 = vadd.f32 0.0, %v174
    %v176 = vpop.f32.mrb[0].mxu0
    %v177 = vadd.f32 0.0, %v176
    %178 = vmatprep.mubr.f32.mxu0 0.0
    %179 = vmatmul.mubr.f32.gmra.mrb[0].mxu0 %v99
    %v180 = vpop.f32.mrb[0].mxu0
    %v181 = vadd.f32 0.0, %v180
    %v182 = vpop.f32.mrb[0].mxu0
    %v183 = vadd.f32 0.0, %v182
    %184 = vdwg.mxu0
    %v186 = vsel %vm94, %v89, 0
    %v189 = vsel %vm94, %v90, 0
    %v192 = vsel %vm101, %v75, 0
    %v195 = vsel %vm101, %v73, 0
    %197 = vmatprep.subr.mxu0 %v72
    %198 = vmatpush1.msra.mxu0 %v74
    %199 = vmatprep.subr.mxu0 %v195
    %200 = vmatpush1.msra.mxu0 %v192
    %201 = vmatprep.subr.mxu0 0.0
    %202 = vmatpush1.msra.mxu0 0.0
    %203 = vmatprep.subr.mxu0 0.0
    %204 = vmatpush1.msra.mxu0 0.0
    %205 = vmatprep.subr.mxu0 0.0
    %206 = vmatpush1.msra.mxu0 0.0
    %207 = vmatprep.subr.mxu0 0.0
    %208 = vmatpush1.msra.mxu0 0.0
    %209 = vmatprep.subr.mxu0 0.0
    %210 = vmatpush1.msra.mxu0 0.0
    %211 = vmatprep.subr.mxu0 0.0
    %212 = vmatpush1.msra.mxu0 0.0
    %213 = vmatprep.subr.mxu0 0.0
    %214 = vmatpush1.msra.mxu0 0.0
    %215 = vmatprep.subr.mxu0 0.0
    %216 = vmatpush1.msra.mxu0 0.0
    %217 = vmatprep.subr.mxu0 0.0
    %218 = vmatpush1.msra.mxu0 0.0
    %219 = vmatprep.subr.mxu0 0.0
    %220 = vmatpush1.msra.mxu0 0.0
    %221 = vmatprep.subr.mxu0 0.0
    %222 = vmatpush1.msra.mxu0 0.0
    %223 = vmatprep.subr.mxu0 0.0
    %224 = vmatpush1.msra.mxu0 0.0
    %225 = vmatprep.subr.mxu0 0.0
    %226 = vmatpush1.msra.mxu0 0.0
    %227 = vmatprep.subr.mxu0 0.0
    %228 = vmatpush1.msra.mxu0 0.0
    %229 = vmatprep.subr.mxu0 0.0
    %230 = vmatpush1.msra.mxu0 0.0
    %231 = vmatprep.subr.mxu0 0.0
    %232 = vmatpush1.msra.mxu0 0.0
    %233 = vmatprep.subr.mxu0 0.0
    %234 = vmatpush1.msra.mxu0 0.0
    %235 = vmatprep.subr.mxu0 0.0
    %236 = vmatpush1.msra.mxu0 0.0
    %237 = vmatprep.subr.mxu0 0.0
    %238 = vmatpush1.msra.mxu0 0.0
    %239 = vmatprep.subr.mxu0 0.0
    %240 = vmatpush1.msra.mxu0 0.0
    %241 = vmatprep.subr.mxu0 0.0
    %242 = vmatpush1.msra.mxu0 0.0
    %243 = vmatprep.subr.mxu0 0.0
    %244 = vmatpush1.msra.mxu0 0.0
    %245 = vmatprep.subr.mxu0 0.0
    %246 = vmatpush1.msra.mxu0 0.0
    %247 = vmatprep.subr.mxu0 0.0
    %248 = vmatpush1.msra.mxu0 0.0
    %249 = vmatprep.subr.mxu0 0.0
    %250 = vmatpush1.msra.mxu0 0.0
    %251 = vmatprep.subr.mxu0 0.0
    %252 = vmatpush1.msra.mxu0 0.0
    %253 = vmatprep.subr.mxu0 0.0
    %254 = vmatpush1.msra.mxu0 0.0
    %255 = vmatprep.subr.mxu0 0.0
    %256 = vmatpush1.msra.mxu0 0.0
    %257 = vmatprep.subr.mxu0 0.0
    %258 = vmatpush1.msra.mxu0 0.0
    %259 = vmatprep.subr.mxu0 0.0
    %260 = vmatpush1.msra.mxu0 0.0
    %261 = vmatprep.mubr.f32.mxu0 0.0
    %262 = vmatmul.mubr.f32.gmra.mrb[0].mxu0 %v186
    %v263 = vpop.f32.mrb[0].mxu0
    %v264 = vadd.f32 %v175, %v263
    %v265 = vpop.f32.mrb[0].mxu0
    %v266 = vadd.f32 %v177, %v265
    %267 = vmatprep.mubr.f32.mxu0 0.0
    %268 = vmatmul.mubr.f32.gmra.mrb[0].mxu0 %v189
    %v269 = vpop.f32.mrb[0].mxu0
    %v270 = vadd.f32 %v181, %v269
    %v271 = vpop.f32.mrb[0].mxu0
    %v272 = vadd.f32 %v183, %v271
    %273 = vdwg.mxu0
    %s274 = scalar_lea.vmem %s1, 32
    %v275 = vld [vmem:[%s274] sm:$0xff]
    %v276 = vld [vmem:[%s274 + $0x8] sm:$0xff]
    %v278 = vsel %vm94, %v275, 0
    %v281 = vsel %vm94, %v276, 0
    %v284 = vsel %vm101, %v86, 0
    %v287 = vsel %vm101, %v88, 0
    %289 = vmatprep.subr.mxu0 %v87
    %290 = vmatpush1.msra.mxu0 %v85
    %291 = vmatprep.subr.mxu0 %v287
    %292 = vmatpush1.msra.mxu0 %v284
    %293 = vmatprep.subr.mxu0 0.0
    %294 = vmatpush1.msra.mxu0 0.0
    %295 = vmatprep.subr.mxu0 0.0
    %296 = vmatpush1.msra.mxu0 0.0
    %297 = vmatprep.subr.mxu0 0.0
    %298 = vmatpush1.msra.mxu0 0.0
    %299 = vmatprep.subr.mxu0 0.0
    %300 = vmatpush1.msra.mxu0 0.0
    %301 = vmatprep.subr.mxu0 0.0
    %302 = vmatpush1.msra.mxu0 0.0
    %303 = vmatprep.subr.mxu0 0.0
    %304 = vmatpush1.msra.mxu0 0.0
    %305 = vmatprep.subr.mxu0 0.0
    %306 = vmatpush1.msra.mxu0 0.0
    %307 = vmatprep.subr.mxu0 0.0
    %308 = vmatpush1.msra.mxu0 0.0
    %309 = vmatprep.subr.mxu0 0.0
    %310 = vmatpush1.msra.mxu0 0.0
    %311 = vmatprep.subr.mxu0 0.0
    %312 = vmatpush1.msra.mxu0 0.0
    %313 = vmatprep.subr.mxu0 0.0
    %314 = vmatpush1.msra.mxu0 0.0
    %315 = vmatprep.subr.mxu0 0.0
    %316 = vmatpush1.msra.mxu0 0.0
    %317 = vmatprep.subr.mxu0 0.0
    %318 = vmatpush1.msra.mxu0 0.0
    %319 = vmatprep.subr.mxu0 0.0
    %320 = vmatpush1.msra.mxu0 0.0
    %321 = vmatprep.subr.mxu0 0.0
    %322 = vmatpush1.msra.mxu0 0.0
    %323 = vmatprep.subr.mxu0 0.0
    %324 = vmatpush1.msra.mxu0 0.0
    %325 = vmatprep.subr.mxu0 0.0
    %326 = vmatpush1.msra.mxu0 0.0
    %327 = vmatprep.subr.mxu0 0.0
    %328 = vmatpush1.msra.mxu0 0.0
    %329 = vmatprep.subr.mxu0 0.0
    %330 = vmatpush1.msra.mxu0 0.0
    %331 = vmatprep.subr.mxu0 0.0
    %332 = vmatpush1.msra.mxu0 0.0
    %333 = vmatprep.subr.mxu0 0.0
    %334 = vmatpush1.msra.mxu0 0.0
    %335 = vmatprep.subr.mxu0 0.0
    %336 = vmatpush1.msra.mxu0 0.0
    %337 = vmatprep.subr.mxu0 0.0
    %338 = vmatpush1.msra.mxu0 0.0
    %339 = vmatprep.subr.mxu0 0.0
    %340 = vmatpush1.msra.mxu0 0.0
    %341 = vmatprep.subr.mxu0 0.0
    %342 = vmatpush1.msra.mxu0 0.0
    %343 = vmatprep.subr.mxu0 0.0
    %344 = vmatpush1.msra.mxu0 0.0
    %345 = vmatprep.subr.mxu0 0.0
    %346 = vmatpush1.msra.mxu0 0.0
    %347 = vmatprep.subr.mxu0 0.0
    %348 = vmatpush1.msra.mxu0 0.0
    %349 = vmatprep.subr.mxu0 0.0
    %350 = vmatpush1.msra.mxu0 0.0
    %351 = vmatprep.subr.mxu0 0.0
    %352 = vmatpush1.msra.mxu0 0.0
    %353 = vmatprep.mubr.f32.mxu0 0.0
    %354 = vmatmul.mubr.f32.gmra.mrb[0].mxu0 %v278
    %v355 = vpop.f32.mrb[0].mxu0
    %v356 = vadd.f32 0.0, %v355
    %v357 = vpop.f32.mrb[0].mxu0
    %v358 = vadd.f32 0.0, %v357
    %359 = vmatprep.mubr.f32.mxu0 0.0
    %360 = vmatmul.mubr.f32.gmra.mrb[0].mxu0 %v281
    %v361 = vpop.f32.mrb[0].mxu0
    %v362 = vadd.f32 0.0, %v361
    %v363 = vpop.f32.mrb[0].mxu0
    %v364 = vadd.f32 0.0, %v363
    %365 = vdwg.mxu0
    %v366 = vadd.f32 %v264, %v356
    %v367 = vadd.f32 %v266, %v358
    %v368 = vadd.f32 %v270, %v362
    %v369 = vadd.f32 %v272, %v364
    %v370 = vadd.f32 %v366, %v368
    %v371 = vrot.slane %v370, 4
    %v372 = vadd.f32 %v370, %v371
    %v373 = vrot.slane %v372, 2
    %v374 = vadd.f32 %v372, %v373
    %v375 = vrot.slane %v374, 1
    %v376 = vadd.f32 %v374, %v375
    %v377 = vadd.f32 %v367, %v369
    %v378 = vrot.slane %v377, 4
    %v379 = vadd.f32 %v377, %v378
    %v380 = vrot.slane %v379, 2
    %v381 = vadd.f32 %v379, %v380
    %v382 = vrot.slane %v381, 1
    %v383 = vadd.f32 %v381, %v382
    %v384 = vadd.f32 %v376, %v383
    %v385 = vmul.f32 %v384, 0.03125
    %v386 = vlaneseq
    %v387 = vshrl.u32 %v386, 7
    %v388 = vsub.s32 0, %v387
    %v389 = vrot.slane %v385, %v388
    %v390 = vsub.f32 %v366, %v389
    %v391 = vsub.f32 %v367, %v389
    %v392 = vsub.f32 %v368, %v389
    %v393 = vsub.f32 %v369, %v389
    %v394 = vmul.f32 %v390, %v390
    %v395 = vmul.f32 %v391, %v391
    %v396 = vmul.f32 %v392, %v392
    %v397 = vmul.f32 %v393, %v393
    %v398 = vadd.f32 %v394, %v396
    %v399 = vrot.slane %v398, 4
    %v400 = vadd.f32 %v398, %v399
    %v401 = vrot.slane %v400, 2
    %v402 = vadd.f32 %v400, %v401
    %v403 = vrot.slane %v402, 1
    %v404 = vadd.f32 %v402, %v403
    %v405 = vadd.f32 %v395, %v397
    %v406 = vrot.slane %v405, 4
    %v407 = vadd.f32 %v405, %v406
    %v408 = vrot.slane %v407, 2
    %v409 = vadd.f32 %v407, %v408
    %v410 = vrot.slane %v409, 1
    %v411 = vadd.f32 %v409, %v410
    %v412 = vadd.f32 %v404, %v411
    %v413 = vmul.f32 %v412, 0.03125
    %v414 = vadd.f32 %v413, 1e-05
    %v415 = vrsqrt.pop %v414
    %v416 = vlaneseq
    %v417 = vshrl.u32 %v416, 7
    %v418 = vsub.s32 0, %v417
    %v419 = vrot.slane %v415, %v418
    %v420 = vmul.f32 %v390, %v419
    %v421 = vmul.f32 %v391, %v419
    %v422 = vmul.f32 %v392, %v419
    %v423 = vmul.f32 %v393, %v419
    %v424 = vmax.f32 %v420, 0.0
    %v425 = vmax.f32 %v421, 0.0
    %v426 = vmax.f32 %v422, 0.0
    %v427 = vmax.f32 %v423, 0.0
    %v428 = vmul.f32 %v424, %v57
    %v429 = vmul.f32 %v425, %v58
    %v430 = vmul.f32 %v426, %v57
    %v431 = vmul.f32 %v427, %v58
    %432 = vrot.lane.b32.xlu0 %v428, 1
    %v433 = vpop.permute.xlu0 %432
    %434 = vrot.lane.b32.xlu0 %v430, 1
    %v435 = vpop.permute.xlu0 %434
    %436 = vrot.lane.b32.xlu0 %v429, 1
    %v437 = vpop.permute.xlu0 %436
    %438 = vrot.lane.b32.xlu0 %v431, 1
    %v439 = vpop.permute.xlu0 %438
    %v440 = vsel %vm71, %v433, %v437
    %v441 = vsel %vm71, %v435, %v439
    %v442 = vsel %vm71, %v437, %v433
    %v443 = vsel %vm71, %v439, %v435
    %444 = vrot.lane.b32.xlu0 %v428, 127
    %v445 = vpop.permute.xlu0 %444
    %446 = vrot.lane.b32.xlu0 %v430, 127
    %v447 = vpop.permute.xlu0 %446
    %448 = vrot.lane.b32.xlu0 %v429, 127
    %v449 = vpop.permute.xlu0 %448
    %450 = vrot.lane.b32.xlu0 %v431, 127
    %v451 = vpop.permute.xlu0 %450
    %v452 = vsel %vm84, %v445, %v449
    %v453 = vsel %vm84, %v447, %v451
    %v454 = vsel %vm84, %v449, %v445
    %v455 = vsel %vm84, %v451, %v447
    %v456 = vld [vmem:[%s2] sm:$0xff]
    %v457 = vld [vmem:[%s2 + $0x8] sm:$0xff]
    %v458 = vld [vmem:[%s2 + $0x10] sm:$0xff]
    %v459 = vld [vmem:[%s2 + $0x18] sm:$0xff]
    %s460 = scalar_lea.vmem %s2, 32
    %v461 = vld [vmem:[%s460] sm:$0xff]
    %v462 = vld [vmem:[%s460 + $0x8] sm:$0xff]
    %v463 = vld [vmem:[%s460 + $0x10] sm:$0xff]
    %v464 = vld [vmem:[%s460 + $0x18] sm:$0xff]
    %vm465 = vcmask 130048
    %v467 = vsel %vm465, %v461, 0
    %v470 = vsel %vm465, %v462, 0
    %v473 = vsel %vm465, %v463, 0
    %v476 = vsel %vm465, %v464, 0
    %478 = vmatprep.subr.mxu0 %v429
    %479 = vmatpush1.msra.mxu0 %v428
    %480 = vmatprep.subr.mxu0 %v431
    %481 = vmatpush1.msra.mxu0 %v430
    %482 = vmatprep.subr.mxu0 0.0
    %483 = vmatpush1.msra.mxu0 0.0
    %484 = vmatprep.subr.mxu0 0.0
    %485 = vmatpush1.msra.mxu0 0.0
    %486 = vmatprep.subr.mxu0 0.0
    %487 = vmatpush1.msra.mxu0 0.0
    %488 = vmatprep.subr.mxu0 0.0
    %489 = vmatpush1.msra.mxu0 0.0
    %490 = vmatprep.subr.mxu0 0.0
    %491 = vmatpush1.msra.mxu0 0.0
    %492 = vmatprep.subr.mxu0 0.0
    %493 = vmatpush1.msra.mxu0 0.0
    %494 = vmatprep.subr.mxu0 0.0
    %495 = vmatpush1.msra.mxu0 0.0
    %496 = vmatprep.subr.mxu0 0.0
    %497 = vmatpush1.msra.mxu0 0.0
    %498 = vmatprep.subr.mxu0 0.0
    %499 = vmatpush1.msra.mxu0 0.0
    %500 = vmatprep.subr.mxu0 0.0
    %501 = vmatpush1.msra.mxu0 0.0
    %502 = vmatprep.subr.mxu0 0.0
    %503 = vmatpush1.msra.mxu0 0.0
    %504 = vmatprep.subr.mxu0 0.0
    %505 = vmatpush1.msra.mxu0 0.0
    %506 = vmatprep.subr.mxu0 0.0
    %507 = vmatpush1.msra.mxu0 0.0
    %508 = vmatprep.subr.mxu0 0.0
    %509 = vmatpush1.msra.mxu0 0.0
    %510 = vmatprep.subr.mxu0 0.0
    %511 = vmatpush1.msra.mxu0 0.0
    %512 = vmatprep.subr.mxu0 0.0
    %513 = vmatpush1.msra.mxu0 0.0
    %514 = vmatprep.subr.mxu0 0.0
    %515 = vmatpush1.msra.mxu0 0.0
    %516 = vmatprep.subr.mxu0 0.0
    %517 = vmatpush1.msra.mxu0 0.0
    %518 = vmatprep.subr.mxu0 0.0
    %519 = vmatpush1.msra.mxu0 0.0
    %520 = vmatprep.subr.mxu0 0.0
    %521 = vmatpush1.msra.mxu0 0.0
    %522 = vmatprep.subr.mxu0 0.0
    %523 = vmatpush1.msra.mxu0 0.0
    %524 = vmatprep.subr.mxu0 0.0
    %525 = vmatpush1.msra.mxu0 0.0
    %526 = vmatprep.subr.mxu0 0.0
    %527 = vmatpush1.msra.mxu0 0.0
    %528 = vmatprep.subr.mxu0 0.0
    %529 = vmatpush1.msra.mxu0 0.0
    %530 = vmatprep.subr.mxu0 0.0
    %531 = vmatpush1.msra.mxu0 0.0
    %532 = vmatprep.subr.mxu0 0.0
    %533 = vmatpush1.msra.mxu0 0.0
    %534 = vmatprep.subr.mxu0 0.0
    %535 = vmatpush1.msra.mxu0 0.0
    %536 = vmatprep.subr.mxu0 0.0
    %537 = vmatpush1.msra.mxu0 0.0
    %538 = vmatprep.subr.mxu0 0.0
    %539 = vmatpush1.msra.mxu0 0.0
    %540 = vmatprep.subr.mxu0 0.0
    %541 = vmatpush1.msra.mxu0 0.0
    %542 = vmatprep.mubr.f32.mxu0 0.0
    %543 = vmatmul.mubr.f32.gmra.mrb[0].mxu0 %v467
    %v544 = vpop.f32.mrb[0].mxu0
    %v545 = vadd.f32 0.0, %v544
    %v546 = vpop.f32.mrb[0].mxu0
    %v547 = vadd.f32 0.0, %v546
    %548 = vmatprep.mubr.f32.mxu0 0.0
    %549 = vmatmul.mubr.f32.gmra.mrb[0].mxu0 %v470
    %v550 = vpop.f32.mrb[0].mxu0
    %v551 = vadd.f32 0.0, %v550
    %v552 = vpop.f32.mrb[0].mxu0
    %v553 = vadd.f32 0.0, %v552
    %554 = vmatprep.mubr.f32.mxu0 0.0
    %555 = vmatmul.mubr.f32.gmra.mrb[0].mxu0 %v473
    %v556 = vpop.f32.mrb[0].mxu0
    %v557 = vadd.f32 0.0, %v556
    %v558 = vpop.f32.mrb[0].mxu0
    %v559 = vadd.f32 0.0, %v558
    %560 = vmatprep.mubr.f32.mxu0 0.0
    %561 = vmatmul.mubr.f32.gmra.mrb[0].mxu0 %v476
    %v562 = vpop.f32.mrb[0].mxu0
    %v563 = vadd.f32 0.0, %v562
    %v564 = vpop.f32.mrb[0].mxu0
    %v565 = vadd.f32 0.0, %v564
    %566 = vdwg.mxu0
    %v568 = vsel %vm465, %v456, 0
    %v571 = vsel %vm465, %v457, 0
    %v574 = vsel %vm465, %v458, 0
    %v577 = vsel %vm465, %v459, 0
    %579 = vmatprep.subr.mxu0 %v440
    %580 = vmatpush1.msra.mxu0 %v442
    %581 = vmatprep.subr.mxu0 %v441
    %582 = vmatpush1.msra.mxu0 %v443
    %583 = vmatprep.subr.mxu0 0.0
    %584 = vmatpush1.msra.mxu0 0.0
    %585 = vmatprep.subr.mxu0 0.0
    %586 = vmatpush1.msra.mxu0 0.0
    %587 = vmatprep.subr.mxu0 0.0
    %588 = vmatpush1.msra.mxu0 0.0
    %589 = vmatprep.subr.mxu0 0.0
    %590 = vmatpush1.msra.mxu0 0.0
    %591 = vmatprep.subr.mxu0 0.0
    %592 = vmatpush1.msra.mxu0 0.0
    %593 = vmatprep.subr.mxu0 0.0
    %594 = vmatpush1.msra.mxu0 0.0
    %595 = vmatprep.subr.mxu0 0.0
    %596 = vmatpush1.msra.mxu0 0.0
    %597 = vmatprep.subr.mxu0 0.0
    %598 = vmatpush1.msra.mxu0 0.0
    %599 = vmatprep.subr.mxu0 0.0
    %600 = vmatpush1.msra.mxu0 0.0
    %601 = vmatprep.subr.mxu0 0.0
    %602 = vmatpush1.msra.mxu0 0.0
    %603 = vmatprep.subr.mxu0 0.0
    %604 = vmatpush1.msra.mxu0 0.0
    %605 = vmatprep.subr.mxu0 0.0
    %606 = vmatpush1.msra.mxu0 0.0
    %607 = vmatprep.subr.mxu0 0.0
    %608 = vmatpush1.msra.mxu0 0.0
    %609 = vmatprep.subr.mxu0 0.0
    %610 = vmatpush1.msra.mxu0 0.0
    %611 = vmatprep.subr.mxu0 0.0
    %612 = vmatpush1.msra.mxu0 0.0
    %613 = vmatprep.subr.mxu0 0.0
    %614 = vmatpush1.msra.mxu0 0.0
    %615 = vmatprep.subr.mxu0 0.0
    %616 = vmatpush1.msra.mxu0 0.0
    %617 = vmatprep.subr.mxu0 0.0
    %618 = vmatpush1.msra.mxu0 0.0
    %619 = vmatprep.subr.mxu0 0.0
    %620 = vmatpush1.msra.mxu0 0.0
    %621 = vmatprep.subr.mxu0 0.0
    %622 = vmatpush1.msra.mxu0 0.0
    %623 = vmatprep.subr.mxu0 0.0
    %624 = vmatpush1.msra.mxu0 0.0
    %625 = vmatprep.subr.mxu0 0.0
    %626 = vmatpush1.msra.mxu0 0.0
    %627 = vmatprep.subr.mxu0 0.0
    %628 = vmatpush1.msra.mxu0 0.0
    %629 = vmatprep.subr.mxu0 0.0
    %630 = vmatpush1.msra.mxu0 0.0
    %631 = vmatprep.subr.mxu0 0.0
    %632 = vmatpush1.msra.mxu0 0.0
    %633 = vmatprep.subr.mxu0 0.0
    %634 = vmatpush1.msra.mxu0 0.0
    %635 = vmatprep.subr.mxu0 0.0
    %636 = vmatpush1.msra.mxu0 0.0
    %637 = vmatprep.subr.mxu0 0.0
    %638 = vmatpush1.msra.mxu0 0.0
    %639 = vmatprep.subr.mxu0 0.0
    %640 = vmatpush1.msra.mxu0 0.0
    %641 = vmatprep.subr.mxu0 0.0
    %642 = vmatpush1.msra.mxu0 0.0
    %643 = vmatprep.mubr.f32.mxu0 0.0
    %644 = vmatmul.mubr.f32.gmra.mrb[0].mxu0 %v568
    %v645 = vpop.f32.mrb[0].mxu0
    %v646 = vadd.f32 %v545, %v645
    %v647 = vpop.f32.mrb[0].mxu0
    %v648 = vadd.f32 %v547, %v647
    %649 = vmatprep.mubr.f32.mxu0 0.0
    %650 = vmatmul.mubr.f32.gmra.mrb[0].mxu0 %v571
    %v651 = vpop.f32.mrb[0].mxu0
    %v652 = vadd.f32 %v551, %v651
    %v653 = vpop.f32.mrb[0].mxu0
    %v654 = vadd.f32 %v553, %v653
    %655 = vmatprep.mubr.f32.mxu0 0.0
    %656 = vmatmul.mubr.f32.gmra.mrb[0].mxu0 %v574
    %v657 = vpop.f32.mrb[0].mxu0
    %v658 = vadd.f32 %v557, %v657
    %v659 = vpop.f32.mrb[0].mxu0
    %v660 = vadd.f32 %v559, %v659
    %661 = vmatprep.mubr.f32.mxu0 0.0
    %662 = vmatmul.mubr.f32.gmra.mrb[0].mxu0 %v577
    %v663 = vpop.f32.mrb[0].mxu0
    %v664 = vadd.f32 %v563, %v663
    %v665 = vpop.f32.mrb[0].mxu0
    %v666 = vadd.f32 %v565, %v665
    %667 = vdwg.mxu0
    %s668 = scalar_lea.vmem %s2, 64
    %v669 = vld [vmem:[%s668] sm:$0xff]
    %v670 = vld [vmem:[%s668 + $0x8] sm:$0xff]
    %v671 = vld [vmem:[%s668 + $0x10] sm:$0xff]
    %v672 = vld [vmem:[%s668 + $0x18] sm:$0xff]
    %v674 = vsel %vm465, %v669, 0
    %v677 = vsel %vm465, %v670, 0
    %v680 = vsel %vm465, %v671, 0
    %v683 = vsel %vm465, %v672, 0
    %685 = vmatprep.subr.mxu0 %v454
    %686 = vmatpush1.msra.mxu0 %v452
    %687 = vmatprep.subr.mxu0 %v455
    %688 = vmatpush1.msra.mxu0 %v453
    %689 = vmatprep.subr.mxu0 0.0
    %690 = vmatpush1.msra.mxu0 0.0
    %691 = vmatprep.subr.mxu0 0.0
    %692 = vmatpush1.msra.mxu0 0.0
    %693 = vmatprep.subr.mxu0 0.0
    %694 = vmatpush1.msra.mxu0 0.0
    %695 = vmatprep.subr.mxu0 0.0
    %696 = vmatpush1.msra.mxu0 0.0
    %697 = vmatprep.subr.mxu0 0.0
    %698 = vmatpush1.msra.mxu0 0.0
    %699 = vmatprep.subr.mxu0 0.0
    %700 = vmatpush1.msra.mxu0 0.0
    %701 = vmatprep.subr.mxu0 0.0
    %702 = vmatpush1.msra.mxu0 0.0
    %703 = vmatprep.subr.mxu0 0.0
    %704 = vmatpush1.msra.mxu0 0.0
    %705 = vmatprep.subr.mxu0 0.0
    %706 = vmatpush1.msra.mxu0 0.0
    %707 = vmatprep.subr.mxu0 0.0
    %708 = vmatpush1.msra.mxu0 0.0
    %709 = vmatprep.subr.mxu0 0.0
    %710 = vmatpush1.msra.mxu0 0.0
    %711 = vmatprep.subr.mxu0 0.0
    %712 = vmatpush1.msra.mxu0 0.0
    %713 = vmatprep.subr.mxu0 0.0
    %714 = vmatpush1.msra.mxu0 0.0
    %715 = vmatprep.subr.mxu0 0.0
    %716 = vmatpush1.msra.mxu0 0.0
    %717 = vmatprep.subr.mxu0 0.0
    %718 = vmatpush1.msra.mxu0 0.0
    %719 = vmatprep.subr.mxu0 0.0
    %720 = vmatpush1.msra.mxu0 0.0
    %721 = vmatprep.subr.mxu0 0.0
    %722 = vmatpush1.msra.mxu0 0.0
    %723 = vmatprep.subr.mxu0 0.0
    %724 = vmatpush1.msra.mxu0 0.0
    %725 = vmatprep.subr.mxu0 0.0
    %726 = vmatpush1.msra.mxu0 0.0
    %727 = vmatprep.subr.mxu0 0.0
    %728 = vmatpush1.msra.mxu0 0.0
    %729 = vmatprep.subr.mxu0 0.0
    %730 = vmatpush1.msra.mxu0 0.0
    %731 = vmatprep.subr.mxu0 0.0
    %732 = vmatpush1.msra.mxu0 0.0
    %733 = vmatprep.subr.mxu0 0.0
    %734 = vmatpush1.msra.mxu0 0.0
    %735 = vmatprep.subr.mxu0 0.0
    %736 = vmatpush1.msra.mxu0 0.0
    %737 = vmatprep.subr.mxu0 0.0
    %738 = vmatpush1.msra.mxu0 0.0
    %739 = vmatprep.subr.mxu0 0.0
    %740 = vmatpush1.msra.mxu0 0.0
    %741 = vmatprep.subr.mxu0 0.0
    %742 = vmatpush1.msra.mxu0 0.0
    %743 = vmatprep.subr.mxu0 0.0
    %744 = vmatpush1.msra.mxu0 0.0
    %745 = vmatprep.subr.mxu0 0.0
    %746 = vmatpush1.msra.mxu0 0.0
    %747 = vmatprep.subr.mxu0 0.0
    %748 = vmatpush1.msra.mxu0 0.0
    %749 = vmatprep.mubr.f32.mxu0 0.0
    %750 = vmatmul.mubr.f32.gmra.mrb[0].mxu0 %v674
    %v751 = vpop.f32.mrb[0].mxu0
    %v752 = vadd.f32 0.0, %v751
    %v753 = vpop.f32.mrb[0].mxu0
    %v754 = vadd.f32 0.0, %v753
    %755 = vmatprep.mubr.f32.mxu0 0.0
    %756 = vmatmul.mubr.f32.gmra.mrb[0].mxu0 %v677
    %v757 = vpop.f32.mrb[0].mxu0
    %v758 = vadd.f32 0.0, %v757
    %v759 = vpop.f32.mrb[0].mxu0
    %v760 = vadd.f32 0.0, %v759
    %761 = vmatprep.mubr.f32.mxu0 0.0
    %762 = vmatmul.mubr.f32.gmra.mrb[0].mxu0 %v680
    %v763 = vpop.f32.mrb[0].mxu0
    %v764 = vadd.f32 0.0, %v763
    %v765 = vpop.f32.mrb[0].mxu0
    %v766 = vadd.f32 0.0, %v765
    %767 = vmatprep.mubr.f32.mxu0 0.0
    %768 = vmatmul.mubr.f32.gmra.mrb[0].mxu0 %v683
    %v769 = vpop.f32.mrb[0].mxu0
    %v770 = vadd.f32 0.0, %v769
    %v771 = vpop.f32.mrb[0].mxu0
    %v772 = vadd.f32 0.0, %v771
    %773 = vdwg.mxu0
    %v774 = vadd.f32 %v646, %v752
    %v775 = vadd.f32 %v648, %v754
    %v776 = vadd.f32 %v652, %v758
    %v777 = vadd.f32 %v654, %v760
    %v778 = vadd.f32 %v658, %v764
    %v779 = vadd.f32 %v660, %v766
    %v780 = vadd.f32 %v664, %v770
    %v781 = vadd.f32 %v666, %v772
    %v782 = vadd.f32 %v774, %v776
    %v783 = vadd.f32 %v782, %v778
    %v784 = vadd.f32 %v783, %v780
    %v785 = vrot.slane %v784, 4
    %v786 = vadd.f32 %v784, %v785
    %v787 = vrot.slane %v786, 2
    %v788 = vadd.f32 %v786, %v787
    %v789 = vrot.slane %v788, 1
    %v790 = vadd.f32 %v788, %v789
    %v791 = vadd.f32 %v775, %v777
    %v792 = vadd.f32 %v791, %v779
    %v793 = vadd.f32 %v792, %v781
    %v794 = vrot.slane %v793, 4
    %v795 = vadd.f32 %v793, %v794
    %v796 = vrot.slane %v795, 2
    %v797 = vadd.f32 %v795, %v796
    %v798 = vrot.slane %v797, 1
    %v799 = vadd.f32 %v797, %v798
    %v800 = vadd.f32 %v790, %v799
    %v801 = vmul.f32 %v800, 0.015625
    %v802 = vlaneseq
    %v803 = vshrl.u32 %v802, 7
    %v804 = vsub.s32 0, %v803
    %v805 = vrot.slane %v801, %v804
    %v806 = vsub.f32 %v774, %v805
    %v807 = vsub.f32 %v775, %v805
    %v808 = vsub.f32 %v776, %v805
    %v809 = vsub.f32 %v777, %v805
    %v810 = vsub.f32 %v778, %v805
    %v811 = vsub.f32 %v779, %v805
    %v812 = vsub.f32 %v780, %v805
    %v813 = vsub.f32 %v781, %v805
    %v814 = vmul.f32 %v806, %v806
    %v815 = vmul.f32 %v807, %v807
    %v816 = vmul.f32 %v808, %v808
    %v817 = vmul.f32 %v809, %v809
    %v818 = vmul.f32 %v810, %v810
    %v819 = vmul.f32 %v811, %v811
    %v820 = vmul.f32 %v812, %v812
    %v821 = vmul.f32 %v813, %v813
    %v822 = vadd.f32 %v814, %v816
    %v823 = vadd.f32 %v822, %v818
    %v824 = vadd.f32 %v823, %v820
    %v825 = vrot.slane %v824, 4
    %v826 = vadd.f32 %v824, %v825
    %v827 = vrot.slane %v826, 2
    %v828 = vadd.f32 %v826, %v827
    %v829 = vrot.slane %v828, 1
    %v830 = vadd.f32 %v828, %v829
    %v831 = vadd.f32 %v815, %v817
    %v832 = vadd.f32 %v831, %v819
    %v833 = vadd.f32 %v832, %v821
    %v834 = vrot.slane %v833, 4
    %v835 = vadd.f32 %v833, %v834
    %v836 = vrot.slane %v835, 2
    %v837 = vadd.f32 %v835, %v836
    %v838 = vrot.slane %v837, 1
    %v839 = vadd.f32 %v837, %v838
    %v840 = vadd.f32 %v830, %v839
    %v841 = vmul.f32 %v840, 0.015625
    %v842 = vadd.f32 %v841, 1e-05
    %v843 = vrsqrt.pop %v842
    %v844 = vlaneseq
    %v845 = vshrl.u32 %v844, 7
    %v846 = vsub.s32 0, %v845
    %v847 = vrot.slane %v843, %v846
    %v848 = vmul.f32 %v806, %v847
    %v849 = vmul.f32 %v807, %v847
    %v850 = vmul.f32 %v808, %v847
    %v851 = vmul.f32 %v809, %v847
    %v852 = vmul.f32 %v810, %v847
    %v853 = vmul.f32 %v811, %v847
    %v854 = vmul.f32 %v812, %v847
    %v855 = vmul.f32 %v813, %v847
    %v856 = vmax.f32 %v848, 0.0
    %v857 = vmax.f32 %v849, 0.0
    %v858 = vmax.f32 %v850, 0.0
    %v859 = vmax.f32 %v851, 0.0
    %v860 = vmax.f32 %v852, 0.0
    %v861 = vmax.f32 %v853, 0.0
    %v862 = vmax.f32 %v854, 0.0
    %v863 = vmax.f32 %v855, 0.0
    %v864 = vmul.f32 %v856, %v57
    %v865 = vmul.f32 %v857, %v58
    %v866 = vmul.f32 %v858, %v57
    %v867 = vmul.f32 %v859, %v58
    %v868 = vmul.f32 %v860, %v57
    %v869 = vmul.f32 %v861, %v58
    %v870 = vmul.f32 %v862, %v57
    %v871 = vmul.f32 %v863, %v58
    %872 = vrot.lane.b32.xlu0 %v864, 1
    %v873 = vpop.permute.xlu0 %872
    %874 = vrot.lane.b32.xlu0 %v866, 1
    %v875 = vpop.permute.xlu0 %874
    %876 = vrot.lane.b32.xlu0 %v868, 1
    %v877 = vpop.permute.xlu0 %876
    %878 = vrot.lane.b32.xlu0 %v870, 1
    %v879 = vpop.permute.xlu0 %878
    %880 = vrot.lane.b32.xlu0 %v865, 1
    %v881 = vpop.permute.xlu0 %880
    %882 = vrot.lane.b32.xlu0 %v867, 1
    %v883 = vpop.permute.xlu0 %882
    %884 = vrot.lane.b32.xlu0 %v869, 1
    %v885 = vpop.permute.xlu0 %884
    %886 = vrot.lane.b32.xlu0 %v871, 1
    %v887 = vpop.permute.xlu0 %886
    %v888 = vsel %vm71, %v873, %v881
    %v889 = vsel %vm71, %v875, %v883
    %v890 = vsel %vm71, %v877, %v885
    %v891 = vsel %vm71, %v879, %v887
    %v892 = vsel %vm71, %v881, %v873
    %v893 = vsel %vm71, %v883, %v875
    %v894 = vsel %vm71, %v885, %v877
    %v895 = vsel %vm71, %v887, %v879
    %896 = vrot.lane.b32.xlu0 %v864, 127
    %v897 = vpop.permute.xlu0 %896
    %898 = vrot.lane.b32.xlu0 %v866, 127
    %v899 = vpop.permute.xlu0 %898
    %900 = vrot.lane.b32.xlu0 %v868, 127
    %v901 = vpop.permute.xlu0 %900
    %902 = vrot.lane.b32.xlu0 %v870, 127
    %v903 = vpop.permute.xlu0 %902
    %904 = vrot.lane.b32.xlu0 %v865, 127
    %v905 = vpop.permute.xlu0 %904
    %906 = vrot.lane.b32.xlu0 %v867, 127
    %v907 = vpop.permute.xlu0 %906
    %908 = vrot.lane.b32.xlu0 %v869, 127
    %v909 = vpop.permute.xlu0 %908
    %910 = vrot.lane.b32.xlu0 %v871, 127
    %v911 = vpop.permute.xlu0 %910
    %v912 = vsel %vm84, %v897, %v905
    %v913 = vsel %vm84, %v899, %v907
    %v914 = vsel %vm84, %v901, %v909
    %v915 = vsel %vm84, %v903, %v911
    %v916 = vsel %vm84, %v905, %v897
    %v917 = vsel %vm84, %v907, %v899
    %v918 = vsel %vm84, %v909, %v901
    %v919 = vsel %vm84, %v911, %v903
    %v920 = vld [vmem:[%s3] sm:$0xff]
    %v921 = vld [vmem:[%s3 + $0x8] sm:$0xff]
    %v922 = vld [vmem:[%s3 + $0x10] sm:$0xff]
    %v923 = vld [vmem:[%s3 + $0x18] sm:$0xff]
    %v924 = vld [vmem:[%s3 + $0x20] sm:$0xff]
    %v925 = vld [vmem:[%s3 + $0x28] sm:$0xff]
    %v926 = vld [vmem:[%s3 + $0x30] sm:$0xff]
    %v927 = vld [vmem:[%s3 + $0x38] sm:$0xff]
    %s928 = scalar_lea.vmem %s3, 64
    %v929 = vld [vmem:[%s928] sm:$0xff]
    %v930 = vld [vmem:[%s928 + $0x8] sm:$0xff]
    %v931 = vld [vmem:[%s928 + $0x10] sm:$0xff]
    %v932 = vld [vmem:[%s928 + $0x18] sm:$0xff]
    %v933 = vld [vmem:[%s928 + $0x20] sm:$0xff]
    %v934 = vld [vmem:[%s928 + $0x28] sm:$0xff]
    %v935 = vld [vmem:[%s928 + $0x30] sm:$0xff]
    %v936 = vld [vmem:[%s928 + $0x38] sm:$0xff]
    %vm937 = vcmask 261120
    %v939 = vsel %vm937, %v929, 0
    %v942 = vsel %vm937, %v930, 0
    %v945 = vsel %vm937, %v931, 0
    %v948 = vsel %vm937, %v932, 0
    %v951 = vsel %vm937, %v933, 0
    %v954 = vsel %vm937, %v934, 0
    %v957 = vsel %vm937, %v935, 0
    %v960 = vsel %vm937, %v936, 0
    %962 = vmatprep.subr.mxu0 %v865
    %963 = vmatpush1.msra.mxu0 %v864
    %964 = vmatprep.subr.mxu0 %v867
    %965 = vmatpush1.msra.mxu0 %v866
    %966 = vmatprep.subr.mxu0 %v869
    %967 = vmatpush1.msra.mxu0 %v868
    %968 = vmatprep.subr.mxu0 %v871
    %969 = vmatpush1.msra.mxu0 %v870
    %970 = vmatprep.subr.mxu0 0.0
    %971 = vmatpush1.msra.mxu0 0.0
    %972 = vmatprep.subr.mxu0 0.0
    %973 = vmatpush1.msra.mxu0 0.0
    %974 = vmatprep.subr.mxu0 0.0
    %975 = vmatpush1.msra.mxu0 0.0
    %976 = vmatprep.subr.mxu0 0.0
    %977 = vmatpush1.msra.mxu0 0.0
    %978 = vmatprep.subr.mxu0 0.0
    %979 = vmatpush1.msra.mxu0 0.0
    %980 = vmatprep.subr.mxu0 0.0
    %981 = vmatpush1.msra.mxu0 0.0
    %982 = vmatprep.subr.mxu0 0.0
    %983 = vmatpush1.msra.mxu0 0.0
    %984 = vmatprep.subr.mxu0 0.0
    %985 = vmatpush1.msra.mxu0 0.0
    %986 = vmatprep.subr.mxu0 0.0
    %987 = vmatpush1.msra.mxu0 0.0
    %988 = vmatprep.subr.mxu0 0.0
    %989 = vmatpush1.msra.mxu0 0.0
    %990 = vmatprep.subr.mxu0 0.0
    %991 = vmatpush1.msra.mxu0 0.0
    %992 = vmatprep.subr.mxu0 0.0
    %993 = vmatpush1.msra.mxu0 0.0
    %994 = vmatprep.subr.mxu0 0.0
    %995 = vmatpush1.msra.mxu0 0.0
    %996 = vmatprep.subr.mxu0 0.0
    %997 = vmatpush1.msra.mxu0 0.0
    %998 = vmatprep.subr.mxu0 0.0
    %999 = vmatpush1.msra.mxu0 0.0
    %1000 = vmatprep.subr.mxu0 0.0
    %1001 = vmatpush1.msra.mxu0 0.0
    %1002 = vmatprep.subr.mxu0 0.0
    %1003 = vmatpush1.msra.mxu0 0.0
    %1004 = vmatprep.subr.mxu0 0.0
    %1005 = vmatpush1.msra.mxu0 0.0
    %1006 = vmatprep.subr.mxu0 0.0
    %1007 = vmatpush1.msra.mxu0 0.0
    %1008 = vmatprep.subr.mxu0 0.0
    %1009 = vmatpush1.msra.mxu0 0.0
    %1010 = vmatprep.subr.mxu0 0.0
    %1011 = vmatpush1.msra.mxu0 0.0
    %1012 = vmatprep.subr.mxu0 0.0
    %1013 = vmatpush1.msra.mxu0 0.0
    %1014 = vmatprep.subr.mxu0 0.0
    %1015 = vmatpush1.msra.mxu0 0.0
    %1016 = vmatprep.subr.mxu0 0.0
    %1017 = vmatpush1.msra.mxu0 0.0
    %1018 = vmatprep.subr.mxu0 0.0
    %1019 = vmatpush1.msra.mxu0 0.0
    %1020 = vmatprep.subr.mxu0 0.0
    %1021 = vmatpush1.msra.mxu0 0.0
    %1022 = vmatprep.subr.mxu0 0.0
    %1023 = vmatpush1.msra.mxu0 0.0
    %1024 = vmatprep.subr.mxu0 0.0
    %1025 = vmatpush1.msra.mxu0 0.0
    %1026 = vmatprep.mubr.f32.mxu0 0.0
    %1027 = vmatmul.mubr.f32.gmra.mrb[0].mxu0 %v939
    %v1028 = vpop.f32.mrb[0].mxu0
    %v1029 = vadd.f32 0.0, %v1028
    %v1030 = vpop.f32.mrb[0].mxu0
    %v1031 = vadd.f32 0.0, %v1030
    %1032 = vmatprep.mubr.f32.mxu0 0.0
    %1033 = vmatmul.mubr.f32.gmra.mrb[0].mxu0 %v942
    %v1034 = vpop.f32.mrb[0].mxu0
    %v1035 = vadd.f32 0.0, %v1034
    %v1036 = vpop.f32.mrb[0].mxu0
    %v1037 = vadd.f32 0.0, %v1036
    %1038 = vmatprep.mubr.f32.mxu0 0.0
    %1039 = vmatmul.mubr.f32.gmra.mrb[0].mxu0 %v945
    %v1040 = vpop.f32.mrb[0].mxu0
    %v1041 = vadd.f32 0.0, %v1040
    %v1042 = vpop.f32.mrb[0].mxu0
    %v1043 = vadd.f32 0.0, %v1042
    %1044 = vmatprep.mubr.f32.mxu0 0.0
    %1045 = vmatmul.mubr.f32.gmra.mrb[0].mxu0 %v948
    %v1046 = vpop.f32.mrb[0].mxu0
    %v1047 = vadd.f32 0.0, %v1046
    %v1048 = vpop.f32.mrb[0].mxu0
    %v1049 = vadd.f32 0.0, %v1048
    %1050 = vmatprep.mubr.f32.mxu0 0.0
    %1051 = vmatmul.mubr.f32.gmra.mrb[0].mxu0 %v951
    %v1052 = vpop.f32.mrb[0].mxu0
    %v1053 = vadd.f32 0.0, %v1052
    %v1054 = vpop.f32.mrb[0].mxu0
    %v1055 = vadd.f32 0.0, %v1054
    %1056 = vmatprep.mubr.f32.mxu0 0.0
    %1057 = vmatmul.mubr.f32.gmra.mrb[0].mxu0 %v954
    %v1058 = vpop.f32.mrb[0].mxu0
    %v1059 = vadd.f32 0.0, %v1058
    %v1060 = vpop.f32.mrb[0].mxu0
    %v1061 = vadd.f32 0.0, %v1060
    %1062 = vmatprep.mubr.f32.mxu0 0.0
    %1063 = vmatmul.mubr.f32.gmra.mrb[0].mxu0 %v957
    %v1064 = vpop.f32.mrb[0].mxu0
    %v1065 = vadd.f32 0.0, %v1064
    %v1066 = vpop.f32.mrb[0].mxu0
    %v1067 = vadd.f32 0.0, %v1066
    %1068 = vmatprep.mubr.f32.mxu0 0.0
    %1069 = vmatmul.mubr.f32.gmra.mrb[0].mxu0 %v960
    %v1070 = vpop.f32.mrb[0].mxu0
    %v1071 = vadd.f32 0.0, %v1070
    %v1072 = vpop.f32.mrb[0].mxu0
    %v1073 = vadd.f32 0.0, %v1072
    %1074 = vdwg.mxu0
    %v1076 = vsel %vm937, %v920, 0
    %v1079 = vsel %vm937, %v921, 0
    %v1082 = vsel %vm937, %v922, 0
    %v1085 = vsel %vm937, %v923, 0
    %v1088 = vsel %vm937, %v924, 0
    %v1091 = vsel %vm937, %v925, 0
    %v1094 = vsel %vm937, %v926, 0
    %v1097 = vsel %vm937, %v927, 0
    %1099 = vmatprep.subr.mxu0 %v888
    %1100 = vmatpush1.msra.mxu0 %v892
    %1101 = vmatprep.subr.mxu0 %v889
    %1102 = vmatpush1.msra.mxu0 %v893
    %1103 = vmatprep.subr.mxu0 %v890
    %1104 = vmatpush1.msra.mxu0 %v894
    %1105 = vmatprep.subr.mxu0 %v891
    %1106 = vmatpush1.msra.mxu0 %v895
    %1107 = vmatprep.subr.mxu0 0.0
    %1108 = vmatpush1.msra.mxu0 0.0
    %1109 = vmatprep.subr.mxu0 0.0
    %1110 = vmatpush1.msra.mxu0 0.0
    %1111 = vmatprep.subr.mxu0 0.0
    %1112 = vmatpush1.msra.mxu0 0.0
    %1113 = vmatprep.subr.mxu0 0.0
    %1114 = vmatpush1.msra.mxu0 0.0
    %1115 = vmatprep.subr.mxu0 0.0
    %1116 = vmatpush1.msra.mxu0 0.0
    %1117 = vmatprep.subr.mxu0 0.0
    %1118 = vmatpush1.msra.mxu0 0.0
    %1119 = vmatprep.subr.mxu0 0.0
    %1120 = vmatpush1.msra.mxu0 0.0
    %1121 = vmatprep.subr.mxu0 0.0
    %1122 = vmatpush1.msra.mxu0 0.0
    %1123 = vmatprep.subr.mxu0 0.0
    %1124 = vmatpush1.msra.mxu0 0.0
    %1125 = vmatprep.subr.mxu0 0.0
    %1126 = vmatpush1.msra.mxu0 0.0
    %1127 = vmatprep.subr.mxu0 0.0
    %1128 = vmatpush1.msra.mxu0 0.0
    %1129 = vmatprep.subr.mxu0 0.0
    %1130 = vmatpush1.msra.mxu0 0.0
    %1131 = vmatprep.subr.mxu0 0.0
    %1132 = vmatpush1.msra.mxu0 0.0
    %1133 = vmatprep.subr.mxu0 0.0
    %1134 = vmatpush1.msra.mxu0 0.0
    %1135 = vmatprep.subr.mxu0 0.0
    %1136 = vmatpush1.msra.mxu0 0.0
    %1137 = vmatprep.subr.mxu0 0.0
    %1138 = vmatpush1.msra.mxu0 0.0
    %1139 = vmatprep.subr.mxu0 0.0
    %1140 = vmatpush1.msra.mxu0 0.0
    %1141 = vmatprep.subr.mxu0 0.0
    %1142 = vmatpush1.msra.mxu0 0.0
    %1143 = vmatprep.subr.mxu0 0.0
    %1144 = vmatpush1.msra.mxu0 0.0
    %1145 = vmatprep.subr.mxu0 0.0
    %1146 = vmatpush1.msra.mxu0 0.0
    %1147 = vmatprep.subr.mxu0 0.0
    %1148 = vmatpush1.msra.mxu0 0.0
    %1149 = vmatprep.subr.mxu0 0.0
    %1150 = vmatpush1.msra.mxu0 0.0
    %1151 = vmatprep.subr.mxu0 0.0
    %1152 = vmatpush1.msra.mxu0 0.0
    %1153 = vmatprep.subr.mxu0 0.0
    %1154 = vmatpush1.msra.mxu0 0.0
    %1155 = vmatprep.subr.mxu0 0.0
    %1156 = vmatpush1.msra.mxu0 0.0
    %1157 = vmatprep.subr.mxu0 0.0
    %1158 = vmatpush1.msra.mxu0 0.0
    %1159 = vmatprep.subr.mxu0 0.0
    %1160 = vmatpush1.msra.mxu0 0.0
    %1161 = vmatprep.subr.mxu0 0.0
    %1162 = vmatpush1.msra.mxu0 0.0
    %1163 = vmatprep.mubr.f32.mxu0 0.0
    %1164 = vmatmul.mubr.f32.gmra.mrb[0].mxu0 %v1076
    %v1165 = vpop.f32.mrb[0].mxu0
    %v1166 = vadd.f32 %v1029, %v1165
    %v1167 = vpop.f32.mrb[0].mxu0
    %v1168 = vadd.f32 %v1031, %v1167
    %1169 = vmatprep.mubr.f32.mxu0 0.0
    %1170 = vmatmul.mubr.f32.gmra.mrb[0].mxu0 %v1079
    %v1171 = vpop.f32.mrb[0].mxu0
    %v1172 = vadd.f32 %v1035, %v1171
    %v1173 = vpop.f32.mrb[0].mxu0
    %v1174 = vadd.f32 %v1037, %v1173
    %1175 = vmatprep.mubr.f32.mxu0 0.0
    %1176 = vmatmul.mubr.f32.gmra.mrb[0].mxu0 %v1082
    %v1177 = vpop.f32.mrb[0].mxu0
    %v1178 = vadd.f32 %v1041, %v1177
    %v1179 = vpop.f32.mrb[0].mxu0
    %v1180 = vadd.f32 %v1043, %v1179
    %1181 = vmatprep.mubr.f32.mxu0 0.0
    %1182 = vmatmul.mubr.f32.gmra.mrb[0].mxu0 %v1085
    %v1183 = vpop.f32.mrb[0].mxu0
    %v1184 = vadd.f32 %v1047, %v1183
    %v1185 = vpop.f32.mrb[0].mxu0
    %v1186 = vadd.f32 %v1049, %v1185
    %1187 = vmatprep.mubr.f32.mxu0 0.0
    %1188 = vmatmul.mubr.f32.gmra.mrb[0].mxu0 %v1088
    %v1189 = vpop.f32.mrb[0].mxu0
    %v1190 = vadd.f32 %v1053, %v1189
    %v1191 = vpop.f32.mrb[0].mxu0
    %v1192 = vadd.f32 %v1055, %v1191
    %1193 = vmatprep.mubr.f32.mxu0 0.0
    %1194 = vmatmul.mubr.f32.gmra.mrb[0].mxu0 %v1091
    %v1195 = vpop.f32.mrb[0].mxu0
    %v1196 = vadd.f32 %v1059, %v1195
    %v1197 = vpop.f32.mrb[0].mxu0
    %v1198 = vadd.f32 %v1061, %v1197
    %1199 = vmatprep.mubr.f32.mxu0 0.0
    %1200 = vmatmul.mubr.f32.gmra.mrb[0].mxu0 %v1094
    %v1201 = vpop.f32.mrb[0].mxu0
    %v1202 = vadd.f32 %v1065, %v1201
    %v1203 = vpop.f32.mrb[0].mxu0
    %v1204 = vadd.f32 %v1067, %v1203
    %1205 = vmatprep.mubr.f32.mxu0 0.0
    %1206 = vmatmul.mubr.f32.gmra.mrb[0].mxu0 %v1097
    %v1207 = vpop.f32.mrb[0].mxu0
    %v1208 = vadd.f32 %v1071, %v1207
    %v1209 = vpop.f32.mrb[0].mxu0
    %v1210 = vadd.f32 %v1073, %v1209
    %1211 = vdwg.mxu0
    %s1212 = scalar_lea.vmem %s3, 128
    %v1213 = vld [vmem:[%s1212] sm:$0xff]
    %v1214 = vld [vmem:[%s1212 + $0x8] sm:$0xff]
    %v1215 = vld [vmem:[%s1212 + $0x10] sm:$0xff]
    %v1216 = vld [vmem:[%s1212 + $0x18] sm:$0xff]
    %v1217 = vld [vmem:[%s1212 + $0x20] sm:$0xff]
    %v1218 = vld [vmem:[%s1212 + $0x28] sm:$0xff]
    %v1219 = vld [vmem:[%s1212 + $0x30] sm:$0xff]
    %v1220 = vld [vmem:[%s1212 + $0x38] sm:$0xff]
    %v1222 = vsel %vm937, %v1213, 0
    %v1225 = vsel %vm937, %v1214, 0
    %v1228 = vsel %vm937, %v1215, 0
    %v1231 = vsel %vm937, %v1216, 0
    %v1234 = vsel %vm937, %v1217, 0
    %v1237 = vsel %vm937, %v1218, 0
    %v1240 = vsel %vm937, %v1219, 0
    %v1243 = vsel %vm937, %v1220, 0
    %1245 = vmatprep.subr.mxu0 %v916
    %1246 = vmatpush1.msra.mxu0 %v912
    %1247 = vmatprep.subr.mxu0 %v917
    %1248 = vmatpush1.msra.mxu0 %v913
    %1249 = vmatprep.subr.mxu0 %v918
    %1250 = vmatpush1.msra.mxu0 %v914
    %1251 = vmatprep.subr.mxu0 %v919
    %1252 = vmatpush1.msra.mxu0 %v915
    %1253 = vmatprep.subr.mxu0 0.0
    %1254 = vmatpush1.msra.mxu0 0.0
    %1255 = vmatprep.subr.mxu0 0.0
    %1256 = vmatpush1.msra.mxu0 0.0
    %1257 = vmatprep.subr.mxu0 0.0
    %1258 = vmatpush1.msra.mxu0 0.0
    %1259 = vmatprep.subr.mxu0 0.0
    %1260 = vmatpush1.msra.mxu0 0.0
    %1261 = vmatprep.subr.mxu0 0.0
    %1262 = vmatpush1.msra.mxu0 0.0
    %1263 = vmatprep.subr.mxu0 0.0
    %1264 = vmatpush1.msra.mxu0 0.0
    %1265 = vmatprep.subr.mxu0 0.0
    %1266 = vmatpush1.msra.mxu0 0.0
    %1267 = vmatprep.subr.mxu0 0.0
    %1268 = vmatpush1.msra.mxu0 0.0
    %1269 = vmatprep.subr.mxu0 0.0
    %1270 = vmatpush1.msra.mxu0 0.0
    %1271 = vmatprep.subr.mxu0 0.0
    %1272 = vmatpush1.msra.mxu0 0.0
    %1273 = vmatprep.subr.mxu0 0.0
    %1274 = vmatpush1.msra.mxu0 0.0
    %1275 = vmatprep.subr.mxu0 0.0
    %1276 = vmatpush1.msra.mxu0 0.0
    %1277 = vmatprep.subr.mxu0 0.0
    %1278 = vmatpush1.msra.mxu0 0.0
    %1279 = vmatprep.subr.mxu0 0.0
    %1280 = vmatpush1.msra.mxu0 0.0
    %1281 = vmatprep.subr.mxu0 0.0
    %1282 = vmatpush1.msra.mxu0 0.0
    %1283 = vmatprep.subr.mxu0 0.0
    %1284 = vmatpush1.msra.mxu0 0.0
    %1285 = vmatprep.subr.mxu0 0.0
    %1286 = vmatpush1.msra.mxu0 0.0
    %1287 = vmatprep.subr.mxu0 0.0
    %1288 = vmatpush1.msra.mxu0 0.0
    %1289 = vmatprep.subr.mxu0 0.0
    %1290 = vmatpush1.msra.mxu0 0.0
    %1291 = vmatprep.subr.mxu0 0.0
    %1292 = vmatpush1.msra.mxu0 0.0
    %1293 = vmatprep.subr.mxu0 0.0
    %1294 = vmatpush1.msra.mxu0 0.0
    %1295 = vmatprep.subr.mxu0 0.0
    %1296 = vmatpush1.msra.mxu0 0.0
    %1297 = vmatprep.subr.mxu0 0.0
    %1298 = vmatpush1.msra.mxu0 0.0
    %1299 = vmatprep.subr.mxu0 0.0
    %1300 = vmatpush1.msra.mxu0 0.0
    %1301 = vmatprep.subr.mxu0 0.0
    %1302 = vmatpush1.msra.mxu0 0.0
    %1303 = vmatprep.subr.mxu0 0.0
    %1304 = vmatpush1.msra.mxu0 0.0
    %1305 = vmatprep.subr.mxu0 0.0
    %1306 = vmatpush1.msra.mxu0 0.0
    %1307 = vmatprep.subr.mxu0 0.0
    %1308 = vmatpush1.msra.mxu0 0.0
    %1309 = vmatprep.mubr.f32.mxu0 0.0
    %1310 = vmatmul.mubr.f32.gmra.mrb[0].mxu0 %v1222
    %v1311 = vpop.f32.mrb[0].mxu0
    %v1312 = vadd.f32 0.0, %v1311
    %v1313 = vpop.f32.mrb[0].mxu0
    %v1314 = vadd.f32 0.0, %v1313
    %1315 = vmatprep.mubr.f32.mxu0 0.0
    %1316 = vmatmul.mubr.f32.gmra.mrb[0].mxu0 %v1225
    %v1317 = vpop.f32.mrb[0].mxu0
    %v1318 = vadd.f32 0.0, %v1317
    %v1319 = vpop.f32.mrb[0].mxu0
    %v1320 = vadd.f32 0.0, %v1319
    %1321 = vmatprep.mubr.f32.mxu0 0.0
    %1322 = vmatmul.mubr.f32.gmra.mrb[0].mxu0 %v1228
    %v1323 = vpop.f32.mrb[0].mxu0
    %v1324 = vadd.f32 0.0, %v1323
    %v1325 = vpop.f32.mrb[0].mxu0
    %v1326 = vadd.f32 0.0, %v1325
    %1327 = vmatprep.mubr.f32.mxu0 0.0
    %1328 = vmatmul.mubr.f32.gmra.mrb[0].mxu0 %v1231
    %v1329 = vpop.f32.mrb[0].mxu0
    %v1330 = vadd.f32 0.0, %v1329
    %v1331 = vpop.f32.mrb[0].mxu0
    %v1332 = vadd.f32 0.0, %v1331
    %1333 = vmatprep.mubr.f32.mxu0 0.0
    %1334 = vmatmul.mubr.f32.gmra.mrb[0].mxu0 %v1234
    %v1335 = vpop.f32.mrb[0].mxu0
    %v1336 = vadd.f32 0.0, %v1335
    %v1337 = vpop.f32.mrb[0].mxu0
    %v1338 = vadd.f32 0.0, %v1337
    %1339 = vmatprep.mubr.f32.mxu0 0.0
    %1340 = vmatmul.mubr.f32.gmra.mrb[0].mxu0 %v1237
    %v1341 = vpop.f32.mrb[0].mxu0
    %v1342 = vadd.f32 0.0, %v1341
    %v1343 = vpop.f32.mrb[0].mxu0
    %v1344 = vadd.f32 0.0, %v1343
    %1345 = vmatprep.mubr.f32.mxu0 0.0
    %1346 = vmatmul.mubr.f32.gmra.mrb[0].mxu0 %v1240
    %v1347 = vpop.f32.mrb[0].mxu0
    %v1348 = vadd.f32 0.0, %v1347
    %v1349 = vpop.f32.mrb[0].mxu0
    %v1350 = vadd.f32 0.0, %v1349
    %1351 = vmatprep.mubr.f32.mxu0 0.0
    %1352 = vmatmul.mubr.f32.gmra.mrb[0].mxu0 %v1243
    %v1353 = vpop.f32.mrb[0].mxu0
    %v1354 = vadd.f32 0.0, %v1353
    %v1355 = vpop.f32.mrb[0].mxu0
    %v1356 = vadd.f32 0.0, %v1355
    %1357 = vdwg.mxu0
    %v1358 = vadd.f32 %v1166, %v1312
    %v1359 = vadd.f32 %v1168, %v1314
    %v1360 = vadd.f32 %v1172, %v1318
    %v1361 = vadd.f32 %v1174, %v1320
    %v1362 = vadd.f32 %v1178, %v1324
    %v1363 = vadd.f32 %v1180, %v1326
    %v1364 = vadd.f32 %v1184, %v1330
    %v1365 = vadd.f32 %v1186, %v1332
    %v1366 = vadd.f32 %v1190, %v1336
    %v1367 = vadd.f32 %v1192, %v1338
    %v1368 = vadd.f32 %v1196, %v1342
    %v1369 = vadd.f32 %v1198, %v1344
    %v1370 = vadd.f32 %v1202, %v1348
    %v1371 = vadd.f32 %v1204, %v1350
    %v1372 = vadd.f32 %v1208, %v1354
    %v1373 = vadd.f32 %v1210, %v1356
    %v1374 = vadd.f32 %v1358, %v1360
    %v1375 = vadd.f32 %v1374, %v1362
    %v1376 = vadd.f32 %v1375, %v1364
    %v1377 = vadd.f32 %v1376, %v1366
    %v1378 = vadd.f32 %v1377, %v1368
    %v1379 = vadd.f32 %v1378, %v1370
    %v1380 = vadd.f32 %v1379, %v1372
    %v1381 = vrot.slane %v1380, 4
    %v1382 = vadd.f32 %v1380, %v1381
    %v1383 = vrot.slane %v1382, 2
    %v1384 = vadd.f32 %v1382, %v1383
    %v1385 = vrot.slane %v1384, 1
    %v1386 = vadd.f32 %v1384, %v1385
    %v1387 = vadd.f32 %v1359, %v1361
    %v1388 = vadd.f32 %v1387, %v1363
    %v1389 = vadd.f32 %v1388, %v1365
    %v1390 = vadd.f32 %v1389, %v1367
    %v1391 = vadd.f32 %v1390, %v1369
    %v1392 = vadd.f32 %v1391, %v1371
    %v1393 = vadd.f32 %v1392, %v1373
    %v1394 = vrot.slane %v1393, 4
    %v1395 = vadd.f32 %v1393, %v1394
    %v1396 = vrot.slane %v1395, 2
    %v1397 = vadd.f32 %v1395, %v1396
    %v1398 = vrot.slane %v1397, 1
    %v1399 = vadd.f32 %v1397, %v1398
    %v1400 = vadd.f32 %v1386, %v1399
    %v1401 = vmul.f32 %v1400, 0.0078125
    %v1402 = vlaneseq
    %v1403 = vshrl.u32 %v1402, 7
    %v1404 = vsub.s32 0, %v1403
    %v1405 = vrot.slane %v1401, %v1404
    %v1406 = vsub.f32 %v1358, %v1405
    %v1407 = vsub.f32 %v1359, %v1405
    %v1408 = vsub.f32 %v1360, %v1405
    %v1409 = vsub.f32 %v1361, %v1405
    %v1410 = vsub.f32 %v1362, %v1405
    %v1411 = vsub.f32 %v1363, %v1405
    %v1412 = vsub.f32 %v1364, %v1405
    %v1413 = vsub.f32 %v1365, %v1405
    %v1414 = vsub.f32 %v1366, %v1405
    %v1415 = vsub.f32 %v1367, %v1405
    %v1416 = vsub.f32 %v1368, %v1405
    %v1417 = vsub.f32 %v1369, %v1405
    %v1418 = vsub.f32 %v1370, %v1405
    %v1419 = vsub.f32 %v1371, %v1405
    %v1420 = vsub.f32 %v1372, %v1405
    %v1421 = vsub.f32 %v1373, %v1405
    %v1422 = vmul.f32 %v1406, %v1406
    %v1423 = vmul.f32 %v1407, %v1407
    %v1424 = vmul.f32 %v1408, %v1408
    %v1425 = vmul.f32 %v1409, %v1409
    %v1426 = vmul.f32 %v1410, %v1410
    %v1427 = vmul.f32 %v1411, %v1411
    %v1428 = vmul.f32 %v1412, %v1412
    %v1429 = vmul.f32 %v1413, %v1413
    %v1430 = vmul.f32 %v1414, %v1414
    %v1431 = vmul.f32 %v1415, %v1415
    %v1432 = vmul.f32 %v1416, %v1416
    %v1433 = vmul.f32 %v1417, %v1417
    %v1434 = vmul.f32 %v1418, %v1418
    %v1435 = vmul.f32 %v1419, %v1419
    %v1436 = vmul.f32 %v1420, %v1420
    %v1437 = vmul.f32 %v1421, %v1421
    %v1438 = vadd.f32 %v1422, %v1424
    %v1439 = vadd.f32 %v1438, %v1426
    %v1440 = vadd.f32 %v1439, %v1428
    %v1441 = vadd.f32 %v1440, %v1430
    %v1442 = vadd.f32 %v1441, %v1432
    %v1443 = vadd.f32 %v1442, %v1434
    %v1444 = vadd.f32 %v1443, %v1436
    %v1445 = vrot.slane %v1444, 4
    %v1446 = vadd.f32 %v1444, %v1445
    %v1447 = vrot.slane %v1446, 2
    %v1448 = vadd.f32 %v1446, %v1447
    %v1449 = vrot.slane %v1448, 1
    %v1450 = vadd.f32 %v1448, %v1449
    %v1451 = vadd.f32 %v1423, %v1425
    %v1452 = vadd.f32 %v1451, %v1427
    %v1453 = vadd.f32 %v1452, %v1429
    %v1454 = vadd.f32 %v1453, %v1431
    %v1455 = vadd.f32 %v1454, %v1433
    %v1456 = vadd.f32 %v1455, %v1435
    %v1457 = vadd.f32 %v1456, %v1437
    %v1458 = vrot.slane %v1457, 4
    %v1459 = vadd.f32 %v1457, %v1458
    %v1460 = vrot.slane %v1459, 2
    %v1461 = vadd.f32 %v1459, %v1460
    %v1462 = vrot.slane %v1461, 1
    %v1463 = vadd.f32 %v1461, %v1462
    %v1464 = vadd.f32 %v1450, %v1463
    %v1465 = vmul.f32 %v1464, 0.0078125
    %v1466 = vadd.f32 %v1465, 1e-05
    %v1467 = vrsqrt.pop %v1466
    %v1468 = vlaneseq
    %v1469 = vshrl.u32 %v1468, 7
    %v1470 = vsub.s32 0, %v1469
    %v1471 = vrot.slane %v1467, %v1470
    %v1472 = vmul.f32 %v1406, %v1471
    %v1473 = vmul.f32 %v1407, %v1471
    %v1474 = vmul.f32 %v1408, %v1471
    %v1475 = vmul.f32 %v1409, %v1471
    %v1476 = vmul.f32 %v1410, %v1471
    %v1477 = vmul.f32 %v1411, %v1471
    %v1478 = vmul.f32 %v1412, %v1471
    %v1479 = vmul.f32 %v1413, %v1471
    %v1480 = vmul.f32 %v1414, %v1471
    %v1481 = vmul.f32 %v1415, %v1471
    %v1482 = vmul.f32 %v1416, %v1471
    %v1483 = vmul.f32 %v1417, %v1471
    %v1484 = vmul.f32 %v1418, %v1471
    %v1485 = vmul.f32 %v1419, %v1471
    %v1486 = vmul.f32 %v1420, %v1471
    %v1487 = vmul.f32 %v1421, %v1471
    %v1488 = vmax.f32 %v1472, 0.0
    %v1489 = vmax.f32 %v1473, 0.0
    %v1490 = vmax.f32 %v1474, 0.0
    %v1491 = vmax.f32 %v1475, 0.0
    %v1492 = vmax.f32 %v1476, 0.0
    %v1493 = vmax.f32 %v1477, 0.0
    %v1494 = vmax.f32 %v1478, 0.0
    %v1495 = vmax.f32 %v1479, 0.0
    %v1496 = vmax.f32 %v1480, 0.0
    %v1497 = vmax.f32 %v1481, 0.0
    %v1498 = vmax.f32 %v1482, 0.0
    %v1499 = vmax.f32 %v1483, 0.0
    %v1500 = vmax.f32 %v1484, 0.0
    %v1501 = vmax.f32 %v1485, 0.0
    %v1502 = vmax.f32 %v1486, 0.0
    %v1503 = vmax.f32 %v1487, 0.0
    %v1504 = vmul.f32 %v1488, %v57
    %v1505 = vmul.f32 %v1489, %v58
    %v1506 = vmul.f32 %v1490, %v57
    %v1507 = vmul.f32 %v1491, %v58
    %v1508 = vmul.f32 %v1492, %v57
    %v1509 = vmul.f32 %v1493, %v58
    %v1510 = vmul.f32 %v1494, %v57
    %v1511 = vmul.f32 %v1495, %v58
    %v1512 = vmul.f32 %v1496, %v57
    %v1513 = vmul.f32 %v1497, %v58
    %v1514 = vmul.f32 %v1498, %v57
    %v1515 = vmul.f32 %v1499, %v58
    %v1516 = vmul.f32 %v1500, %v57
    %v1517 = vmul.f32 %v1501, %v58
    %v1518 = vmul.f32 %v1502, %v57
    %v1519 = vmul.f32 %v1503, %v58
    %v1521 = vrot.slane %v1504, 1
    %v1523 = vrot.slane %v1504, 2
    %v1525 = vrot.slane %v1504, 3
    %v1527 = vrot.slane %v1504, 4
    %v1529 = vrot.slane %v1504, 5
    %v1531 = vrot.slane %v1504, 6
    %v1533 = vrot.slane %v1504, 7
    %v1536 = vrot.slane %v1506, 1
    %v1538 = vrot.slane %v1506, 2
    %v1540 = vrot.slane %v1506, 3
    %v1542 = vrot.slane %v1506, 4
    %v1544 = vrot.slane %v1506, 5
    %v1546 = vrot.slane %v1506, 6
    %v1548 = vrot.slane %v1506, 7
    %v1551 = vrot.slane %v1508, 1
    %v1553 = vrot.slane %v1508, 2
    %v1555 = vrot.slane %v1508, 3
    %v1557 = vrot.slane %v1508, 4
    %v1559 = vrot.slane %v1508, 5
    %v1561 = vrot.slane %v1508, 6
    %v1563 = vrot.slane %v1508, 7
    %v1566 = vrot.slane %v1510, 1
    %v1568 = vrot.slane %v1510, 2
    %v1570 = vrot.slane %v1510, 3
    %v1572 = vrot.slane %v1510, 4
    %v1574 = vrot.slane %v1510, 5
    %v1576 = vrot.slane %v1510, 6
    %v1578 = vrot.slane %v1510, 7
    %v1581 = vrot.slane %v1512, 1
    %v1583 = vrot.slane %v1512, 2
    %v1585 = vrot.slane %v1512, 3
    %v1587 = vrot.slane %v1512, 4
    %v1589 = vrot.slane %v1512, 5
    %v1591 = vrot.slane %v1512, 6
    %v1593 = vrot.slane %v1512, 7
    %v1596 = vrot.slane %v1514, 1
    %v1598 = vrot.slane %v1514, 2
    %v1600 = vrot.slane %v1514, 3
    %v1602 = vrot.slane %v1514, 4
    %v1604 = vrot.slane %v1514, 5
    %v1606 = vrot.slane %v1514, 6
    %v1608 = vrot.slane %v1514, 7
    %v1611 = vrot.slane %v1516, 1
    %v1613 = vrot.slane %v1516, 2
    %v1615 = vrot.slane %v1516, 3
    %v1617 = vrot.slane %v1516, 4
    %v1619 = vrot.slane %v1516, 5
    %v1621 = vrot.slane %v1516, 6
    %v1623 = vrot.slane %v1516, 7
    %v1626 = vrot.slane %v1518, 1
    %v1628 = vrot.slane %v1518, 2
    %v1630 = vrot.slane %v1518, 3
    %v1632 = vrot.slane %v1518, 4
    %v1634 = vrot.slane %v1518, 5
    %v1636 = vrot.slane %v1518, 6
    %v1638 = vrot.slane %v1518, 7
    %v1641 = vrot.slane %v1505, 1
    %v1642 = vrot.slane %v1505, 2
    %v1643 = vrot.slane %v1505, 3
    %v1644 = vrot.slane %v1505, 4
    %v1645 = vrot.slane %v1505, 5
    %v1646 = vrot.slane %v1505, 6
    %v1647 = vrot.slane %v1505, 7
    %v1649 = vrot.slane %v1507, 1
    %v1650 = vrot.slane %v1507, 2
    %v1651 = vrot.slane %v1507, 3
    %v1652 = vrot.slane %v1507, 4
    %v1653 = vrot.slane %v1507, 5
    %v1654 = vrot.slane %v1507, 6
    %v1655 = vrot.slane %v1507, 7
    %v1657 = vrot.slane %v1509, 1
    %v1658 = vrot.slane %v1509, 2
    %v1659 = vrot.slane %v1509, 3
    %v1660 = vrot.slane %v1509, 4
    %v1661 = vrot.slane %v1509, 5
    %v1662 = vrot.slane %v1509, 6
    %v1663 = vrot.slane %v1509, 7
    %v1665 = vrot.slane %v1511, 1
    %v1666 = vrot.slane %v1511, 2
    %v1667 = vrot.slane %v1511, 3
    %v1668 = vrot.slane %v1511, 4
    %v1669 = vrot.slane %v1511, 5
    %v1670 = vrot.slane %v1511, 6
    %v1671 = vrot.slane %v1511, 7
    %v1673 = vrot.slane %v1513, 1
    %v1674 = vrot.slane %v1513, 2
    %v1675 = vrot.slane %v1513, 3
    %v1676 = vrot.slane %v1513, 4
    %v1677 = vrot.slane %v1513, 5
    %v1678 = vrot.slane %v1513, 6
    %v1679 = vrot.slane %v1513, 7
    %v1681 = vrot.slane %v1515, 1
    %v1682 = vrot.slane %v1515, 2
    %v1683 = vrot.slane %v1515, 3
    %v1684 = vrot.slane %v1515, 4
    %v1685 = vrot.slane %v1515, 5
    %v1686 = vrot.slane %v1515, 6
    %v1687 = vrot.slane %v1515, 7
    %v1689 = vrot.slane %v1517, 1
    %v1690 = vrot.slane %v1517, 2
    %v1691 = vrot.slane %v1517, 3
    %v1692 = vrot.slane %v1517, 4
    %v1693 = vrot.slane %v1517, 5
    %v1694 = vrot.slane %v1517, 6
    %v1695 = vrot.slane %v1517, 7
    %v1697 = vrot.slane %v1519, 1
    %v1698 = vrot.slane %v1519, 2
    %v1699 = vrot.slane %v1519, 3
    %v1700 = vrot.slane %v1519, 4
    %v1701 = vrot.slane %v1519, 5
    %v1702 = vrot.slane %v1519, 6
    %v1703 = vrot.slane %v1519, 7
    %v1704 = vrot.slane %v1641, 7
    %v1705 = vrot.slane %v1642, 7
    %v1706 = vrot.slane %v1643, 7
    %v1707 = vrot.slane %v1644, 7
    %v1708 = vrot.slane %v1645, 7
    %v1709 = vrot.slane %v1646, 7
    %v1710 = vrot.slane %v1647, 7
    %v1711 = vrot.slane %v1649, 7
    %v1712 = vrot.slane %v1650, 7
    %v1713 = vrot.slane %v1651, 7
    %v1714 = vrot.slane %v1652, 7
    %v1715 = vrot.slane %v1653, 7
    %v1716 = vrot.slane %v1654, 7
    %v1717 = vrot.slane %v1655, 7
    %v1718 = vrot.slane %v1657, 7
    %v1719 = vrot.slane %v1658, 7
    %v1720 = vrot.slane %v1659, 7
    %v1721 = vrot.slane %v1660, 7
    %v1722 = vrot.slane %v1661, 7
    %v1723 = vrot.slane %v1662, 7
    %v1724 = vrot.slane %v1663, 7
    %v1725 = vrot.slane %v1665, 7
    %v1726 = vrot.slane %v1666, 7
    %v1727 = vrot.slane %v1667, 7
    %v1728 = vrot.slane %v1668, 7
    %v1729 = vrot.slane %v1669, 7
    %v1730 = vrot.slane %v1670, 7
    %v1731 = vrot.slane %v1671, 7
    %v1732 = vrot.slane %v1673, 7
    %v1733 = vrot.slane %v1674, 7
    %v1734 = vrot.slane %v1675, 7
    %v1735 = vrot.slane %v1676, 7
    %v1736 = vrot.slane %v1677, 7
    %v1737 = vrot.slane %v1678, 7
    %v1738 = vrot.slane %v1679, 7
    %v1739 = vrot.slane %v1681, 7
    %v1740 = vrot.slane %v1682, 7
    %v1741 = vrot.slane %v1683, 7
    %v1742 = vrot.slane %v1684, 7
    %v1743 = vrot.slane %v1685, 7
    %v1744 = vrot.slane %v1686, 7
    %v1745 = vrot.slane %v1687, 7
    %v1746 = vrot.slane %v1689, 7
    %v1747 = vrot.slane %v1690, 7
    %v1748 = vrot.slane %v1691, 7
    %v1749 = vrot.slane %v1692, 7
    %v1750 = vrot.slane %v1693, 7
    %v1751 = vrot.slane %v1694, 7
    %v1752 = vrot.slane %v1695, 7
    %v1753 = vrot.slane %v1697, 7
    %v1754 = vrot.slane %v1698, 7
    %v1755 = vrot.slane %v1699, 7
    %v1756 = vrot.slane %v1700, 7
    %v1757 = vrot.slane %v1701, 7
    %v1758 = vrot.slane %v1702, 7
    %v1759 = vrot.slane %v1703, 7
    %vm1824 = vcmask 1040384
    %v1825 = vsel %vm1824, %v1504, %v1647
    %v1826 = vsel %vm1824, %v1521, %v1704
    %v1827 = vsel %vm1824, %v1523, %v1705
    %v1828 = vsel %vm1824, %v1525, %v1706
    %v1829 = vsel %vm1824, %v1527, %v1707
    %v1830 = vsel %vm1824, %v1529, %v1708
    %v1831 = vsel %vm1824, %v1531, %v1709
    %v1832 = vsel %vm1824, %v1533, %v1710
    %v1833 = vsel %vm1824, %v1506, %v1655
    %v1834 = vsel %vm1824, %v1536, %v1711
    %v1835 = vsel %vm1824, %v1538, %v1712
    %v1836 = vsel %vm1824, %v1540, %v1713
    %v1837 = vsel %vm1824, %v1542, %v1714
    %v1838 = vsel %vm1824, %v1544, %v1715
    %v1839 = vsel %vm1824, %v1546, %v1716
    %v1840 = vsel %vm1824, %v1548, %v1717
    %v1841 = vsel %vm1824, %v1508, %v1663
    %v1842 = vsel %vm1824, %v1551, %v1718
    %v1843 = vsel %vm1824, %v1553, %v1719
    %v1844 = vsel %vm1824, %v1555, %v1720
    %v1845 = vsel %vm1824, %v1557, %v1721
    %v1846 = vsel %vm1824, %v1559, %v1722
    %v1847 = vsel %vm1824, %v1561, %v1723
    %v1848 = vsel %vm1824, %v1563, %v1724
    %v1849 = vsel %vm1824, %v1510, %v1671
    %v1850 = vsel %vm1824, %v1566, %v1725
    %v1851 = vsel %vm1824, %v1568, %v1726
    %v1852 = vsel %vm1824, %v1570, %v1727
    %v1853 = vsel %vm1824, %v1572, %v1728
    %v1854 = vsel %vm1824, %v1574, %v1729
    %v1855 = vsel %vm1824, %v1576, %v1730
    %v1856 = vsel %vm1824, %v1578, %v1731
    %v1857 = vsel %vm1824, %v1512, %v1679
    %v1858 = vsel %vm1824, %v1581, %v1732
    %v1859 = vsel %vm1824, %v1583, %v1733
    %v1860 = vsel %vm1824, %v1585, %v1734
    %v1861 = vsel %vm1824, %v1587, %v1735
    %v1862 = vsel %vm1824, %v1589, %v1736
    %v1863 = vsel %vm1824, %v1591, %v1737
    %v1864 = vsel %vm1824, %v1593, %v1738
    %v1865 = vsel %vm1824, %v1514, %v1687
    %v1866 = vsel %vm1824, %v1596, %v1739
    %v1867 = vsel %vm1824, %v1598, %v1740
    %v1868 = vsel %vm1824, %v1600, %v1741
    %v1869 = vsel %vm1824, %v1602, %v1742
    %v1870 = vsel %vm1824, %v1604, %v1743
    %v1871 = vsel %vm1824, %v1606, %v1744
    %v1872 = vsel %vm1824, %v1608, %v1745
    %v1873 = vsel %vm1824, %v1516, %v1695
    %v1874 = vsel %vm1824, %v1611, %v1746
    %v1875 = vsel %vm1824, %v1613, %v1747
    %v1876 = vsel %vm1824, %v1615, %v1748
    %v1877 = vsel %vm1824, %v1617, %v1749
    %v1878 = vsel %vm1824, %v1619, %v1750
    %v1879 = vsel %vm1824, %v1621, %v1751
    %v1880 = vsel %vm1824, %v1623, %v1752
    %v1881 = vsel %vm1824, %v1518, %v1703
    %v1882 = vsel %vm1824, %v1626, %v1753
    %v1883 = vsel %vm1824, %v1628, %v1754
    %v1884 = vsel %vm1824, %v1630, %v1755
    %v1885 = vsel %vm1824, %v1632, %v1756
    %v1886 = vsel %vm1824, %v1634, %v1757
    %v1887 = vsel %vm1824, %v1636, %v1758
    %v1888 = vsel %vm1824, %v1638, %v1759
    %v1889 = vpack.c.bf16 %v1825, %v1825
    %v1890 = vpack.c.bf16 %v1826, %v1826
    %v1891 = vpack.c.bf16 %v1827, %v1827
    %v1892 = vpack.c.bf16 %v1828, %v1828
    %v1893 = vpack.c.bf16 %v1829, %v1829
    %v1894 = vpack.c.bf16 %v1830, %v1830
    %v1895 = vpack.c.bf16 %v1831, %v1831
    %v1896 = vpack.c.bf16 %v1832, %v1832
    %v1897 = vpack.c.bf16 %v1833, %v1833
    %v1898 = vpack.c.bf16 %v1834, %v1834
    %v1899 = vpack.c.bf16 %v1835, %v1835
    %v1900 = vpack.c.bf16 %v1836, %v1836
    %v1901 = vpack.c.bf16 %v1837, %v1837
    %v1902 = vpack.c.bf16 %v1838, %v1838
    %v1903 = vpack.c.bf16 %v1839, %v1839
    %v1904 = vpack.c.bf16 %v1840, %v1840
    %v1905 = vpack.c.bf16 %v1841, %v1841
    %v1906 = vpack.c.bf16 %v1842, %v1842
    %v1907 = vpack.c.bf16 %v1843, %v1843
    %v1908 = vpack.c.bf16 %v1844, %v1844
    %v1909 = vpack.c.bf16 %v1845, %v1845
    %v1910 = vpack.c.bf16 %v1846, %v1846
    %v1911 = vpack.c.bf16 %v1847, %v1847
    %v1912 = vpack.c.bf16 %v1848, %v1848
    %v1913 = vpack.c.bf16 %v1849, %v1849
    %v1914 = vpack.c.bf16 %v1850, %v1850
    %v1915 = vpack.c.bf16 %v1851, %v1851
    %v1916 = vpack.c.bf16 %v1852, %v1852
    %v1917 = vpack.c.bf16 %v1853, %v1853
    %v1918 = vpack.c.bf16 %v1854, %v1854
    %v1919 = vpack.c.bf16 %v1855, %v1855
    %v1920 = vpack.c.bf16 %v1856, %v1856
    %v1921 = vpack.c.bf16 %v1857, %v1857
    %v1922 = vpack.c.bf16 %v1858, %v1858
    %v1923 = vpack.c.bf16 %v1859, %v1859
    %v1924 = vpack.c.bf16 %v1860, %v1860
    %v1925 = vpack.c.bf16 %v1861, %v1861
    %v1926 = vpack.c.bf16 %v1862, %v1862
    %v1927 = vpack.c.bf16 %v1863, %v1863
    %v1928 = vpack.c.bf16 %v1864, %v1864
    %v1929 = vpack.c.bf16 %v1865, %v1865
    %v1930 = vpack.c.bf16 %v1866, %v1866
    %v1931 = vpack.c.bf16 %v1867, %v1867
    %v1932 = vpack.c.bf16 %v1868, %v1868
    %v1933 = vpack.c.bf16 %v1869, %v1869
    %v1934 = vpack.c.bf16 %v1870, %v1870
    %v1935 = vpack.c.bf16 %v1871, %v1871
    %v1936 = vpack.c.bf16 %v1872, %v1872
    %v1937 = vpack.c.bf16 %v1873, %v1873
    %v1938 = vpack.c.bf16 %v1874, %v1874
    %v1939 = vpack.c.bf16 %v1875, %v1875
    %v1940 = vpack.c.bf16 %v1876, %v1876
    %v1941 = vpack.c.bf16 %v1877, %v1877
    %v1942 = vpack.c.bf16 %v1878, %v1878
    %v1943 = vpack.c.bf16 %v1879, %v1879
    %v1944 = vpack.c.bf16 %v1880, %v1880
    %v1945 = vpack.c.bf16 %v1881, %v1881
    %v1946 = vpack.c.bf16 %v1882, %v1882
    %v1947 = vpack.c.bf16 %v1883, %v1883
    %v1948 = vpack.c.bf16 %v1884, %v1884
    %v1949 = vpack.c.bf16 %v1885, %v1885
    %v1950 = vpack.c.bf16 %v1886, %v1886
    %v1951 = vpack.c.bf16 %v1887, %v1887
    %v1952 = vpack.c.bf16 %v1888, %v1888
    %v1953 = vld [vmem:[%s4] sm:$0xf]
    %v1954 = vld [vmem:[%s4 + $0x4] sm:$0xf]
    %v1955 = vld [vmem:[%s4 + $0x8] sm:$0xf]
    %v1956 = vld [vmem:[%s4 + $0xc] sm:$0xf]
    %v1957 = vld [vmem:[%s4 + $0x10] sm:$0xf]
    %v1958 = vld [vmem:[%s4 + $0x14] sm:$0xf]
    %v1959 = vld [vmem:[%s4 + $0x18] sm:$0xf]
    %v1960 = vld [vmem:[%s4 + $0x1c] sm:$0xf]
    %v1961 = vld [vmem:[%s4 + $0x20] sm:$0xf]
    %v1962 = vld [vmem:[%s4 + $0x24] sm:$0xf]
    %v1963 = vld [vmem:[%s4 + $0x28] sm:$0xf]
    %v1964 = vld [vmem:[%s4 + $0x2c] sm:$0xf]
    %v1965 = vld [vmem:[%s4 + $0x30] sm:$0xf]
    %v1966 = vld [vmem:[%s4 + $0x34] sm:$0xf]
    %v1967 = vld [vmem:[%s4 + $0x38] sm:$0xf]
    %v1968 = vld [vmem:[%s4 + $0x3c] sm:$0xf]
    %v1969 = vld [vmem:[%s4 + $0x40] sm:$0xf]
    %v1970 = vld [vmem:[%s4 + $0x44] sm:$0xf]
    %v1971 = vld [vmem:[%s4 + $0x48] sm:$0xf]
    %v1972 = vld [vmem:[%s4 + $0x4c] sm:$0xf]
    %v1973 = vld [vmem:[%s4 + $0x50] sm:$0xf]
    %v1974 = vld [vmem:[%s4 + $0x54] sm:$0xf]
    %v1975 = vld [vmem:[%s4 + $0x58] sm:$0xf]
    %v1976 = vld [vmem:[%s4 + $0x5c] sm:$0xf]
    %v1977 = vld [vmem:[%s4 + $0x60] sm:$0xf]
    %v1978 = vld [vmem:[%s4 + $0x64] sm:$0xf]
    %v1979 = vld [vmem:[%s4 + $0x68] sm:$0xf]
    %v1980 = vld [vmem:[%s4 + $0x6c] sm:$0xf]
    %v1981 = vld [vmem:[%s4 + $0x70] sm:$0xf]
    %v1982 = vld [vmem:[%s4 + $0x74] sm:$0xf]
    %v1983 = vld [vmem:[%s4 + $0x78] sm:$0xf]
    %v1984 = vld [vmem:[%s4 + $0x7c] sm:$0xf]
    %v1985 = vld [vmem:[%s4 + $0x80] sm:$0xf]
    %v1986 = vld [vmem:[%s4 + $0x84] sm:$0xf]
    %v1987 = vld [vmem:[%s4 + $0x88] sm:$0xf]
    %v1988 = vld [vmem:[%s4 + $0x8c] sm:$0xf]
    %v1989 = vld [vmem:[%s4 + $0x90] sm:$0xf]
    %v1990 = vld [vmem:[%s4 + $0x94] sm:$0xf]
    %v1991 = vld [vmem:[%s4 + $0x98] sm:$0xf]
    %v1992 = vld [vmem:[%s4 + $0x9c] sm:$0xf]
    %v1993 = vld [vmem:[%s4 + $0xa0] sm:$0xf]
    %v1994 = vld [vmem:[%s4 + $0xa4] sm:$0xf]
    %v1995 = vld [vmem:[%s4 + $0xa8] sm:$0xf]
    %v1996 = vld [vmem:[%s4 + $0xac] sm:$0xf]
    %v1997 = vld [vmem:[%s4 + $0xb0] sm:$0xf]
    %v1998 = vld [vmem:[%s4 + $0xb4] sm:$0xf]
    %v1999 = vld [vmem:[%s4 + $0xb8] sm:$0xf]
    %v2000 = vld [vmem:[%s4 + $0xbc] sm:$0xf]
    %v2001 = vld [vmem:[%s4 + $0xc0] sm:$0xf]
    %v2002 = vld [vmem:[%s4 + $0xc4] sm:$0xf]
    %v2003 = vld [vmem:[%s4 + $0xc8] sm:$0xf]
    %v2004 = vld [vmem:[%s4 + $0xcc] sm:$0xf]
    %v2005 = vld [vmem:[%s4 + $0xd0] sm:$0xf]
    %v2006 = vld [vmem:[%s4 + $0xd4] sm:$0xf]
    %v2007 = vld [vmem:[%s4 + $0xd8] sm:$0xf]
    %v2008 = vld [vmem:[%s4 + $0xdc] sm:$0xf]
    %v2009 = vld [vmem:[%s4 + $0xe0] sm:$0xf]
    %v2010 = vld [vmem:[%s4 + $0xe4] sm:$0xf]
    %v2011 = vld [vmem:[%s4 + $0xe8] sm:$0xf]
    %v2012 = vld [vmem:[%s4 + $0xec] sm:$0xf]
    %v2013 = vld [vmem:[%s4 + $0xf0] sm:$0xf]
    %v2014 = vld [vmem:[%s4 + $0xf4] sm:$0xf]
    %v2015 = vld [vmem:[%s4 + $0xf8] sm:$0xf]
    %v2016 = vld [vmem:[%s4 + $0xfc] sm:$0xf]
    %v2017 = vld [vmem:[%s4 + $0x100] sm:$0xf]
    %v2018 = vld [vmem:[%s4 + $0x104] sm:$0xf]
    %v2019 = vld [vmem:[%s4 + $0x108] sm:$0xf]
    %v2020 = vld [vmem:[%s4 + $0x10c] sm:$0xf]
    %v2021 = vld [vmem:[%s4 + $0x110] sm:$0xf]
    %v2022 = vld [vmem:[%s4 + $0x114] sm:$0xf]
    %v2023 = vld [vmem:[%s4 + $0x118] sm:$0xf]
    %v2024 = vld [vmem:[%s4 + $0x11c] sm:$0xf]
    %v2025 = vld [vmem:[%s4 + $0x120] sm:$0xf]
    %v2026 = vld [vmem:[%s4 + $0x124] sm:$0xf]
    %v2027 = vld [vmem:[%s4 + $0x128] sm:$0xf]
    %v2028 = vld [vmem:[%s4 + $0x12c] sm:$0xf]
    %v2029 = vld [vmem:[%s4 + $0x130] sm:$0xf]
    %v2030 = vld [vmem:[%s4 + $0x134] sm:$0xf]
    %v2031 = vld [vmem:[%s4 + $0x138] sm:$0xf]
    %v2032 = vld [vmem:[%s4 + $0x13c] sm:$0xf]
    %v2033 = vld [vmem:[%s4 + $0x140] sm:$0xf]
    %v2034 = vld [vmem:[%s4 + $0x144] sm:$0xf]
    %v2035 = vld [vmem:[%s4 + $0x148] sm:$0xf]
    %v2036 = vld [vmem:[%s4 + $0x14c] sm:$0xf]
    %v2037 = vld [vmem:[%s4 + $0x150] sm:$0xf]
    %v2038 = vld [vmem:[%s4 + $0x154] sm:$0xf]
    %v2039 = vld [vmem:[%s4 + $0x158] sm:$0xf]
    %v2040 = vld [vmem:[%s4 + $0x15c] sm:$0xf]
    %v2041 = vld [vmem:[%s4 + $0x160] sm:$0xf]
    %v2042 = vld [vmem:[%s4 + $0x164] sm:$0xf]
    %v2043 = vld [vmem:[%s4 + $0x168] sm:$0xf]
    %v2044 = vld [vmem:[%s4 + $0x16c] sm:$0xf]
    %v2045 = vld [vmem:[%s4 + $0x170] sm:$0xf]
    %v2046 = vld [vmem:[%s4 + $0x174] sm:$0xf]
    %v2047 = vld [vmem:[%s4 + $0x178] sm:$0xf]
    %v2048 = vld [vmem:[%s4 + $0x17c] sm:$0xf]
    %v2049 = vld [vmem:[%s4 + $0x180] sm:$0xf]
    %v2050 = vld [vmem:[%s4 + $0x184] sm:$0xf]
    %v2051 = vld [vmem:[%s4 + $0x188] sm:$0xf]
    %v2052 = vld [vmem:[%s4 + $0x18c] sm:$0xf]
    %v2053 = vld [vmem:[%s4 + $0x190] sm:$0xf]
    %v2054 = vld [vmem:[%s4 + $0x194] sm:$0xf]
    %v2055 = vld [vmem:[%s4 + $0x198] sm:$0xf]
    %v2056 = vld [vmem:[%s4 + $0x19c] sm:$0xf]
    %v2057 = vld [vmem:[%s4 + $0x1a0] sm:$0xf]
    %v2058 = vld [vmem:[%s4 + $0x1a4] sm:$0xf]
    %v2059 = vld [vmem:[%s4 + $0x1a8] sm:$0xf]
    %v2060 = vld [vmem:[%s4 + $0x1ac] sm:$0xf]
    %v2061 = vld [vmem:[%s4 + $0x1b0] sm:$0xf]
    %v2062 = vld [vmem:[%s4 + $0x1b4] sm:$0xf]
    %v2063 = vld [vmem:[%s4 + $0x1b8] sm:$0xf]
    %v2064 = vld [vmem:[%s4 + $0x1bc] sm:$0xf]
    %v2065 = vld [vmem:[%s4 + $0x1c0] sm:$0xf]
    %v2066 = vld [vmem:[%s4 + $0x1c4] sm:$0xf]
    %v2067 = vld [vmem:[%s4 + $0x1c8] sm:$0xf]
    %v2068 = vld [vmem:[%s4 + $0x1cc] sm:$0xf]
    %v2069 = vld [vmem:[%s4 + $0x1d0] sm:$0xf]
    %v2070 = vld [vmem:[%s4 + $0x1d4] sm:$0xf]
    %v2071 = vld [vmem:[%s4 + $0x1d8] sm:$0xf]
    %v2072 = vld [vmem:[%s4 + $0x1dc] sm:$0xf]
    %v2073 = vld [vmem:[%s4 + $0x1e0] sm:$0xf]
    %v2074 = vld [vmem:[%s4 + $0x1e4] sm:$0xf]
    %v2075 = vld [vmem:[%s4 + $0x1e8] sm:$0xf]
    %v2076 = vld [vmem:[%s4 + $0x1ec] sm:$0xf]
    %v2077 = vld [vmem:[%s4 + $0x1f0] sm:$0xf]
    %v2078 = vld [vmem:[%s4 + $0x1f4] sm:$0xf]
    %v2079 = vld [vmem:[%s4 + $0x1f8] sm:$0xf]
    %v2080 = vld [vmem:[%s4 + $0x1fc] sm:$0xf]
    %v2081 = vld [vmem:[%s4 + $0x200] sm:$0xf]
    %v2082 = vld [vmem:[%s4 + $0x204] sm:$0xf]
    %v2083 = vld [vmem:[%s4 + $0x208] sm:$0xf]
    %v2084 = vld [vmem:[%s4 + $0x20c] sm:$0xf]
    %v2085 = vld [vmem:[%s4 + $0x210] sm:$0xf]
    %v2086 = vld [vmem:[%s4 + $0x214] sm:$0xf]
    %v2087 = vld [vmem:[%s4 + $0x218] sm:$0xf]
    %v2088 = vld [vmem:[%s4 + $0x21c] sm:$0xf]
    %v2089 = vld [vmem:[%s4 + $0x220] sm:$0xf]
    %v2090 = vld [vmem:[%s4 + $0x224] sm:$0xf]
    %v2091 = vld [vmem:[%s4 + $0x228] sm:$0xf]
    %v2092 = vld [vmem:[%s4 + $0x22c] sm:$0xf]
    %v2093 = vld [vmem:[%s4 + $0x230] sm:$0xf]
    %v2094 = vld [vmem:[%s4 + $0x234] sm:$0xf]
    %v2095 = vld [vmem:[%s4 + $0x238] sm:$0xf]
    %v2096 = vld [vmem:[%s4 + $0x23c] sm:$0xf]
    %v2097 = vld [vmem:[%s4 + $0x240] sm:$0xf]
    %v2098 = vld [vmem:[%s4 + $0x244] sm:$0xf]
    %v2099 = vld [vmem:[%s4 + $0x248] sm:$0xf]
    %v2100 = vld [vmem:[%s4 + $0x24c] sm:$0xf]
    %v2101 = vld [vmem:[%s4 + $0x250] sm:$0xf]
    %v2102 = vld [vmem:[%s4 + $0x254] sm:$0xf]
    %v2103 = vld [vmem:[%s4 + $0x258] sm:$0xf]
    %v2104 = vld [vmem:[%s4 + $0x25c] sm:$0xf]
    %v2105 = vld [vmem:[%s4 + $0x260] sm:$0xf]
    %v2106 = vld [vmem:[%s4 + $0x264] sm:$0xf]
    %v2107 = vld [vmem:[%s4 + $0x268] sm:$0xf]
    %v2108 = vld [vmem:[%s4 + $0x26c] sm:$0xf]
    %v2109 = vld [vmem:[%s4 + $0x270] sm:$0xf]
    %v2110 = vld [vmem:[%s4 + $0x274] sm:$0xf]
    %v2111 = vld [vmem:[%s4 + $0x278] sm:$0xf]
    %v2112 = vld [vmem:[%s4 + $0x27c] sm:$0xf]
    %v2113 = vld [vmem:[%s4 + $0x280] sm:$0xf]
    %v2114 = vld [vmem:[%s4 + $0x284] sm:$0xf]
    %v2115 = vld [vmem:[%s4 + $0x288] sm:$0xf]
    %v2116 = vld [vmem:[%s4 + $0x28c] sm:$0xf]
    %v2117 = vld [vmem:[%s4 + $0x290] sm:$0xf]
    %v2118 = vld [vmem:[%s4 + $0x294] sm:$0xf]
    %v2119 = vld [vmem:[%s4 + $0x298] sm:$0xf]
    %v2120 = vld [vmem:[%s4 + $0x29c] sm:$0xf]
    %v2121 = vld [vmem:[%s4 + $0x2a0] sm:$0xf]
    %v2122 = vld [vmem:[%s4 + $0x2a4] sm:$0xf]
    %v2123 = vld [vmem:[%s4 + $0x2a8] sm:$0xf]
    %v2124 = vld [vmem:[%s4 + $0x2ac] sm:$0xf]
    %v2125 = vld [vmem:[%s4 + $0x2b0] sm:$0xf]
    %v2126 = vld [vmem:[%s4 + $0x2b4] sm:$0xf]
    %v2127 = vld [vmem:[%s4 + $0x2b8] sm:$0xf]
    %v2128 = vld [vmem:[%s4 + $0x2bc] sm:$0xf]
    %v2129 = vld [vmem:[%s4 + $0x2c0] sm:$0xf]
    %v2130 = vld [vmem:[%s4 + $0x2c4] sm:$0xf]
    %v2131 = vld [vmem:[%s4 + $0x2c8] sm:$0xf]
    %v2132 = vld [vmem:[%s4 + $0x2cc] sm:$0xf]
    %v2133 = vld [vmem:[%s4 + $0x2d0] sm:$0xf]
    %v2134 = vld [vmem:[%s4 + $0x2d4] sm:$0xf]
    %v2135 = vld [vmem:[%s4 + $0x2d8] sm:$0xf]
    %v2136 = vld [vmem:[%s4 + $0x2dc] sm:$0xf]
    %v2137 = vld [vmem:[%s4 + $0x2e0] sm:$0xf]
    %v2138 = vld [vmem:[%s4 + $0x2e4] sm:$0xf]
    %v2139 = vld [vmem:[%s4 + $0x2e8] sm:$0xf]
    %v2140 = vld [vmem:[%s4 + $0x2ec] sm:$0xf]
    %v2141 = vld [vmem:[%s4 + $0x2f0] sm:$0xf]
    %v2142 = vld [vmem:[%s4 + $0x2f4] sm:$0xf]
    %v2143 = vld [vmem:[%s4 + $0x2f8] sm:$0xf]
    %v2144 = vld [vmem:[%s4 + $0x2fc] sm:$0xf]
    %v2145 = vld [vmem:[%s4 + $0x300] sm:$0xf]
    %v2146 = vld [vmem:[%s4 + $0x304] sm:$0xf]
    %v2147 = vld [vmem:[%s4 + $0x308] sm:$0xf]
    %v2148 = vld [vmem:[%s4 + $0x30c] sm:$0xf]
    %v2149 = vld [vmem:[%s4 + $0x310] sm:$0xf]
    %v2150 = vld [vmem:[%s4 + $0x314] sm:$0xf]
    %v2151 = vld [vmem:[%s4 + $0x318] sm:$0xf]
    %v2152 = vld [vmem:[%s4 + $0x31c] sm:$0xf]
    %v2153 = vld [vmem:[%s4 + $0x320] sm:$0xf]
    %v2154 = vld [vmem:[%s4 + $0x324] sm:$0xf]
    %v2155 = vld [vmem:[%s4 + $0x328] sm:$0xf]
    %v2156 = vld [vmem:[%s4 + $0x32c] sm:$0xf]
    %v2157 = vld [vmem:[%s4 + $0x330] sm:$0xf]
    %v2158 = vld [vmem:[%s4 + $0x334] sm:$0xf]
    %v2159 = vld [vmem:[%s4 + $0x338] sm:$0xf]
    %v2160 = vld [vmem:[%s4 + $0x33c] sm:$0xf]
    %v2161 = vld [vmem:[%s4 + $0x340] sm:$0xf]
    %v2162 = vld [vmem:[%s4 + $0x344] sm:$0xf]
    %v2163 = vld [vmem:[%s4 + $0x348] sm:$0xf]
    %v2164 = vld [vmem:[%s4 + $0x34c] sm:$0xf]
    %v2165 = vld [vmem:[%s4 + $0x350] sm:$0xf]
    %v2166 = vld [vmem:[%s4 + $0x354] sm:$0xf]
    %v2167 = vld [vmem:[%s4 + $0x358] sm:$0xf]
    %v2168 = vld [vmem:[%s4 + $0x35c] sm:$0xf]
    %v2169 = vld [vmem:[%s4 + $0x360] sm:$0xf]
    %v2170 = vld [vmem:[%s4 + $0x364] sm:$0xf]
    %v2171 = vld [vmem:[%s4 + $0x368] sm:$0xf]
    %v2172 = vld [vmem:[%s4 + $0x36c] sm:$0xf]
    %v2173 = vld [vmem:[%s4 + $0x370] sm:$0xf]
    %v2174 = vld [vmem:[%s4 + $0x374] sm:$0xf]
    %v2175 = vld [vmem:[%s4 + $0x378] sm:$0xf]
    %v2176 = vld [vmem:[%s4 + $0x37c] sm:$0xf]
    %v2177 = vld [vmem:[%s4 + $0x380] sm:$0xf]
    %v2178 = vld [vmem:[%s4 + $0x384] sm:$0xf]
    %v2179 = vld [vmem:[%s4 + $0x388] sm:$0xf]
    %v2180 = vld [vmem:[%s4 + $0x38c] sm:$0xf]
    %v2181 = vld [vmem:[%s4 + $0x390] sm:$0xf]
    %v2182 = vld [vmem:[%s4 + $0x394] sm:$0xf]
    %v2183 = vld [vmem:[%s4 + $0x398] sm:$0xf]
    %v2184 = vld [vmem:[%s4 + $0x39c] sm:$0xf]
    %v2185 = vld [vmem:[%s4 + $0x3a0] sm:$0xf]
    %v2186 = vld [vmem:[%s4 + $0x3a4] sm:$0xf]
    %v2187 = vld [vmem:[%s4 + $0x3a8] sm:$0xf]
    %v2188 = vld [vmem:[%s4 + $0x3ac] sm:$0xf]
    %v2189 = vld [vmem:[%s4 + $0x3b0] sm:$0xf]
    %v2190 = vld [vmem:[%s4 + $0x3b4] sm:$0xf]
    %v2191 = vld [vmem:[%s4 + $0x3b8] sm:$0xf]
    %v2192 = vld [vmem:[%s4 + $0x3bc] sm:$0xf]
    %v2193 = vld [vmem:[%s4 + $0x3c0] sm:$0xf]
    %v2194 = vld [vmem:[%s4 + $0x3c4] sm:$0xf]
    %v2195 = vld [vmem:[%s4 + $0x3c8] sm:$0xf]
    %v2196 = vld [vmem:[%s4 + $0x3cc] sm:$0xf]
    %v2197 = vld [vmem:[%s4 + $0x3d0] sm:$0xf]
    %v2198 = vld [vmem:[%s4 + $0x3d4] sm:$0xf]
    %v2199 = vld [vmem:[%s4 + $0x3d8] sm:$0xf]
    %v2200 = vld [vmem:[%s4 + $0x3dc] sm:$0xf]
    %v2201 = vld [vmem:[%s4 + $0x3e0] sm:$0xf]
    %v2202 = vld [vmem:[%s4 + $0x3e4] sm:$0xf]
    %v2203 = vld [vmem:[%s4 + $0x3e8] sm:$0xf]
    %v2204 = vld [vmem:[%s4 + $0x3ec] sm:$0xf]
    %v2205 = vld [vmem:[%s4 + $0x3f0] sm:$0xf]
    %v2206 = vld [vmem:[%s4 + $0x3f4] sm:$0xf]
    %v2207 = vld [vmem:[%s4 + $0x3f8] sm:$0xf]
    %v2208 = vld [vmem:[%s4 + $0x3fc] sm:$0xf]
    %v2209 = vld [vmem:[%s4 + $0x400] sm:$0xf]
    %v2210 = vld [vmem:[%s4 + $0x404] sm:$0xf]
    %v2211 = vld [vmem:[%s4 + $0x408] sm:$0xf]
    %v2212 = vld [vmem:[%s4 + $0x40c] sm:$0xf]
    %v2213 = vld [vmem:[%s4 + $0x410] sm:$0xf]
    %v2214 = vld [vmem:[%s4 + $0x414] sm:$0xf]
    %v2215 = vld [vmem:[%s4 + $0x418] sm:$0xf]
    %v2216 = vld [vmem:[%s4 + $0x41c] sm:$0xf]
    %v2217 = vld [vmem:[%s4 + $0x420] sm:$0xf]
    %v2218 = vld [vmem:[%s4 + $0x424] sm:$0xf]
    %v2219 = vld [vmem:[%s4 + $0x428] sm:$0xf]
    %v2220 = vld [vmem:[%s4 + $0x42c] sm:$0xf]
    %v2221 = vld [vmem:[%s4 + $0x430] sm:$0xf]
    %v2222 = vld [vmem:[%s4 + $0x434] sm:$0xf]
    %v2223 = vld [vmem:[%s4 + $0x438] sm:$0xf]
    %v2224 = vld [vmem:[%s4 + $0x43c] sm:$0xf]
    %v2225 = vld [vmem:[%s4 + $0x440] sm:$0xf]
    %v2226 = vld [vmem:[%s4 + $0x444] sm:$0xf]
    %v2227 = vld [vmem:[%s4 + $0x448] sm:$0xf]
    %v2228 = vld [vmem:[%s4 + $0x44c] sm:$0xf]
    %v2229 = vld [vmem:[%s4 + $0x450] sm:$0xf]
    %v2230 = vld [vmem:[%s4 + $0x454] sm:$0xf]
    %v2231 = vld [vmem:[%s4 + $0x458] sm:$0xf]
    %v2232 = vld [vmem:[%s4 + $0x45c] sm:$0xf]
    %v2233 = vld [vmem:[%s4 + $0x460] sm:$0xf]
    %v2234 = vld [vmem:[%s4 + $0x464] sm:$0xf]
    %v2235 = vld [vmem:[%s4 + $0x468] sm:$0xf]
    %v2236 = vld [vmem:[%s4 + $0x46c] sm:$0xf]
    %v2237 = vld [vmem:[%s4 + $0x470] sm:$0xf]
    %v2238 = vld [vmem:[%s4 + $0x474] sm:$0xf]
    %v2239 = vld [vmem:[%s4 + $0x478] sm:$0xf]
    %v2240 = vld [vmem:[%s4 + $0x47c] sm:$0xf]
    %v2241 = vld [vmem:[%s4 + $0x480] sm:$0xf]
    %v2242 = vld [vmem:[%s4 + $0x484] sm:$0xf]
    %v2243 = vld [vmem:[%s4 + $0x488] sm:$0xf]
    %v2244 = vld [vmem:[%s4 + $0x48c] sm:$0xf]
    %v2245 = vld [vmem:[%s4 + $0x490] sm:$0xf]
    %v2246 = vld [vmem:[%s4 + $0x494] sm:$0xf]
    %v2247 = vld [vmem:[%s4 + $0x498] sm:$0xf]
    %v2248 = vld [vmem:[%s4 + $0x49c] sm:$0xf]
    %v2249 = vld [vmem:[%s4 + $0x4a0] sm:$0xf]
    %v2250 = vld [vmem:[%s4 + $0x4a4] sm:$0xf]
    %v2251 = vld [vmem:[%s4 + $0x4a8] sm:$0xf]
    %v2252 = vld [vmem:[%s4 + $0x4ac] sm:$0xf]
    %v2253 = vld [vmem:[%s4 + $0x4b0] sm:$0xf]
    %v2254 = vld [vmem:[%s4 + $0x4b4] sm:$0xf]
    %v2255 = vld [vmem:[%s4 + $0x4b8] sm:$0xf]
    %v2256 = vld [vmem:[%s4 + $0x4bc] sm:$0xf]
    %v2257 = vld [vmem:[%s4 + $0x4c0] sm:$0xf]
    %v2258 = vld [vmem:[%s4 + $0x4c4] sm:$0xf]
    %v2259 = vld [vmem:[%s4 + $0x4c8] sm:$0xf]
    %v2260 = vld [vmem:[%s4 + $0x4cc] sm:$0xf]
    %v2261 = vld [vmem:[%s4 + $0x4d0] sm:$0xf]
    %v2262 = vld [vmem:[%s4 + $0x4d4] sm:$0xf]
    %v2263 = vld [vmem:[%s4 + $0x4d8] sm:$0xf]
    %v2264 = vld [vmem:[%s4 + $0x4dc] sm:$0xf]
    %v2265 = vld [vmem:[%s4 + $0x4e0] sm:$0xf]
    %v2266 = vld [vmem:[%s4 + $0x4e4] sm:$0xf]
    %v2267 = vld [vmem:[%s4 + $0x4e8] sm:$0xf]
    %v2268 = vld [vmem:[%s4 + $0x4ec] sm:$0xf]
    %v2269 = vld [vmem:[%s4 + $0x4f0] sm:$0xf]
    %v2270 = vld [vmem:[%s4 + $0x4f4] sm:$0xf]
    %v2271 = vld [vmem:[%s4 + $0x4f8] sm:$0xf]
    %v2272 = vld [vmem:[%s4 + $0x4fc] sm:$0xf]
    %v2273 = vld [vmem:[%s4 + $0x500] sm:$0xf]
    %v2274 = vld [vmem:[%s4 + $0x504] sm:$0xf]
    %v2275 = vld [vmem:[%s4 + $0x508] sm:$0xf]
    %v2276 = vld [vmem:[%s4 + $0x50c] sm:$0xf]
    %v2277 = vld [vmem:[%s4 + $0x510] sm:$0xf]
    %v2278 = vld [vmem:[%s4 + $0x514] sm:$0xf]
    %v2279 = vld [vmem:[%s4 + $0x518] sm:$0xf]
    %v2280 = vld [vmem:[%s4 + $0x51c] sm:$0xf]
    %v2281 = vld [vmem:[%s4 + $0x520] sm:$0xf]
    %v2282 = vld [vmem:[%s4 + $0x524] sm:$0xf]
    %v2283 = vld [vmem:[%s4 + $0x528] sm:$0xf]
    %v2284 = vld [vmem:[%s4 + $0x52c] sm:$0xf]
    %v2285 = vld [vmem:[%s4 + $0x530] sm:$0xf]
    %v2286 = vld [vmem:[%s4 + $0x534] sm:$0xf]
    %v2287 = vld [vmem:[%s4 + $0x538] sm:$0xf]
    %v2288 = vld [vmem:[%s4 + $0x53c] sm:$0xf]
    %v2289 = vld [vmem:[%s4 + $0x540] sm:$0xf]
    %v2290 = vld [vmem:[%s4 + $0x544] sm:$0xf]
    %v2291 = vld [vmem:[%s4 + $0x548] sm:$0xf]
    %v2292 = vld [vmem:[%s4 + $0x54c] sm:$0xf]
    %v2293 = vld [vmem:[%s4 + $0x550] sm:$0xf]
    %v2294 = vld [vmem:[%s4 + $0x554] sm:$0xf]
    %v2295 = vld [vmem:[%s4 + $0x558] sm:$0xf]
    %v2296 = vld [vmem:[%s4 + $0x55c] sm:$0xf]
    %v2297 = vld [vmem:[%s4 + $0x560] sm:$0xf]
    %v2298 = vld [vmem:[%s4 + $0x564] sm:$0xf]
    %v2299 = vld [vmem:[%s4 + $0x568] sm:$0xf]
    %v2300 = vld [vmem:[%s4 + $0x56c] sm:$0xf]
    %v2301 = vld [vmem:[%s4 + $0x570] sm:$0xf]
    %v2302 = vld [vmem:[%s4 + $0x574] sm:$0xf]
    %v2303 = vld [vmem:[%s4 + $0x578] sm:$0xf]
    %v2304 = vld [vmem:[%s4 + $0x57c] sm:$0xf]
    %v2305 = vld [vmem:[%s4 + $0x580] sm:$0xf]
    %v2306 = vld [vmem:[%s4 + $0x584] sm:$0xf]
    %v2307 = vld [vmem:[%s4 + $0x588] sm:$0xf]
    %v2308 = vld [vmem:[%s4 + $0x58c] sm:$0xf]
    %v2309 = vld [vmem:[%s4 + $0x590] sm:$0xf]
    %v2310 = vld [vmem:[%s4 + $0x594] sm:$0xf]
    %v2311 = vld [vmem:[%s4 + $0x598] sm:$0xf]
    %v2312 = vld [vmem:[%s4 + $0x59c] sm:$0xf]
    %v2313 = vld [vmem:[%s4 + $0x5a0] sm:$0xf]
    %v2314 = vld [vmem:[%s4 + $0x5a4] sm:$0xf]
    %v2315 = vld [vmem:[%s4 + $0x5a8] sm:$0xf]
    %v2316 = vld [vmem:[%s4 + $0x5ac] sm:$0xf]
    %v2317 = vld [vmem:[%s4 + $0x5b0] sm:$0xf]
    %v2318 = vld [vmem:[%s4 + $0x5b4] sm:$0xf]
    %v2319 = vld [vmem:[%s4 + $0x5b8] sm:$0xf]
    %v2320 = vld [vmem:[%s4 + $0x5bc] sm:$0xf]
    %v2321 = vld [vmem:[%s4 + $0x5c0] sm:$0xf]
    %v2322 = vld [vmem:[%s4 + $0x5c4] sm:$0xf]
    %v2323 = vld [vmem:[%s4 + $0x5c8] sm:$0xf]
    %v2324 = vld [vmem:[%s4 + $0x5cc] sm:$0xf]
    %v2325 = vld [vmem:[%s4 + $0x5d0] sm:$0xf]
    %v2326 = vld [vmem:[%s4 + $0x5d4] sm:$0xf]
    %v2327 = vld [vmem:[%s4 + $0x5d8] sm:$0xf]
    %v2328 = vld [vmem:[%s4 + $0x5dc] sm:$0xf]
    %v2329 = vld [vmem:[%s4 + $0x5e0] sm:$0xf]
    %v2330 = vld [vmem:[%s4 + $0x5e4] sm:$0xf]
    %v2331 = vld [vmem:[%s4 + $0x5e8] sm:$0xf]
    %v2332 = vld [vmem:[%s4 + $0x5ec] sm:$0xf]
    %v2333 = vld [vmem:[%s4 + $0x5f0] sm:$0xf]
    %v2334 = vld [vmem:[%s4 + $0x5f4] sm:$0xf]
    %v2335 = vld [vmem:[%s4 + $0x5f8] sm:$0xf]
    %v2336 = vld [vmem:[%s4 + $0x5fc] sm:$0xf]
    %v2337 = vld [vmem:[%s4 + $0x600] sm:$0xf]
    %v2338 = vld [vmem:[%s4 + $0x604] sm:$0xf]
    %v2339 = vld [vmem:[%s4 + $0x608] sm:$0xf]
    %v2340 = vld [vmem:[%s4 + $0x60c] sm:$0xf]
    %v2341 = vld [vmem:[%s4 + $0x610] sm:$0xf]
    %v2342 = vld [vmem:[%s4 + $0x614] sm:$0xf]
    %v2343 = vld [vmem:[%s4 + $0x618] sm:$0xf]
    %v2344 = vld [vmem:[%s4 + $0x61c] sm:$0xf]
    %v2345 = vld [vmem:[%s4 + $0x620] sm:$0xf]
    %v2346 = vld [vmem:[%s4 + $0x624] sm:$0xf]
    %v2347 = vld [vmem:[%s4 + $0x628] sm:$0xf]
    %v2348 = vld [vmem:[%s4 + $0x62c] sm:$0xf]
    %v2349 = vld [vmem:[%s4 + $0x630] sm:$0xf]
    %v2350 = vld [vmem:[%s4 + $0x634] sm:$0xf]
    %v2351 = vld [vmem:[%s4 + $0x638] sm:$0xf]
    %v2352 = vld [vmem:[%s4 + $0x63c] sm:$0xf]
    %v2353 = vld [vmem:[%s4 + $0x640] sm:$0xf]
    %v2354 = vld [vmem:[%s4 + $0x644] sm:$0xf]
    %v2355 = vld [vmem:[%s4 + $0x648] sm:$0xf]
    %v2356 = vld [vmem:[%s4 + $0x64c] sm:$0xf]
    %v2357 = vld [vmem:[%s4 + $0x650] sm:$0xf]
    %v2358 = vld [vmem:[%s4 + $0x654] sm:$0xf]
    %v2359 = vld [vmem:[%s4 + $0x658] sm:$0xf]
    %v2360 = vld [vmem:[%s4 + $0x65c] sm:$0xf]
    %v2361 = vld [vmem:[%s4 + $0x660] sm:$0xf]
    %v2362 = vld [vmem:[%s4 + $0x664] sm:$0xf]
    %v2363 = vld [vmem:[%s4 + $0x668] sm:$0xf]
    %v2364 = vld [vmem:[%s4 + $0x66c] sm:$0xf]
    %v2365 = vld [vmem:[%s4 + $0x670] sm:$0xf]
    %v2366 = vld [vmem:[%s4 + $0x674] sm:$0xf]
    %v2367 = vld [vmem:[%s4 + $0x678] sm:$0xf]
    %v2368 = vld [vmem:[%s4 + $0x67c] sm:$0xf]
    %v2369 = vld [vmem:[%s4 + $0x680] sm:$0xf]
    %v2370 = vld [vmem:[%s4 + $0x684] sm:$0xf]
    %v2371 = vld [vmem:[%s4 + $0x688] sm:$0xf]
    %v2372 = vld [vmem:[%s4 + $0x68c] sm:$0xf]
    %v2373 = vld [vmem:[%s4 + $0x690] sm:$0xf]
    %v2374 = vld [vmem:[%s4 + $0x694] sm:$0xf]
    %v2375 = vld [vmem:[%s4 + $0x698] sm:$0xf]
    %v2376 = vld [vmem:[%s4 + $0x69c] sm:$0xf]
    %v2377 = vld [vmem:[%s4 + $0x6a0] sm:$0xf]
    %v2378 = vld [vmem:[%s4 + $0x6a4] sm:$0xf]
    %v2379 = vld [vmem:[%s4 + $0x6a8] sm:$0xf]
    %v2380 = vld [vmem:[%s4 + $0x6ac] sm:$0xf]
    %v2381 = vld [vmem:[%s4 + $0x6b0] sm:$0xf]
    %v2382 = vld [vmem:[%s4 + $0x6b4] sm:$0xf]
    %v2383 = vld [vmem:[%s4 + $0x6b8] sm:$0xf]
    %v2384 = vld [vmem:[%s4 + $0x6bc] sm:$0xf]
    %v2385 = vld [vmem:[%s4 + $0x6c0] sm:$0xf]
    %v2386 = vld [vmem:[%s4 + $0x6c4] sm:$0xf]
    %v2387 = vld [vmem:[%s4 + $0x6c8] sm:$0xf]
    %v2388 = vld [vmem:[%s4 + $0x6cc] sm:$0xf]
    %v2389 = vld [vmem:[%s4 + $0x6d0] sm:$0xf]
    %v2390 = vld [vmem:[%s4 + $0x6d4] sm:$0xf]
    %v2391 = vld [vmem:[%s4 + $0x6d8] sm:$0xf]
    %v2392 = vld [vmem:[%s4 + $0x6dc] sm:$0xf]
    %v2393 = vld [vmem:[%s4 + $0x6e0] sm:$0xf]
    %v2394 = vld [vmem:[%s4 + $0x6e4] sm:$0xf]
    %v2395 = vld [vmem:[%s4 + $0x6e8] sm:$0xf]
    %v2396 = vld [vmem:[%s4 + $0x6ec] sm:$0xf]
    %v2397 = vld [vmem:[%s4 + $0x6f0] sm:$0xf]
    %v2398 = vld [vmem:[%s4 + $0x6f4] sm:$0xf]
    %v2399 = vld [vmem:[%s4 + $0x6f8] sm:$0xf]
    %v2400 = vld [vmem:[%s4 + $0x6fc] sm:$0xf]
    %v2401 = vld [vmem:[%s4 + $0x700] sm:$0xf]
    %v2402 = vld [vmem:[%s4 + $0x704] sm:$0xf]
    %v2403 = vld [vmem:[%s4 + $0x708] sm:$0xf]
    %v2404 = vld [vmem:[%s4 + $0x70c] sm:$0xf]
    %v2405 = vld [vmem:[%s4 + $0x710] sm:$0xf]
    %v2406 = vld [vmem:[%s4 + $0x714] sm:$0xf]
    %v2407 = vld [vmem:[%s4 + $0x718] sm:$0xf]
    %v2408 = vld [vmem:[%s4 + $0x71c] sm:$0xf]
    %v2409 = vld [vmem:[%s4 + $0x720] sm:$0xf]
    %v2410 = vld [vmem:[%s4 + $0x724] sm:$0xf]
    %v2411 = vld [vmem:[%s4 + $0x728] sm:$0xf]
    %v2412 = vld [vmem:[%s4 + $0x72c] sm:$0xf]
    %v2413 = vld [vmem:[%s4 + $0x730] sm:$0xf]
    %v2414 = vld [vmem:[%s4 + $0x734] sm:$0xf]
    %v2415 = vld [vmem:[%s4 + $0x738] sm:$0xf]
    %v2416 = vld [vmem:[%s4 + $0x73c] sm:$0xf]
    %v2417 = vld [vmem:[%s4 + $0x740] sm:$0xf]
    %v2418 = vld [vmem:[%s4 + $0x744] sm:$0xf]
    %v2419 = vld [vmem:[%s4 + $0x748] sm:$0xf]
    %v2420 = vld [vmem:[%s4 + $0x74c] sm:$0xf]
    %v2421 = vld [vmem:[%s4 + $0x750] sm:$0xf]
    %v2422 = vld [vmem:[%s4 + $0x754] sm:$0xf]
    %v2423 = vld [vmem:[%s4 + $0x758] sm:$0xf]
    %v2424 = vld [vmem:[%s4 + $0x75c] sm:$0xf]
    %v2425 = vld [vmem:[%s4 + $0x760] sm:$0xf]
    %v2426 = vld [vmem:[%s4 + $0x764] sm:$0xf]
    %v2427 = vld [vmem:[%s4 + $0x768] sm:$0xf]
    %v2428 = vld [vmem:[%s4 + $0x76c] sm:$0xf]
    %v2429 = vld [vmem:[%s4 + $0x770] sm:$0xf]
    %v2430 = vld [vmem:[%s4 + $0x774] sm:$0xf]
    %v2431 = vld [vmem:[%s4 + $0x778] sm:$0xf]
    %v2432 = vld [vmem:[%s4 + $0x77c] sm:$0xf]
    %v2433 = vld [vmem:[%s4 + $0x780] sm:$0xf]
    %v2434 = vld [vmem:[%s4 + $0x784] sm:$0xf]
    %v2435 = vld [vmem:[%s4 + $0x788] sm:$0xf]
    %v2436 = vld [vmem:[%s4 + $0x78c] sm:$0xf]
    %v2437 = vld [vmem:[%s4 + $0x790] sm:$0xf]
    %v2438 = vld [vmem:[%s4 + $0x794] sm:$0xf]
    %v2439 = vld [vmem:[%s4 + $0x798] sm:$0xf]
    %v2440 = vld [vmem:[%s4 + $0x79c] sm:$0xf]
    %v2441 = vld [vmem:[%s4 + $0x7a0] sm:$0xf]
    %v2442 = vld [vmem:[%s4 + $0x7a4] sm:$0xf]
    %v2443 = vld [vmem:[%s4 + $0x7a8] sm:$0xf]
    %v2444 = vld [vmem:[%s4 + $0x7ac] sm:$0xf]
    %v2445 = vld [vmem:[%s4 + $0x7b0] sm:$0xf]
    %v2446 = vld [vmem:[%s4 + $0x7b4] sm:$0xf]
    %v2447 = vld [vmem:[%s4 + $0x7b8] sm:$0xf]
    %v2448 = vld [vmem:[%s4 + $0x7bc] sm:$0xf]
    %v2449 = vld [vmem:[%s4 + $0x7c0] sm:$0xf]
    %v2450 = vld [vmem:[%s4 + $0x7c4] sm:$0xf]
    %v2451 = vld [vmem:[%s4 + $0x7c8] sm:$0xf]
    %v2452 = vld [vmem:[%s4 + $0x7cc] sm:$0xf]
    %v2453 = vld [vmem:[%s4 + $0x7d0] sm:$0xf]
    %v2454 = vld [vmem:[%s4 + $0x7d4] sm:$0xf]
    %v2455 = vld [vmem:[%s4 + $0x7d8] sm:$0xf]
    %v2456 = vld [vmem:[%s4 + $0x7dc] sm:$0xf]
    %v2457 = vld [vmem:[%s4 + $0x7e0] sm:$0xf]
    %v2458 = vld [vmem:[%s4 + $0x7e4] sm:$0xf]
    %v2459 = vld [vmem:[%s4 + $0x7e8] sm:$0xf]
    %v2460 = vld [vmem:[%s4 + $0x7ec] sm:$0xf]
    %v2461 = vld [vmem:[%s4 + $0x7f0] sm:$0xf]
    %v2462 = vld [vmem:[%s4 + $0x7f4] sm:$0xf]
    %v2463 = vld [vmem:[%s4 + $0x7f8] sm:$0xf]
    %v2464 = vld [vmem:[%s4 + $0x7fc] sm:$0xf]
    %v2465 = vld [vmem:[%s4 + $0x800] sm:$0xf]
    %v2466 = vld [vmem:[%s4 + $0x804] sm:$0xf]
    %v2467 = vld [vmem:[%s4 + $0x808] sm:$0xf]
    %v2468 = vld [vmem:[%s4 + $0x80c] sm:$0xf]
    %v2469 = vld [vmem:[%s4 + $0x810] sm:$0xf]
    %v2470 = vld [vmem:[%s4 + $0x814] sm:$0xf]
    %v2471 = vld [vmem:[%s4 + $0x818] sm:$0xf]
    %v2472 = vld [vmem:[%s4 + $0x81c] sm:$0xf]
    %v2473 = vld [vmem:[%s4 + $0x820] sm:$0xf]
    %v2474 = vld [vmem:[%s4 + $0x824] sm:$0xf]
    %v2475 = vld [vmem:[%s4 + $0x828] sm:$0xf]
    %v2476 = vld [vmem:[%s4 + $0x82c] sm:$0xf]
    %v2477 = vld [vmem:[%s4 + $0x830] sm:$0xf]
    %v2478 = vld [vmem:[%s4 + $0x834] sm:$0xf]
    %v2479 = vld [vmem:[%s4 + $0x838] sm:$0xf]
    %v2480 = vld [vmem:[%s4 + $0x83c] sm:$0xf]
    %v2481 = vld [vmem:[%s4 + $0x840] sm:$0xf]
    %v2482 = vld [vmem:[%s4 + $0x844] sm:$0xf]
    %v2483 = vld [vmem:[%s4 + $0x848] sm:$0xf]
    %v2484 = vld [vmem:[%s4 + $0x84c] sm:$0xf]
    %v2485 = vld [vmem:[%s4 + $0x850] sm:$0xf]
    %v2486 = vld [vmem:[%s4 + $0x854] sm:$0xf]
    %v2487 = vld [vmem:[%s4 + $0x858] sm:$0xf]
    %v2488 = vld [vmem:[%s4 + $0x85c] sm:$0xf]
    %v2489 = vld [vmem:[%s4 + $0x860] sm:$0xf]
    %v2490 = vld [vmem:[%s4 + $0x864] sm:$0xf]
    %v2491 = vld [vmem:[%s4 + $0x868] sm:$0xf]
    %v2492 = vld [vmem:[%s4 + $0x86c] sm:$0xf]
    %v2493 = vld [vmem:[%s4 + $0x870] sm:$0xf]
    %v2494 = vld [vmem:[%s4 + $0x874] sm:$0xf]
    %v2495 = vld [vmem:[%s4 + $0x878] sm:$0xf]
    %v2496 = vld [vmem:[%s4 + $0x87c] sm:$0xf]
    %v2497 = vld [vmem:[%s4 + $0x880] sm:$0xf]
    %v2498 = vld [vmem:[%s4 + $0x884] sm:$0xf]
    %v2499 = vld [vmem:[%s4 + $0x888] sm:$0xf]
    %v2500 = vld [vmem:[%s4 + $0x88c] sm:$0xf]
    %v2501 = vld [vmem:[%s4 + $0x890] sm:$0xf]
    %v2502 = vld [vmem:[%s4 + $0x894] sm:$0xf]
    %v2503 = vld [vmem:[%s4 + $0x898] sm:$0xf]
    %v2504 = vld [vmem:[%s4 + $0x89c] sm:$0xf]
    %v2505 = vld [vmem:[%s4 + $0x8a0] sm:$0xf]
    %v2506 = vld [vmem:[%s4 + $0x8a4] sm:$0xf]
    %v2507 = vld [vmem:[%s4 + $0x8a8] sm:$0xf]
    %v2508 = vld [vmem:[%s4 + $0x8ac] sm:$0xf]
    %v2509 = vld [vmem:[%s4 + $0x8b0] sm:$0xf]
    %v2510 = vld [vmem:[%s4 + $0x8b4] sm:$0xf]
    %v2511 = vld [vmem:[%s4 + $0x8b8] sm:$0xf]
    %v2512 = vld [vmem:[%s4 + $0x8bc] sm:$0xf]
    %v2513 = vld [vmem:[%s4 + $0x8c0] sm:$0xf]
    %v2514 = vld [vmem:[%s4 + $0x8c4] sm:$0xf]
    %v2515 = vld [vmem:[%s4 + $0x8c8] sm:$0xf]
    %v2516 = vld [vmem:[%s4 + $0x8cc] sm:$0xf]
    %v2517 = vld [vmem:[%s4 + $0x8d0] sm:$0xf]
    %v2518 = vld [vmem:[%s4 + $0x8d4] sm:$0xf]
    %v2519 = vld [vmem:[%s4 + $0x8d8] sm:$0xf]
    %v2520 = vld [vmem:[%s4 + $0x8dc] sm:$0xf]
    %v2521 = vld [vmem:[%s4 + $0x8e0] sm:$0xf]
    %v2522 = vld [vmem:[%s4 + $0x8e4] sm:$0xf]
    %v2523 = vld [vmem:[%s4 + $0x8e8] sm:$0xf]
    %v2524 = vld [vmem:[%s4 + $0x8ec] sm:$0xf]
    %v2525 = vld [vmem:[%s4 + $0x8f0] sm:$0xf]
    %v2526 = vld [vmem:[%s4 + $0x8f4] sm:$0xf]
    %v2527 = vld [vmem:[%s4 + $0x8f8] sm:$0xf]
    %v2528 = vld [vmem:[%s4 + $0x8fc] sm:$0xf]
    %v2529 = vld [vmem:[%s4 + $0x900] sm:$0xf]
    %v2530 = vld [vmem:[%s4 + $0x904] sm:$0xf]
    %v2531 = vld [vmem:[%s4 + $0x908] sm:$0xf]
    %v2532 = vld [vmem:[%s4 + $0x90c] sm:$0xf]
    %v2533 = vld [vmem:[%s4 + $0x910] sm:$0xf]
    %v2534 = vld [vmem:[%s4 + $0x914] sm:$0xf]
    %v2535 = vld [vmem:[%s4 + $0x918] sm:$0xf]
    %v2536 = vld [vmem:[%s4 + $0x91c] sm:$0xf]
    %v2537 = vld [vmem:[%s4 + $0x920] sm:$0xf]
    %v2538 = vld [vmem:[%s4 + $0x924] sm:$0xf]
    %v2539 = vld [vmem:[%s4 + $0x928] sm:$0xf]
    %v2540 = vld [vmem:[%s4 + $0x92c] sm:$0xf]
    %v2541 = vld [vmem:[%s4 + $0x930] sm:$0xf]
    %v2542 = vld [vmem:[%s4 + $0x934] sm:$0xf]
    %v2543 = vld [vmem:[%s4 + $0x938] sm:$0xf]
    %v2544 = vld [vmem:[%s4 + $0x93c] sm:$0xf]
    %v2545 = vld [vmem:[%s4 + $0x940] sm:$0xf]
    %v2546 = vld [vmem:[%s4 + $0x944] sm:$0xf]
    %v2547 = vld [vmem:[%s4 + $0x948] sm:$0xf]
    %v2548 = vld [vmem:[%s4 + $0x94c] sm:$0xf]
    %v2549 = vld [vmem:[%s4 + $0x950] sm:$0xf]
    %v2550 = vld [vmem:[%s4 + $0x954] sm:$0xf]
    %v2551 = vld [vmem:[%s4 + $0x958] sm:$0xf]
    %v2552 = vld [vmem:[%s4 + $0x95c] sm:$0xf]
    %v2553 = vld [vmem:[%s4 + $0x960] sm:$0xf]
    %v2554 = vld [vmem:[%s4 + $0x964] sm:$0xf]
    %v2555 = vld [vmem:[%s4 + $0x968] sm:$0xf]
    %v2556 = vld [vmem:[%s4 + $0x96c] sm:$0xf]
    %v2557 = vld [vmem:[%s4 + $0x970] sm:$0xf]
    %v2558 = vld [vmem:[%s4 + $0x974] sm:$0xf]
    %v2559 = vld [vmem:[%s4 + $0x978] sm:$0xf]
    %v2560 = vld [vmem:[%s4 + $0x97c] sm:$0xf]
    %v2561 = vld [vmem:[%s4 + $0x980] sm:$0xf]
    %v2562 = vld [vmem:[%s4 + $0x984] sm:$0xf]
    %v2563 = vld [vmem:[%s4 + $0x988] sm:$0xf]
    %v2564 = vld [vmem:[%s4 + $0x98c] sm:$0xf]
    %v2565 = vld [vmem:[%s4 + $0x990] sm:$0xf]
    %v2566 = vld [vmem:[%s4 + $0x994] sm:$0xf]
    %v2567 = vld [vmem:[%s4 + $0x998] sm:$0xf]
    %v2568 = vld [vmem:[%s4 + $0x99c] sm:$0xf]
    %v2569 = vld [vmem:[%s4 + $0x9a0] sm:$0xf]
    %v2570 = vld [vmem:[%s4 + $0x9a4] sm:$0xf]
    %v2571 = vld [vmem:[%s4 + $0x9a8] sm:$0xf]
    %v2572 = vld [vmem:[%s4 + $0x9ac] sm:$0xf]
    %v2573 = vld [vmem:[%s4 + $0x9b0] sm:$0xf]
    %v2574 = vld [vmem:[%s4 + $0x9b4] sm:$0xf]
    %v2575 = vld [vmem:[%s4 + $0x9b8] sm:$0xf]
    %v2576 = vld [vmem:[%s4 + $0x9bc] sm:$0xf]
    %v2577 = vld [vmem:[%s4 + $0x9c0] sm:$0xf]
    %v2578 = vld [vmem:[%s4 + $0x9c4] sm:$0xf]
    %v2579 = vld [vmem:[%s4 + $0x9c8] sm:$0xf]
    %v2580 = vld [vmem:[%s4 + $0x9cc] sm:$0xf]
    %v2581 = vld [vmem:[%s4 + $0x9d0] sm:$0xf]
    %v2582 = vld [vmem:[%s4 + $0x9d4] sm:$0xf]
    %v2583 = vld [vmem:[%s4 + $0x9d8] sm:$0xf]
    %v2584 = vld [vmem:[%s4 + $0x9dc] sm:$0xf]
    %v2585 = vld [vmem:[%s4 + $0x9e0] sm:$0xf]
    %v2586 = vld [vmem:[%s4 + $0x9e4] sm:$0xf]
    %v2587 = vld [vmem:[%s4 + $0x9e8] sm:$0xf]
    %v2588 = vld [vmem:[%s4 + $0x9ec] sm:$0xf]
    %v2589 = vld [vmem:[%s4 + $0x9f0] sm:$0xf]
    %v2590 = vld [vmem:[%s4 + $0x9f4] sm:$0xf]
    %v2591 = vld [vmem:[%s4 + $0x9f8] sm:$0xf]
    %v2592 = vld [vmem:[%s4 + $0x9fc] sm:$0xf]
    %v2593 = vld [vmem:[%s4 + $0xa00] sm:$0xf]
    %v2594 = vld [vmem:[%s4 + $0xa04] sm:$0xf]
    %v2595 = vld [vmem:[%s4 + $0xa08] sm:$0xf]
    %v2596 = vld [vmem:[%s4 + $0xa0c] sm:$0xf]
    %v2597 = vld [vmem:[%s4 + $0xa10] sm:$0xf]
    %v2598 = vld [vmem:[%s4 + $0xa14] sm:$0xf]
    %v2599 = vld [vmem:[%s4 + $0xa18] sm:$0xf]
    %v2600 = vld [vmem:[%s4 + $0xa1c] sm:$0xf]
    %v2601 = vld [vmem:[%s4 + $0xa20] sm:$0xf]
    %v2602 = vld [vmem:[%s4 + $0xa24] sm:$0xf]
    %v2603 = vld [vmem:[%s4 + $0xa28] sm:$0xf]
    %v2604 = vld [vmem:[%s4 + $0xa2c] sm:$0xf]
    %v2605 = vld [vmem:[%s4 + $0xa30] sm:$0xf]
    %v2606 = vld [vmem:[%s4 + $0xa34] sm:$0xf]
    %v2607 = vld [vmem:[%s4 + $0xa38] sm:$0xf]
    %v2608 = vld [vmem:[%s4 + $0xa3c] sm:$0xf]
    %v2609 = vld [vmem:[%s4 + $0xa40] sm:$0xf]
    %v2610 = vld [vmem:[%s4 + $0xa44] sm:$0xf]
    %v2611 = vld [vmem:[%s4 + $0xa48] sm:$0xf]
    %v2612 = vld [vmem:[%s4 + $0xa4c] sm:$0xf]
    %v2613 = vld [vmem:[%s4 + $0xa50] sm:$0xf]
    %v2614 = vld [vmem:[%s4 + $0xa54] sm:$0xf]
    %v2615 = vld [vmem:[%s4 + $0xa58] sm:$0xf]
    %v2616 = vld [vmem:[%s4 + $0xa5c] sm:$0xf]
    %v2617 = vld [vmem:[%s4 + $0xa60] sm:$0xf]
    %v2618 = vld [vmem:[%s4 + $0xa64] sm:$0xf]
    %v2619 = vld [vmem:[%s4 + $0xa68] sm:$0xf]
    %v2620 = vld [vmem:[%s4 + $0xa6c] sm:$0xf]
    %v2621 = vld [vmem:[%s4 + $0xa70] sm:$0xf]
    %v2622 = vld [vmem:[%s4 + $0xa74] sm:$0xf]
    %v2623 = vld [vmem:[%s4 + $0xa78] sm:$0xf]
    %v2624 = vld [vmem:[%s4 + $0xa7c] sm:$0xf]
    %v2625 = vld [vmem:[%s4 + $0xa80] sm:$0xf]
    %v2626 = vld [vmem:[%s4 + $0xa84] sm:$0xf]
    %v2627 = vld [vmem:[%s4 + $0xa88] sm:$0xf]
    %v2628 = vld [vmem:[%s4 + $0xa8c] sm:$0xf]
    %v2629 = vld [vmem:[%s4 + $0xa90] sm:$0xf]
    %v2630 = vld [vmem:[%s4 + $0xa94] sm:$0xf]
    %v2631 = vld [vmem:[%s4 + $0xa98] sm:$0xf]
    %v2632 = vld [vmem:[%s4 + $0xa9c] sm:$0xf]
    %v2633 = vld [vmem:[%s4 + $0xaa0] sm:$0xf]
    %v2634 = vld [vmem:[%s4 + $0xaa4] sm:$0xf]
    %v2635 = vld [vmem:[%s4 + $0xaa8] sm:$0xf]
    %v2636 = vld [vmem:[%s4 + $0xaac] sm:$0xf]
    %v2637 = vld [vmem:[%s4 + $0xab0] sm:$0xf]
    %v2638 = vld [vmem:[%s4 + $0xab4] sm:$0xf]
    %v2639 = vld [vmem:[%s4 + $0xab8] sm:$0xf]
    %v2640 = vld [vmem:[%s4 + $0xabc] sm:$0xf]
    %v2641 = vld [vmem:[%s4 + $0xac0] sm:$0xf]
    %v2642 = vld [vmem:[%s4 + $0xac4] sm:$0xf]
    %v2643 = vld [vmem:[%s4 + $0xac8] sm:$0xf]
    %v2644 = vld [vmem:[%s4 + $0xacc] sm:$0xf]
    %v2645 = vld [vmem:[%s4 + $0xad0] sm:$0xf]
    %v2646 = vld [vmem:[%s4 + $0xad4] sm:$0xf]
    %v2647 = vld [vmem:[%s4 + $0xad8] sm:$0xf]
    %v2648 = vld [vmem:[%s4 + $0xadc] sm:$0xf]
    %v2649 = vld [vmem:[%s4 + $0xae0] sm:$0xf]
    %v2650 = vld [vmem:[%s4 + $0xae4] sm:$0xf]
    %v2651 = vld [vmem:[%s4 + $0xae8] sm:$0xf]
    %v2652 = vld [vmem:[%s4 + $0xaec] sm:$0xf]
    %v2653 = vld [vmem:[%s4 + $0xaf0] sm:$0xf]
    %v2654 = vld [vmem:[%s4 + $0xaf4] sm:$0xf]
    %v2655 = vld [vmem:[%s4 + $0xaf8] sm:$0xf]
    %v2656 = vld [vmem:[%s4 + $0xafc] sm:$0xf]
    %v2657 = vld [vmem:[%s4 + $0xb00] sm:$0xf]
    %v2658 = vld [vmem:[%s4 + $0xb04] sm:$0xf]
    %v2659 = vld [vmem:[%s4 + $0xb08] sm:$0xf]
    %v2660 = vld [vmem:[%s4 + $0xb0c] sm:$0xf]
    %v2661 = vld [vmem:[%s4 + $0xb10] sm:$0xf]
    %v2662 = vld [vmem:[%s4 + $0xb14] sm:$0xf]
    %v2663 = vld [vmem:[%s4 + $0xb18] sm:$0xf]
    %v2664 = vld [vmem:[%s4 + $0xb1c] sm:$0xf]
    %v2665 = vld [vmem:[%s4 + $0xb20] sm:$0xf]
    %v2666 = vld [vmem:[%s4 + $0xb24] sm:$0xf]
    %v2667 = vld [vmem:[%s4 + $0xb28] sm:$0xf]
    %v2668 = vld [vmem:[%s4 + $0xb2c] sm:$0xf]
    %v2669 = vld [vmem:[%s4 + $0xb30] sm:$0xf]
    %v2670 = vld [vmem:[%s4 + $0xb34] sm:$0xf]
    %v2671 = vld [vmem:[%s4 + $0xb38] sm:$0xf]
    %v2672 = vld [vmem:[%s4 + $0xb3c] sm:$0xf]
    %v2673 = vld [vmem:[%s4 + $0xb40] sm:$0xf]
    %v2674 = vld [vmem:[%s4 + $0xb44] sm:$0xf]
    %v2675 = vld [vmem:[%s4 + $0xb48] sm:$0xf]
    %v2676 = vld [vmem:[%s4 + $0xb4c] sm:$0xf]
    %v2677 = vld [vmem:[%s4 + $0xb50] sm:$0xf]
    %v2678 = vld [vmem:[%s4 + $0xb54] sm:$0xf]
    %v2679 = vld [vmem:[%s4 + $0xb58] sm:$0xf]
    %v2680 = vld [vmem:[%s4 + $0xb5c] sm:$0xf]
    %v2681 = vld [vmem:[%s4 + $0xb60] sm:$0xf]
    %v2682 = vld [vmem:[%s4 + $0xb64] sm:$0xf]
    %v2683 = vld [vmem:[%s4 + $0xb68] sm:$0xf]
    %v2684 = vld [vmem:[%s4 + $0xb6c] sm:$0xf]
    %v2685 = vld [vmem:[%s4 + $0xb70] sm:$0xf]
    %v2686 = vld [vmem:[%s4 + $0xb74] sm:$0xf]
    %v2687 = vld [vmem:[%s4 + $0xb78] sm:$0xf]
    %v2688 = vld [vmem:[%s4 + $0xb7c] sm:$0xf]
    %v2689 = vld [vmem:[%s4 + $0xb80] sm:$0xf]
    %v2690 = vld [vmem:[%s4 + $0xb84] sm:$0xf]
    %v2691 = vld [vmem:[%s4 + $0xb88] sm:$0xf]
    %v2692 = vld [vmem:[%s4 + $0xb8c] sm:$0xf]
    %v2693 = vld [vmem:[%s4 + $0xb90] sm:$0xf]
    %v2694 = vld [vmem:[%s4 + $0xb94] sm:$0xf]
    %v2695 = vld [vmem:[%s4 + $0xb98] sm:$0xf]
    %v2696 = vld [vmem:[%s4 + $0xb9c] sm:$0xf]
    %v2697 = vld [vmem:[%s4 + $0xba0] sm:$0xf]
    %v2698 = vld [vmem:[%s4 + $0xba4] sm:$0xf]
    %v2699 = vld [vmem:[%s4 + $0xba8] sm:$0xf]
    %v2700 = vld [vmem:[%s4 + $0xbac] sm:$0xf]
    %v2701 = vld [vmem:[%s4 + $0xbb0] sm:$0xf]
    %v2702 = vld [vmem:[%s4 + $0xbb4] sm:$0xf]
    %v2703 = vld [vmem:[%s4 + $0xbb8] sm:$0xf]
    %v2704 = vld [vmem:[%s4 + $0xbbc] sm:$0xf]
    %v2705 = vld [vmem:[%s4 + $0xbc0] sm:$0xf]
    %v2706 = vld [vmem:[%s4 + $0xbc4] sm:$0xf]
    %v2707 = vld [vmem:[%s4 + $0xbc8] sm:$0xf]
    %v2708 = vld [vmem:[%s4 + $0xbcc] sm:$0xf]
    %v2709 = vld [vmem:[%s4 + $0xbd0] sm:$0xf]
    %v2710 = vld [vmem:[%s4 + $0xbd4] sm:$0xf]
    %v2711 = vld [vmem:[%s4 + $0xbd8] sm:$0xf]
    %v2712 = vld [vmem:[%s4 + $0xbdc] sm:$0xf]
    %v2713 = vld [vmem:[%s4 + $0xbe0] sm:$0xf]
    %v2714 = vld [vmem:[%s4 + $0xbe4] sm:$0xf]
    %v2715 = vld [vmem:[%s4 + $0xbe8] sm:$0xf]
    %v2716 = vld [vmem:[%s4 + $0xbec] sm:$0xf]
    %v2717 = vld [vmem:[%s4 + $0xbf0] sm:$0xf]
    %v2718 = vld [vmem:[%s4 + $0xbf4] sm:$0xf]
    %v2719 = vld [vmem:[%s4 + $0xbf8] sm:$0xf]
    %v2720 = vld [vmem:[%s4 + $0xbfc] sm:$0xf]
    %v2721 = vld [vmem:[%s4 + $0xc00] sm:$0xf]
    %v2722 = vld [vmem:[%s4 + $0xc04] sm:$0xf]
    %v2723 = vld [vmem:[%s4 + $0xc08] sm:$0xf]
    %v2724 = vld [vmem:[%s4 + $0xc0c] sm:$0xf]
    %v2725 = vld [vmem:[%s4 + $0xc10] sm:$0xf]
    %v2726 = vld [vmem:[%s4 + $0xc14] sm:$0xf]
    %v2727 = vld [vmem:[%s4 + $0xc18] sm:$0xf]
    %v2728 = vld [vmem:[%s4 + $0xc1c] sm:$0xf]
    %v2729 = vld [vmem:[%s4 + $0xc20] sm:$0xf]
    %v2730 = vld [vmem:[%s4 + $0xc24] sm:$0xf]
    %v2731 = vld [vmem:[%s4 + $0xc28] sm:$0xf]
    %v2732 = vld [vmem:[%s4 + $0xc2c] sm:$0xf]
    %v2733 = vld [vmem:[%s4 + $0xc30] sm:$0xf]
    %v2734 = vld [vmem:[%s4 + $0xc34] sm:$0xf]
    %v2735 = vld [vmem:[%s4 + $0xc38] sm:$0xf]
    %v2736 = vld [vmem:[%s4 + $0xc3c] sm:$0xf]
    %v2737 = vld [vmem:[%s4 + $0xc40] sm:$0xf]
    %v2738 = vld [vmem:[%s4 + $0xc44] sm:$0xf]
    %v2739 = vld [vmem:[%s4 + $0xc48] sm:$0xf]
    %v2740 = vld [vmem:[%s4 + $0xc4c] sm:$0xf]
    %v2741 = vld [vmem:[%s4 + $0xc50] sm:$0xf]
    %v2742 = vld [vmem:[%s4 + $0xc54] sm:$0xf]
    %v2743 = vld [vmem:[%s4 + $0xc58] sm:$0xf]
    %v2744 = vld [vmem:[%s4 + $0xc5c] sm:$0xf]
    %v2745 = vld [vmem:[%s4 + $0xc60] sm:$0xf]
    %v2746 = vld [vmem:[%s4 + $0xc64] sm:$0xf]
    %v2747 = vld [vmem:[%s4 + $0xc68] sm:$0xf]
    %v2748 = vld [vmem:[%s4 + $0xc6c] sm:$0xf]
    %v2749 = vld [vmem:[%s4 + $0xc70] sm:$0xf]
    %v2750 = vld [vmem:[%s4 + $0xc74] sm:$0xf]
    %v2751 = vld [vmem:[%s4 + $0xc78] sm:$0xf]
    %v2752 = vld [vmem:[%s4 + $0xc7c] sm:$0xf]
    %v2753 = vld [vmem:[%s4 + $0xc80] sm:$0xf]
    %v2754 = vld [vmem:[%s4 + $0xc84] sm:$0xf]
    %v2755 = vld [vmem:[%s4 + $0xc88] sm:$0xf]
    %v2756 = vld [vmem:[%s4 + $0xc8c] sm:$0xf]
    %v2757 = vld [vmem:[%s4 + $0xc90] sm:$0xf]
    %v2758 = vld [vmem:[%s4 + $0xc94] sm:$0xf]
    %v2759 = vld [vmem:[%s4 + $0xc98] sm:$0xf]
    %v2760 = vld [vmem:[%s4 + $0xc9c] sm:$0xf]
    %v2761 = vld [vmem:[%s4 + $0xca0] sm:$0xf]
    %v2762 = vld [vmem:[%s4 + $0xca4] sm:$0xf]
    %v2763 = vld [vmem:[%s4 + $0xca8] sm:$0xf]
    %v2764 = vld [vmem:[%s4 + $0xcac] sm:$0xf]
    %v2765 = vld [vmem:[%s4 + $0xcb0] sm:$0xf]
    %v2766 = vld [vmem:[%s4 + $0xcb4] sm:$0xf]
    %v2767 = vld [vmem:[%s4 + $0xcb8] sm:$0xf]
    %v2768 = vld [vmem:[%s4 + $0xcbc] sm:$0xf]
    %v2769 = vld [vmem:[%s4 + $0xcc0] sm:$0xf]
    %v2770 = vld [vmem:[%s4 + $0xcc4] sm:$0xf]
    %v2771 = vld [vmem:[%s4 + $0xcc8] sm:$0xf]
    %v2772 = vld [vmem:[%s4 + $0xccc] sm:$0xf]
    %v2773 = vld [vmem:[%s4 + $0xcd0] sm:$0xf]
    %v2774 = vld [vmem:[%s4 + $0xcd4] sm:$0xf]
    %v2775 = vld [vmem:[%s4 + $0xcd8] sm:$0xf]
    %v2776 = vld [vmem:[%s4 + $0xcdc] sm:$0xf]
    %v2777 = vld [vmem:[%s4 + $0xce0] sm:$0xf]
    %v2778 = vld [vmem:[%s4 + $0xce4] sm:$0xf]
    %v2779 = vld [vmem:[%s4 + $0xce8] sm:$0xf]
    %v2780 = vld [vmem:[%s4 + $0xcec] sm:$0xf]
    %v2781 = vld [vmem:[%s4 + $0xcf0] sm:$0xf]
    %v2782 = vld [vmem:[%s4 + $0xcf4] sm:$0xf]
    %v2783 = vld [vmem:[%s4 + $0xcf8] sm:$0xf]
    %v2784 = vld [vmem:[%s4 + $0xcfc] sm:$0xf]
    %v2785 = vld [vmem:[%s4 + $0xd00] sm:$0xf]
    %v2786 = vld [vmem:[%s4 + $0xd04] sm:$0xf]
    %v2787 = vld [vmem:[%s4 + $0xd08] sm:$0xf]
    %v2788 = vld [vmem:[%s4 + $0xd0c] sm:$0xf]
    %v2789 = vld [vmem:[%s4 + $0xd10] sm:$0xf]
    %v2790 = vld [vmem:[%s4 + $0xd14] sm:$0xf]
    %v2791 = vld [vmem:[%s4 + $0xd18] sm:$0xf]
    %v2792 = vld [vmem:[%s4 + $0xd1c] sm:$0xf]
    %v2793 = vld [vmem:[%s4 + $0xd20] sm:$0xf]
    %v2794 = vld [vmem:[%s4 + $0xd24] sm:$0xf]
    %v2795 = vld [vmem:[%s4 + $0xd28] sm:$0xf]
    %v2796 = vld [vmem:[%s4 + $0xd2c] sm:$0xf]
    %v2797 = vld [vmem:[%s4 + $0xd30] sm:$0xf]
    %v2798 = vld [vmem:[%s4 + $0xd34] sm:$0xf]
    %v2799 = vld [vmem:[%s4 + $0xd38] sm:$0xf]
    %v2800 = vld [vmem:[%s4 + $0xd3c] sm:$0xf]
    %v2801 = vld [vmem:[%s4 + $0xd40] sm:$0xf]
    %v2802 = vld [vmem:[%s4 + $0xd44] sm:$0xf]
    %v2803 = vld [vmem:[%s4 + $0xd48] sm:$0xf]
    %v2804 = vld [vmem:[%s4 + $0xd4c] sm:$0xf]
    %v2805 = vld [vmem:[%s4 + $0xd50] sm:$0xf]
    %v2806 = vld [vmem:[%s4 + $0xd54] sm:$0xf]
    %v2807 = vld [vmem:[%s4 + $0xd58] sm:$0xf]
    %v2808 = vld [vmem:[%s4 + $0xd5c] sm:$0xf]
    %v2809 = vld [vmem:[%s4 + $0xd60] sm:$0xf]
    %v2810 = vld [vmem:[%s4 + $0xd64] sm:$0xf]
    %v2811 = vld [vmem:[%s4 + $0xd68] sm:$0xf]
    %v2812 = vld [vmem:[%s4 + $0xd6c] sm:$0xf]
    %v2813 = vld [vmem:[%s4 + $0xd70] sm:$0xf]
    %v2814 = vld [vmem:[%s4 + $0xd74] sm:$0xf]
    %v2815 = vld [vmem:[%s4 + $0xd78] sm:$0xf]
    %v2816 = vld [vmem:[%s4 + $0xd7c] sm:$0xf]
    %v2817 = vld [vmem:[%s4 + $0xd80] sm:$0xf]
    %v2818 = vld [vmem:[%s4 + $0xd84] sm:$0xf]
    %v2819 = vld [vmem:[%s4 + $0xd88] sm:$0xf]
    %v2820 = vld [vmem:[%s4 + $0xd8c] sm:$0xf]
    %v2821 = vld [vmem:[%s4 + $0xd90] sm:$0xf]
    %v2822 = vld [vmem:[%s4 + $0xd94] sm:$0xf]
    %v2823 = vld [vmem:[%s4 + $0xd98] sm:$0xf]
    %v2824 = vld [vmem:[%s4 + $0xd9c] sm:$0xf]
    %v2825 = vld [vmem:[%s4 + $0xda0] sm:$0xf]
    %v2826 = vld [vmem:[%s4 + $0xda4] sm:$0xf]
    %v2827 = vld [vmem:[%s4 + $0xda8] sm:$0xf]
    %v2828 = vld [vmem:[%s4 + $0xdac] sm:$0xf]
    %v2829 = vld [vmem:[%s4 + $0xdb0] sm:$0xf]
    %v2830 = vld [vmem:[%s4 + $0xdb4] sm:$0xf]
    %v2831 = vld [vmem:[%s4 + $0xdb8] sm:$0xf]
    %v2832 = vld [vmem:[%s4 + $0xdbc] sm:$0xf]
    %v2833 = vld [vmem:[%s4 + $0xdc0] sm:$0xf]
    %v2834 = vld [vmem:[%s4 + $0xdc4] sm:$0xf]
    %v2835 = vld [vmem:[%s4 + $0xdc8] sm:$0xf]
    %v2836 = vld [vmem:[%s4 + $0xdcc] sm:$0xf]
    %v2837 = vld [vmem:[%s4 + $0xdd0] sm:$0xf]
    %v2838 = vld [vmem:[%s4 + $0xdd4] sm:$0xf]
    %v2839 = vld [vmem:[%s4 + $0xdd8] sm:$0xf]
    %v2840 = vld [vmem:[%s4 + $0xddc] sm:$0xf]
    %v2841 = vld [vmem:[%s4 + $0xde0] sm:$0xf]
    %v2842 = vld [vmem:[%s4 + $0xde4] sm:$0xf]
    %v2843 = vld [vmem:[%s4 + $0xde8] sm:$0xf]
    %v2844 = vld [vmem:[%s4 + $0xdec] sm:$0xf]
    %v2845 = vld [vmem:[%s4 + $0xdf0] sm:$0xf]
    %v2846 = vld [vmem:[%s4 + $0xdf4] sm:$0xf]
    %v2847 = vld [vmem:[%s4 + $0xdf8] sm:$0xf]
    %v2848 = vld [vmem:[%s4 + $0xdfc] sm:$0xf]
    %v2849 = vld [vmem:[%s4 + $0xe00] sm:$0xf]
    %v2850 = vld [vmem:[%s4 + $0xe04] sm:$0xf]
    %v2851 = vld [vmem:[%s4 + $0xe08] sm:$0xf]
    %v2852 = vld [vmem:[%s4 + $0xe0c] sm:$0xf]
    %v2853 = vld [vmem:[%s4 + $0xe10] sm:$0xf]
    %v2854 = vld [vmem:[%s4 + $0xe14] sm:$0xf]
    %v2855 = vld [vmem:[%s4 + $0xe18] sm:$0xf]
    %v2856 = vld [vmem:[%s4 + $0xe1c] sm:$0xf]
    %v2857 = vld [vmem:[%s4 + $0xe20] sm:$0xf]
    %v2858 = vld [vmem:[%s4 + $0xe24] sm:$0xf]
    %v2859 = vld [vmem:[%s4 + $0xe28] sm:$0xf]
    %v2860 = vld [vmem:[%s4 + $0xe2c] sm:$0xf]
    %v2861 = vld [vmem:[%s4 + $0xe30] sm:$0xf]
    %v2862 = vld [vmem:[%s4 + $0xe34] sm:$0xf]
    %v2863 = vld [vmem:[%s4 + $0xe38] sm:$0xf]
    %v2864 = vld [vmem:[%s4 + $0xe3c] sm:$0xf]
    %v2865 = vld [vmem:[%s4 + $0xe40] sm:$0xf]
    %v2866 = vld [vmem:[%s4 + $0xe44] sm:$0xf]
    %v2867 = vld [vmem:[%s4 + $0xe48] sm:$0xf]
    %v2868 = vld [vmem:[%s4 + $0xe4c] sm:$0xf]
    %v2869 = vld [vmem:[%s4 + $0xe50] sm:$0xf]
    %v2870 = vld [vmem:[%s4 + $0xe54] sm:$0xf]
    %v2871 = vld [vmem:[%s4 + $0xe58] sm:$0xf]
    %v2872 = vld [vmem:[%s4 + $0xe5c] sm:$0xf]
    %v2873 = vld [vmem:[%s4 + $0xe60] sm:$0xf]
    %v2874 = vld [vmem:[%s4 + $0xe64] sm:$0xf]
    %v2875 = vld [vmem:[%s4 + $0xe68] sm:$0xf]
    %v2876 = vld [vmem:[%s4 + $0xe6c] sm:$0xf]
    %v2877 = vld [vmem:[%s4 + $0xe70] sm:$0xf]
    %v2878 = vld [vmem:[%s4 + $0xe74] sm:$0xf]
    %v2879 = vld [vmem:[%s4 + $0xe78] sm:$0xf]
    %v2880 = vld [vmem:[%s4 + $0xe7c] sm:$0xf]
    %v2881 = vld [vmem:[%s4 + $0xe80] sm:$0xf]
    %v2882 = vld [vmem:[%s4 + $0xe84] sm:$0xf]
    %v2883 = vld [vmem:[%s4 + $0xe88] sm:$0xf]
    %v2884 = vld [vmem:[%s4 + $0xe8c] sm:$0xf]
    %v2885 = vld [vmem:[%s4 + $0xe90] sm:$0xf]
    %v2886 = vld [vmem:[%s4 + $0xe94] sm:$0xf]
    %v2887 = vld [vmem:[%s4 + $0xe98] sm:$0xf]
    %v2888 = vld [vmem:[%s4 + $0xe9c] sm:$0xf]
    %v2889 = vld [vmem:[%s4 + $0xea0] sm:$0xf]
    %v2890 = vld [vmem:[%s4 + $0xea4] sm:$0xf]
    %v2891 = vld [vmem:[%s4 + $0xea8] sm:$0xf]
    %v2892 = vld [vmem:[%s4 + $0xeac] sm:$0xf]
    %v2893 = vld [vmem:[%s4 + $0xeb0] sm:$0xf]
    %v2894 = vld [vmem:[%s4 + $0xeb4] sm:$0xf]
    %v2895 = vld [vmem:[%s4 + $0xeb8] sm:$0xf]
    %v2896 = vld [vmem:[%s4 + $0xebc] sm:$0xf]
    %v2897 = vld [vmem:[%s4 + $0xec0] sm:$0xf]
    %v2898 = vld [vmem:[%s4 + $0xec4] sm:$0xf]
    %v2899 = vld [vmem:[%s4 + $0xec8] sm:$0xf]
    %v2900 = vld [vmem:[%s4 + $0xecc] sm:$0xf]
    %v2901 = vld [vmem:[%s4 + $0xed0] sm:$0xf]
    %v2902 = vld [vmem:[%s4 + $0xed4] sm:$0xf]
    %v2903 = vld [vmem:[%s4 + $0xed8] sm:$0xf]
    %v2904 = vld [vmem:[%s4 + $0xedc] sm:$0xf]
    %v2905 = vld [vmem:[%s4 + $0xee0] sm:$0xf]
    %v2906 = vld [vmem:[%s4 + $0xee4] sm:$0xf]
    %v2907 = vld [vmem:[%s4 + $0xee8] sm:$0xf]
    %v2908 = vld [vmem:[%s4 + $0xeec] sm:$0xf]
    %v2909 = vld [vmem:[%s4 + $0xef0] sm:$0xf]
    %v2910 = vld [vmem:[%s4 + $0xef4] sm:$0xf]
    %v2911 = vld [vmem:[%s4 + $0xef8] sm:$0xf]
    %v2912 = vld [vmem:[%s4 + $0xefc] sm:$0xf]
    %v2913 = vld [vmem:[%s4 + $0xf00] sm:$0xf]
    %v2914 = vld [vmem:[%s4 + $0xf04] sm:$0xf]
    %v2915 = vld [vmem:[%s4 + $0xf08] sm:$0xf]
    %v2916 = vld [vmem:[%s4 + $0xf0c] sm:$0xf]
    %v2917 = vld [vmem:[%s4 + $0xf10] sm:$0xf]
    %v2918 = vld [vmem:[%s4 + $0xf14] sm:$0xf]
    %v2919 = vld [vmem:[%s4 + $0xf18] sm:$0xf]
    %v2920 = vld [vmem:[%s4 + $0xf1c] sm:$0xf]
    %v2921 = vld [vmem:[%s4 + $0xf20] sm:$0xf]
    %v2922 = vld [vmem:[%s4 + $0xf24] sm:$0xf]
    %v2923 = vld [vmem:[%s4 + $0xf28] sm:$0xf]
    %v2924 = vld [vmem:[%s4 + $0xf2c] sm:$0xf]
    %v2925 = vld [vmem:[%s4 + $0xf30] sm:$0xf]
    %v2926 = vld [vmem:[%s4 + $0xf34] sm:$0xf]
    %v2927 = vld [vmem:[%s4 + $0xf38] sm:$0xf]
    %v2928 = vld [vmem:[%s4 + $0xf3c] sm:$0xf]
    %v2929 = vld [vmem:[%s4 + $0xf40] sm:$0xf]
    %v2930 = vld [vmem:[%s4 + $0xf44] sm:$0xf]
    %v2931 = vld [vmem:[%s4 + $0xf48] sm:$0xf]
    %v2932 = vld [vmem:[%s4 + $0xf4c] sm:$0xf]
    %v2933 = vld [vmem:[%s4 + $0xf50] sm:$0xf]
    %v2934 = vld [vmem:[%s4 + $0xf54] sm:$0xf]
    %v2935 = vld [vmem:[%s4 + $0xf58] sm:$0xf]
    %v2936 = vld [vmem:[%s4 + $0xf5c] sm:$0xf]
    %v2937 = vld [vmem:[%s4 + $0xf60] sm:$0xf]
    %v2938 = vld [vmem:[%s4 + $0xf64] sm:$0xf]
    %v2939 = vld [vmem:[%s4 + $0xf68] sm:$0xf]
    %v2940 = vld [vmem:[%s4 + $0xf6c] sm:$0xf]
    %v2941 = vld [vmem:[%s4 + $0xf70] sm:$0xf]
    %v2942 = vld [vmem:[%s4 + $0xf74] sm:$0xf]
    %v2943 = vld [vmem:[%s4 + $0xf78] sm:$0xf]
    %v2944 = vld [vmem:[%s4 + $0xf7c] sm:$0xf]
    %v2945 = vld [vmem:[%s4 + $0xf80] sm:$0xf]
    %v2946 = vld [vmem:[%s4 + $0xf84] sm:$0xf]
    %v2947 = vld [vmem:[%s4 + $0xf88] sm:$0xf]
    %v2948 = vld [vmem:[%s4 + $0xf8c] sm:$0xf]
    %v2949 = vld [vmem:[%s4 + $0xf90] sm:$0xf]
    %v2950 = vld [vmem:[%s4 + $0xf94] sm:$0xf]
    %v2951 = vld [vmem:[%s4 + $0xf98] sm:$0xf]
    %v2952 = vld [vmem:[%s4 + $0xf9c] sm:$0xf]
    %v2953 = vld [vmem:[%s4 + $0xfa0] sm:$0xf]
    %v2954 = vld [vmem:[%s4 + $0xfa4] sm:$0xf]
    %v2955 = vld [vmem:[%s4 + $0xfa8] sm:$0xf]
    %v2956 = vld [vmem:[%s4 + $0xfac] sm:$0xf]
    %v2957 = vld [vmem:[%s4 + $0xfb0] sm:$0xf]
    %v2958 = vld [vmem:[%s4 + $0xfb4] sm:$0xf]
    %v2959 = vld [vmem:[%s4 + $0xfb8] sm:$0xf]
    %v2960 = vld [vmem:[%s4 + $0xfbc] sm:$0xf]
    %v2961 = vld [vmem:[%s4 + $0xfc0] sm:$0xf]
    %v2962 = vld [vmem:[%s4 + $0xfc4] sm:$0xf]
    %v2963 = vld [vmem:[%s4 + $0xfc8] sm:$0xf]
    %v2964 = vld [vmem:[%s4 + $0xfcc] sm:$0xf]
    %v2965 = vld [vmem:[%s4 + $0xfd0] sm:$0xf]
    %v2966 = vld [vmem:[%s4 + $0xfd4] sm:$0xf]
    %v2967 = vld [vmem:[%s4 + $0xfd8] sm:$0xf]
    %v2968 = vld [vmem:[%s4 + $0xfdc] sm:$0xf]
    %v2969 = vld [vmem:[%s4 + $0xfe0] sm:$0xf]
    %v2970 = vld [vmem:[%s4 + $0xfe4] sm:$0xf]
    %v2971 = vld [vmem:[%s4 + $0xfe8] sm:$0xf]
    %v2972 = vld [vmem:[%s4 + $0xfec] sm:$0xf]
    %v2973 = vld [vmem:[%s4 + $0xff0] sm:$0xf]
    %v2974 = vld [vmem:[%s4 + $0xff4] sm:$0xf]
    %v2975 = vld [vmem:[%s4 + $0xff8] sm:$0xf]
    %v2976 = vld [vmem:[%s4 + $0xffc] sm:$0xf]
    %v2977 = vld [vmem:[%s5] sm:$0x1]
    %v2979 = vlaneseq
    %v2980 = vshrl.u32 %v2979, 7
    %v2981 = vsub.s32 0, %v2980
    %v2982 = vrot.slane %v2977, %v2981
    %v4008 = vunpack.c.l.b16 %v1953
    %v4009 = vunpack.c.l.b16 %v1954
    %v4010 = vunpack.c.l.b16 %v1955
    %v4011 = vunpack.c.l.b16 %v1956
    %v4012 = vunpack.c.l.b16 %v1957
    %v4013 = vunpack.c.l.b16 %v1958
    %v4014 = vunpack.c.l.b16 %v1959
    %v4015 = vunpack.c.l.b16 %v1960
    %v4016 = vunpack.c.l.b16 %v1961
    %v4017 = vunpack.c.l.b16 %v1962
    %v4018 = vunpack.c.l.b16 %v1963
    %v4019 = vunpack.c.l.b16 %v1964
    %v4020 = vunpack.c.l.b16 %v1965
    %v4021 = vunpack.c.l.b16 %v1966
    %v4022 = vunpack.c.l.b16 %v1967
    %v4023 = vunpack.c.l.b16 %v1968
    %v4024 = vunpack.c.l.b16 %v1969
    %v4025 = vunpack.c.l.b16 %v1970
    %v4026 = vunpack.c.l.b16 %v1971
    %v4027 = vunpack.c.l.b16 %v1972
    %v4028 = vunpack.c.l.b16 %v1973
    %v4029 = vunpack.c.l.b16 %v1974
    %v4030 = vunpack.c.l.b16 %v1975
    %v4031 = vunpack.c.l.b16 %v1976
    %v4032 = vunpack.c.l.b16 %v1977
    %v4033 = vunpack.c.l.b16 %v1978
    %v4034 = vunpack.c.l.b16 %v1979
    %v4035 = vunpack.c.l.b16 %v1980
    %v4036 = vunpack.c.l.b16 %v1981
    %v4037 = vunpack.c.l.b16 %v1982
    %v4038 = vunpack.c.l.b16 %v1983
    %v4039 = vunpack.c.l.b16 %v1984
    %v4040 = vunpack.c.l.b16 %v1985
    %v4041 = vunpack.c.l.b16 %v1986
    %v4042 = vunpack.c.l.b16 %v1987
    %v4043 = vunpack.c.l.b16 %v1988
    %v4044 = vunpack.c.l.b16 %v1989
    %v4045 = vunpack.c.l.b16 %v1990
    %v4046 = vunpack.c.l.b16 %v1991
    %v4047 = vunpack.c.l.b16 %v1992
    %v4048 = vunpack.c.l.b16 %v1993
    %v4049 = vunpack.c.l.b16 %v1994
    %v4050 = vunpack.c.l.b16 %v1995
    %v4051 = vunpack.c.l.b16 %v1996
    %v4052 = vunpack.c.l.b16 %v1997
    %v4053 = vunpack.c.l.b16 %v1998
    %v4054 = vunpack.c.l.b16 %v1999
    %v4055 = vunpack.c.l.b16 %v2000
    %v4056 = vunpack.c.l.b16 %v2001
    %v4057 = vunpack.c.l.b16 %v2002
    %v4058 = vunpack.c.l.b16 %v2003
    %v4059 = vunpack.c.l.b16 %v2004
    %v4060 = vunpack.c.l.b16 %v2005
    %v4061 = vunpack.c.l.b16 %v2006
    %v4062 = vunpack.c.l.b16 %v2007
    %v4063 = vunpack.c.l.b16 %v2008
    %v4064 = vunpack.c.l.b16 %v2009
    %v4065 = vunpack.c.l.b16 %v2010
    %v4066 = vunpack.c.l.b16 %v2011
    %v4067 = vunpack.c.l.b16 %v2012
    %v4068 = vunpack.c.l.b16 %v2013
    %v4069 = vunpack.c.l.b16 %v2014
    %v4070 = vunpack.c.l.b16 %v2015
    %v4071 = vunpack.c.l.b16 %v2016
    %v4072 = vunpack.c.l.b16 %v2017
    %v4073 = vunpack.c.l.b16 %v2018
    %v4074 = vunpack.c.l.b16 %v2019
    %v4075 = vunpack.c.l.b16 %v2020
    %v4076 = vunpack.c.l.b16 %v2021
    %v4077 = vunpack.c.l.b16 %v2022
    %v4078 = vunpack.c.l.b16 %v2023
    %v4079 = vunpack.c.l.b16 %v2024
    %v4080 = vunpack.c.l.b16 %v2025
    %v4081 = vunpack.c.l.b16 %v2026
    %v4082 = vunpack.c.l.b16 %v2027
    %v4083 = vunpack.c.l.b16 %v2028
    %v4084 = vunpack.c.l.b16 %v2029
    %v4085 = vunpack.c.l.b16 %v2030
    %v4086 = vunpack.c.l.b16 %v2031
    %v4087 = vunpack.c.l.b16 %v2032
    %v4088 = vunpack.c.l.b16 %v2033
    %v4089 = vunpack.c.l.b16 %v2034
    %v4090 = vunpack.c.l.b16 %v2035
    %v4091 = vunpack.c.l.b16 %v2036
    %v4092 = vunpack.c.l.b16 %v2037
    %v4093 = vunpack.c.l.b16 %v2038
    %v4094 = vunpack.c.l.b16 %v2039
    %v4095 = vunpack.c.l.b16 %v2040
    %v4096 = vunpack.c.l.b16 %v2041
    %v4097 = vunpack.c.l.b16 %v2042
    %v4098 = vunpack.c.l.b16 %v2043
    %v4099 = vunpack.c.l.b16 %v2044
    %v4100 = vunpack.c.l.b16 %v2045
    %v4101 = vunpack.c.l.b16 %v2046
    %v4102 = vunpack.c.l.b16 %v2047
    %v4103 = vunpack.c.l.b16 %v2048
    %v4104 = vunpack.c.l.b16 %v2049
    %v4105 = vunpack.c.l.b16 %v2050
    %v4106 = vunpack.c.l.b16 %v2051
    %v4107 = vunpack.c.l.b16 %v2052
    %v4108 = vunpack.c.l.b16 %v2053
    %v4109 = vunpack.c.l.b16 %v2054
    %v4110 = vunpack.c.l.b16 %v2055
    %v4111 = vunpack.c.l.b16 %v2056
    %v4112 = vunpack.c.l.b16 %v2057
    %v4113 = vunpack.c.l.b16 %v2058
    %v4114 = vunpack.c.l.b16 %v2059
    %v4115 = vunpack.c.l.b16 %v2060
    %v4116 = vunpack.c.l.b16 %v2061
    %v4117 = vunpack.c.l.b16 %v2062
    %v4118 = vunpack.c.l.b16 %v2063
    %v4119 = vunpack.c.l.b16 %v2064
    %v4120 = vunpack.c.l.b16 %v2065
    %v4121 = vunpack.c.l.b16 %v2066
    %v4122 = vunpack.c.l.b16 %v2067
    %v4123 = vunpack.c.l.b16 %v2068
    %v4124 = vunpack.c.l.b16 %v2069
    %v4125 = vunpack.c.l.b16 %v2070
    %v4126 = vunpack.c.l.b16 %v2071
    %v4127 = vunpack.c.l.b16 %v2072
    %v4128 = vunpack.c.l.b16 %v2073
    %v4129 = vunpack.c.l.b16 %v2074
    %v4130 = vunpack.c.l.b16 %v2075
    %v4131 = vunpack.c.l.b16 %v2076
    %v4132 = vunpack.c.l.b16 %v2077
    %v4133 = vunpack.c.l.b16 %v2078
    %v4134 = vunpack.c.l.b16 %v2079
    %v4135 = vunpack.c.l.b16 %v2080
    %v4136 = vunpack.c.l.b16 %v2081
    %v4137 = vunpack.c.l.b16 %v2082
    %v4138 = vunpack.c.l.b16 %v2083
    %v4139 = vunpack.c.l.b16 %v2084
    %v4140 = vunpack.c.l.b16 %v2085
    %v4141 = vunpack.c.l.b16 %v2086
    %v4142 = vunpack.c.l.b16 %v2087
    %v4143 = vunpack.c.l.b16 %v2088
    %v4144 = vunpack.c.l.b16 %v2089
    %v4145 = vunpack.c.l.b16 %v2090
    %v4146 = vunpack.c.l.b16 %v2091
    %v4147 = vunpack.c.l.b16 %v2092
    %v4148 = vunpack.c.l.b16 %v2093
    %v4149 = vunpack.c.l.b16 %v2094
    %v4150 = vunpack.c.l.b16 %v2095
    %v4151 = vunpack.c.l.b16 %v2096
    %v4152 = vunpack.c.l.b16 %v2097
    %v4153 = vunpack.c.l.b16 %v2098
    %v4154 = vunpack.c.l.b16 %v2099
    %v4155 = vunpack.c.l.b16 %v2100
    %v4156 = vunpack.c.l.b16 %v2101
    %v4157 = vunpack.c.l.b16 %v2102
    %v4158 = vunpack.c.l.b16 %v2103
    %v4159 = vunpack.c.l.b16 %v2104
    %v4160 = vunpack.c.l.b16 %v2105
    %v4161 = vunpack.c.l.b16 %v2106
    %v4162 = vunpack.c.l.b16 %v2107
    %v4163 = vunpack.c.l.b16 %v2108
    %v4164 = vunpack.c.l.b16 %v2109
    %v4165 = vunpack.c.l.b16 %v2110
    %v4166 = vunpack.c.l.b16 %v2111
    %v4167 = vunpack.c.l.b16 %v2112
    %v4168 = vunpack.c.l.b16 %v2113
    %v4169 = vunpack.c.l.b16 %v2114
    %v4170 = vunpack.c.l.b16 %v2115
    %v4171 = vunpack.c.l.b16 %v2116
    %v4172 = vunpack.c.l.b16 %v2117
    %v4173 = vunpack.c.l.b16 %v2118
    %v4174 = vunpack.c.l.b16 %v2119
    %v4175 = vunpack.c.l.b16 %v2120
    %v4176 = vunpack.c.l.b16 %v2121
    %v4177 = vunpack.c.l.b16 %v2122
    %v4178 = vunpack.c.l.b16 %v2123
    %v4179 = vunpack.c.l.b16 %v2124
    %v4180 = vunpack.c.l.b16 %v2125
    %v4181 = vunpack.c.l.b16 %v2126
    %v4182 = vunpack.c.l.b16 %v2127
    %v4183 = vunpack.c.l.b16 %v2128
    %v4184 = vunpack.c.l.b16 %v2129
    %v4185 = vunpack.c.l.b16 %v2130
    %v4186 = vunpack.c.l.b16 %v2131
    %v4187 = vunpack.c.l.b16 %v2132
    %v4188 = vunpack.c.l.b16 %v2133
    %v4189 = vunpack.c.l.b16 %v2134
    %v4190 = vunpack.c.l.b16 %v2135
    %v4191 = vunpack.c.l.b16 %v2136
    %v4192 = vunpack.c.l.b16 %v2137
    %v4193 = vunpack.c.l.b16 %v2138
    %v4194 = vunpack.c.l.b16 %v2139
    %v4195 = vunpack.c.l.b16 %v2140
    %v4196 = vunpack.c.l.b16 %v2141
    %v4197 = vunpack.c.l.b16 %v2142
    %v4198 = vunpack.c.l.b16 %v2143
    %v4199 = vunpack.c.l.b16 %v2144
    %v4200 = vunpack.c.l.b16 %v2145
    %v4201 = vunpack.c.l.b16 %v2146
    %v4202 = vunpack.c.l.b16 %v2147
    %v4203 = vunpack.c.l.b16 %v2148
    %v4204 = vunpack.c.l.b16 %v2149
    %v4205 = vunpack.c.l.b16 %v2150
    %v4206 = vunpack.c.l.b16 %v2151
    %v4207 = vunpack.c.l.b16 %v2152
    %v4208 = vunpack.c.l.b16 %v2153
    %v4209 = vunpack.c.l.b16 %v2154
    %v4210 = vunpack.c.l.b16 %v2155
    %v4211 = vunpack.c.l.b16 %v2156
    %v4212 = vunpack.c.l.b16 %v2157
    %v4213 = vunpack.c.l.b16 %v2158
    %v4214 = vunpack.c.l.b16 %v2159
    %v4215 = vunpack.c.l.b16 %v2160
    %v4216 = vunpack.c.l.b16 %v2161
    %v4217 = vunpack.c.l.b16 %v2162
    %v4218 = vunpack.c.l.b16 %v2163
    %v4219 = vunpack.c.l.b16 %v2164
    %v4220 = vunpack.c.l.b16 %v2165
    %v4221 = vunpack.c.l.b16 %v2166
    %v4222 = vunpack.c.l.b16 %v2167
    %v4223 = vunpack.c.l.b16 %v2168
    %v4224 = vunpack.c.l.b16 %v2169
    %v4225 = vunpack.c.l.b16 %v2170
    %v4226 = vunpack.c.l.b16 %v2171
    %v4227 = vunpack.c.l.b16 %v2172
    %v4228 = vunpack.c.l.b16 %v2173
    %v4229 = vunpack.c.l.b16 %v2174
    %v4230 = vunpack.c.l.b16 %v2175
    %v4231 = vunpack.c.l.b16 %v2176
    %v4232 = vunpack.c.l.b16 %v2177
    %v4233 = vunpack.c.l.b16 %v2178
    %v4234 = vunpack.c.l.b16 %v2179
    %v4235 = vunpack.c.l.b16 %v2180
    %v4236 = vunpack.c.l.b16 %v2181
    %v4237 = vunpack.c.l.b16 %v2182
    %v4238 = vunpack.c.l.b16 %v2183
    %v4239 = vunpack.c.l.b16 %v2184
    %v4240 = vunpack.c.l.b16 %v2185
    %v4241 = vunpack.c.l.b16 %v2186
    %v4242 = vunpack.c.l.b16 %v2187
    %v4243 = vunpack.c.l.b16 %v2188
    %v4244 = vunpack.c.l.b16 %v2189
    %v4245 = vunpack.c.l.b16 %v2190
    %v4246 = vunpack.c.l.b16 %v2191
    %v4247 = vunpack.c.l.b16 %v2192
    %v4248 = vunpack.c.l.b16 %v2193
    %v4249 = vunpack.c.l.b16 %v2194
    %v4250 = vunpack.c.l.b16 %v2195
    %v4251 = vunpack.c.l.b16 %v2196
    %v4252 = vunpack.c.l.b16 %v2197
    %v4253 = vunpack.c.l.b16 %v2198
    %v4254 = vunpack.c.l.b16 %v2199
    %v4255 = vunpack.c.l.b16 %v2200
    %v4256 = vunpack.c.l.b16 %v2201
    %v4257 = vunpack.c.l.b16 %v2202
    %v4258 = vunpack.c.l.b16 %v2203
    %v4259 = vunpack.c.l.b16 %v2204
    %v4260 = vunpack.c.l.b16 %v2205
    %v4261 = vunpack.c.l.b16 %v2206
    %v4262 = vunpack.c.l.b16 %v2207
    %v4263 = vunpack.c.l.b16 %v2208
    %v4264 = vunpack.c.l.b16 %v2209
    %v4265 = vunpack.c.l.b16 %v2210
    %v4266 = vunpack.c.l.b16 %v2211
    %v4267 = vunpack.c.l.b16 %v2212
    %v4268 = vunpack.c.l.b16 %v2213
    %v4269 = vunpack.c.l.b16 %v2214
    %v4270 = vunpack.c.l.b16 %v2215
    %v4271 = vunpack.c.l.b16 %v2216
    %v4272 = vunpack.c.l.b16 %v2217
    %v4273 = vunpack.c.l.b16 %v2218
    %v4274 = vunpack.c.l.b16 %v2219
    %v4275 = vunpack.c.l.b16 %v2220
    %v4276 = vunpack.c.l.b16 %v2221
    %v4277 = vunpack.c.l.b16 %v2222
    %v4278 = vunpack.c.l.b16 %v2223
    %v4279 = vunpack.c.l.b16 %v2224
    %v4280 = vunpack.c.l.b16 %v2225
    %v4281 = vunpack.c.l.b16 %v2226
    %v4282 = vunpack.c.l.b16 %v2227
    %v4283 = vunpack.c.l.b16 %v2228
    %v4284 = vunpack.c.l.b16 %v2229
    %v4285 = vunpack.c.l.b16 %v2230
    %v4286 = vunpack.c.l.b16 %v2231
    %v4287 = vunpack.c.l.b16 %v2232
    %v4288 = vunpack.c.l.b16 %v2233
    %v4289 = vunpack.c.l.b16 %v2234
    %v4290 = vunpack.c.l.b16 %v2235
    %v4291 = vunpack.c.l.b16 %v2236
    %v4292 = vunpack.c.l.b16 %v2237
    %v4293 = vunpack.c.l.b16 %v2238
    %v4294 = vunpack.c.l.b16 %v2239
    %v4295 = vunpack.c.l.b16 %v2240
    %v4296 = vunpack.c.l.b16 %v2241
    %v4297 = vunpack.c.l.b16 %v2242
    %v4298 = vunpack.c.l.b16 %v2243
    %v4299 = vunpack.c.l.b16 %v2244
    %v4300 = vunpack.c.l.b16 %v2245
    %v4301 = vunpack.c.l.b16 %v2246
    %v4302 = vunpack.c.l.b16 %v2247
    %v4303 = vunpack.c.l.b16 %v2248
    %v4304 = vunpack.c.l.b16 %v2249
    %v4305 = vunpack.c.l.b16 %v2250
    %v4306 = vunpack.c.l.b16 %v2251
    %v4307 = vunpack.c.l.b16 %v2252
    %v4308 = vunpack.c.l.b16 %v2253
    %v4309 = vunpack.c.l.b16 %v2254
    %v4310 = vunpack.c.l.b16 %v2255
    %v4311 = vunpack.c.l.b16 %v2256
    %v4312 = vunpack.c.l.b16 %v2257
    %v4313 = vunpack.c.l.b16 %v2258
    %v4314 = vunpack.c.l.b16 %v2259
    %v4315 = vunpack.c.l.b16 %v2260
    %v4316 = vunpack.c.l.b16 %v2261
    %v4317 = vunpack.c.l.b16 %v2262
    %v4318 = vunpack.c.l.b16 %v2263
    %v4319 = vunpack.c.l.b16 %v2264
    %v4320 = vunpack.c.l.b16 %v2265
    %v4321 = vunpack.c.l.b16 %v2266
    %v4322 = vunpack.c.l.b16 %v2267
    %v4323 = vunpack.c.l.b16 %v2268
    %v4324 = vunpack.c.l.b16 %v2269
    %v4325 = vunpack.c.l.b16 %v2270
    %v4326 = vunpack.c.l.b16 %v2271
    %v4327 = vunpack.c.l.b16 %v2272
    %v4328 = vunpack.c.l.b16 %v2273
    %v4329 = vunpack.c.l.b16 %v2274
    %v4330 = vunpack.c.l.b16 %v2275
    %v4331 = vunpack.c.l.b16 %v2276
    %v4332 = vunpack.c.l.b16 %v2277
    %v4333 = vunpack.c.l.b16 %v2278
    %v4334 = vunpack.c.l.b16 %v2279
    %v4335 = vunpack.c.l.b16 %v2280
    %v4336 = vunpack.c.l.b16 %v2281
    %v4337 = vunpack.c.l.b16 %v2282
    %v4338 = vunpack.c.l.b16 %v2283
    %v4339 = vunpack.c.l.b16 %v2284
    %v4340 = vunpack.c.l.b16 %v2285
    %v4341 = vunpack.c.l.b16 %v2286
    %v4342 = vunpack.c.l.b16 %v2287
    %v4343 = vunpack.c.l.b16 %v2288
    %v4344 = vunpack.c.l.b16 %v2289
    %v4345 = vunpack.c.l.b16 %v2290
    %v4346 = vunpack.c.l.b16 %v2291
    %v4347 = vunpack.c.l.b16 %v2292
    %v4348 = vunpack.c.l.b16 %v2293
    %v4349 = vunpack.c.l.b16 %v2294
    %v4350 = vunpack.c.l.b16 %v2295
    %v4351 = vunpack.c.l.b16 %v2296
    %v4352 = vunpack.c.l.b16 %v2297
    %v4353 = vunpack.c.l.b16 %v2298
    %v4354 = vunpack.c.l.b16 %v2299
    %v4355 = vunpack.c.l.b16 %v2300
    %v4356 = vunpack.c.l.b16 %v2301
    %v4357 = vunpack.c.l.b16 %v2302
    %v4358 = vunpack.c.l.b16 %v2303
    %v4359 = vunpack.c.l.b16 %v2304
    %v4360 = vunpack.c.l.b16 %v2305
    %v4361 = vunpack.c.l.b16 %v2306
    %v4362 = vunpack.c.l.b16 %v2307
    %v4363 = vunpack.c.l.b16 %v2308
    %v4364 = vunpack.c.l.b16 %v2309
    %v4365 = vunpack.c.l.b16 %v2310
    %v4366 = vunpack.c.l.b16 %v2311
    %v4367 = vunpack.c.l.b16 %v2312
    %v4368 = vunpack.c.l.b16 %v2313
    %v4369 = vunpack.c.l.b16 %v2314
    %v4370 = vunpack.c.l.b16 %v2315
    %v4371 = vunpack.c.l.b16 %v2316
    %v4372 = vunpack.c.l.b16 %v2317
    %v4373 = vunpack.c.l.b16 %v2318
    %v4374 = vunpack.c.l.b16 %v2319
    %v4375 = vunpack.c.l.b16 %v2320
    %v4376 = vunpack.c.l.b16 %v2321
    %v4377 = vunpack.c.l.b16 %v2322
    %v4378 = vunpack.c.l.b16 %v2323
    %v4379 = vunpack.c.l.b16 %v2324
    %v4380 = vunpack.c.l.b16 %v2325
    %v4381 = vunpack.c.l.b16 %v2326
    %v4382 = vunpack.c.l.b16 %v2327
    %v4383 = vunpack.c.l.b16 %v2328
    %v4384 = vunpack.c.l.b16 %v2329
    %v4385 = vunpack.c.l.b16 %v2330
    %v4386 = vunpack.c.l.b16 %v2331
    %v4387 = vunpack.c.l.b16 %v2332
    %v4388 = vunpack.c.l.b16 %v2333
    %v4389 = vunpack.c.l.b16 %v2334
    %v4390 = vunpack.c.l.b16 %v2335
    %v4391 = vunpack.c.l.b16 %v2336
    %v4392 = vunpack.c.l.b16 %v2337
    %v4393 = vunpack.c.l.b16 %v2338
    %v4394 = vunpack.c.l.b16 %v2339
    %v4395 = vunpack.c.l.b16 %v2340
    %v4396 = vunpack.c.l.b16 %v2341
    %v4397 = vunpack.c.l.b16 %v2342
    %v4398 = vunpack.c.l.b16 %v2343
    %v4399 = vunpack.c.l.b16 %v2344
    %v4400 = vunpack.c.l.b16 %v2345
    %v4401 = vunpack.c.l.b16 %v2346
    %v4402 = vunpack.c.l.b16 %v2347
    %v4403 = vunpack.c.l.b16 %v2348
    %v4404 = vunpack.c.l.b16 %v2349
    %v4405 = vunpack.c.l.b16 %v2350
    %v4406 = vunpack.c.l.b16 %v2351
    %v4407 = vunpack.c.l.b16 %v2352
    %v4408 = vunpack.c.l.b16 %v2353
    %v4409 = vunpack.c.l.b16 %v2354
    %v4410 = vunpack.c.l.b16 %v2355
    %v4411 = vunpack.c.l.b16 %v2356
    %v4412 = vunpack.c.l.b16 %v2357
    %v4413 = vunpack.c.l.b16 %v2358
    %v4414 = vunpack.c.l.b16 %v2359
    %v4415 = vunpack.c.l.b16 %v2360
    %v4416 = vunpack.c.l.b16 %v2361
    %v4417 = vunpack.c.l.b16 %v2362
    %v4418 = vunpack.c.l.b16 %v2363
    %v4419 = vunpack.c.l.b16 %v2364
    %v4420 = vunpack.c.l.b16 %v2365
    %v4421 = vunpack.c.l.b16 %v2366
    %v4422 = vunpack.c.l.b16 %v2367
    %v4423 = vunpack.c.l.b16 %v2368
    %v4424 = vunpack.c.l.b16 %v2369
    %v4425 = vunpack.c.l.b16 %v2370
    %v4426 = vunpack.c.l.b16 %v2371
    %v4427 = vunpack.c.l.b16 %v2372
    %v4428 = vunpack.c.l.b16 %v2373
    %v4429 = vunpack.c.l.b16 %v2374
    %v4430 = vunpack.c.l.b16 %v2375
    %v4431 = vunpack.c.l.b16 %v2376
    %v4432 = vunpack.c.l.b16 %v2377
    %v4433 = vunpack.c.l.b16 %v2378
    %v4434 = vunpack.c.l.b16 %v2379
    %v4435 = vunpack.c.l.b16 %v2380
    %v4436 = vunpack.c.l.b16 %v2381
    %v4437 = vunpack.c.l.b16 %v2382
    %v4438 = vunpack.c.l.b16 %v2383
    %v4439 = vunpack.c.l.b16 %v2384
    %v4440 = vunpack.c.l.b16 %v2385
    %v4441 = vunpack.c.l.b16 %v2386
    %v4442 = vunpack.c.l.b16 %v2387
    %v4443 = vunpack.c.l.b16 %v2388
    %v4444 = vunpack.c.l.b16 %v2389
    %v4445 = vunpack.c.l.b16 %v2390
    %v4446 = vunpack.c.l.b16 %v2391
    %v4447 = vunpack.c.l.b16 %v2392
    %v4448 = vunpack.c.l.b16 %v2393
    %v4449 = vunpack.c.l.b16 %v2394
    %v4450 = vunpack.c.l.b16 %v2395
    %v4451 = vunpack.c.l.b16 %v2396
    %v4452 = vunpack.c.l.b16 %v2397
    %v4453 = vunpack.c.l.b16 %v2398
    %v4454 = vunpack.c.l.b16 %v2399
    %v4455 = vunpack.c.l.b16 %v2400
    %v4456 = vunpack.c.l.b16 %v2401
    %v4457 = vunpack.c.l.b16 %v2402
    %v4458 = vunpack.c.l.b16 %v2403
    %v4459 = vunpack.c.l.b16 %v2404
    %v4460 = vunpack.c.l.b16 %v2405
    %v4461 = vunpack.c.l.b16 %v2406
    %v4462 = vunpack.c.l.b16 %v2407
    %v4463 = vunpack.c.l.b16 %v2408
    %v4464 = vunpack.c.l.b16 %v2409
    %v4465 = vunpack.c.l.b16 %v2410
    %v4466 = vunpack.c.l.b16 %v2411
    %v4467 = vunpack.c.l.b16 %v2412
    %v4468 = vunpack.c.l.b16 %v2413
    %v4469 = vunpack.c.l.b16 %v2414
    %v4470 = vunpack.c.l.b16 %v2415
    %v4471 = vunpack.c.l.b16 %v2416
    %v4472 = vunpack.c.l.b16 %v2417
    %v4473 = vunpack.c.l.b16 %v2418
    %v4474 = vunpack.c.l.b16 %v2419
    %v4475 = vunpack.c.l.b16 %v2420
    %v4476 = vunpack.c.l.b16 %v2421
    %v4477 = vunpack.c.l.b16 %v2422
    %v4478 = vunpack.c.l.b16 %v2423
    %v4479 = vunpack.c.l.b16 %v2424
    %v4480 = vunpack.c.l.b16 %v2425
    %v4481 = vunpack.c.l.b16 %v2426
    %v4482 = vunpack.c.l.b16 %v2427
    %v4483 = vunpack.c.l.b16 %v2428
    %v4484 = vunpack.c.l.b16 %v2429
    %v4485 = vunpack.c.l.b16 %v2430
    %v4486 = vunpack.c.l.b16 %v2431
    %v4487 = vunpack.c.l.b16 %v2432
    %v4488 = vunpack.c.l.b16 %v2433
    %v4489 = vunpack.c.l.b16 %v2434
    %v4490 = vunpack.c.l.b16 %v2435
    %v4491 = vunpack.c.l.b16 %v2436
    %v4492 = vunpack.c.l.b16 %v2437
    %v4493 = vunpack.c.l.b16 %v2438
    %v4494 = vunpack.c.l.b16 %v2439
    %v4495 = vunpack.c.l.b16 %v2440
    %v4496 = vunpack.c.l.b16 %v2441
    %v4497 = vunpack.c.l.b16 %v2442
    %v4498 = vunpack.c.l.b16 %v2443
    %v4499 = vunpack.c.l.b16 %v2444
    %v4500 = vunpack.c.l.b16 %v2445
    %v4501 = vunpack.c.l.b16 %v2446
    %v4502 = vunpack.c.l.b16 %v2447
    %v4503 = vunpack.c.l.b16 %v2448
    %v4504 = vunpack.c.l.b16 %v2449
    %v4505 = vunpack.c.l.b16 %v2450
    %v4506 = vunpack.c.l.b16 %v2451
    %v4507 = vunpack.c.l.b16 %v2452
    %v4508 = vunpack.c.l.b16 %v2453
    %v4509 = vunpack.c.l.b16 %v2454
    %v4510 = vunpack.c.l.b16 %v2455
    %v4511 = vunpack.c.l.b16 %v2456
    %v4512 = vunpack.c.l.b16 %v2457
    %v4513 = vunpack.c.l.b16 %v2458
    %v4514 = vunpack.c.l.b16 %v2459
    %v4515 = vunpack.c.l.b16 %v2460
    %v4516 = vunpack.c.l.b16 %v2461
    %v4517 = vunpack.c.l.b16 %v2462
    %v4518 = vunpack.c.l.b16 %v2463
    %v4519 = vunpack.c.l.b16 %v2464
    %v4520 = vunpack.c.l.b16 %v2465
    %v4521 = vunpack.c.l.b16 %v2466
    %v4522 = vunpack.c.l.b16 %v2467
    %v4523 = vunpack.c.l.b16 %v2468
    %v4524 = vunpack.c.l.b16 %v2469
    %v4525 = vunpack.c.l.b16 %v2470
    %v4526 = vunpack.c.l.b16 %v2471
    %v4527 = vunpack.c.l.b16 %v2472
    %v4528 = vunpack.c.l.b16 %v2473
    %v4529 = vunpack.c.l.b16 %v2474
    %v4530 = vunpack.c.l.b16 %v2475
    %v4531 = vunpack.c.l.b16 %v2476
    %v4532 = vunpack.c.l.b16 %v2477
    %v4533 = vunpack.c.l.b16 %v2478
    %v4534 = vunpack.c.l.b16 %v2479
    %v4535 = vunpack.c.l.b16 %v2480
    %v4536 = vunpack.c.l.b16 %v2481
    %v4537 = vunpack.c.l.b16 %v2482
    %v4538 = vunpack.c.l.b16 %v2483
    %v4539 = vunpack.c.l.b16 %v2484
    %v4540 = vunpack.c.l.b16 %v2485
    %v4541 = vunpack.c.l.b16 %v2486
    %v4542 = vunpack.c.l.b16 %v2487
    %v4543 = vunpack.c.l.b16 %v2488
    %v4544 = vunpack.c.l.b16 %v2489
    %v4545 = vunpack.c.l.b16 %v2490
    %v4546 = vunpack.c.l.b16 %v2491
    %v4547 = vunpack.c.l.b16 %v2492
    %v4548 = vunpack.c.l.b16 %v2493
    %v4549 = vunpack.c.l.b16 %v2494
    %v4550 = vunpack.c.l.b16 %v2495
    %v4551 = vunpack.c.l.b16 %v2496
    %v4552 = vunpack.c.l.b16 %v2497
    %v4553 = vunpack.c.l.b16 %v2498
    %v4554 = vunpack.c.l.b16 %v2499
    %v4555 = vunpack.c.l.b16 %v2500
    %v4556 = vunpack.c.l.b16 %v2501
    %v4557 = vunpack.c.l.b16 %v2502
    %v4558 = vunpack.c.l.b16 %v2503
    %v4559 = vunpack.c.l.b16 %v2504
    %v4560 = vunpack.c.l.b16 %v2505
    %v4561 = vunpack.c.l.b16 %v2506
    %v4562 = vunpack.c.l.b16 %v2507
    %v4563 = vunpack.c.l.b16 %v2508
    %v4564 = vunpack.c.l.b16 %v2509
    %v4565 = vunpack.c.l.b16 %v2510
    %v4566 = vunpack.c.l.b16 %v2511
    %v4567 = vunpack.c.l.b16 %v2512
    %v4568 = vunpack.c.l.b16 %v2513
    %v4569 = vunpack.c.l.b16 %v2514
    %v4570 = vunpack.c.l.b16 %v2515
    %v4571 = vunpack.c.l.b16 %v2516
    %v4572 = vunpack.c.l.b16 %v2517
    %v4573 = vunpack.c.l.b16 %v2518
    %v4574 = vunpack.c.l.b16 %v2519
    %v4575 = vunpack.c.l.b16 %v2520
    %v4576 = vunpack.c.l.b16 %v2521
    %v4577 = vunpack.c.l.b16 %v2522
    %v4578 = vunpack.c.l.b16 %v2523
    %v4579 = vunpack.c.l.b16 %v2524
    %v4580 = vunpack.c.l.b16 %v2525
    %v4581 = vunpack.c.l.b16 %v2526
    %v4582 = vunpack.c.l.b16 %v2527
    %v4583 = vunpack.c.l.b16 %v2528
    %v4584 = vunpack.c.l.b16 %v2529
    %v4585 = vunpack.c.l.b16 %v2530
    %v4586 = vunpack.c.l.b16 %v2531
    %v4587 = vunpack.c.l.b16 %v2532
    %v4588 = vunpack.c.l.b16 %v2533
    %v4589 = vunpack.c.l.b16 %v2534
    %v4590 = vunpack.c.l.b16 %v2535
    %v4591 = vunpack.c.l.b16 %v2536
    %v4592 = vunpack.c.l.b16 %v2537
    %v4593 = vunpack.c.l.b16 %v2538
    %v4594 = vunpack.c.l.b16 %v2539
    %v4595 = vunpack.c.l.b16 %v2540
    %v4596 = vunpack.c.l.b16 %v2541
    %v4597 = vunpack.c.l.b16 %v2542
    %v4598 = vunpack.c.l.b16 %v2543
    %v4599 = vunpack.c.l.b16 %v2544
    %v4600 = vunpack.c.l.b16 %v2545
    %v4601 = vunpack.c.l.b16 %v2546
    %v4602 = vunpack.c.l.b16 %v2547
    %v4603 = vunpack.c.l.b16 %v2548
    %v4604 = vunpack.c.l.b16 %v2549
    %v4605 = vunpack.c.l.b16 %v2550
    %v4606 = vunpack.c.l.b16 %v2551
    %v4607 = vunpack.c.l.b16 %v2552
    %v4608 = vunpack.c.l.b16 %v2553
    %v4609 = vunpack.c.l.b16 %v2554
    %v4610 = vunpack.c.l.b16 %v2555
    %v4611 = vunpack.c.l.b16 %v2556
    %v4612 = vunpack.c.l.b16 %v2557
    %v4613 = vunpack.c.l.b16 %v2558
    %v4614 = vunpack.c.l.b16 %v2559
    %v4615 = vunpack.c.l.b16 %v2560
    %v4616 = vunpack.c.l.b16 %v2561
    %v4617 = vunpack.c.l.b16 %v2562
    %v4618 = vunpack.c.l.b16 %v2563
    %v4619 = vunpack.c.l.b16 %v2564
    %v4620 = vunpack.c.l.b16 %v2565
    %v4621 = vunpack.c.l.b16 %v2566
    %v4622 = vunpack.c.l.b16 %v2567
    %v4623 = vunpack.c.l.b16 %v2568
    %v4624 = vunpack.c.l.b16 %v2569
    %v4625 = vunpack.c.l.b16 %v2570
    %v4626 = vunpack.c.l.b16 %v2571
    %v4627 = vunpack.c.l.b16 %v2572
    %v4628 = vunpack.c.l.b16 %v2573
    %v4629 = vunpack.c.l.b16 %v2574
    %v4630 = vunpack.c.l.b16 %v2575
    %v4631 = vunpack.c.l.b16 %v2576
    %v4632 = vunpack.c.l.b16 %v2577
    %v4633 = vunpack.c.l.b16 %v2578
    %v4634 = vunpack.c.l.b16 %v2579
    %v4635 = vunpack.c.l.b16 %v2580
    %v4636 = vunpack.c.l.b16 %v2581
    %v4637 = vunpack.c.l.b16 %v2582
    %v4638 = vunpack.c.l.b16 %v2583
    %v4639 = vunpack.c.l.b16 %v2584
    %v4640 = vunpack.c.l.b16 %v2585
    %v4641 = vunpack.c.l.b16 %v2586
    %v4642 = vunpack.c.l.b16 %v2587
    %v4643 = vunpack.c.l.b16 %v2588
    %v4644 = vunpack.c.l.b16 %v2589
    %v4645 = vunpack.c.l.b16 %v2590
    %v4646 = vunpack.c.l.b16 %v2591
    %v4647 = vunpack.c.l.b16 %v2592
    %v4648 = vunpack.c.l.b16 %v2593
    %v4649 = vunpack.c.l.b16 %v2594
    %v4650 = vunpack.c.l.b16 %v2595
    %v4651 = vunpack.c.l.b16 %v2596
    %v4652 = vunpack.c.l.b16 %v2597
    %v4653 = vunpack.c.l.b16 %v2598
    %v4654 = vunpack.c.l.b16 %v2599
    %v4655 = vunpack.c.l.b16 %v2600
    %v4656 = vunpack.c.l.b16 %v2601
    %v4657 = vunpack.c.l.b16 %v2602
    %v4658 = vunpack.c.l.b16 %v2603
    %v4659 = vunpack.c.l.b16 %v2604
    %v4660 = vunpack.c.l.b16 %v2605
    %v4661 = vunpack.c.l.b16 %v2606
    %v4662 = vunpack.c.l.b16 %v2607
    %v4663 = vunpack.c.l.b16 %v2608
    %v4664 = vunpack.c.l.b16 %v2609
    %v4665 = vunpack.c.l.b16 %v2610
    %v4666 = vunpack.c.l.b16 %v2611
    %v4667 = vunpack.c.l.b16 %v2612
    %v4668 = vunpack.c.l.b16 %v2613
    %v4669 = vunpack.c.l.b16 %v2614
    %v4670 = vunpack.c.l.b16 %v2615
    %v4671 = vunpack.c.l.b16 %v2616
    %v4672 = vunpack.c.l.b16 %v2617
    %v4673 = vunpack.c.l.b16 %v2618
    %v4674 = vunpack.c.l.b16 %v2619
    %v4675 = vunpack.c.l.b16 %v2620
    %v4676 = vunpack.c.l.b16 %v2621
    %v4677 = vunpack.c.l.b16 %v2622
    %v4678 = vunpack.c.l.b16 %v2623
    %v4679 = vunpack.c.l.b16 %v2624
    %v4680 = vunpack.c.l.b16 %v2625
    %v4681 = vunpack.c.l.b16 %v2626
    %v4682 = vunpack.c.l.b16 %v2627
    %v4683 = vunpack.c.l.b16 %v2628
    %v4684 = vunpack.c.l.b16 %v2629
    %v4685 = vunpack.c.l.b16 %v2630
    %v4686 = vunpack.c.l.b16 %v2631
    %v4687 = vunpack.c.l.b16 %v2632
    %v4688 = vunpack.c.l.b16 %v2633
    %v4689 = vunpack.c.l.b16 %v2634
    %v4690 = vunpack.c.l.b16 %v2635
    %v4691 = vunpack.c.l.b16 %v2636
    %v4692 = vunpack.c.l.b16 %v2637
    %v4693 = vunpack.c.l.b16 %v2638
    %v4694 = vunpack.c.l.b16 %v2639
    %v4695 = vunpack.c.l.b16 %v2640
    %v4696 = vunpack.c.l.b16 %v2641
    %v4697 = vunpack.c.l.b16 %v2642
    %v4698 = vunpack.c.l.b16 %v2643
    %v4699 = vunpack.c.l.b16 %v2644
    %v4700 = vunpack.c.l.b16 %v2645
    %v4701 = vunpack.c.l.b16 %v2646
    %v4702 = vunpack.c.l.b16 %v2647
    %v4703 = vunpack.c.l.b16 %v2648
    %v4704 = vunpack.c.l.b16 %v2649
    %v4705 = vunpack.c.l.b16 %v2650
    %v4706 = vunpack.c.l.b16 %v2651
    %v4707 = vunpack.c.l.b16 %v2652
    %v4708 = vunpack.c.l.b16 %v2653
    %v4709 = vunpack.c.l.b16 %v2654
    %v4710 = vunpack.c.l.b16 %v2655
    %v4711 = vunpack.c.l.b16 %v2656
    %v4712 = vunpack.c.l.b16 %v2657
    %v4713 = vunpack.c.l.b16 %v2658
    %v4714 = vunpack.c.l.b16 %v2659
    %v4715 = vunpack.c.l.b16 %v2660
    %v4716 = vunpack.c.l.b16 %v2661
    %v4717 = vunpack.c.l.b16 %v2662
    %v4718 = vunpack.c.l.b16 %v2663
    %v4719 = vunpack.c.l.b16 %v2664
    %v4720 = vunpack.c.l.b16 %v2665
    %v4721 = vunpack.c.l.b16 %v2666
    %v4722 = vunpack.c.l.b16 %v2667
    %v4723 = vunpack.c.l.b16 %v2668
    %v4724 = vunpack.c.l.b16 %v2669
    %v4725 = vunpack.c.l.b16 %v2670
    %v4726 = vunpack.c.l.b16 %v2671
    %v4727 = vunpack.c.l.b16 %v2672
    %v4728 = vunpack.c.l.b16 %v2673
    %v4729 = vunpack.c.l.b16 %v2674
    %v4730 = vunpack.c.l.b16 %v2675
    %v4731 = vunpack.c.l.b16 %v2676
    %v4732 = vunpack.c.l.b16 %v2677
    %v4733 = vunpack.c.l.b16 %v2678
    %v4734 = vunpack.c.l.b16 %v2679
    %v4735 = vunpack.c.l.b16 %v2680
    %v4736 = vunpack.c.l.b16 %v2681
    %v4737 = vunpack.c.l.b16 %v2682
    %v4738 = vunpack.c.l.b16 %v2683
    %v4739 = vunpack.c.l.b16 %v2684
    %v4740 = vunpack.c.l.b16 %v2685
    %v4741 = vunpack.c.l.b16 %v2686
    %v4742 = vunpack.c.l.b16 %v2687
    %v4743 = vunpack.c.l.b16 %v2688
    %v4744 = vunpack.c.l.b16 %v2689
    %v4745 = vunpack.c.l.b16 %v2690
    %v4746 = vunpack.c.l.b16 %v2691
    %v4747 = vunpack.c.l.b16 %v2692
    %v4748 = vunpack.c.l.b16 %v2693
    %v4749 = vunpack.c.l.b16 %v2694
    %v4750 = vunpack.c.l.b16 %v2695
    %v4751 = vunpack.c.l.b16 %v2696
    %v4752 = vunpack.c.l.b16 %v2697
    %v4753 = vunpack.c.l.b16 %v2698
    %v4754 = vunpack.c.l.b16 %v2699
    %v4755 = vunpack.c.l.b16 %v2700
    %v4756 = vunpack.c.l.b16 %v2701
    %v4757 = vunpack.c.l.b16 %v2702
    %v4758 = vunpack.c.l.b16 %v2703
    %v4759 = vunpack.c.l.b16 %v2704
    %v4760 = vunpack.c.l.b16 %v2705
    %v4761 = vunpack.c.l.b16 %v2706
    %v4762 = vunpack.c.l.b16 %v2707
    %v4763 = vunpack.c.l.b16 %v2708
    %v4764 = vunpack.c.l.b16 %v2709
    %v4765 = vunpack.c.l.b16 %v2710
    %v4766 = vunpack.c.l.b16 %v2711
    %v4767 = vunpack.c.l.b16 %v2712
    %v4768 = vunpack.c.l.b16 %v2713
    %v4769 = vunpack.c.l.b16 %v2714
    %v4770 = vunpack.c.l.b16 %v2715
    %v4771 = vunpack.c.l.b16 %v2716
    %v4772 = vunpack.c.l.b16 %v2717
    %v4773 = vunpack.c.l.b16 %v2718
    %v4774 = vunpack.c.l.b16 %v2719
    %v4775 = vunpack.c.l.b16 %v2720
    %v4776 = vunpack.c.l.b16 %v2721
    %v4777 = vunpack.c.l.b16 %v2722
    %v4778 = vunpack.c.l.b16 %v2723
    %v4779 = vunpack.c.l.b16 %v2724
    %v4780 = vunpack.c.l.b16 %v2725
    %v4781 = vunpack.c.l.b16 %v2726
    %v4782 = vunpack.c.l.b16 %v2727
    %v4783 = vunpack.c.l.b16 %v2728
    %v4784 = vunpack.c.l.b16 %v2729
    %v4785 = vunpack.c.l.b16 %v2730
    %v4786 = vunpack.c.l.b16 %v2731
    %v4787 = vunpack.c.l.b16 %v2732
    %v4788 = vunpack.c.l.b16 %v2733
    %v4789 = vunpack.c.l.b16 %v2734
    %v4790 = vunpack.c.l.b16 %v2735
    %v4791 = vunpack.c.l.b16 %v2736
    %v4792 = vunpack.c.l.b16 %v2737
    %v4793 = vunpack.c.l.b16 %v2738
    %v4794 = vunpack.c.l.b16 %v2739
    %v4795 = vunpack.c.l.b16 %v2740
    %v4796 = vunpack.c.l.b16 %v2741
    %v4797 = vunpack.c.l.b16 %v2742
    %v4798 = vunpack.c.l.b16 %v2743
    %v4799 = vunpack.c.l.b16 %v2744
    %v4800 = vunpack.c.l.b16 %v2745
    %v4801 = vunpack.c.l.b16 %v2746
    %v4802 = vunpack.c.l.b16 %v2747
    %v4803 = vunpack.c.l.b16 %v2748
    %v4804 = vunpack.c.l.b16 %v2749
    %v4805 = vunpack.c.l.b16 %v2750
    %v4806 = vunpack.c.l.b16 %v2751
    %v4807 = vunpack.c.l.b16 %v2752
    %v4808 = vunpack.c.l.b16 %v2753
    %v4809 = vunpack.c.l.b16 %v2754
    %v4810 = vunpack.c.l.b16 %v2755
    %v4811 = vunpack.c.l.b16 %v2756
    %v4812 = vunpack.c.l.b16 %v2757
    %v4813 = vunpack.c.l.b16 %v2758
    %v4814 = vunpack.c.l.b16 %v2759
    %v4815 = vunpack.c.l.b16 %v2760
    %v4816 = vunpack.c.l.b16 %v2761
    %v4817 = vunpack.c.l.b16 %v2762
    %v4818 = vunpack.c.l.b16 %v2763
    %v4819 = vunpack.c.l.b16 %v2764
    %v4820 = vunpack.c.l.b16 %v2765
    %v4821 = vunpack.c.l.b16 %v2766
    %v4822 = vunpack.c.l.b16 %v2767
    %v4823 = vunpack.c.l.b16 %v2768
    %v4824 = vunpack.c.l.b16 %v2769
    %v4825 = vunpack.c.l.b16 %v2770
    %v4826 = vunpack.c.l.b16 %v2771
    %v4827 = vunpack.c.l.b16 %v2772
    %v4828 = vunpack.c.l.b16 %v2773
    %v4829 = vunpack.c.l.b16 %v2774
    %v4830 = vunpack.c.l.b16 %v2775
    %v4831 = vunpack.c.l.b16 %v2776
    %v4832 = vunpack.c.l.b16 %v2777
    %v4833 = vunpack.c.l.b16 %v2778
    %v4834 = vunpack.c.l.b16 %v2779
    %v4835 = vunpack.c.l.b16 %v2780
    %v4836 = vunpack.c.l.b16 %v2781
    %v4837 = vunpack.c.l.b16 %v2782
    %v4838 = vunpack.c.l.b16 %v2783
    %v4839 = vunpack.c.l.b16 %v2784
    %v4840 = vunpack.c.l.b16 %v2785
    %v4841 = vunpack.c.l.b16 %v2786
    %v4842 = vunpack.c.l.b16 %v2787
    %v4843 = vunpack.c.l.b16 %v2788
    %v4844 = vunpack.c.l.b16 %v2789
    %v4845 = vunpack.c.l.b16 %v2790
    %v4846 = vunpack.c.l.b16 %v2791
    %v4847 = vunpack.c.l.b16 %v2792
    %v4848 = vunpack.c.l.b16 %v2793
    %v4849 = vunpack.c.l.b16 %v2794
    %v4850 = vunpack.c.l.b16 %v2795
    %v4851 = vunpack.c.l.b16 %v2796
    %v4852 = vunpack.c.l.b16 %v2797
    %v4853 = vunpack.c.l.b16 %v2798
    %v4854 = vunpack.c.l.b16 %v2799
    %v4855 = vunpack.c.l.b16 %v2800
    %v4856 = vunpack.c.l.b16 %v2801
    %v4857 = vunpack.c.l.b16 %v2802
    %v4858 = vunpack.c.l.b16 %v2803
    %v4859 = vunpack.c.l.b16 %v2804
    %v4860 = vunpack.c.l.b16 %v2805
    %v4861 = vunpack.c.l.b16 %v2806
    %v4862 = vunpack.c.l.b16 %v2807
    %v4863 = vunpack.c.l.b16 %v2808
    %v4864 = vunpack.c.l.b16 %v2809
    %v4865 = vunpack.c.l.b16 %v2810
    %v4866 = vunpack.c.l.b16 %v2811
    %v4867 = vunpack.c.l.b16 %v2812
    %v4868 = vunpack.c.l.b16 %v2813
    %v4869 = vunpack.c.l.b16 %v2814
    %v4870 = vunpack.c.l.b16 %v2815
    %v4871 = vunpack.c.l.b16 %v2816
    %v4872 = vunpack.c.l.b16 %v2817
    %v4873 = vunpack.c.l.b16 %v2818
    %v4874 = vunpack.c.l.b16 %v2819
    %v4875 = vunpack.c.l.b16 %v2820
    %v4876 = vunpack.c.l.b16 %v2821
    %v4877 = vunpack.c.l.b16 %v2822
    %v4878 = vunpack.c.l.b16 %v2823
    %v4879 = vunpack.c.l.b16 %v2824
    %v4880 = vunpack.c.l.b16 %v2825
    %v4881 = vunpack.c.l.b16 %v2826
    %v4882 = vunpack.c.l.b16 %v2827
    %v4883 = vunpack.c.l.b16 %v2828
    %v4884 = vunpack.c.l.b16 %v2829
    %v4885 = vunpack.c.l.b16 %v2830
    %v4886 = vunpack.c.l.b16 %v2831
    %v4887 = vunpack.c.l.b16 %v2832
    %v4888 = vunpack.c.l.b16 %v2833
    %v4889 = vunpack.c.l.b16 %v2834
    %v4890 = vunpack.c.l.b16 %v2835
    %v4891 = vunpack.c.l.b16 %v2836
    %v4892 = vunpack.c.l.b16 %v2837
    %v4893 = vunpack.c.l.b16 %v2838
    %v4894 = vunpack.c.l.b16 %v2839
    %v4895 = vunpack.c.l.b16 %v2840
    %v4896 = vunpack.c.l.b16 %v2841
    %v4897 = vunpack.c.l.b16 %v2842
    %v4898 = vunpack.c.l.b16 %v2843
    %v4899 = vunpack.c.l.b16 %v2844
    %v4900 = vunpack.c.l.b16 %v2845
    %v4901 = vunpack.c.l.b16 %v2846
    %v4902 = vunpack.c.l.b16 %v2847
    %v4903 = vunpack.c.l.b16 %v2848
    %v4904 = vunpack.c.l.b16 %v2849
    %v4905 = vunpack.c.l.b16 %v2850
    %v4906 = vunpack.c.l.b16 %v2851
    %v4907 = vunpack.c.l.b16 %v2852
    %v4908 = vunpack.c.l.b16 %v2853
    %v4909 = vunpack.c.l.b16 %v2854
    %v4910 = vunpack.c.l.b16 %v2855
    %v4911 = vunpack.c.l.b16 %v2856
    %v4912 = vunpack.c.l.b16 %v2857
    %v4913 = vunpack.c.l.b16 %v2858
    %v4914 = vunpack.c.l.b16 %v2859
    %v4915 = vunpack.c.l.b16 %v2860
    %v4916 = vunpack.c.l.b16 %v2861
    %v4917 = vunpack.c.l.b16 %v2862
    %v4918 = vunpack.c.l.b16 %v2863
    %v4919 = vunpack.c.l.b16 %v2864
    %v4920 = vunpack.c.l.b16 %v2865
    %v4921 = vunpack.c.l.b16 %v2866
    %v4922 = vunpack.c.l.b16 %v2867
    %v4923 = vunpack.c.l.b16 %v2868
    %v4924 = vunpack.c.l.b16 %v2869
    %v4925 = vunpack.c.l.b16 %v2870
    %v4926 = vunpack.c.l.b16 %v2871
    %v4927 = vunpack.c.l.b16 %v2872
    %v4928 = vunpack.c.l.b16 %v2873
    %v4929 = vunpack.c.l.b16 %v2874
    %v4930 = vunpack.c.l.b16 %v2875
    %v4931 = vunpack.c.l.b16 %v2876
    %v4932 = vunpack.c.l.b16 %v2877
    %v4933 = vunpack.c.l.b16 %v2878
    %v4934 = vunpack.c.l.b16 %v2879
    %v4935 = vunpack.c.l.b16 %v2880
    %v4936 = vunpack.c.l.b16 %v2881
    %v4937 = vunpack.c.l.b16 %v2882
    %v4938 = vunpack.c.l.b16 %v2883
    %v4939 = vunpack.c.l.b16 %v2884
    %v4940 = vunpack.c.l.b16 %v2885
    %v4941 = vunpack.c.l.b16 %v2886
    %v4942 = vunpack.c.l.b16 %v2887
    %v4943 = vunpack.c.l.b16 %v2888
    %v4944 = vunpack.c.l.b16 %v2889
    %v4945 = vunpack.c.l.b16 %v2890
    %v4946 = vunpack.c.l.b16 %v2891
    %v4947 = vunpack.c.l.b16 %v2892
    %v4948 = vunpack.c.l.b16 %v2893
    %v4949 = vunpack.c.l.b16 %v2894
    %v4950 = vunpack.c.l.b16 %v2895
    %v4951 = vunpack.c.l.b16 %v2896
    %v4952 = vunpack.c.l.b16 %v2897
    %v4953 = vunpack.c.l.b16 %v2898
    %v4954 = vunpack.c.l.b16 %v2899
    %v4955 = vunpack.c.l.b16 %v2900
    %v4956 = vunpack.c.l.b16 %v2901
    %v4957 = vunpack.c.l.b16 %v2902
    %v4958 = vunpack.c.l.b16 %v2903
    %v4959 = vunpack.c.l.b16 %v2904
    %v4960 = vunpack.c.l.b16 %v2905
    %v4961 = vunpack.c.l.b16 %v2906
    %v4962 = vunpack.c.l.b16 %v2907
    %v4963 = vunpack.c.l.b16 %v2908
    %v4964 = vunpack.c.l.b16 %v2909
    %v4965 = vunpack.c.l.b16 %v2910
    %v4966 = vunpack.c.l.b16 %v2911
    %v4967 = vunpack.c.l.b16 %v2912
    %v4968 = vunpack.c.l.b16 %v2913
    %v4969 = vunpack.c.l.b16 %v2914
    %v4970 = vunpack.c.l.b16 %v2915
    %v4971 = vunpack.c.l.b16 %v2916
    %v4972 = vunpack.c.l.b16 %v2917
    %v4973 = vunpack.c.l.b16 %v2918
    %v4974 = vunpack.c.l.b16 %v2919
    %v4975 = vunpack.c.l.b16 %v2920
    %v4976 = vunpack.c.l.b16 %v2921
    %v4977 = vunpack.c.l.b16 %v2922
    %v4978 = vunpack.c.l.b16 %v2923
    %v4979 = vunpack.c.l.b16 %v2924
    %v4980 = vunpack.c.l.b16 %v2925
    %v4981 = vunpack.c.l.b16 %v2926
    %v4982 = vunpack.c.l.b16 %v2927
    %v4983 = vunpack.c.l.b16 %v2928
    %v4984 = vunpack.c.l.b16 %v2929
    %v4985 = vunpack.c.l.b16 %v2930
    %v4986 = vunpack.c.l.b16 %v2931
    %v4987 = vunpack.c.l.b16 %v2932
    %v4988 = vunpack.c.l.b16 %v2933
    %v4989 = vunpack.c.l.b16 %v2934
    %v4990 = vunpack.c.l.b16 %v2935
    %v4991 = vunpack.c.l.b16 %v2936
    %v4992 = vunpack.c.l.b16 %v2937
    %v4993 = vunpack.c.l.b16 %v2938
    %v4994 = vunpack.c.l.b16 %v2939
    %v4995 = vunpack.c.l.b16 %v2940
    %v4996 = vunpack.c.l.b16 %v2941
    %v4997 = vunpack.c.l.b16 %v2942
    %v4998 = vunpack.c.l.b16 %v2943
    %v4999 = vunpack.c.l.b16 %v2944
    %v5000 = vunpack.c.l.b16 %v2945
    %v5001 = vunpack.c.l.b16 %v2946
    %v5002 = vunpack.c.l.b16 %v2947
    %v5003 = vunpack.c.l.b16 %v2948
    %v5004 = vunpack.c.l.b16 %v2949
    %v5005 = vunpack.c.l.b16 %v2950
    %v5006 = vunpack.c.l.b16 %v2951
    %v5007 = vunpack.c.l.b16 %v2952
    %v5008 = vunpack.c.l.b16 %v2953
    %v5009 = vunpack.c.l.b16 %v2954
    %v5010 = vunpack.c.l.b16 %v2955
    %v5011 = vunpack.c.l.b16 %v2956
    %v5012 = vunpack.c.l.b16 %v2957
    %v5013 = vunpack.c.l.b16 %v2958
    %v5014 = vunpack.c.l.b16 %v2959
    %v5015 = vunpack.c.l.b16 %v2960
    %v5016 = vunpack.c.l.b16 %v2961
    %v5017 = vunpack.c.l.b16 %v2962
    %v5018 = vunpack.c.l.b16 %v2963
    %v5019 = vunpack.c.l.b16 %v2964
    %v5020 = vunpack.c.l.b16 %v2965
    %v5021 = vunpack.c.l.b16 %v2966
    %v5022 = vunpack.c.l.b16 %v2967
    %v5023 = vunpack.c.l.b16 %v2968
    %v5024 = vunpack.c.l.b16 %v2969
    %v5025 = vunpack.c.l.b16 %v2970
    %v5026 = vunpack.c.l.b16 %v2971
    %v5027 = vunpack.c.l.b16 %v2972
    %v5028 = vunpack.c.l.b16 %v2973
    %v5029 = vunpack.c.l.b16 %v2974
    %v5030 = vunpack.c.l.b16 %v2975
    %v5031 = vunpack.c.l.b16 %v2976
    %v5032 = vpack.c.b16 %v4009, %v4008
    %v5033 = vpack.c.b16 %v4011, %v4010
    %v5034 = vpack.c.b16 %v4013, %v4012
    %v5035 = vpack.c.b16 %v4015, %v4014
    %v5036 = vpack.c.b16 %v4017, %v4016
    %v5037 = vpack.c.b16 %v4019, %v4018
    %v5038 = vpack.c.b16 %v4021, %v4020
    %v5039 = vpack.c.b16 %v4023, %v4022
    %v5040 = vpack.c.b16 %v4025, %v4024
    %v5041 = vpack.c.b16 %v4027, %v4026
    %v5042 = vpack.c.b16 %v4029, %v4028
    %v5043 = vpack.c.b16 %v4031, %v4030
    %v5044 = vpack.c.b16 %v4033, %v4032
    %v5045 = vpack.c.b16 %v4035, %v4034
    %v5046 = vpack.c.b16 %v4037, %v4036
    %v5047 = vpack.c.b16 %v4039, %v4038
    %v5048 = vpack.c.b16 %v4041, %v4040
    %v5049 = vpack.c.b16 %v4043, %v4042
    %v5050 = vpack.c.b16 %v4045, %v4044
    %v5051 = vpack.c.b16 %v4047, %v4046
    %v5052 = vpack.c.b16 %v4049, %v4048
    %v5053 = vpack.c.b16 %v4051, %v4050
    %v5054 = vpack.c.b16 %v4053, %v4052
    %v5055 = vpack.c.b16 %v4055, %v4054
    %v5056 = vpack.c.b16 %v4057, %v4056
    %v5057 = vpack.c.b16 %v4059, %v4058
    %v5058 = vpack.c.b16 %v4061, %v4060
    %v5059 = vpack.c.b16 %v4063, %v4062
    %v5060 = vpack.c.b16 %v4065, %v4064
    %v5061 = vpack.c.b16 %v4067, %v4066
    %v5062 = vpack.c.b16 %v4069, %v4068
    %v5063 = vpack.c.b16 %v4071, %v4070
    %v5064 = vpack.c.b16 %v4073, %v4072
    %v5065 = vpack.c.b16 %v4075, %v4074
    %v5066 = vpack.c.b16 %v4077, %v4076
    %v5067 = vpack.c.b16 %v4079, %v4078
    %v5068 = vpack.c.b16 %v4081, %v4080
    %v5069 = vpack.c.b16 %v4083, %v4082
    %v5070 = vpack.c.b16 %v4085, %v4084
    %v5071 = vpack.c.b16 %v4087, %v4086
    %v5072 = vpack.c.b16 %v4089, %v4088
    %v5073 = vpack.c.b16 %v4091, %v4090
    %v5074 = vpack.c.b16 %v4093, %v4092
    %v5075 = vpack.c.b16 %v4095, %v4094
    %v5076 = vpack.c.b16 %v4097, %v4096
    %v5077 = vpack.c.b16 %v4099, %v4098
    %v5078 = vpack.c.b16 %v4101, %v4100
    %v5079 = vpack.c.b16 %v4103, %v4102
    %v5080 = vpack.c.b16 %v4105, %v4104
    %v5081 = vpack.c.b16 %v4107, %v4106
    %v5082 = vpack.c.b16 %v4109, %v4108
    %v5083 = vpack.c.b16 %v4111, %v4110
    %v5084 = vpack.c.b16 %v4113, %v4112
    %v5085 = vpack.c.b16 %v4115, %v4114
    %v5086 = vpack.c.b16 %v4117, %v4116
    %v5087 = vpack.c.b16 %v4119, %v4118
    %v5088 = vpack.c.b16 %v4121, %v4120
    %v5089 = vpack.c.b16 %v4123, %v4122
    %v5090 = vpack.c.b16 %v4125, %v4124
    %v5091 = vpack.c.b16 %v4127, %v4126
    %v5092 = vpack.c.b16 %v4129, %v4128
    %v5093 = vpack.c.b16 %v4131, %v4130
    %v5094 = vpack.c.b16 %v4133, %v4132
    %v5095 = vpack.c.b16 %v4135, %v4134
    %v5096 = vpack.c.b16 %v4137, %v4136
    %v5097 = vpack.c.b16 %v4139, %v4138
    %v5098 = vpack.c.b16 %v4141, %v4140
    %v5099 = vpack.c.b16 %v4143, %v4142
    %v5100 = vpack.c.b16 %v4145, %v4144
    %v5101 = vpack.c.b16 %v4147, %v4146
    %v5102 = vpack.c.b16 %v4149, %v4148
    %v5103 = vpack.c.b16 %v4151, %v4150
    %v5104 = vpack.c.b16 %v4153, %v4152
    %v5105 = vpack.c.b16 %v4155, %v4154
    %v5106 = vpack.c.b16 %v4157, %v4156
    %v5107 = vpack.c.b16 %v4159, %v4158
    %v5108 = vpack.c.b16 %v4161, %v4160
    %v5109 = vpack.c.b16 %v4163, %v4162
    %v5110 = vpack.c.b16 %v4165, %v4164
    %v5111 = vpack.c.b16 %v4167, %v4166
    %v5112 = vpack.c.b16 %v4169, %v4168
    %v5113 = vpack.c.b16 %v4171, %v4170
    %v5114 = vpack.c.b16 %v4173, %v4172
    %v5115 = vpack.c.b16 %v4175, %v4174
    %v5116 = vpack.c.b16 %v4177, %v4176
    %v5117 = vpack.c.b16 %v4179, %v4178
    %v5118 = vpack.c.b16 %v4181, %v4180
    %v5119 = vpack.c.b16 %v4183, %v4182
    %v5120 = vpack.c.b16 %v4185, %v4184
    %v5121 = vpack.c.b16 %v4187, %v4186
    %v5122 = vpack.c.b16 %v4189, %v4188
    %v5123 = vpack.c.b16 %v4191, %v4190
    %v5124 = vpack.c.b16 %v4193, %v4192
    %v5125 = vpack.c.b16 %v4195, %v4194
    %v5126 = vpack.c.b16 %v4197, %v4196
    %v5127 = vpack.c.b16 %v4199, %v4198
    %v5128 = vpack.c.b16 %v4201, %v4200
    %v5129 = vpack.c.b16 %v4203, %v4202
    %v5130 = vpack.c.b16 %v4205, %v4204
    %v5131 = vpack.c.b16 %v4207, %v4206
    %v5132 = vpack.c.b16 %v4209, %v4208
    %v5133 = vpack.c.b16 %v4211, %v4210
    %v5134 = vpack.c.b16 %v4213, %v4212
    %v5135 = vpack.c.b16 %v4215, %v4214
    %v5136 = vpack.c.b16 %v4217, %v4216
    %v5137 = vpack.c.b16 %v4219, %v4218
    %v5138 = vpack.c.b16 %v4221, %v4220
    %v5139 = vpack.c.b16 %v4223, %v4222
    %v5140 = vpack.c.b16 %v4225, %v4224
    %v5141 = vpack.c.b16 %v4227, %v4226
    %v5142 = vpack.c.b16 %v4229, %v4228
    %v5143 = vpack.c.b16 %v4231, %v4230
    %v5144 = vpack.c.b16 %v4233, %v4232
    %v5145 = vpack.c.b16 %v4235, %v4234
    %v5146 = vpack.c.b16 %v4237, %v4236
    %v5147 = vpack.c.b16 %v4239, %v4238
    %v5148 = vpack.c.b16 %v4241, %v4240
    %v5149 = vpack.c.b16 %v4243, %v4242
    %v5150 = vpack.c.b16 %v4245, %v4244
    %v5151 = vpack.c.b16 %v4247, %v4246
    %v5152 = vpack.c.b16 %v4249, %v4248
    %v5153 = vpack.c.b16 %v4251, %v4250
    %v5154 = vpack.c.b16 %v4253, %v4252
    %v5155 = vpack.c.b16 %v4255, %v4254
    %v5156 = vpack.c.b16 %v4257, %v4256
    %v5157 = vpack.c.b16 %v4259, %v4258
    %v5158 = vpack.c.b16 %v4261, %v4260
    %v5159 = vpack.c.b16 %v4263, %v4262
    %v5160 = vpack.c.b16 %v4265, %v4264
    %v5161 = vpack.c.b16 %v4267, %v4266
    %v5162 = vpack.c.b16 %v4269, %v4268
    %v5163 = vpack.c.b16 %v4271, %v4270
    %v5164 = vpack.c.b16 %v4273, %v4272
    %v5165 = vpack.c.b16 %v4275, %v4274
    %v5166 = vpack.c.b16 %v4277, %v4276
    %v5167 = vpack.c.b16 %v4279, %v4278
    %v5168 = vpack.c.b16 %v4281, %v4280
    %v5169 = vpack.c.b16 %v4283, %v4282
    %v5170 = vpack.c.b16 %v4285, %v4284
    %v5171 = vpack.c.b16 %v4287, %v4286
    %v5172 = vpack.c.b16 %v4289, %v4288
    %v5173 = vpack.c.b16 %v4291, %v4290
    %v5174 = vpack.c.b16 %v4293, %v4292
    %v5175 = vpack.c.b16 %v4295, %v4294
    %v5176 = vpack.c.b16 %v4297, %v4296
    %v5177 = vpack.c.b16 %v4299, %v4298
    %v5178 = vpack.c.b16 %v4301, %v4300
    %v5179 = vpack.c.b16 %v4303, %v4302
    %v5180 = vpack.c.b16 %v4305, %v4304
    %v5181 = vpack.c.b16 %v4307, %v4306
    %v5182 = vpack.c.b16 %v4309, %v4308
    %v5183 = vpack.c.b16 %v4311, %v4310
    %v5184 = vpack.c.b16 %v4313, %v4312
    %v5185 = vpack.c.b16 %v4315, %v4314
    %v5186 = vpack.c.b16 %v4317, %v4316
    %v5187 = vpack.c.b16 %v4319, %v4318
    %v5188 = vpack.c.b16 %v4321, %v4320
    %v5189 = vpack.c.b16 %v4323, %v4322
    %v5190 = vpack.c.b16 %v4325, %v4324
    %v5191 = vpack.c.b16 %v4327, %v4326
    %v5192 = vpack.c.b16 %v4329, %v4328
    %v5193 = vpack.c.b16 %v4331, %v4330
    %v5194 = vpack.c.b16 %v4333, %v4332
    %v5195 = vpack.c.b16 %v4335, %v4334
    %v5196 = vpack.c.b16 %v4337, %v4336
    %v5197 = vpack.c.b16 %v4339, %v4338
    %v5198 = vpack.c.b16 %v4341, %v4340
    %v5199 = vpack.c.b16 %v4343, %v4342
    %v5200 = vpack.c.b16 %v4345, %v4344
    %v5201 = vpack.c.b16 %v4347, %v4346
    %v5202 = vpack.c.b16 %v4349, %v4348
    %v5203 = vpack.c.b16 %v4351, %v4350
    %v5204 = vpack.c.b16 %v4353, %v4352
    %v5205 = vpack.c.b16 %v4355, %v4354
    %v5206 = vpack.c.b16 %v4357, %v4356
    %v5207 = vpack.c.b16 %v4359, %v4358
    %v5208 = vpack.c.b16 %v4361, %v4360
    %v5209 = vpack.c.b16 %v4363, %v4362
    %v5210 = vpack.c.b16 %v4365, %v4364
    %v5211 = vpack.c.b16 %v4367, %v4366
    %v5212 = vpack.c.b16 %v4369, %v4368
    %v5213 = vpack.c.b16 %v4371, %v4370
    %v5214 = vpack.c.b16 %v4373, %v4372
    %v5215 = vpack.c.b16 %v4375, %v4374
    %v5216 = vpack.c.b16 %v4377, %v4376
    %v5217 = vpack.c.b16 %v4379, %v4378
    %v5218 = vpack.c.b16 %v4381, %v4380
    %v5219 = vpack.c.b16 %v4383, %v4382
    %v5220 = vpack.c.b16 %v4385, %v4384
    %v5221 = vpack.c.b16 %v4387, %v4386
    %v5222 = vpack.c.b16 %v4389, %v4388
    %v5223 = vpack.c.b16 %v4391, %v4390
    %v5224 = vpack.c.b16 %v4393, %v4392
    %v5225 = vpack.c.b16 %v4395, %v4394
    %v5226 = vpack.c.b16 %v4397, %v4396
    %v5227 = vpack.c.b16 %v4399, %v4398
    %v5228 = vpack.c.b16 %v4401, %v4400
    %v5229 = vpack.c.b16 %v4403, %v4402
    %v5230 = vpack.c.b16 %v4405, %v4404
    %v5231 = vpack.c.b16 %v4407, %v4406
    %v5232 = vpack.c.b16 %v4409, %v4408
    %v5233 = vpack.c.b16 %v4411, %v4410
    %v5234 = vpack.c.b16 %v4413, %v4412
    %v5235 = vpack.c.b16 %v4415, %v4414
    %v5236 = vpack.c.b16 %v4417, %v4416
    %v5237 = vpack.c.b16 %v4419, %v4418
    %v5238 = vpack.c.b16 %v4421, %v4420
    %v5239 = vpack.c.b16 %v4423, %v4422
    %v5240 = vpack.c.b16 %v4425, %v4424
    %v5241 = vpack.c.b16 %v4427, %v4426
    %v5242 = vpack.c.b16 %v4429, %v4428
    %v5243 = vpack.c.b16 %v4431, %v4430
    %v5244 = vpack.c.b16 %v4433, %v4432
    %v5245 = vpack.c.b16 %v4435, %v4434
    %v5246 = vpack.c.b16 %v4437, %v4436
    %v5247 = vpack.c.b16 %v4439, %v4438
    %v5248 = vpack.c.b16 %v4441, %v4440
    %v5249 = vpack.c.b16 %v4443, %v4442
    %v5250 = vpack.c.b16 %v4445, %v4444
    %v5251 = vpack.c.b16 %v4447, %v4446
    %v5252 = vpack.c.b16 %v4449, %v4448
    %v5253 = vpack.c.b16 %v4451, %v4450
    %v5254 = vpack.c.b16 %v4453, %v4452
    %v5255 = vpack.c.b16 %v4455, %v4454
    %v5256 = vpack.c.b16 %v4457, %v4456
    %v5257 = vpack.c.b16 %v4459, %v4458
    %v5258 = vpack.c.b16 %v4461, %v4460
    %v5259 = vpack.c.b16 %v4463, %v4462
    %v5260 = vpack.c.b16 %v4465, %v4464
    %v5261 = vpack.c.b16 %v4467, %v4466
    %v5262 = vpack.c.b16 %v4469, %v4468
    %v5263 = vpack.c.b16 %v4471, %v4470
    %v5264 = vpack.c.b16 %v4473, %v4472
    %v5265 = vpack.c.b16 %v4475, %v4474
    %v5266 = vpack.c.b16 %v4477, %v4476
    %v5267 = vpack.c.b16 %v4479, %v4478
    %v5268 = vpack.c.b16 %v4481, %v4480
    %v5269 = vpack.c.b16 %v4483, %v4482
    %v5270 = vpack.c.b16 %v4485, %v4484
    %v5271 = vpack.c.b16 %v4487, %v4486
    %v5272 = vpack.c.b16 %v4489, %v4488
    %v5273 = vpack.c.b16 %v4491, %v4490
    %v5274 = vpack.c.b16 %v4493, %v4492
    %v5275 = vpack.c.b16 %v4495, %v4494
    %v5276 = vpack.c.b16 %v4497, %v4496
    %v5277 = vpack.c.b16 %v4499, %v4498
    %v5278 = vpack.c.b16 %v4501, %v4500
    %v5279 = vpack.c.b16 %v4503, %v4502
    %v5280 = vpack.c.b16 %v4505, %v4504
    %v5281 = vpack.c.b16 %v4507, %v4506
    %v5282 = vpack.c.b16 %v4509, %v4508
    %v5283 = vpack.c.b16 %v4511, %v4510
    %v5284 = vpack.c.b16 %v4513, %v4512
    %v5285 = vpack.c.b16 %v4515, %v4514
    %v5286 = vpack.c.b16 %v4517, %v4516
    %v5287 = vpack.c.b16 %v4519, %v4518
    %v5288 = vpack.c.b16 %v4521, %v4520
    %v5289 = vpack.c.b16 %v4523, %v4522
    %v5290 = vpack.c.b16 %v4525, %v4524
    %v5291 = vpack.c.b16 %v4527, %v4526
    %v5292 = vpack.c.b16 %v4529, %v4528
    %v5293 = vpack.c.b16 %v4531, %v4530
    %v5294 = vpack.c.b16 %v4533, %v4532
    %v5295 = vpack.c.b16 %v4535, %v4534
    %v5296 = vpack.c.b16 %v4537, %v4536
    %v5297 = vpack.c.b16 %v4539, %v4538
    %v5298 = vpack.c.b16 %v4541, %v4540
    %v5299 = vpack.c.b16 %v4543, %v4542
    %v5300 = vpack.c.b16 %v4545, %v4544
    %v5301 = vpack.c.b16 %v4547, %v4546
    %v5302 = vpack.c.b16 %v4549, %v4548
    %v5303 = vpack.c.b16 %v4551, %v4550
    %v5304 = vpack.c.b16 %v4553, %v4552
    %v5305 = vpack.c.b16 %v4555, %v4554
    %v5306 = vpack.c.b16 %v4557, %v4556
    %v5307 = vpack.c.b16 %v4559, %v4558
    %v5308 = vpack.c.b16 %v4561, %v4560
    %v5309 = vpack.c.b16 %v4563, %v4562
    %v5310 = vpack.c.b16 %v4565, %v4564
    %v5311 = vpack.c.b16 %v4567, %v4566
    %v5312 = vpack.c.b16 %v4569, %v4568
    %v5313 = vpack.c.b16 %v4571, %v4570
    %v5314 = vpack.c.b16 %v4573, %v4572
    %v5315 = vpack.c.b16 %v4575, %v4574
    %v5316 = vpack.c.b16 %v4577, %v4576
    %v5317 = vpack.c.b16 %v4579, %v4578
    %v5318 = vpack.c.b16 %v4581, %v4580
    %v5319 = vpack.c.b16 %v4583, %v4582
    %v5320 = vpack.c.b16 %v4585, %v4584
    %v5321 = vpack.c.b16 %v4587, %v4586
    %v5322 = vpack.c.b16 %v4589, %v4588
    %v5323 = vpack.c.b16 %v4591, %v4590
    %v5324 = vpack.c.b16 %v4593, %v4592
    %v5325 = vpack.c.b16 %v4595, %v4594
    %v5326 = vpack.c.b16 %v4597, %v4596
    %v5327 = vpack.c.b16 %v4599, %v4598
    %v5328 = vpack.c.b16 %v4601, %v4600
    %v5329 = vpack.c.b16 %v4603, %v4602
    %v5330 = vpack.c.b16 %v4605, %v4604
    %v5331 = vpack.c.b16 %v4607, %v4606
    %v5332 = vpack.c.b16 %v4609, %v4608
    %v5333 = vpack.c.b16 %v4611, %v4610
    %v5334 = vpack.c.b16 %v4613, %v4612
    %v5335 = vpack.c.b16 %v4615, %v4614
    %v5336 = vpack.c.b16 %v4617, %v4616
    %v5337 = vpack.c.b16 %v4619, %v4618
    %v5338 = vpack.c.b16 %v4621, %v4620
    %v5339 = vpack.c.b16 %v4623, %v4622
    %v5340 = vpack.c.b16 %v4625, %v4624
    %v5341 = vpack.c.b16 %v4627, %v4626
    %v5342 = vpack.c.b16 %v4629, %v4628
    %v5343 = vpack.c.b16 %v4631, %v4630
    %v5344 = vpack.c.b16 %v4633, %v4632
    %v5345 = vpack.c.b16 %v4635, %v4634
    %v5346 = vpack.c.b16 %v4637, %v4636
    %v5347 = vpack.c.b16 %v4639, %v4638
    %v5348 = vpack.c.b16 %v4641, %v4640
    %v5349 = vpack.c.b16 %v4643, %v4642
    %v5350 = vpack.c.b16 %v4645, %v4644
    %v5351 = vpack.c.b16 %v4647, %v4646
    %v5352 = vpack.c.b16 %v4649, %v4648
    %v5353 = vpack.c.b16 %v4651, %v4650
    %v5354 = vpack.c.b16 %v4653, %v4652
    %v5355 = vpack.c.b16 %v4655, %v4654
    %v5356 = vpack.c.b16 %v4657, %v4656
    %v5357 = vpack.c.b16 %v4659, %v4658
    %v5358 = vpack.c.b16 %v4661, %v4660
    %v5359 = vpack.c.b16 %v4663, %v4662
    %v5360 = vpack.c.b16 %v4665, %v4664
    %v5361 = vpack.c.b16 %v4667, %v4666
    %v5362 = vpack.c.b16 %v4669, %v4668
    %v5363 = vpack.c.b16 %v4671, %v4670
    %v5364 = vpack.c.b16 %v4673, %v4672
    %v5365 = vpack.c.b16 %v4675, %v4674
    %v5366 = vpack.c.b16 %v4677, %v4676
    %v5367 = vpack.c.b16 %v4679, %v4678
    %v5368 = vpack.c.b16 %v4681, %v4680
    %v5369 = vpack.c.b16 %v4683, %v4682
    %v5370 = vpack.c.b16 %v4685, %v4684
    %v5371 = vpack.c.b16 %v4687, %v4686
    %v5372 = vpack.c.b16 %v4689, %v4688
    %v5373 = vpack.c.b16 %v4691, %v4690
    %v5374 = vpack.c.b16 %v4693, %v4692
    %v5375 = vpack.c.b16 %v4695, %v4694
    %v5376 = vpack.c.b16 %v4697, %v4696
    %v5377 = vpack.c.b16 %v4699, %v4698
    %v5378 = vpack.c.b16 %v4701, %v4700
    %v5379 = vpack.c.b16 %v4703, %v4702
    %v5380 = vpack.c.b16 %v4705, %v4704
    %v5381 = vpack.c.b16 %v4707, %v4706
    %v5382 = vpack.c.b16 %v4709, %v4708
    %v5383 = vpack.c.b16 %v4711, %v4710
    %v5384 = vpack.c.b16 %v4713, %v4712
    %v5385 = vpack.c.b16 %v4715, %v4714
    %v5386 = vpack.c.b16 %v4717, %v4716
    %v5387 = vpack.c.b16 %v4719, %v4718
    %v5388 = vpack.c.b16 %v4721, %v4720
    %v5389 = vpack.c.b16 %v4723, %v4722
    %v5390 = vpack.c.b16 %v4725, %v4724
    %v5391 = vpack.c.b16 %v4727, %v4726
    %v5392 = vpack.c.b16 %v4729, %v4728
    %v5393 = vpack.c.b16 %v4731, %v4730
    %v5394 = vpack.c.b16 %v4733, %v4732
    %v5395 = vpack.c.b16 %v4735, %v4734
    %v5396 = vpack.c.b16 %v4737, %v4736
    %v5397 = vpack.c.b16 %v4739, %v4738
    %v5398 = vpack.c.b16 %v4741, %v4740
    %v5399 = vpack.c.b16 %v4743, %v4742
    %v5400 = vpack.c.b16 %v4745, %v4744
    %v5401 = vpack.c.b16 %v4747, %v4746
    %v5402 = vpack.c.b16 %v4749, %v4748
    %v5403 = vpack.c.b16 %v4751, %v4750
    %v5404 = vpack.c.b16 %v4753, %v4752
    %v5405 = vpack.c.b16 %v4755, %v4754
    %v5406 = vpack.c.b16 %v4757, %v4756
    %v5407 = vpack.c.b16 %v4759, %v4758
    %v5408 = vpack.c.b16 %v4761, %v4760
    %v5409 = vpack.c.b16 %v4763, %v4762
    %v5410 = vpack.c.b16 %v4765, %v4764
    %v5411 = vpack.c.b16 %v4767, %v4766
    %v5412 = vpack.c.b16 %v4769, %v4768
    %v5413 = vpack.c.b16 %v4771, %v4770
    %v5414 = vpack.c.b16 %v4773, %v4772
    %v5415 = vpack.c.b16 %v4775, %v4774
    %v5416 = vpack.c.b16 %v4777, %v4776
    %v5417 = vpack.c.b16 %v4779, %v4778
    %v5418 = vpack.c.b16 %v4781, %v4780
    %v5419 = vpack.c.b16 %v4783, %v4782
    %v5420 = vpack.c.b16 %v4785, %v4784
    %v5421 = vpack.c.b16 %v4787, %v4786
    %v5422 = vpack.c.b16 %v4789, %v4788
    %v5423 = vpack.c.b16 %v4791, %v4790
    %v5424 = vpack.c.b16 %v4793, %v4792
    %v5425 = vpack.c.b16 %v4795, %v4794
    %v5426 = vpack.c.b16 %v4797, %v4796
    %v5427 = vpack.c.b16 %v4799, %v4798
    %v5428 = vpack.c.b16 %v4801, %v4800
    %v5429 = vpack.c.b16 %v4803, %v4802
    %v5430 = vpack.c.b16 %v4805, %v4804
    %v5431 = vpack.c.b16 %v4807, %v4806
    %v5432 = vpack.c.b16 %v4809, %v4808
    %v5433 = vpack.c.b16 %v4811, %v4810
    %v5434 = vpack.c.b16 %v4813, %v4812
    %v5435 = vpack.c.b16 %v4815, %v4814
    %v5436 = vpack.c.b16 %v4817, %v4816
    %v5437 = vpack.c.b16 %v4819, %v4818
    %v5438 = vpack.c.b16 %v4821, %v4820
    %v5439 = vpack.c.b16 %v4823, %v4822
    %v5440 = vpack.c.b16 %v4825, %v4824
    %v5441 = vpack.c.b16 %v4827, %v4826
    %v5442 = vpack.c.b16 %v4829, %v4828
    %v5443 = vpack.c.b16 %v4831, %v4830
    %v5444 = vpack.c.b16 %v4833, %v4832
    %v5445 = vpack.c.b16 %v4835, %v4834
    %v5446 = vpack.c.b16 %v4837, %v4836
    %v5447 = vpack.c.b16 %v4839, %v4838
    %v5448 = vpack.c.b16 %v4841, %v4840
    %v5449 = vpack.c.b16 %v4843, %v4842
    %v5450 = vpack.c.b16 %v4845, %v4844
    %v5451 = vpack.c.b16 %v4847, %v4846
    %v5452 = vpack.c.b16 %v4849, %v4848
    %v5453 = vpack.c.b16 %v4851, %v4850
    %v5454 = vpack.c.b16 %v4853, %v4852
    %v5455 = vpack.c.b16 %v4855, %v4854
    %v5456 = vpack.c.b16 %v4857, %v4856
    %v5457 = vpack.c.b16 %v4859, %v4858
    %v5458 = vpack.c.b16 %v4861, %v4860
    %v5459 = vpack.c.b16 %v4863, %v4862
    %v5460 = vpack.c.b16 %v4865, %v4864
    %v5461 = vpack.c.b16 %v4867, %v4866
    %v5462 = vpack.c.b16 %v4869, %v4868
    %v5463 = vpack.c.b16 %v4871, %v4870
    %v5464 = vpack.c.b16 %v4873, %v4872
    %v5465 = vpack.c.b16 %v4875, %v4874
    %v5466 = vpack.c.b16 %v4877, %v4876
    %v5467 = vpack.c.b16 %v4879, %v4878
    %v5468 = vpack.c.b16 %v4881, %v4880
    %v5469 = vpack.c.b16 %v4883, %v4882
    %v5470 = vpack.c.b16 %v4885, %v4884
    %v5471 = vpack.c.b16 %v4887, %v4886
    %v5472 = vpack.c.b16 %v4889, %v4888
    %v5473 = vpack.c.b16 %v4891, %v4890
    %v5474 = vpack.c.b16 %v4893, %v4892
    %v5475 = vpack.c.b16 %v4895, %v4894
    %v5476 = vpack.c.b16 %v4897, %v4896
    %v5477 = vpack.c.b16 %v4899, %v4898
    %v5478 = vpack.c.b16 %v4901, %v4900
    %v5479 = vpack.c.b16 %v4903, %v4902
    %v5480 = vpack.c.b16 %v4905, %v4904
    %v5481 = vpack.c.b16 %v4907, %v4906
    %v5482 = vpack.c.b16 %v4909, %v4908
    %v5483 = vpack.c.b16 %v4911, %v4910
    %v5484 = vpack.c.b16 %v4913, %v4912
    %v5485 = vpack.c.b16 %v4915, %v4914
    %v5486 = vpack.c.b16 %v4917, %v4916
    %v5487 = vpack.c.b16 %v4919, %v4918
    %v5488 = vpack.c.b16 %v4921, %v4920
    %v5489 = vpack.c.b16 %v4923, %v4922
    %v5490 = vpack.c.b16 %v4925, %v4924
    %v5491 = vpack.c.b16 %v4927, %v4926
    %v5492 = vpack.c.b16 %v4929, %v4928
    %v5493 = vpack.c.b16 %v4931, %v4930
    %v5494 = vpack.c.b16 %v4933, %v4932
    %v5495 = vpack.c.b16 %v4935, %v4934
    %v5496 = vpack.c.b16 %v4937, %v4936
    %v5497 = vpack.c.b16 %v4939, %v4938
    %v5498 = vpack.c.b16 %v4941, %v4940
    %v5499 = vpack.c.b16 %v4943, %v4942
    %v5500 = vpack.c.b16 %v4945, %v4944
    %v5501 = vpack.c.b16 %v4947, %v4946
    %v5502 = vpack.c.b16 %v4949, %v4948
    %v5503 = vpack.c.b16 %v4951, %v4950
    %v5504 = vpack.c.b16 %v4953, %v4952
    %v5505 = vpack.c.b16 %v4955, %v4954
    %v5506 = vpack.c.b16 %v4957, %v4956
    %v5507 = vpack.c.b16 %v4959, %v4958
    %v5508 = vpack.c.b16 %v4961, %v4960
    %v5509 = vpack.c.b16 %v4963, %v4962
    %v5510 = vpack.c.b16 %v4965, %v4964
    %v5511 = vpack.c.b16 %v4967, %v4966
    %v5512 = vpack.c.b16 %v4969, %v4968
    %v5513 = vpack.c.b16 %v4971, %v4970
    %v5514 = vpack.c.b16 %v4973, %v4972
    %v5515 = vpack.c.b16 %v4975, %v4974
    %v5516 = vpack.c.b16 %v4977, %v4976
    %v5517 = vpack.c.b16 %v4979, %v4978
    %v5518 = vpack.c.b16 %v4981, %v4980
    %v5519 = vpack.c.b16 %v4983, %v4982
    %v5520 = vpack.c.b16 %v4985, %v4984
    %v5521 = vpack.c.b16 %v4987, %v4986
    %v5522 = vpack.c.b16 %v4989, %v4988
    %v5523 = vpack.c.b16 %v4991, %v4990
    %v5524 = vpack.c.b16 %v4993, %v4992
    %v5525 = vpack.c.b16 %v4995, %v4994
    %v5526 = vpack.c.b16 %v4997, %v4996
    %v5527 = vpack.c.b16 %v4999, %v4998
    %v5528 = vpack.c.b16 %v5001, %v5000
    %v5529 = vpack.c.b16 %v5003, %v5002
    %v5530 = vpack.c.b16 %v5005, %v5004
    %v5531 = vpack.c.b16 %v5007, %v5006
    %v5532 = vpack.c.b16 %v5009, %v5008
    %v5533 = vpack.c.b16 %v5011, %v5010
    %v5534 = vpack.c.b16 %v5013, %v5012
    %v5535 = vpack.c.b16 %v5015, %v5014
    %v5536 = vpack.c.b16 %v5017, %v5016
    %v5537 = vpack.c.b16 %v5019, %v5018
    %v5538 = vpack.c.b16 %v5021, %v5020
    %v5539 = vpack.c.b16 %v5023, %v5022
    %v5540 = vpack.c.b16 %v5025, %v5024
    %v5541 = vpack.c.b16 %v5027, %v5026
    %v5542 = vpack.c.b16 %v5029, %v5028
    %v5543 = vpack.c.b16 %v5031, %v5030
    %6056 = vmatprep.subr.bf16.mxu0 0
    %6057 = vmatpush1.bf16.msra.mxu0 %v5032
    %6058 = vmatprep.subr.bf16.mxu0 0
    %6059 = vmatpush1.bf16.msra.mxu0 %v5033
    %6060 = vmatprep.subr.bf16.mxu0 0
    %6061 = vmatpush1.bf16.msra.mxu0 %v5034
    %6062 = vmatprep.subr.bf16.mxu0 0
    %6063 = vmatpush1.bf16.msra.mxu0 %v5035
    %6064 = vmatprep.subr.bf16.mxu0 0
    %6065 = vmatpush1.bf16.msra.mxu0 %v5036
    %6066 = vmatprep.subr.bf16.mxu0 0
    %6067 = vmatpush1.bf16.msra.mxu0 %v5037
    %6068 = vmatprep.subr.bf16.mxu0 0
    %6069 = vmatpush1.bf16.msra.mxu0 %v5038
    %6070 = vmatprep.subr.bf16.mxu0 0
    %6071 = vmatpush1.bf16.msra.mxu0 %v5039
    %6072 = vmatprep.subr.bf16.mxu0 0
    %6073 = vmatpush1.bf16.msra.mxu0 %v5040
    %6074 = vmatprep.subr.bf16.mxu0 0
    %6075 = vmatpush1.bf16.msra.mxu0 %v5041
    %6076 = vmatprep.subr.bf16.mxu0 0
    %6077 = vmatpush1.bf16.msra.mxu0 %v5042
    %6078 = vmatprep.subr.bf16.mxu0 0
    %6079 = vmatpush1.bf16.msra.mxu0 %v5043
    %6080 = vmatprep.subr.bf16.mxu0 0
    %6081 = vmatpush1.bf16.msra.mxu0 %v5044
    %6082 = vmatprep.subr.bf16.mxu0 0
    %6083 = vmatpush1.bf16.msra.mxu0 %v5045
    %6084 = vmatprep.subr.bf16.mxu0 0
    %6085 = vmatpush1.bf16.msra.mxu0 %v5046
    %6086 = vmatprep.subr.bf16.mxu0 0
    %6087 = vmatpush1.bf16.msra.mxu0 %v5047
    %6088 = vmatprep.mubr.bf16.mxu0 %v1890
    %6089 = vmatmul.mubr.bf16.gmra.mrb[0].mxu0 %v1889
    %v6090 = vpop.f32.mrb[0].mxu0
    %v6091 = vadd.f32 %v2982, %v6090
    %v6092 = vpop.f32.mrb[0].mxu0
    %v6093 = vpop.f32.mrb[0].mxu0
    %v6094 = vpop.f32.mrb[0].mxu0
    %6095 = vdwg.mxu0
    %6096 = vmatprep.subr.bf16.mxu0 0
    %6097 = vmatpush1.bf16.msra.mxu0 %v5048
    %6098 = vmatprep.subr.bf16.mxu0 0
    %6099 = vmatpush1.bf16.msra.mxu0 %v5049
    %6100 = vmatprep.subr.bf16.mxu0 0
    %6101 = vmatpush1.bf16.msra.mxu0 %v5050
    %6102 = vmatprep.subr.bf16.mxu0 0
    %6103 = vmatpush1.bf16.msra.mxu0 %v5051
    %6104 = vmatprep.subr.bf16.mxu0 0
    %6105 = vmatpush1.bf16.msra.mxu0 %v5052
    %6106 = vmatprep.subr.bf16.mxu0 0
    %6107 = vmatpush1.bf16.msra.mxu0 %v5053
    %6108 = vmatprep.subr.bf16.mxu0 0
    %6109 = vmatpush1.bf16.msra.mxu0 %v5054
    %6110 = vmatprep.subr.bf16.mxu0 0
    %6111 = vmatpush1.bf16.msra.mxu0 %v5055
    %6112 = vmatprep.subr.bf16.mxu0 0
    %6113 = vmatpush1.bf16.msra.mxu0 %v5056
    %6114 = vmatprep.subr.bf16.mxu0 0
    %6115 = vmatpush1.bf16.msra.mxu0 %v5057
    %6116 = vmatprep.subr.bf16.mxu0 0
    %6117 = vmatpush1.bf16.msra.mxu0 %v5058
    %6118 = vmatprep.subr.bf16.mxu0 0
    %6119 = vmatpush1.bf16.msra.mxu0 %v5059
    %6120 = vmatprep.subr.bf16.mxu0 0
    %6121 = vmatpush1.bf16.msra.mxu0 %v5060
    %6122 = vmatprep.subr.bf16.mxu0 0
    %6123 = vmatpush1.bf16.msra.mxu0 %v5061
    %6124 = vmatprep.subr.bf16.mxu0 0
    %6125 = vmatpush1.bf16.msra.mxu0 %v5062
    %6126 = vmatprep.subr.bf16.mxu0 0
    %6127 = vmatpush1.bf16.msra.mxu0 %v5063
    %6128 = vmatprep.mubr.bf16.mxu0 %v1892
    %6129 = vmatmul.mubr.bf16.gmra.mrb[0].mxu0 %v1891
    %v6130 = vpop.f32.mrb[0].mxu0
    %v6131 = vadd.f32 %v6091, %v6130
    %v6132 = vpop.f32.mrb[0].mxu0
    %v6133 = vpop.f32.mrb[0].mxu0
    %v6134 = vpop.f32.mrb[0].mxu0
    %6135 = vdwg.mxu0
    %6136 = vmatprep.subr.bf16.mxu0 0
    %6137 = vmatpush1.bf16.msra.mxu0 %v5064
    %6138 = vmatprep.subr.bf16.mxu0 0
    %6139 = vmatpush1.bf16.msra.mxu0 %v5065
    %6140 = vmatprep.subr.bf16.mxu0 0
    %6141 = vmatpush1.bf16.msra.mxu0 %v5066
    %6142 = vmatprep.subr.bf16.mxu0 0
    %6143 = vmatpush1.bf16.msra.mxu0 %v5067
    %6144 = vmatprep.subr.bf16.mxu0 0
    %6145 = vmatpush1.bf16.msra.mxu0 %v5068
    %6146 = vmatprep.subr.bf16.mxu0 0
    %6147 = vmatpush1.bf16.msra.mxu0 %v5069
    %6148 = vmatprep.subr.bf16.mxu0 0
    %6149 = vmatpush1.bf16.msra.mxu0 %v5070
    %6150 = vmatprep.subr.bf16.mxu0 0
    %6151 = vmatpush1.bf16.msra.mxu0 %v5071
    %6152 = vmatprep.subr.bf16.mxu0 0
    %6153 = vmatpush1.bf16.msra.mxu0 %v5072
    %6154 = vmatprep.subr.bf16.mxu0 0
    %6155 = vmatpush1.bf16.msra.mxu0 %v5073
    %6156 = vmatprep.subr.bf16.mxu0 0
    %6157 = vmatpush1.bf16.msra.mxu0 %v5074
    %6158 = vmatprep.subr.bf16.mxu0 0
    %6159 = vmatpush1.bf16.msra.mxu0 %v5075
    %6160 = vmatprep.subr.bf16.mxu0 0
    %6161 = vmatpush1.bf16.msra.mxu0 %v5076
    %6162 = vmatprep.subr.bf16.mxu0 0
    %6163 = vmatpush1.bf16.msra.mxu0 %v5077
    %6164 = vmatprep.subr.bf16.mxu0 0
    %6165 = vmatpush1.bf16.msra.mxu0 %v5078
    %6166 = vmatprep.subr.bf16.mxu0 0
    %6167 = vmatpush1.bf16.msra.mxu0 %v5079
    %6168 = vmatprep.mubr.bf16.mxu0 %v1894
    %6169 = vmatmul.mubr.bf16.gmra.mrb[0].mxu0 %v1893
    %v6170 = vpop.f32.mrb[0].mxu0
    %v6171 = vadd.f32 %v6131, %v6170
    %v6172 = vpop.f32.mrb[0].mxu0
    %v6173 = vpop.f32.mrb[0].mxu0
    %v6174 = vpop.f32.mrb[0].mxu0
    %6175 = vdwg.mxu0
    %6176 = vmatprep.subr.bf16.mxu0 0
    %6177 = vmatpush1.bf16.msra.mxu0 %v5080
    %6178 = vmatprep.subr.bf16.mxu0 0
    %6179 = vmatpush1.bf16.msra.mxu0 %v5081
    %6180 = vmatprep.subr.bf16.mxu0 0
    %6181 = vmatpush1.bf16.msra.mxu0 %v5082
    %6182 = vmatprep.subr.bf16.mxu0 0
    %6183 = vmatpush1.bf16.msra.mxu0 %v5083
    %6184 = vmatprep.subr.bf16.mxu0 0
    %6185 = vmatpush1.bf16.msra.mxu0 %v5084
    %6186 = vmatprep.subr.bf16.mxu0 0
    %6187 = vmatpush1.bf16.msra.mxu0 %v5085
    %6188 = vmatprep.subr.bf16.mxu0 0
    %6189 = vmatpush1.bf16.msra.mxu0 %v5086
    %6190 = vmatprep.subr.bf16.mxu0 0
    %6191 = vmatpush1.bf16.msra.mxu0 %v5087
    %6192 = vmatprep.subr.bf16.mxu0 0
    %6193 = vmatpush1.bf16.msra.mxu0 %v5088
    %6194 = vmatprep.subr.bf16.mxu0 0
    %6195 = vmatpush1.bf16.msra.mxu0 %v5089
    %6196 = vmatprep.subr.bf16.mxu0 0
    %6197 = vmatpush1.bf16.msra.mxu0 %v5090
    %6198 = vmatprep.subr.bf16.mxu0 0
    %6199 = vmatpush1.bf16.msra.mxu0 %v5091
    %6200 = vmatprep.subr.bf16.mxu0 0
    %6201 = vmatpush1.bf16.msra.mxu0 %v5092
    %6202 = vmatprep.subr.bf16.mxu0 0
    %6203 = vmatpush1.bf16.msra.mxu0 %v5093
    %6204 = vmatprep.subr.bf16.mxu0 0
    %6205 = vmatpush1.bf16.msra.mxu0 %v5094
    %6206 = vmatprep.subr.bf16.mxu0 0
    %6207 = vmatpush1.bf16.msra.mxu0 %v5095
    %6208 = vmatprep.mubr.bf16.mxu0 %v1896
    %6209 = vmatmul.mubr.bf16.gmra.mrb[0].mxu0 %v1895
    %v6210 = vpop.f32.mrb[0].mxu0
    %v6211 = vadd.f32 %v6171, %v6210
    %v6212 = vpop.f32.mrb[0].mxu0
    %v6213 = vpop.f32.mrb[0].mxu0
    %v6214 = vpop.f32.mrb[0].mxu0
    %6215 = vdwg.mxu0
    %6216 = vmatprep.subr.bf16.mxu0 0
    %6217 = vmatpush1.bf16.msra.mxu0 %v5096
    %6218 = vmatprep.subr.bf16.mxu0 0
    %6219 = vmatpush1.bf16.msra.mxu0 %v5097
    %6220 = vmatprep.subr.bf16.mxu0 0
    %6221 = vmatpush1.bf16.msra.mxu0 %v5098
    %6222 = vmatprep.subr.bf16.mxu0 0
    %6223 = vmatpush1.bf16.msra.mxu0 %v5099
    %6224 = vmatprep.subr.bf16.mxu0 0
    %6225 = vmatpush1.bf16.msra.mxu0 %v5100
    %6226 = vmatprep.subr.bf16.mxu0 0
    %6227 = vmatpush1.bf16.msra.mxu0 %v5101
    %6228 = vmatprep.subr.bf16.mxu0 0
    %6229 = vmatpush1.bf16.msra.mxu0 %v5102
    %6230 = vmatprep.subr.bf16.mxu0 0
    %6231 = vmatpush1.bf16.msra.mxu0 %v5103
    %6232 = vmatprep.subr.bf16.mxu0 0
    %6233 = vmatpush1.bf16.msra.mxu0 %v5104
    %6234 = vmatprep.subr.bf16.mxu0 0
    %6235 = vmatpush1.bf16.msra.mxu0 %v5105
    %6236 = vmatprep.subr.bf16.mxu0 0
    %6237 = vmatpush1.bf16.msra.mxu0 %v5106
    %6238 = vmatprep.subr.bf16.mxu0 0
    %6239 = vmatpush1.bf16.msra.mxu0 %v5107
    %6240 = vmatprep.subr.bf16.mxu0 0
    %6241 = vmatpush1.bf16.msra.mxu0 %v5108
    %6242 = vmatprep.subr.bf16.mxu0 0
    %6243 = vmatpush1.bf16.msra.mxu0 %v5109
    %6244 = vmatprep.subr.bf16.mxu0 0
    %6245 = vmatpush1.bf16.msra.mxu0 %v5110
    %6246 = vmatprep.subr.bf16.mxu0 0
    %6247 = vmatpush1.bf16.msra.mxu0 %v5111
    %6248 = vmatprep.mubr.bf16.mxu0 %v1898
    %6249 = vmatmul.mubr.bf16.gmra.mrb[0].mxu0 %v1897
    %v6250 = vpop.f32.mrb[0].mxu0
    %v6251 = vadd.f32 %v6211, %v6250
    %v6252 = vpop.f32.mrb[0].mxu0
    %v6253 = vpop.f32.mrb[0].mxu0
    %v6254 = vpop.f32.mrb[0].mxu0
    %6255 = vdwg.mxu0
    %6256 = vmatprep.subr.bf16.mxu0 0
    %6257 = vmatpush1.bf16.msra.mxu0 %v5112
    %6258 = vmatprep.subr.bf16.mxu0 0
    %6259 = vmatpush1.bf16.msra.mxu0 %v5113
    %6260 = vmatprep.subr.bf16.mxu0 0
    %6261 = vmatpush1.bf16.msra.mxu0 %v5114
    %6262 = vmatprep.subr.bf16.mxu0 0
    %6263 = vmatpush1.bf16.msra.mxu0 %v5115
    %6264 = vmatprep.subr.bf16.mxu0 0
    %6265 = vmatpush1.bf16.msra.mxu0 %v5116
    %6266 = vmatprep.subr.bf16.mxu0 0
    %6267 = vmatpush1.bf16.msra.mxu0 %v5117
    %6268 = vmatprep.subr.bf16.mxu0 0
    %6269 = vmatpush1.bf16.msra.mxu0 %v5118
    %6270 = vmatprep.subr.bf16.mxu0 0
    %6271 = vmatpush1.bf16.msra.mxu0 %v5119
    %6272 = vmatprep.subr.bf16.mxu0 0
    %6273 = vmatpush1.bf16.msra.mxu0 %v5120
    %6274 = vmatprep.subr.bf16.mxu0 0
    %6275 = vmatpush1.bf16.msra.mxu0 %v5121
    %6276 = vmatprep.subr.bf16.mxu0 0
    %6277 = vmatpush1.bf16.msra.mxu0 %v5122
    %6278 = vmatprep.subr.bf16.mxu0 0
    %6279 = vmatpush1.bf16.msra.mxu0 %v5123
    %6280 = vmatprep.subr.bf16.mxu0 0
    %6281 = vmatpush1.bf16.msra.mxu0 %v5124
    %6282 = vmatprep.subr.bf16.mxu0 0
    %6283 = vmatpush1.bf16.msra.mxu0 %v5125
    %6284 = vmatprep.subr.bf16.mxu0 0
    %6285 = vmatpush1.bf16.msra.mxu0 %v5126
    %6286 = vmatprep.subr.bf16.mxu0 0
    %6287 = vmatpush1.bf16.msra.mxu0 %v5127
    %6288 = vmatprep.mubr.bf16.mxu0 %v1900
    %6289 = vmatmul.mubr.bf16.gmra.mrb[0].mxu0 %v1899
    %v6290 = vpop.f32.mrb[0].mxu0
    %v6291 = vadd.f32 %v6251, %v6290
    %v6292 = vpop.f32.mrb[0].mxu0
    %v6293 = vpop.f32.mrb[0].mxu0
    %v6294 = vpop.f32.mrb[0].mxu0
    %6295 = vdwg.mxu0
    %6296 = vmatprep.subr.bf16.mxu0 0
    %6297 = vmatpush1.bf16.msra.mxu0 %v5128
    %6298 = vmatprep.subr.bf16.mxu0 0
    %6299 = vmatpush1.bf16.msra.mxu0 %v5129
    %6300 = vmatprep.subr.bf16.mxu0 0
    %6301 = vmatpush1.bf16.msra.mxu0 %v5130
    %6302 = vmatprep.subr.bf16.mxu0 0
    %6303 = vmatpush1.bf16.msra.mxu0 %v5131
    %6304 = vmatprep.subr.bf16.mxu0 0
    %6305 = vmatpush1.bf16.msra.mxu0 %v5132
    %6306 = vmatprep.subr.bf16.mxu0 0
    %6307 = vmatpush1.bf16.msra.mxu0 %v5133
    %6308 = vmatprep.subr.bf16.mxu0 0
    %6309 = vmatpush1.bf16.msra.mxu0 %v5134
    %6310 = vmatprep.subr.bf16.mxu0 0
    %6311 = vmatpush1.bf16.msra.mxu0 %v5135
    %6312 = vmatprep.subr.bf16.mxu0 0
    %6313 = vmatpush1.bf16.msra.mxu0 %v5136
    %6314 = vmatprep.subr.bf16.mxu0 0
    %6315 = vmatpush1.bf16.msra.mxu0 %v5137
    %6316 = vmatprep.subr.bf16.mxu0 0
    %6317 = vmatpush1.bf16.msra.mxu0 %v5138
    %6318 = vmatprep.subr.bf16.mxu0 0
    %6319 = vmatpush1.bf16.msra.mxu0 %v5139
    %6320 = vmatprep.subr.bf16.mxu0 0
    %6321 = vmatpush1.bf16.msra.mxu0 %v5140
    %6322 = vmatprep.subr.bf16.mxu0 0
    %6323 = vmatpush1.bf16.msra.mxu0 %v5141
    %6324 = vmatprep.subr.bf16.mxu0 0
    %6325 = vmatpush1.bf16.msra.mxu0 %v5142
    %6326 = vmatprep.subr.bf16.mxu0 0
    %6327 = vmatpush1.bf16.msra.mxu0 %v5143
    %6328 = vmatprep.mubr.bf16.mxu0 %v1902
    %6329 = vmatmul.mubr.bf16.gmra.mrb[0].mxu0 %v1901
    %v6330 = vpop.f32.mrb[0].mxu0
    %v6331 = vadd.f32 %v6291, %v6330
    %v6332 = vpop.f32.mrb[0].mxu0
    %v6333 = vpop.f32.mrb[0].mxu0
    %v6334 = vpop.f32.mrb[0].mxu0
    %6335 = vdwg.mxu0
    %6336 = vmatprep.subr.bf16.mxu0 0
    %6337 = vmatpush1.bf16.msra.mxu0 %v5144
    %6338 = vmatprep.subr.bf16.mxu0 0
    %6339 = vmatpush1.bf16.msra.mxu0 %v5145
    %6340 = vmatprep.subr.bf16.mxu0 0
    %6341 = vmatpush1.bf16.msra.mxu0 %v5146
    %6342 = vmatprep.subr.bf16.mxu0 0
    %6343 = vmatpush1.bf16.msra.mxu0 %v5147
    %6344 = vmatprep.subr.bf16.mxu0 0
    %6345 = vmatpush1.bf16.msra.mxu0 %v5148
    %6346 = vmatprep.subr.bf16.mxu0 0
    %6347 = vmatpush1.bf16.msra.mxu0 %v5149
    %6348 = vmatprep.subr.bf16.mxu0 0
    %6349 = vmatpush1.bf16.msra.mxu0 %v5150
    %6350 = vmatprep.subr.bf16.mxu0 0
    %6351 = vmatpush1.bf16.msra.mxu0 %v5151
    %6352 = vmatprep.subr.bf16.mxu0 0
    %6353 = vmatpush1.bf16.msra.mxu0 %v5152
    %6354 = vmatprep.subr.bf16.mxu0 0
    %6355 = vmatpush1.bf16.msra.mxu0 %v5153
    %6356 = vmatprep.subr.bf16.mxu0 0
    %6357 = vmatpush1.bf16.msra.mxu0 %v5154
    %6358 = vmatprep.subr.bf16.mxu0 0
    %6359 = vmatpush1.bf16.msra.mxu0 %v5155
    %6360 = vmatprep.subr.bf16.mxu0 0
    %6361 = vmatpush1.bf16.msra.mxu0 %v5156
    %6362 = vmatprep.subr.bf16.mxu0 0
    %6363 = vmatpush1.bf16.msra.mxu0 %v5157
    %6364 = vmatprep.subr.bf16.mxu0 0
    %6365 = vmatpush1.bf16.msra.mxu0 %v5158
    %6366 = vmatprep.subr.bf16.mxu0 0
    %6367 = vmatpush1.bf16.msra.mxu0 %v5159
    %6368 = vmatprep.mubr.bf16.mxu0 %v1904
    %6369 = vmatmul.mubr.bf16.gmra.mrb[0].mxu0 %v1903
    %v6370 = vpop.f32.mrb[0].mxu0
    %v6371 = vadd.f32 %v6331, %v6370
    %v6372 = vpop.f32.mrb[0].mxu0
    %v6373 = vpop.f32.mrb[0].mxu0
    %v6374 = vpop.f32.mrb[0].mxu0
    %6375 = vdwg.mxu0
    %6376 = vmatprep.subr.bf16.mxu0 0
    %6377 = vmatpush1.bf16.msra.mxu0 %v5160
    %6378 = vmatprep.subr.bf16.mxu0 0
    %6379 = vmatpush1.bf16.msra.mxu0 %v5161
    %6380 = vmatprep.subr.bf16.mxu0 0
    %6381 = vmatpush1.bf16.msra.mxu0 %v5162
    %6382 = vmatprep.subr.bf16.mxu0 0
    %6383 = vmatpush1.bf16.msra.mxu0 %v5163
    %6384 = vmatprep.subr.bf16.mxu0 0
    %6385 = vmatpush1.bf16.msra.mxu0 %v5164
    %6386 = vmatprep.subr.bf16.mxu0 0
    %6387 = vmatpush1.bf16.msra.mxu0 %v5165
    %6388 = vmatprep.subr.bf16.mxu0 0
    %6389 = vmatpush1.bf16.msra.mxu0 %v5166
    %6390 = vmatprep.subr.bf16.mxu0 0
    %6391 = vmatpush1.bf16.msra.mxu0 %v5167
    %6392 = vmatprep.subr.bf16.mxu0 0
    %6393 = vmatpush1.bf16.msra.mxu0 %v5168
    %6394 = vmatprep.subr.bf16.mxu0 0
    %6395 = vmatpush1.bf16.msra.mxu0 %v5169
    %6396 = vmatprep.subr.bf16.mxu0 0
    %6397 = vmatpush1.bf16.msra.mxu0 %v5170
    %6398 = vmatprep.subr.bf16.mxu0 0
    %6399 = vmatpush1.bf16.msra.mxu0 %v5171
    %6400 = vmatprep.subr.bf16.mxu0 0
    %6401 = vmatpush1.bf16.msra.mxu0 %v5172
    %6402 = vmatprep.subr.bf16.mxu0 0
    %6403 = vmatpush1.bf16.msra.mxu0 %v5173
    %6404 = vmatprep.subr.bf16.mxu0 0
    %6405 = vmatpush1.bf16.msra.mxu0 %v5174
    %6406 = vmatprep.subr.bf16.mxu0 0
    %6407 = vmatpush1.bf16.msra.mxu0 %v5175
    %6408 = vmatprep.mubr.bf16.mxu0 %v1906
    %6409 = vmatmul.mubr.bf16.gmra.mrb[0].mxu0 %v1905
    %v6410 = vpop.f32.mrb[0].mxu0
    %v6411 = vadd.f32 %v6371, %v6410
    %v6412 = vpop.f32.mrb[0].mxu0
    %v6413 = vpop.f32.mrb[0].mxu0
    %v6414 = vpop.f32.mrb[0].mxu0
    %6415 = vdwg.mxu0
    %6416 = vmatprep.subr.bf16.mxu0 0
    %6417 = vmatpush1.bf16.msra.mxu0 %v5176
    %6418 = vmatprep.subr.bf16.mxu0 0
    %6419 = vmatpush1.bf16.msra.mxu0 %v5177
    %6420 = vmatprep.subr.bf16.mxu0 0
    %6421 = vmatpush1.bf16.msra.mxu0 %v5178
    %6422 = vmatprep.subr.bf16.mxu0 0
    %6423 = vmatpush1.bf16.msra.mxu0 %v5179
    %6424 = vmatprep.subr.bf16.mxu0 0
    %6425 = vmatpush1.bf16.msra.mxu0 %v5180
    %6426 = vmatprep.subr.bf16.mxu0 0
    %6427 = vmatpush1.bf16.msra.mxu0 %v5181
    %6428 = vmatprep.subr.bf16.mxu0 0
    %6429 = vmatpush1.bf16.msra.mxu0 %v5182
    %6430 = vmatprep.subr.bf16.mxu0 0
    %6431 = vmatpush1.bf16.msra.mxu0 %v5183
    %6432 = vmatprep.subr.bf16.mxu0 0
    %6433 = vmatpush1.bf16.msra.mxu0 %v5184
    %6434 = vmatprep.subr.bf16.mxu0 0
    %6435 = vmatpush1.bf16.msra.mxu0 %v5185
    %6436 = vmatprep.subr.bf16.mxu0 0
    %6437 = vmatpush1.bf16.msra.mxu0 %v5186
    %6438 = vmatprep.subr.bf16.mxu0 0
    %6439 = vmatpush1.bf16.msra.mxu0 %v5187
    %6440 = vmatprep.subr.bf16.mxu0 0
    %6441 = vmatpush1.bf16.msra.mxu0 %v5188
    %6442 = vmatprep.subr.bf16.mxu0 0
    %6443 = vmatpush1.bf16.msra.mxu0 %v5189
    %6444 = vmatprep.subr.bf16.mxu0 0
    %6445 = vmatpush1.bf16.msra.mxu0 %v5190
    %6446 = vmatprep.subr.bf16.mxu0 0
    %6447 = vmatpush1.bf16.msra.mxu0 %v5191
    %6448 = vmatprep.mubr.bf16.mxu0 %v1908
    %6449 = vmatmul.mubr.bf16.gmra.mrb[0].mxu0 %v1907
    %v6450 = vpop.f32.mrb[0].mxu0
    %v6451 = vadd.f32 %v6411, %v6450
    %v6452 = vpop.f32.mrb[0].mxu0
    %v6453 = vpop.f32.mrb[0].mxu0
    %v6454 = vpop.f32.mrb[0].mxu0
    %6455 = vdwg.mxu0
    %6456 = vmatprep.subr.bf16.mxu0 0
    %6457 = vmatpush1.bf16.msra.mxu0 %v5192
    %6458 = vmatprep.subr.bf16.mxu0 0
    %6459 = vmatpush1.bf16.msra.mxu0 %v5193
    %6460 = vmatprep.subr.bf16.mxu0 0
    %6461 = vmatpush1.bf16.msra.mxu0 %v5194
    %6462 = vmatprep.subr.bf16.mxu0 0
    %6463 = vmatpush1.bf16.msra.mxu0 %v5195
    %6464 = vmatprep.subr.bf16.mxu0 0
    %6465 = vmatpush1.bf16.msra.mxu0 %v5196
    %6466 = vmatprep.subr.bf16.mxu0 0
    %6467 = vmatpush1.bf16.msra.mxu0 %v5197
    %6468 = vmatprep.subr.bf16.mxu0 0
    %6469 = vmatpush1.bf16.msra.mxu0 %v5198
    %6470 = vmatprep.subr.bf16.mxu0 0
    %6471 = vmatpush1.bf16.msra.mxu0 %v5199
    %6472 = vmatprep.subr.bf16.mxu0 0
    %6473 = vmatpush1.bf16.msra.mxu0 %v5200
    %6474 = vmatprep.subr.bf16.mxu0 0
    %6475 = vmatpush1.bf16.msra.mxu0 %v5201
    %6476 = vmatprep.subr.bf16.mxu0 0
    %6477 = vmatpush1.bf16.msra.mxu0 %v5202
    %6478 = vmatprep.subr.bf16.mxu0 0
    %6479 = vmatpush1.bf16.msra.mxu0 %v5203
    %6480 = vmatprep.subr.bf16.mxu0 0
    %6481 = vmatpush1.bf16.msra.mxu0 %v5204
    %6482 = vmatprep.subr.bf16.mxu0 0
    %6483 = vmatpush1.bf16.msra.mxu0 %v5205
    %6484 = vmatprep.subr.bf16.mxu0 0
    %6485 = vmatpush1.bf16.msra.mxu0 %v5206
    %6486 = vmatprep.subr.bf16.mxu0 0
    %6487 = vmatpush1.bf16.msra.mxu0 %v5207
    %6488 = vmatprep.mubr.bf16.mxu0 %v1910
    %6489 = vmatmul.mubr.bf16.gmra.mrb[0].mxu0 %v1909
    %v6490 = vpop.f32.mrb[0].mxu0
    %v6491 = vadd.f32 %v6451, %v6490
    %v6492 = vpop.f32.mrb[0].mxu0
    %v6493 = vpop.f32.mrb[0].mxu0
    %v6494 = vpop.f32.mrb[0].mxu0
    %6495 = vdwg.mxu0
    %6496 = vmatprep.subr.bf16.mxu0 0
    %6497 = vmatpush1.bf16.msra.mxu0 %v5208
    %6498 = vmatprep.subr.bf16.mxu0 0
    %6499 = vmatpush1.bf16.msra.mxu0 %v5209
    %6500 = vmatprep.subr.bf16.mxu0 0
    %6501 = vmatpush1.bf16.msra.mxu0 %v5210
    %6502 = vmatprep.subr.bf16.mxu0 0
    %6503 = vmatpush1.bf16.msra.mxu0 %v5211
    %6504 = vmatprep.subr.bf16.mxu0 0
    %6505 = vmatpush1.bf16.msra.mxu0 %v5212
    %6506 = vmatprep.subr.bf16.mxu0 0
    %6507 = vmatpush1.bf16.msra.mxu0 %v5213
    %6508 = vmatprep.subr.bf16.mxu0 0
    %6509 = vmatpush1.bf16.msra.mxu0 %v5214
    %6510 = vmatprep.subr.bf16.mxu0 0
    %6511 = vmatpush1.bf16.msra.mxu0 %v5215
    %6512 = vmatprep.subr.bf16.mxu0 0
    %6513 = vmatpush1.bf16.msra.mxu0 %v5216
    %6514 = vmatprep.subr.bf16.mxu0 0
    %6515 = vmatpush1.bf16.msra.mxu0 %v5217
    %6516 = vmatprep.subr.bf16.mxu0 0
    %6517 = vmatpush1.bf16.msra.mxu0 %v5218
    %6518 = vmatprep.subr.bf16.mxu0 0
    %6519 = vmatpush1.bf16.msra.mxu0 %v5219
    %6520 = vmatprep.subr.bf16.mxu0 0
    %6521 = vmatpush1.bf16.msra.mxu0 %v5220
    %6522 = vmatprep.subr.bf16.mxu0 0
    %6523 = vmatpush1.bf16.msra.mxu0 %v5221
    %6524 = vmatprep.subr.bf16.mxu0 0
    %6525 = vmatpush1.bf16.msra.mxu0 %v5222
    %6526 = vmatprep.subr.bf16.mxu0 0
    %6527 = vmatpush1.bf16.msra.mxu0 %v5223
    %6528 = vmatprep.mubr.bf16.mxu0 %v1912
    %6529 = vmatmul.mubr.bf16.gmra.mrb[0].mxu0 %v1911
    %v6530 = vpop.f32.mrb[0].mxu0
    %v6531 = vadd.f32 %v6491, %v6530
    %v6532 = vpop.f32.mrb[0].mxu0
    %v6533 = vpop.f32.mrb[0].mxu0
    %v6534 = vpop.f32.mrb[0].mxu0
    %6535 = vdwg.mxu0
    %6536 = vmatprep.subr.bf16.mxu0 0
    %6537 = vmatpush1.bf16.msra.mxu0 %v5224
    %6538 = vmatprep.subr.bf16.mxu0 0
    %6539 = vmatpush1.bf16.msra.mxu0 %v5225
    %6540 = vmatprep.subr.bf16.mxu0 0
    %6541 = vmatpush1.bf16.msra.mxu0 %v5226
    %6542 = vmatprep.subr.bf16.mxu0 0
    %6543 = vmatpush1.bf16.msra.mxu0 %v5227
    %6544 = vmatprep.subr.bf16.mxu0 0
    %6545 = vmatpush1.bf16.msra.mxu0 %v5228
    %6546 = vmatprep.subr.bf16.mxu0 0
    %6547 = vmatpush1.bf16.msra.mxu0 %v5229
    %6548 = vmatprep.subr.bf16.mxu0 0
    %6549 = vmatpush1.bf16.msra.mxu0 %v5230
    %6550 = vmatprep.subr.bf16.mxu0 0
    %6551 = vmatpush1.bf16.msra.mxu0 %v5231
    %6552 = vmatprep.subr.bf16.mxu0 0
    %6553 = vmatpush1.bf16.msra.mxu0 %v5232
    %6554 = vmatprep.subr.bf16.mxu0 0
    %6555 = vmatpush1.bf16.msra.mxu0 %v5233
    %6556 = vmatprep.subr.bf16.mxu0 0
    %6557 = vmatpush1.bf16.msra.mxu0 %v5234
    %6558 = vmatprep.subr.bf16.mxu0 0
    %6559 = vmatpush1.bf16.msra.mxu0 %v5235
    %6560 = vmatprep.subr.bf16.mxu0 0
    %6561 = vmatpush1.bf16.msra.mxu0 %v5236
    %6562 = vmatprep.subr.bf16.mxu0 0
    %6563 = vmatpush1.bf16.msra.mxu0 %v5237
    %6564 = vmatprep.subr.bf16.mxu0 0
    %6565 = vmatpush1.bf16.msra.mxu0 %v5238
    %6566 = vmatprep.subr.bf16.mxu0 0
    %6567 = vmatpush1.bf16.msra.mxu0 %v5239
    %6568 = vmatprep.mubr.bf16.mxu0 %v1914
    %6569 = vmatmul.mubr.bf16.gmra.mrb[0].mxu0 %v1913
    %v6570 = vpop.f32.mrb[0].mxu0
    %v6571 = vadd.f32 %v6531, %v6570
    %v6572 = vpop.f32.mrb[0].mxu0
    %v6573 = vpop.f32.mrb[0].mxu0
    %v6574 = vpop.f32.mrb[0].mxu0
    %6575 = vdwg.mxu0
    %6576 = vmatprep.subr.bf16.mxu0 0
    %6577 = vmatpush1.bf16.msra.mxu0 %v5240
    %6578 = vmatprep.subr.bf16.mxu0 0
    %6579 = vmatpush1.bf16.msra.mxu0 %v5241
    %6580 = vmatprep.subr.bf16.mxu0 0
    %6581 = vmatpush1.bf16.msra.mxu0 %v5242
    %6582 = vmatprep.subr.bf16.mxu0 0
    %6583 = vmatpush1.bf16.msra.mxu0 %v5243
    %6584 = vmatprep.subr.bf16.mxu0 0
    %6585 = vmatpush1.bf16.msra.mxu0 %v5244
    %6586 = vmatprep.subr.bf16.mxu0 0
    %6587 = vmatpush1.bf16.msra.mxu0 %v5245
    %6588 = vmatprep.subr.bf16.mxu0 0
    %6589 = vmatpush1.bf16.msra.mxu0 %v5246
    %6590 = vmatprep.subr.bf16.mxu0 0
    %6591 = vmatpush1.bf16.msra.mxu0 %v5247
    %6592 = vmatprep.subr.bf16.mxu0 0
    %6593 = vmatpush1.bf16.msra.mxu0 %v5248
    %6594 = vmatprep.subr.bf16.mxu0 0
    %6595 = vmatpush1.bf16.msra.mxu0 %v5249
    %6596 = vmatprep.subr.bf16.mxu0 0
    %6597 = vmatpush1.bf16.msra.mxu0 %v5250
    %6598 = vmatprep.subr.bf16.mxu0 0
    %6599 = vmatpush1.bf16.msra.mxu0 %v5251
    %6600 = vmatprep.subr.bf16.mxu0 0
    %6601 = vmatpush1.bf16.msra.mxu0 %v5252
    %6602 = vmatprep.subr.bf16.mxu0 0
    %6603 = vmatpush1.bf16.msra.mxu0 %v5253
    %6604 = vmatprep.subr.bf16.mxu0 0
    %6605 = vmatpush1.bf16.msra.mxu0 %v5254
    %6606 = vmatprep.subr.bf16.mxu0 0
    %6607 = vmatpush1.bf16.msra.mxu0 %v5255
    %6608 = vmatprep.mubr.bf16.mxu0 %v1916
    %6609 = vmatmul.mubr.bf16.gmra.mrb[0].mxu0 %v1915
    %v6610 = vpop.f32.mrb[0].mxu0
    %v6611 = vadd.f32 %v6571, %v6610
    %v6612 = vpop.f32.mrb[0].mxu0
    %v6613 = vpop.f32.mrb[0].mxu0
    %v6614 = vpop.f32.mrb[0].mxu0
    %6615 = vdwg.mxu0
    %6616 = vmatprep.subr.bf16.mxu0 0
    %6617 = vmatpush1.bf16.msra.mxu0 %v5256
    %6618 = vmatprep.subr.bf16.mxu0 0
    %6619 = vmatpush1.bf16.msra.mxu0 %v5257
    %6620 = vmatprep.subr.bf16.mxu0 0
    %6621 = vmatpush1.bf16.msra.mxu0 %v5258
    %6622 = vmatprep.subr.bf16.mxu0 0
    %6623 = vmatpush1.bf16.msra.mxu0 %v5259
    %6624 = vmatprep.subr.bf16.mxu0 0
    %6625 = vmatpush1.bf16.msra.mxu0 %v5260
    %6626 = vmatprep.subr.bf16.mxu0 0
    %6627 = vmatpush1.bf16.msra.mxu0 %v5261
    %6628 = vmatprep.subr.bf16.mxu0 0
    %6629 = vmatpush1.bf16.msra.mxu0 %v5262
    %6630 = vmatprep.subr.bf16.mxu0 0
    %6631 = vmatpush1.bf16.msra.mxu0 %v5263
    %6632 = vmatprep.subr.bf16.mxu0 0
    %6633 = vmatpush1.bf16.msra.mxu0 %v5264
    %6634 = vmatprep.subr.bf16.mxu0 0
    %6635 = vmatpush1.bf16.msra.mxu0 %v5265
    %6636 = vmatprep.subr.bf16.mxu0 0
    %6637 = vmatpush1.bf16.msra.mxu0 %v5266
    %6638 = vmatprep.subr.bf16.mxu0 0
    %6639 = vmatpush1.bf16.msra.mxu0 %v5267
    %6640 = vmatprep.subr.bf16.mxu0 0
    %6641 = vmatpush1.bf16.msra.mxu0 %v5268
    %6642 = vmatprep.subr.bf16.mxu0 0
    %6643 = vmatpush1.bf16.msra.mxu0 %v5269
    %6644 = vmatprep.subr.bf16.mxu0 0
    %6645 = vmatpush1.bf16.msra.mxu0 %v5270
    %6646 = vmatprep.subr.bf16.mxu0 0
    %6647 = vmatpush1.bf16.msra.mxu0 %v5271
    %6648 = vmatprep.mubr.bf16.mxu0 %v1918
    %6649 = vmatmul.mubr.bf16.gmra.mrb[0].mxu0 %v1917
    %v6650 = vpop.f32.mrb[0].mxu0
    %v6651 = vadd.f32 %v6611, %v6650
    %v6652 = vpop.f32.mrb[0].mxu0
    %v6653 = vpop.f32.mrb[0].mxu0
    %v6654 = vpop.f32.mrb[0].mxu0
    %6655 = vdwg.mxu0
    %6656 = vmatprep.subr.bf16.mxu0 0
    %6657 = vmatpush1.bf16.msra.mxu0 %v5272
    %6658 = vmatprep.subr.bf16.mxu0 0
    %6659 = vmatpush1.bf16.msra.mxu0 %v5273
    %6660 = vmatprep.subr.bf16.mxu0 0
    %6661 = vmatpush1.bf16.msra.mxu0 %v5274
    %6662 = vmatprep.subr.bf16.mxu0 0
    %6663 = vmatpush1.bf16.msra.mxu0 %v5275
    %6664 = vmatprep.subr.bf16.mxu0 0
    %6665 = vmatpush1.bf16.msra.mxu0 %v5276
    %6666 = vmatprep.subr.bf16.mxu0 0
    %6667 = vmatpush1.bf16.msra.mxu0 %v5277
    %6668 = vmatprep.subr.bf16.mxu0 0
    %6669 = vmatpush1.bf16.msra.mxu0 %v5278
    %6670 = vmatprep.subr.bf16.mxu0 0
    %6671 = vmatpush1.bf16.msra.mxu0 %v5279
    %6672 = vmatprep.subr.bf16.mxu0 0
    %6673 = vmatpush1.bf16.msra.mxu0 %v5280
    %6674 = vmatprep.subr.bf16.mxu0 0
    %6675 = vmatpush1.bf16.msra.mxu0 %v5281
    %6676 = vmatprep.subr.bf16.mxu0 0
    %6677 = vmatpush1.bf16.msra.mxu0 %v5282
    %6678 = vmatprep.subr.bf16.mxu0 0
    %6679 = vmatpush1.bf16.msra.mxu0 %v5283
    %6680 = vmatprep.subr.bf16.mxu0 0
    %6681 = vmatpush1.bf16.msra.mxu0 %v5284
    %6682 = vmatprep.subr.bf16.mxu0 0
    %6683 = vmatpush1.bf16.msra.mxu0 %v5285
    %6684 = vmatprep.subr.bf16.mxu0 0
    %6685 = vmatpush1.bf16.msra.mxu0 %v5286
    %6686 = vmatprep.subr.bf16.mxu0 0
    %6687 = vmatpush1.bf16.msra.mxu0 %v5287
    %6688 = vmatprep.mubr.bf16.mxu0 %v1920
    %6689 = vmatmul.mubr.bf16.gmra.mrb[0].mxu0 %v1919
    %v6690 = vpop.f32.mrb[0].mxu0
    %v6691 = vadd.f32 %v6651, %v6690
    %v6692 = vpop.f32.mrb[0].mxu0
    %v6693 = vpop.f32.mrb[0].mxu0
    %v6694 = vpop.f32.mrb[0].mxu0
    %6695 = vdwg.mxu0
    %6696 = vmatprep.subr.bf16.mxu0 0
    %6697 = vmatpush1.bf16.msra.mxu0 %v5288
    %6698 = vmatprep.subr.bf16.mxu0 0
    %6699 = vmatpush1.bf16.msra.mxu0 %v5289
    %6700 = vmatprep.subr.bf16.mxu0 0
    %6701 = vmatpush1.bf16.msra.mxu0 %v5290
    %6702 = vmatprep.subr.bf16.mxu0 0
    %6703 = vmatpush1.bf16.msra.mxu0 %v5291
    %6704 = vmatprep.subr.bf16.mxu0 0
    %6705 = vmatpush1.bf16.msra.mxu0 %v5292
    %6706 = vmatprep.subr.bf16.mxu0 0
    %6707 = vmatpush1.bf16.msra.mxu0 %v5293
    %6708 = vmatprep.subr.bf16.mxu0 0
    %6709 = vmatpush1.bf16.msra.mxu0 %v5294
    %6710 = vmatprep.subr.bf16.mxu0 0
    %6711 = vmatpush1.bf16.msra.mxu0 %v5295
    %6712 = vmatprep.subr.bf16.mxu0 0
    %6713 = vmatpush1.bf16.msra.mxu0 %v5296
    %6714 = vmatprep.subr.bf16.mxu0 0
    %6715 = vmatpush1.bf16.msra.mxu0 %v5297
    %6716 = vmatprep.subr.bf16.mxu0 0
    %6717 = vmatpush1.bf16.msra.mxu0 %v5298
    %6718 = vmatprep.subr.bf16.mxu0 0
    %6719 = vmatpush1.bf16.msra.mxu0 %v5299
    %6720 = vmatprep.subr.bf16.mxu0 0
    %6721 = vmatpush1.bf16.msra.mxu0 %v5300
    %6722 = vmatprep.subr.bf16.mxu0 0
    %6723 = vmatpush1.bf16.msra.mxu0 %v5301
    %6724 = vmatprep.subr.bf16.mxu0 0
    %6725 = vmatpush1.bf16.msra.mxu0 %v5302
    %6726 = vmatprep.subr.bf16.mxu0 0
    %6727 = vmatpush1.bf16.msra.mxu0 %v5303
    %6728 = vmatprep.mubr.bf16.mxu0 %v1922
    %6729 = vmatmul.mubr.bf16.gmra.mrb[0].mxu0 %v1921
    %v6730 = vpop.f32.mrb[0].mxu0
    %v6731 = vadd.f32 %v6691, %v6730
    %v6732 = vpop.f32.mrb[0].mxu0
    %v6733 = vpop.f32.mrb[0].mxu0
    %v6734 = vpop.f32.mrb[0].mxu0
    %6735 = vdwg.mxu0
    %6736 = vmatprep.subr.bf16.mxu0 0
    %6737 = vmatpush1.bf16.msra.mxu0 %v5304
    %6738 = vmatprep.subr.bf16.mxu0 0
    %6739 = vmatpush1.bf16.msra.mxu0 %v5305
    %6740 = vmatprep.subr.bf16.mxu0 0
    %6741 = vmatpush1.bf16.msra.mxu0 %v5306
    %6742 = vmatprep.subr.bf16.mxu0 0
    %6743 = vmatpush1.bf16.msra.mxu0 %v5307
    %6744 = vmatprep.subr.bf16.mxu0 0
    %6745 = vmatpush1.bf16.msra.mxu0 %v5308
    %6746 = vmatprep.subr.bf16.mxu0 0
    %6747 = vmatpush1.bf16.msra.mxu0 %v5309
    %6748 = vmatprep.subr.bf16.mxu0 0
    %6749 = vmatpush1.bf16.msra.mxu0 %v5310
    %6750 = vmatprep.subr.bf16.mxu0 0
    %6751 = vmatpush1.bf16.msra.mxu0 %v5311
    %6752 = vmatprep.subr.bf16.mxu0 0
    %6753 = vmatpush1.bf16.msra.mxu0 %v5312
    %6754 = vmatprep.subr.bf16.mxu0 0
    %6755 = vmatpush1.bf16.msra.mxu0 %v5313
    %6756 = vmatprep.subr.bf16.mxu0 0
    %6757 = vmatpush1.bf16.msra.mxu0 %v5314
    %6758 = vmatprep.subr.bf16.mxu0 0
    %6759 = vmatpush1.bf16.msra.mxu0 %v5315
    %6760 = vmatprep.subr.bf16.mxu0 0
    %6761 = vmatpush1.bf16.msra.mxu0 %v5316
    %6762 = vmatprep.subr.bf16.mxu0 0
    %6763 = vmatpush1.bf16.msra.mxu0 %v5317
    %6764 = vmatprep.subr.bf16.mxu0 0
    %6765 = vmatpush1.bf16.msra.mxu0 %v5318
    %6766 = vmatprep.subr.bf16.mxu0 0
    %6767 = vmatpush1.bf16.msra.mxu0 %v5319
    %6768 = vmatprep.mubr.bf16.mxu0 %v1924
    %6769 = vmatmul.mubr.bf16.gmra.mrb[0].mxu0 %v1923
    %v6770 = vpop.f32.mrb[0].mxu0
    %v6771 = vadd.f32 %v6731, %v6770
    %v6772 = vpop.f32.mrb[0].mxu0
    %v6773 = vpop.f32.mrb[0].mxu0
    %v6774 = vpop.f32.mrb[0].mxu0
    %6775 = vdwg.mxu0
    %6776 = vmatprep.subr.bf16.mxu0 0
    %6777 = vmatpush1.bf16.msra.mxu0 %v5320
    %6778 = vmatprep.subr.bf16.mxu0 0
    %6779 = vmatpush1.bf16.msra.mxu0 %v5321
    %6780 = vmatprep.subr.bf16.mxu0 0
    %6781 = vmatpush1.bf16.msra.mxu0 %v5322
    %6782 = vmatprep.subr.bf16.mxu0 0
    %6783 = vmatpush1.bf16.msra.mxu0 %v5323
    %6784 = vmatprep.subr.bf16.mxu0 0
    %6785 = vmatpush1.bf16.msra.mxu0 %v5324
    %6786 = vmatprep.subr.bf16.mxu0 0
    %6787 = vmatpush1.bf16.msra.mxu0 %v5325
    %6788 = vmatprep.subr.bf16.mxu0 0
    %6789 = vmatpush1.bf16.msra.mxu0 %v5326
    %6790 = vmatprep.subr.bf16.mxu0 0
    %6791 = vmatpush1.bf16.msra.mxu0 %v5327
    %6792 = vmatprep.subr.bf16.mxu0 0
    %6793 = vmatpush1.bf16.msra.mxu0 %v5328
    %6794 = vmatprep.subr.bf16.mxu0 0
    %6795 = vmatpush1.bf16.msra.mxu0 %v5329
    %6796 = vmatprep.subr.bf16.mxu0 0
    %6797 = vmatpush1.bf16.msra.mxu0 %v5330
    %6798 = vmatprep.subr.bf16.mxu0 0
    %6799 = vmatpush1.bf16.msra.mxu0 %v5331
    %6800 = vmatprep.subr.bf16.mxu0 0
    %6801 = vmatpush1.bf16.msra.mxu0 %v5332
    %6802 = vmatprep.subr.bf16.mxu0 0
    %6803 = vmatpush1.bf16.msra.mxu0 %v5333
    %6804 = vmatprep.subr.bf16.mxu0 0
    %6805 = vmatpush1.bf16.msra.mxu0 %v5334
    %6806 = vmatprep.subr.bf16.mxu0 0
    %6807 = vmatpush1.bf16.msra.mxu0 %v5335
    %6808 = vmatprep.mubr.bf16.mxu0 %v1926
    %6809 = vmatmul.mubr.bf16.gmra.mrb[0].mxu0 %v1925
    %v6810 = vpop.f32.mrb[0].mxu0
    %v6811 = vadd.f32 %v6771, %v6810
    %v6812 = vpop.f32.mrb[0].mxu0
    %v6813 = vpop.f32.mrb[0].mxu0
    %v6814 = vpop.f32.mrb[0].mxu0
    %6815 = vdwg.mxu0
    %6816 = vmatprep.subr.bf16.mxu0 0
    %6817 = vmatpush1.bf16.msra.mxu0 %v5336
    %6818 = vmatprep.subr.bf16.mxu0 0
    %6819 = vmatpush1.bf16.msra.mxu0 %v5337
    %6820 = vmatprep.subr.bf16.mxu0 0
    %6821 = vmatpush1.bf16.msra.mxu0 %v5338
    %6822 = vmatprep.subr.bf16.mxu0 0
    %6823 = vmatpush1.bf16.msra.mxu0 %v5339
    %6824 = vmatprep.subr.bf16.mxu0 0
    %6825 = vmatpush1.bf16.msra.mxu0 %v5340
    %6826 = vmatprep.subr.bf16.mxu0 0
    %6827 = vmatpush1.bf16.msra.mxu0 %v5341
    %6828 = vmatprep.subr.bf16.mxu0 0
    %6829 = vmatpush1.bf16.msra.mxu0 %v5342
    %6830 = vmatprep.subr.bf16.mxu0 0
    %6831 = vmatpush1.bf16.msra.mxu0 %v5343
    %6832 = vmatprep.subr.bf16.mxu0 0
    %6833 = vmatpush1.bf16.msra.mxu0 %v5344
    %6834 = vmatprep.subr.bf16.mxu0 0
    %6835 = vmatpush1.bf16.msra.mxu0 %v5345
    %6836 = vmatprep.subr.bf16.mxu0 0
    %6837 = vmatpush1.bf16.msra.mxu0 %v5346
    %6838 = vmatprep.subr.bf16.mxu0 0
    %6839 = vmatpush1.bf16.msra.mxu0 %v5347
    %6840 = vmatprep.subr.bf16.mxu0 0
    %6841 = vmatpush1.bf16.msra.mxu0 %v5348
    %6842 = vmatprep.subr.bf16.mxu0 0
    %6843 = vmatpush1.bf16.msra.mxu0 %v5349
    %6844 = vmatprep.subr.bf16.mxu0 0
    %6845 = vmatpush1.bf16.msra.mxu0 %v5350
    %6846 = vmatprep.subr.bf16.mxu0 0
    %6847 = vmatpush1.bf16.msra.mxu0 %v5351
    %6848 = vmatprep.mubr.bf16.mxu0 %v1928
    %6849 = vmatmul.mubr.bf16.gmra.mrb[0].mxu0 %v1927
    %v6850 = vpop.f32.mrb[0].mxu0
    %v6851 = vadd.f32 %v6811, %v6850
    %v6852 = vpop.f32.mrb[0].mxu0
    %v6853 = vpop.f32.mrb[0].mxu0
    %v6854 = vpop.f32.mrb[0].mxu0
    %6855 = vdwg.mxu0
    %6856 = vmatprep.subr.bf16.mxu0 0
    %6857 = vmatpush1.bf16.msra.mxu0 %v5352
    %6858 = vmatprep.subr.bf16.mxu0 0
    %6859 = vmatpush1.bf16.msra.mxu0 %v5353
    %6860 = vmatprep.subr.bf16.mxu0 0
    %6861 = vmatpush1.bf16.msra.mxu0 %v5354
    %6862 = vmatprep.subr.bf16.mxu0 0
    %6863 = vmatpush1.bf16.msra.mxu0 %v5355
    %6864 = vmatprep.subr.bf16.mxu0 0
    %6865 = vmatpush1.bf16.msra.mxu0 %v5356
    %6866 = vmatprep.subr.bf16.mxu0 0
    %6867 = vmatpush1.bf16.msra.mxu0 %v5357
    %6868 = vmatprep.subr.bf16.mxu0 0
    %6869 = vmatpush1.bf16.msra.mxu0 %v5358
    %6870 = vmatprep.subr.bf16.mxu0 0
    %6871 = vmatpush1.bf16.msra.mxu0 %v5359
    %6872 = vmatprep.subr.bf16.mxu0 0
    %6873 = vmatpush1.bf16.msra.mxu0 %v5360
    %6874 = vmatprep.subr.bf16.mxu0 0
    %6875 = vmatpush1.bf16.msra.mxu0 %v5361
    %6876 = vmatprep.subr.bf16.mxu0 0
    %6877 = vmatpush1.bf16.msra.mxu0 %v5362
    %6878 = vmatprep.subr.bf16.mxu0 0
    %6879 = vmatpush1.bf16.msra.mxu0 %v5363
    %6880 = vmatprep.subr.bf16.mxu0 0
    %6881 = vmatpush1.bf16.msra.mxu0 %v5364
    %6882 = vmatprep.subr.bf16.mxu0 0
    %6883 = vmatpush1.bf16.msra.mxu0 %v5365
    %6884 = vmatprep.subr.bf16.mxu0 0
    %6885 = vmatpush1.bf16.msra.mxu0 %v5366
    %6886 = vmatprep.subr.bf16.mxu0 0
    %6887 = vmatpush1.bf16.msra.mxu0 %v5367
    %6888 = vmatprep.mubr.bf16.mxu0 %v1930
    %6889 = vmatmul.mubr.bf16.gmra.mrb[0].mxu0 %v1929
    %v6890 = vpop.f32.mrb[0].mxu0
    %v6891 = vadd.f32 %v6851, %v6890
    %v6892 = vpop.f32.mrb[0].mxu0
    %v6893 = vpop.f32.mrb[0].mxu0
    %v6894 = vpop.f32.mrb[0].mxu0
    %6895 = vdwg.mxu0
    %6896 = vmatprep.subr.bf16.mxu0 0
    %6897 = vmatpush1.bf16.msra.mxu0 %v5368
    %6898 = vmatprep.subr.bf16.mxu0 0
    %6899 = vmatpush1.bf16.msra.mxu0 %v5369
    %6900 = vmatprep.subr.bf16.mxu0 0
    %6901 = vmatpush1.bf16.msra.mxu0 %v5370
    %6902 = vmatprep.subr.bf16.mxu0 0
    %6903 = vmatpush1.bf16.msra.mxu0 %v5371
    %6904 = vmatprep.subr.bf16.mxu0 0
    %6905 = vmatpush1.bf16.msra.mxu0 %v5372
    %6906 = vmatprep.subr.bf16.mxu0 0
    %6907 = vmatpush1.bf16.msra.mxu0 %v5373
    %6908 = vmatprep.subr.bf16.mxu0 0
    %6909 = vmatpush1.bf16.msra.mxu0 %v5374
    %6910 = vmatprep.subr.bf16.mxu0 0
    %6911 = vmatpush1.bf16.msra.mxu0 %v5375
    %6912 = vmatprep.subr.bf16.mxu0 0
    %6913 = vmatpush1.bf16.msra.mxu0 %v5376
    %6914 = vmatprep.subr.bf16.mxu0 0
    %6915 = vmatpush1.bf16.msra.mxu0 %v5377
    %6916 = vmatprep.subr.bf16.mxu0 0
    %6917 = vmatpush1.bf16.msra.mxu0 %v5378
    %6918 = vmatprep.subr.bf16.mxu0 0
    %6919 = vmatpush1.bf16.msra.mxu0 %v5379
    %6920 = vmatprep.subr.bf16.mxu0 0
    %6921 = vmatpush1.bf16.msra.mxu0 %v5380
    %6922 = vmatprep.subr.bf16.mxu0 0
    %6923 = vmatpush1.bf16.msra.mxu0 %v5381
    %6924 = vmatprep.subr.bf16.mxu0 0
    %6925 = vmatpush1.bf16.msra.mxu0 %v5382
    %6926 = vmatprep.subr.bf16.mxu0 0
    %6927 = vmatpush1.bf16.msra.mxu0 %v5383
    %6928 = vmatprep.mubr.bf16.mxu0 %v1932
    %6929 = vmatmul.mubr.bf16.gmra.mrb[0].mxu0 %v1931
    %v6930 = vpop.f32.mrb[0].mxu0
    %v6931 = vadd.f32 %v6891, %v6930
    %v6932 = vpop.f32.mrb[0].mxu0
    %v6933 = vpop.f32.mrb[0].mxu0
    %v6934 = vpop.f32.mrb[0].mxu0
    %6935 = vdwg.mxu0
    %6936 = vmatprep.subr.bf16.mxu0 0
    %6937 = vmatpush1.bf16.msra.mxu0 %v5384
    %6938 = vmatprep.subr.bf16.mxu0 0
    %6939 = vmatpush1.bf16.msra.mxu0 %v5385
    %6940 = vmatprep.subr.bf16.mxu0 0
    %6941 = vmatpush1.bf16.msra.mxu0 %v5386
    %6942 = vmatprep.subr.bf16.mxu0 0
    %6943 = vmatpush1.bf16.msra.mxu0 %v5387
    %6944 = vmatprep.subr.bf16.mxu0 0
    %6945 = vmatpush1.bf16.msra.mxu0 %v5388
    %6946 = vmatprep.subr.bf16.mxu0 0
    %6947 = vmatpush1.bf16.msra.mxu0 %v5389
    %6948 = vmatprep.subr.bf16.mxu0 0
    %6949 = vmatpush1.bf16.msra.mxu0 %v5390
    %6950 = vmatprep.subr.bf16.mxu0 0
    %6951 = vmatpush1.bf16.msra.mxu0 %v5391
    %6952 = vmatprep.subr.bf16.mxu0 0
    %6953 = vmatpush1.bf16.msra.mxu0 %v5392
    %6954 = vmatprep.subr.bf16.mxu0 0
    %6955 = vmatpush1.bf16.msra.mxu0 %v5393
    %6956 = vmatprep.subr.bf16.mxu0 0
    %6957 = vmatpush1.bf16.msra.mxu0 %v5394
    %6958 = vmatprep.subr.bf16.mxu0 0
    %6959 = vmatpush1.bf16.msra.mxu0 %v5395
    %6960 = vmatprep.subr.bf16.mxu0 0
    %6961 = vmatpush1.bf16.msra.mxu0 %v5396
    %6962 = vmatprep.subr.bf16.mxu0 0
    %6963 = vmatpush1.bf16.msra.mxu0 %v5397
    %6964 = vmatprep.subr.bf16.mxu0 0
    %6965 = vmatpush1.bf16.msra.mxu0 %v5398
    %6966 = vmatprep.subr.bf16.mxu0 0
    %6967 = vmatpush1.bf16.msra.mxu0 %v5399
    %6968 = vmatprep.mubr.bf16.mxu0 %v1934
    %6969 = vmatmul.mubr.bf16.gmra.mrb[0].mxu0 %v1933
    %v6970 = vpop.f32.mrb[0].mxu0
    %v6971 = vadd.f32 %v6931, %v6970
    %v6972 = vpop.f32.mrb[0].mxu0
    %v6973 = vpop.f32.mrb[0].mxu0
    %v6974 = vpop.f32.mrb[0].mxu0
    %6975 = vdwg.mxu0
    %6976 = vmatprep.subr.bf16.mxu0 0
    %6977 = vmatpush1.bf16.msra.mxu0 %v5400
    %6978 = vmatprep.subr.bf16.mxu0 0
    %6979 = vmatpush1.bf16.msra.mxu0 %v5401
    %6980 = vmatprep.subr.bf16.mxu0 0
    %6981 = vmatpush1.bf16.msra.mxu0 %v5402
    %6982 = vmatprep.subr.bf16.mxu0 0
    %6983 = vmatpush1.bf16.msra.mxu0 %v5403
    %6984 = vmatprep.subr.bf16.mxu0 0
    %6985 = vmatpush1.bf16.msra.mxu0 %v5404
    %6986 = vmatprep.subr.bf16.mxu0 0
    %6987 = vmatpush1.bf16.msra.mxu0 %v5405
    %6988 = vmatprep.subr.bf16.mxu0 0
    %6989 = vmatpush1.bf16.msra.mxu0 %v5406
    %6990 = vmatprep.subr.bf16.mxu0 0
    %6991 = vmatpush1.bf16.msra.mxu0 %v5407
    %6992 = vmatprep.subr.bf16.mxu0 0
    %6993 = vmatpush1.bf16.msra.mxu0 %v5408
    %6994 = vmatprep.subr.bf16.mxu0 0
    %6995 = vmatpush1.bf16.msra.mxu0 %v5409
    %6996 = vmatprep.subr.bf16.mxu0 0
    %6997 = vmatpush1.bf16.msra.mxu0 %v5410
    %6998 = vmatprep.subr.bf16.mxu0 0
    %6999 = vmatpush1.bf16.msra.mxu0 %v5411
    %7000 = vmatprep.subr.bf16.mxu0 0
    %7001 = vmatpush1.bf16.msra.mxu0 %v5412
    %7002 = vmatprep.subr.bf16.mxu0 0
    %7003 = vmatpush1.bf16.msra.mxu0 %v5413
    %7004 = vmatprep.subr.bf16.mxu0 0
    %7005 = vmatpush1.bf16.msra.mxu0 %v5414
    %7006 = vmatprep.subr.bf16.mxu0 0
    %7007 = vmatpush1.bf16.msra.mxu0 %v5415
    %7008 = vmatprep.mubr.bf16.mxu0 %v1936
    %7009 = vmatmul.mubr.bf16.gmra.mrb[0].mxu0 %v1935
    %v7010 = vpop.f32.mrb[0].mxu0
    %v7011 = vadd.f32 %v6971, %v7010
    %v7012 = vpop.f32.mrb[0].mxu0
    %v7013 = vpop.f32.mrb[0].mxu0
    %v7014 = vpop.f32.mrb[0].mxu0
    %7015 = vdwg.mxu0
    %7016 = vmatprep.subr.bf16.mxu0 0
    %7017 = vmatpush1.bf16.msra.mxu0 %v5416
    %7018 = vmatprep.subr.bf16.mxu0 0
    %7019 = vmatpush1.bf16.msra.mxu0 %v5417
    %7020 = vmatprep.subr.bf16.mxu0 0
    %7021 = vmatpush1.bf16.msra.mxu0 %v5418
    %7022 = vmatprep.subr.bf16.mxu0 0
    %7023 = vmatpush1.bf16.msra.mxu0 %v5419
    %7024 = vmatprep.subr.bf16.mxu0 0
    %7025 = vmatpush1.bf16.msra.mxu0 %v5420
    %7026 = vmatprep.subr.bf16.mxu0 0
    %7027 = vmatpush1.bf16.msra.mxu0 %v5421
    %7028 = vmatprep.subr.bf16.mxu0 0
    %7029 = vmatpush1.bf16.msra.mxu0 %v5422
    %7030 = vmatprep.subr.bf16.mxu0 0
    %7031 = vmatpush1.bf16.msra.mxu0 %v5423
    %7032 = vmatprep.subr.bf16.mxu0 0
    %7033 = vmatpush1.bf16.msra.mxu0 %v5424
    %7034 = vmatprep.subr.bf16.mxu0 0
    %7035 = vmatpush1.bf16.msra.mxu0 %v5425
    %7036 = vmatprep.subr.bf16.mxu0 0
    %7037 = vmatpush1.bf16.msra.mxu0 %v5426
    %7038 = vmatprep.subr.bf16.mxu0 0
    %7039 = vmatpush1.bf16.msra.mxu0 %v5427
    %7040 = vmatprep.subr.bf16.mxu0 0
    %7041 = vmatpush1.bf16.msra.mxu0 %v5428
    %7042 = vmatprep.subr.bf16.mxu0 0
    %7043 = vmatpush1.bf16.msra.mxu0 %v5429
    %7044 = vmatprep.subr.bf16.mxu0 0
    %7045 = vmatpush1.bf16.msra.mxu0 %v5430
    %7046 = vmatprep.subr.bf16.mxu0 0
    %7047 = vmatpush1.bf16.msra.mxu0 %v5431
    %7048 = vmatprep.mubr.bf16.mxu0 %v1938
    %7049 = vmatmul.mubr.bf16.gmra.mrb[0].mxu0 %v1937
    %v7050 = vpop.f32.mrb[0].mxu0
    %v7051 = vadd.f32 %v7011, %v7050
    %v7052 = vpop.f32.mrb[0].mxu0
    %v7053 = vpop.f32.mrb[0].mxu0
    %v7054 = vpop.f32.mrb[0].mxu0
    %7055 = vdwg.mxu0
    %7056 = vmatprep.subr.bf16.mxu0 0
    %7057 = vmatpush1.bf16.msra.mxu0 %v5432
    %7058 = vmatprep.subr.bf16.mxu0 0
    %7059 = vmatpush1.bf16.msra.mxu0 %v5433
    %7060 = vmatprep.subr.bf16.mxu0 0
    %7061 = vmatpush1.bf16.msra.mxu0 %v5434
    %7062 = vmatprep.subr.bf16.mxu0 0
    %7063 = vmatpush1.bf16.msra.mxu0 %v5435
    %7064 = vmatprep.subr.bf16.mxu0 0
    %7065 = vmatpush1.bf16.msra.mxu0 %v5436
    %7066 = vmatprep.subr.bf16.mxu0 0
    %7067 = vmatpush1.bf16.msra.mxu0 %v5437
    %7068 = vmatprep.subr.bf16.mxu0 0
    %7069 = vmatpush1.bf16.msra.mxu0 %v5438
    %7070 = vmatprep.subr.bf16.mxu0 0
    %7071 = vmatpush1.bf16.msra.mxu0 %v5439
    %7072 = vmatprep.subr.bf16.mxu0 0
    %7073 = vmatpush1.bf16.msra.mxu0 %v5440
    %7074 = vmatprep.subr.bf16.mxu0 0
    %7075 = vmatpush1.bf16.msra.mxu0 %v5441
    %7076 = vmatprep.subr.bf16.mxu0 0
    %7077 = vmatpush1.bf16.msra.mxu0 %v5442
    %7078 = vmatprep.subr.bf16.mxu0 0
    %7079 = vmatpush1.bf16.msra.mxu0 %v5443
    %7080 = vmatprep.subr.bf16.mxu0 0
    %7081 = vmatpush1.bf16.msra.mxu0 %v5444
    %7082 = vmatprep.subr.bf16.mxu0 0
    %7083 = vmatpush1.bf16.msra.mxu0 %v5445
    %7084 = vmatprep.subr.bf16.mxu0 0
    %7085 = vmatpush1.bf16.msra.mxu0 %v5446
    %7086 = vmatprep.subr.bf16.mxu0 0
    %7087 = vmatpush1.bf16.msra.mxu0 %v5447
    %7088 = vmatprep.mubr.bf16.mxu0 %v1940
    %7089 = vmatmul.mubr.bf16.gmra.mrb[0].mxu0 %v1939
    %v7090 = vpop.f32.mrb[0].mxu0
    %v7091 = vadd.f32 %v7051, %v7090
    %v7092 = vpop.f32.mrb[0].mxu0
    %v7093 = vpop.f32.mrb[0].mxu0
    %v7094 = vpop.f32.mrb[0].mxu0
    %7095 = vdwg.mxu0
    %7096 = vmatprep.subr.bf16.mxu0 0
    %7097 = vmatpush1.bf16.msra.mxu0 %v5448
    %7098 = vmatprep.subr.bf16.mxu0 0
    %7099 = vmatpush1.bf16.msra.mxu0 %v5449
    %7100 = vmatprep.subr.bf16.mxu0 0
    %7101 = vmatpush1.bf16.msra.mxu0 %v5450
    %7102 = vmatprep.subr.bf16.mxu0 0
    %7103 = vmatpush1.bf16.msra.mxu0 %v5451
    %7104 = vmatprep.subr.bf16.mxu0 0
    %7105 = vmatpush1.bf16.msra.mxu0 %v5452
    %7106 = vmatprep.subr.bf16.mxu0 0
    %7107 = vmatpush1.bf16.msra.mxu0 %v5453
    %7108 = vmatprep.subr.bf16.mxu0 0
    %7109 = vmatpush1.bf16.msra.mxu0 %v5454
    %7110 = vmatprep.subr.bf16.mxu0 0
    %7111 = vmatpush1.bf16.msra.mxu0 %v5455
    %7112 = vmatprep.subr.bf16.mxu0 0
    %7113 = vmatpush1.bf16.msra.mxu0 %v5456
    %7114 = vmatprep.subr.bf16.mxu0 0
    %7115 = vmatpush1.bf16.msra.mxu0 %v5457
    %7116 = vmatprep.subr.bf16.mxu0 0
    %7117 = vmatpush1.bf16.msra.mxu0 %v5458
    %7118 = vmatprep.subr.bf16.mxu0 0
    %7119 = vmatpush1.bf16.msra.mxu0 %v5459
    %7120 = vmatprep.subr.bf16.mxu0 0
    %7121 = vmatpush1.bf16.msra.mxu0 %v5460
    %7122 = vmatprep.subr.bf16.mxu0 0
    %7123 = vmatpush1.bf16.msra.mxu0 %v5461
    %7124 = vmatprep.subr.bf16.mxu0 0
    %7125 = vmatpush1.bf16.msra.mxu0 %v5462
    %7126 = vmatprep.subr.bf16.mxu0 0
    %7127 = vmatpush1.bf16.msra.mxu0 %v5463
    %7128 = vmatprep.mubr.bf16.mxu0 %v1942
    %7129 = vmatmul.mubr.bf16.gmra.mrb[0].mxu0 %v1941
    %v7130 = vpop.f32.mrb[0].mxu0
    %v7131 = vadd.f32 %v7091, %v7130
    %v7132 = vpop.f32.mrb[0].mxu0
    %v7133 = vpop.f32.mrb[0].mxu0
    %v7134 = vpop.f32.mrb[0].mxu0
    %7135 = vdwg.mxu0
    %7136 = vmatprep.subr.bf16.mxu0 0
    %7137 = vmatpush1.bf16.msra.mxu0 %v5464
    %7138 = vmatprep.subr.bf16.mxu0 0
    %7139 = vmatpush1.bf16.msra.mxu0 %v5465
    %7140 = vmatprep.subr.bf16.mxu0 0
    %7141 = vmatpush1.bf16.msra.mxu0 %v5466
    %7142 = vmatprep.subr.bf16.mxu0 0
    %7143 = vmatpush1.bf16.msra.mxu0 %v5467
    %7144 = vmatprep.subr.bf16.mxu0 0
    %7145 = vmatpush1.bf16.msra.mxu0 %v5468
    %7146 = vmatprep.subr.bf16.mxu0 0
    %7147 = vmatpush1.bf16.msra.mxu0 %v5469
    %7148 = vmatprep.subr.bf16.mxu0 0
    %7149 = vmatpush1.bf16.msra.mxu0 %v5470
    %7150 = vmatprep.subr.bf16.mxu0 0
    %7151 = vmatpush1.bf16.msra.mxu0 %v5471
    %7152 = vmatprep.subr.bf16.mxu0 0
    %7153 = vmatpush1.bf16.msra.mxu0 %v5472
    %7154 = vmatprep.subr.bf16.mxu0 0
    %7155 = vmatpush1.bf16.msra.mxu0 %v5473
    %7156 = vmatprep.subr.bf16.mxu0 0
    %7157 = vmatpush1.bf16.msra.mxu0 %v5474
    %7158 = vmatprep.subr.bf16.mxu0 0
    %7159 = vmatpush1.bf16.msra.mxu0 %v5475
    %7160 = vmatprep.subr.bf16.mxu0 0
    %7161 = vmatpush1.bf16.msra.mxu0 %v5476
    %7162 = vmatprep.subr.bf16.mxu0 0
    %7163 = vmatpush1.bf16.msra.mxu0 %v5477
    %7164 = vmatprep.subr.bf16.mxu0 0
    %7165 = vmatpush1.bf16.msra.mxu0 %v5478
    %7166 = vmatprep.subr.bf16.mxu0 0
    %7167 = vmatpush1.bf16.msra.mxu0 %v5479
    %7168 = vmatprep.mubr.bf16.mxu0 %v1944
    %7169 = vmatmul.mubr.bf16.gmra.mrb[0].mxu0 %v1943
    %v7170 = vpop.f32.mrb[0].mxu0
    %v7171 = vadd.f32 %v7131, %v7170
    %v7172 = vpop.f32.mrb[0].mxu0
    %v7173 = vpop.f32.mrb[0].mxu0
    %v7174 = vpop.f32.mrb[0].mxu0
    %7175 = vdwg.mxu0
    %7176 = vmatprep.subr.bf16.mxu0 0
    %7177 = vmatpush1.bf16.msra.mxu0 %v5480
    %7178 = vmatprep.subr.bf16.mxu0 0
    %7179 = vmatpush1.bf16.msra.mxu0 %v5481
    %7180 = vmatprep.subr.bf16.mxu0 0
    %7181 = vmatpush1.bf16.msra.mxu0 %v5482
    %7182 = vmatprep.subr.bf16.mxu0 0
    %7183 = vmatpush1.bf16.msra.mxu0 %v5483
    %7184 = vmatprep.subr.bf16.mxu0 0
    %7185 = vmatpush1.bf16.msra.mxu0 %v5484
    %7186 = vmatprep.subr.bf16.mxu0 0
    %7187 = vmatpush1.bf16.msra.mxu0 %v5485
    %7188 = vmatprep.subr.bf16.mxu0 0
    %7189 = vmatpush1.bf16.msra.mxu0 %v5486
    %7190 = vmatprep.subr.bf16.mxu0 0
    %7191 = vmatpush1.bf16.msra.mxu0 %v5487
    %7192 = vmatprep.subr.bf16.mxu0 0
    %7193 = vmatpush1.bf16.msra.mxu0 %v5488
    %7194 = vmatprep.subr.bf16.mxu0 0
    %7195 = vmatpush1.bf16.msra.mxu0 %v5489
    %7196 = vmatprep.subr.bf16.mxu0 0
    %7197 = vmatpush1.bf16.msra.mxu0 %v5490
    %7198 = vmatprep.subr.bf16.mxu0 0
    %7199 = vmatpush1.bf16.msra.mxu0 %v5491
    %7200 = vmatprep.subr.bf16.mxu0 0
    %7201 = vmatpush1.bf16.msra.mxu0 %v5492
    %7202 = vmatprep.subr.bf16.mxu0 0
    %7203 = vmatpush1.bf16.msra.mxu0 %v5493
    %7204 = vmatprep.subr.bf16.mxu0 0
    %7205 = vmatpush1.bf16.msra.mxu0 %v5494
    %7206 = vmatprep.subr.bf16.mxu0 0
    %7207 = vmatpush1.bf16.msra.mxu0 %v5495
    %7208 = vmatprep.mubr.bf16.mxu0 %v1946
    %7209 = vmatmul.mubr.bf16.gmra.mrb[0].mxu0 %v1945
    %v7210 = vpop.f32.mrb[0].mxu0
    %v7211 = vadd.f32 %v7171, %v7210
    %v7212 = vpop.f32.mrb[0].mxu0
    %v7213 = vpop.f32.mrb[0].mxu0
    %v7214 = vpop.f32.mrb[0].mxu0
    %7215 = vdwg.mxu0
    %7216 = vmatprep.subr.bf16.mxu0 0
    %7217 = vmatpush1.bf16.msra.mxu0 %v5496
    %7218 = vmatprep.subr.bf16.mxu0 0
    %7219 = vmatpush1.bf16.msra.mxu0 %v5497
    %7220 = vmatprep.subr.bf16.mxu0 0
    %7221 = vmatpush1.bf16.msra.mxu0 %v5498
    %7222 = vmatprep.subr.bf16.mxu0 0
    %7223 = vmatpush1.bf16.msra.mxu0 %v5499
    %7224 = vmatprep.subr.bf16.mxu0 0
    %7225 = vmatpush1.bf16.msra.mxu0 %v5500
    %7226 = vmatprep.subr.bf16.mxu0 0
    %7227 = vmatpush1.bf16.msra.mxu0 %v5501
    %7228 = vmatprep.subr.bf16.mxu0 0
    %7229 = vmatpush1.bf16.msra.mxu0 %v5502
    %7230 = vmatprep.subr.bf16.mxu0 0
    %7231 = vmatpush1.bf16.msra.mxu0 %v5503
    %7232 = vmatprep.subr.bf16.mxu0 0
    %7233 = vmatpush1.bf16.msra.mxu0 %v5504
    %7234 = vmatprep.subr.bf16.mxu0 0
    %7235 = vmatpush1.bf16.msra.mxu0 %v5505
    %7236 = vmatprep.subr.bf16.mxu0 0
    %7237 = vmatpush1.bf16.msra.mxu0 %v5506
    %7238 = vmatprep.subr.bf16.mxu0 0
    %7239 = vmatpush1.bf16.msra.mxu0 %v5507
    %7240 = vmatprep.subr.bf16.mxu0 0
    %7241 = vmatpush1.bf16.msra.mxu0 %v5508
    %7242 = vmatprep.subr.bf16.mxu0 0
    %7243 = vmatpush1.bf16.msra.mxu0 %v5509
    %7244 = vmatprep.subr.bf16.mxu0 0
    %7245 = vmatpush1.bf16.msra.mxu0 %v5510
    %7246 = vmatprep.subr.bf16.mxu0 0
    %7247 = vmatpush1.bf16.msra.mxu0 %v5511
    %7248 = vmatprep.mubr.bf16.mxu0 %v1948
    %7249 = vmatmul.mubr.bf16.gmra.mrb[0].mxu0 %v1947
    %v7250 = vpop.f32.mrb[0].mxu0
    %v7251 = vadd.f32 %v7211, %v7250
    %v7252 = vpop.f32.mrb[0].mxu0
    %v7253 = vpop.f32.mrb[0].mxu0
    %v7254 = vpop.f32.mrb[0].mxu0
    %7255 = vdwg.mxu0
    %7256 = vmatprep.subr.bf16.mxu0 0
    %7257 = vmatpush1.bf16.msra.mxu0 %v5512
    %7258 = vmatprep.subr.bf16.mxu0 0
    %7259 = vmatpush1.bf16.msra.mxu0 %v5513
    %7260 = vmatprep.subr.bf16.mxu0 0
    %7261 = vmatpush1.bf16.msra.mxu0 %v5514
    %7262 = vmatprep.subr.bf16.mxu0 0
    %7263 = vmatpush1.bf16.msra.mxu0 %v5515
    %7264 = vmatprep.subr.bf16.mxu0 0
    %7265 = vmatpush1.bf16.msra.mxu0 %v5516
    %7266 = vmatprep.subr.bf16.mxu0 0
    %7267 = vmatpush1.bf16.msra.mxu0 %v5517
    %7268 = vmatprep.subr.bf16.mxu0 0
    %7269 = vmatpush1.bf16.msra.mxu0 %v5518
    %7270 = vmatprep.subr.bf16.mxu0 0
    %7271 = vmatpush1.bf16.msra.mxu0 %v5519
    %7272 = vmatprep.subr.bf16.mxu0 0
    %7273 = vmatpush1.bf16.msra.mxu0 %v5520
    %7274 = vmatprep.subr.bf16.mxu0 0
    %7275 = vmatpush1.bf16.msra.mxu0 %v5521
    %7276 = vmatprep.subr.bf16.mxu0 0
    %7277 = vmatpush1.bf16.msra.mxu0 %v5522
    %7278 = vmatprep.subr.bf16.mxu0 0
    %7279 = vmatpush1.bf16.msra.mxu0 %v5523
    %7280 = vmatprep.subr.bf16.mxu0 0
    %7281 = vmatpush1.bf16.msra.mxu0 %v5524
    %7282 = vmatprep.subr.bf16.mxu0 0
    %7283 = vmatpush1.bf16.msra.mxu0 %v5525
    %7284 = vmatprep.subr.bf16.mxu0 0
    %7285 = vmatpush1.bf16.msra.mxu0 %v5526
    %7286 = vmatprep.subr.bf16.mxu0 0
    %7287 = vmatpush1.bf16.msra.mxu0 %v5527
    %7288 = vmatprep.mubr.bf16.mxu0 %v1950
    %7289 = vmatmul.mubr.bf16.gmra.mrb[0].mxu0 %v1949
    %v7290 = vpop.f32.mrb[0].mxu0
    %v7291 = vadd.f32 %v7251, %v7290
    %v7292 = vpop.f32.mrb[0].mxu0
    %v7293 = vpop.f32.mrb[0].mxu0
    %v7294 = vpop.f32.mrb[0].mxu0
    %7295 = vdwg.mxu0
    %7296 = vmatprep.subr.bf16.mxu0 0
    %7297 = vmatpush1.bf16.msra.mxu0 %v5528
    %7298 = vmatprep.subr.bf16.mxu0 0
    %7299 = vmatpush1.bf16.msra.mxu0 %v5529
    %7300 = vmatprep.subr.bf16.mxu0 0
    %7301 = vmatpush1.bf16.msra.mxu0 %v5530
    %7302 = vmatprep.subr.bf16.mxu0 0
    %7303 = vmatpush1.bf16.msra.mxu0 %v5531
    %7304 = vmatprep.subr.bf16.mxu0 0
    %7305 = vmatpush1.bf16.msra.mxu0 %v5532
    %7306 = vmatprep.subr.bf16.mxu0 0
    %7307 = vmatpush1.bf16.msra.mxu0 %v5533
    %7308 = vmatprep.subr.bf16.mxu0 0
    %7309 = vmatpush1.bf16.msra.mxu0 %v5534
    %7310 = vmatprep.subr.bf16.mxu0 0
    %7311 = vmatpush1.bf16.msra.mxu0 %v5535
    %7312 = vmatprep.subr.bf16.mxu0 0
    %7313 = vmatpush1.bf16.msra.mxu0 %v5536
    %7314 = vmatprep.subr.bf16.mxu0 0
    %7315 = vmatpush1.bf16.msra.mxu0 %v5537
    %7316 = vmatprep.subr.bf16.mxu0 0
    %7317 = vmatpush1.bf16.msra.mxu0 %v5538
    %7318 = vmatprep.subr.bf16.mxu0 0
    %7319 = vmatpush1.bf16.msra.mxu0 %v5539
    %7320 = vmatprep.subr.bf16.mxu0 0
    %7321 = vmatpush1.bf16.msra.mxu0 %v5540
    %7322 = vmatprep.subr.bf16.mxu0 0
    %7323 = vmatpush1.bf16.msra.mxu0 %v5541
    %7324 = vmatprep.subr.bf16.mxu0 0
    %7325 = vmatpush1.bf16.msra.mxu0 %v5542
    %7326 = vmatprep.subr.bf16.mxu0 0
    %7327 = vmatpush1.bf16.msra.mxu0 %v5543
    %7328 = vmatprep.mubr.bf16.mxu0 %v1952
    %7329 = vmatmul.mubr.bf16.gmra.mrb[0].mxu0 %v1951
    %v7330 = vpop.f32.mrb[0].mxu0
    %v7331 = vadd.f32 %v7291, %v7330
    %v7332 = vpop.f32.mrb[0].mxu0
    %v7333 = vpop.f32.mrb[0].mxu0
    %v7334 = vpop.f32.mrb[0].mxu0
    %7335 = vdwg.mxu0
    %v7336 = vld [vmem:[%s6] sm:$0x3]
    %v7337 = vmul.f32 %v7331, 0.5
    %v7338 = vmul.f32 %v7337, 1.442695
    %v7339 = vpow.pop %v7338
    %7341 = vrot.lane.b32.xlu0 %v7339, 96
    %v7342 = vpop.permute.xlu0 %7341
    %v7344 = vmul.f32 %v7336, %v7342
    %v7345 = vadd.f32 %v7344, %v7331
    %v7346 = vpack.c.bf16 %v7345, %v7345
    %v7347 = vld [vmem:[%s7] sm:$0xff]
    %v7348 = vld [vmem:[%s7 + $0x8] sm:$0xff]
    %v7349 = vld [vmem:[%s7 + $0x10] sm:$0xff]
    %v7350 = vld [vmem:[%s7 + $0x18] sm:$0xff]
    %v7351 = vld [vmem:[%s7 + $0x20] sm:$0xff]
    %v7352 = vld [vmem:[%s7 + $0x28] sm:$0xff]
    %v7353 = vld [vmem:[%s7 + $0x30] sm:$0xff]
    %v7354 = vld [vmem:[%s7 + $0x38] sm:$0xff]
    %v7355 = vld [vmem:[%s7 + $0x40] sm:$0xff]
    %v7356 = vld [vmem:[%s7 + $0x48] sm:$0xff]
    %v7357 = vld [vmem:[%s7 + $0x50] sm:$0xff]
    %v7358 = vld [vmem:[%s7 + $0x58] sm:$0xff]
    %v7359 = vld [vmem:[%s7 + $0x60] sm:$0xff]
    %v7360 = vld [vmem:[%s7 + $0x68] sm:$0xff]
    %v7361 = vld [vmem:[%s7 + $0x70] sm:$0xff]
    %v7362 = vld [vmem:[%s7 + $0x78] sm:$0xff]
    %v7363 = vld [vmem:[%s7 + $0x80] sm:$0xff]
    %v7364 = vld [vmem:[%s7 + $0x88] sm:$0xff]
    %v7365 = vld [vmem:[%s7 + $0x90] sm:$0xff]
    %v7366 = vld [vmem:[%s7 + $0x98] sm:$0xff]
    %v7367 = vld [vmem:[%s7 + $0xa0] sm:$0xff]
    %v7368 = vld [vmem:[%s7 + $0xa8] sm:$0xff]
    %v7369 = vld [vmem:[%s7 + $0xb0] sm:$0xff]
    %v7370 = vld [vmem:[%s7 + $0xb8] sm:$0xff]
    %v7371 = vld [vmem:[%s7 + $0xc0] sm:$0xff]
    %v7372 = vld [vmem:[%s7 + $0xc8] sm:$0xff]
    %v7373 = vld [vmem:[%s7 + $0xd0] sm:$0xff]
    %v7374 = vld [vmem:[%s7 + $0xd8] sm:$0xff]
    %v7375 = vld [vmem:[%s7 + $0xe0] sm:$0xff]
    %v7376 = vld [vmem:[%s7 + $0xe8] sm:$0xff]
    %v7377 = vld [vmem:[%s7 + $0xf0] sm:$0xff]
    %v7378 = vld [vmem:[%s7 + $0xf8] sm:$0xff]
    %v7379 = vld [vmem:[%s7 + $0x100] sm:$0xff]
    %v7380 = vld [vmem:[%s7 + $0x108] sm:$0xff]
    %v7381 = vld [vmem:[%s7 + $0x110] sm:$0xff]
    %v7382 = vld [vmem:[%s7 + $0x118] sm:$0xff]
    %v7383 = vld [vmem:[%s7 + $0x120] sm:$0xff]
    %v7384 = vld [vmem:[%s7 + $0x128] sm:$0xff]
    %v7385 = vld [vmem:[%s7 + $0x130] sm:$0xff]
    %v7386 = vld [vmem:[%s7 + $0x138] sm:$0xff]
    %v7387 = vld [vmem:[%s7 + $0x140] sm:$0xff]
    %v7388 = vld [vmem:[%s7 + $0x148] sm:$0xff]
    %v7389 = vld [vmem:[%s7 + $0x150] sm:$0xff]
    %v7390 = vld [vmem:[%s7 + $0x158] sm:$0xff]
    %v7391 = vld [vmem:[%s7 + $0x160] sm:$0xff]
    %v7392 = vld [vmem:[%s7 + $0x168] sm:$0xff]
    %v7393 = vld [vmem:[%s7 + $0x170] sm:$0xff]
    %v7394 = vld [vmem:[%s7 + $0x178] sm:$0xff]
    %v7395 = vld [vmem:[%s7 + $0x180] sm:$0xff]
    %v7396 = vld [vmem:[%s7 + $0x188] sm:$0xff]
    %v7397 = vld [vmem:[%s7 + $0x190] sm:$0xff]
    %v7398 = vld [vmem:[%s7 + $0x198] sm:$0xff]
    %v7399 = vld [vmem:[%s7 + $0x1a0] sm:$0xff]
    %v7400 = vld [vmem:[%s7 + $0x1a8] sm:$0xff]
    %v7401 = vld [vmem:[%s7 + $0x1b0] sm:$0xff]
    %v7402 = vld [vmem:[%s7 + $0x1b8] sm:$0xff]
    %v7403 = vld [vmem:[%s7 + $0x1c0] sm:$0xff]
    %v7404 = vld [vmem:[%s7 + $0x1c8] sm:$0xff]
    %v7405 = vld [vmem:[%s7 + $0x1d0] sm:$0xff]
    %v7406 = vld [vmem:[%s7 + $0x1d8] sm:$0xff]
    %v7407 = vld [vmem:[%s7 + $0x1e0] sm:$0xff]
    %v7408 = vld [vmem:[%s7 + $0x1e8] sm:$0xff]
    %v7409 = vld [vmem:[%s7 + $0x1f0] sm:$0xff]
    %v7410 = vld [vmem:[%s7 + $0x1f8] sm:$0xff]
    %v7411 = vld [vmem:[%s7 + $0x200] sm:$0xff]
    %v7412 = vld [vmem:[%s7 + $0x208] sm:$0xff]
    %v7413 = vld [vmem:[%s7 + $0x210] sm:$0xff]
    %v7414 = vld [vmem:[%s7 + $0x218] sm:$0xff]
    %v7415 = vld [vmem:[%s7 + $0x220] sm:$0xff]
    %v7416 = vld [vmem:[%s7 + $0x228] sm:$0xff]
    %v7417 = vld [vmem:[%s7 + $0x230] sm:$0xff]
    %v7418 = vld [vmem:[%s7 + $0x238] sm:$0xff]
    %v7419 = vld [vmem:[%s7 + $0x240] sm:$0xff]
    %v7420 = vld [vmem:[%s7 + $0x248] sm:$0xff]
    %v7421 = vld [vmem:[%s7 + $0x250] sm:$0xff]
    %v7422 = vld [vmem:[%s7 + $0x258] sm:$0xff]
    %v7423 = vld [vmem:[%s7 + $0x260] sm:$0xff]
    %v7424 = vld [vmem:[%s7 + $0x268] sm:$0xff]
    %v7425 = vld [vmem:[%s7 + $0x270] sm:$0xff]
    %v7426 = vld [vmem:[%s7 + $0x278] sm:$0xff]
    %v7427 = vld [vmem:[%s7 + $0x280] sm:$0xff]
    %v7428 = vld [vmem:[%s7 + $0x288] sm:$0xff]
    %v7429 = vld [vmem:[%s7 + $0x290] sm:$0xff]
    %v7430 = vld [vmem:[%s7 + $0x298] sm:$0xff]
    %v7431 = vld [vmem:[%s7 + $0x2a0] sm:$0xff]
    %v7432 = vld [vmem:[%s7 + $0x2a8] sm:$0xff]
    %v7433 = vld [vmem:[%s7 + $0x2b0] sm:$0xff]
    %v7434 = vld [vmem:[%s7 + $0x2b8] sm:$0xff]
    %v7435 = vld [vmem:[%s7 + $0x2c0] sm:$0xff]
    %v7436 = vld [vmem:[%s7 + $0x2c8] sm:$0xff]
    %v7437 = vld [vmem:[%s7 + $0x2d0] sm:$0xff]
    %v7438 = vld [vmem:[%s7 + $0x2d8] sm:$0xff]
    %v7439 = vld [vmem:[%s7 + $0x2e0] sm:$0xff]
    %v7440 = vld [vmem:[%s7 + $0x2e8] sm:$0xff]
    %v7441 = vld [vmem:[%s7 + $0x2f0] sm:$0xff]
    %v7442 = vld [vmem:[%s7 + $0x2f8] sm:$0xff]
    %v7443 = vld [vmem:[%s7 + $0x300] sm:$0xff]
    %v7444 = vld [vmem:[%s7 + $0x308] sm:$0xff]
    %v7445 = vld [vmem:[%s7 + $0x310] sm:$0xff]
    %v7446 = vld [vmem:[%s7 + $0x318] sm:$0xff]
    %v7447 = vld [vmem:[%s7 + $0x320] sm:$0xff]
    %v7448 = vld [vmem:[%s7 + $0x328] sm:$0xff]
    %v7449 = vld [vmem:[%s7 + $0x330] sm:$0xff]
    %v7450 = vld [vmem:[%s7 + $0x338] sm:$0xff]
    %v7451 = vld [vmem:[%s7 + $0x340] sm:$0xff]
    %v7452 = vld [vmem:[%s7 + $0x348] sm:$0xff]
    %v7453 = vld [vmem:[%s7 + $0x350] sm:$0xff]
    %v7454 = vld [vmem:[%s7 + $0x358] sm:$0xff]
    %v7455 = vld [vmem:[%s7 + $0x360] sm:$0xff]
    %v7456 = vld [vmem:[%s7 + $0x368] sm:$0xff]
    %v7457 = vld [vmem:[%s7 + $0x370] sm:$0xff]
    %v7458 = vld [vmem:[%s7 + $0x378] sm:$0xff]
    %v7459 = vld [vmem:[%s7 + $0x380] sm:$0xff]
    %v7460 = vld [vmem:[%s7 + $0x388] sm:$0xff]
    %v7461 = vld [vmem:[%s7 + $0x390] sm:$0xff]
    %v7462 = vld [vmem:[%s7 + $0x398] sm:$0xff]
    %v7463 = vld [vmem:[%s7 + $0x3a0] sm:$0xff]
    %v7464 = vld [vmem:[%s7 + $0x3a8] sm:$0xff]
    %v7465 = vld [vmem:[%s7 + $0x3b0] sm:$0xff]
    %v7466 = vld [vmem:[%s7 + $0x3b8] sm:$0xff]
    %v7467 = vld [vmem:[%s7 + $0x3c0] sm:$0xff]
    %v7468 = vld [vmem:[%s7 + $0x3c8] sm:$0xff]
    %v7469 = vld [vmem:[%s7 + $0x3d0] sm:$0xff]
    %v7470 = vld [vmem:[%s7 + $0x3d8] sm:$0xff]
    %v7471 = vld [vmem:[%s7 + $0x3e0] sm:$0xff]
    %v7472 = vld [vmem:[%s7 + $0x3e8] sm:$0xff]
    %v7473 = vld [vmem:[%s7 + $0x3f0] sm:$0xff]
    %v7474 = vld [vmem:[%s7 + $0x3f8] sm:$0xff]
    %v7475 = vld [vmem:[%s8] sm:$0xff]
    %v7476 = vld [vmem:[%s8 + $0x8] sm:$0xff]
    %v7477 = vld [vmem:[%s8 + $0x10] sm:$0xff]
    %v7478 = vld [vmem:[%s8 + $0x18] sm:$0xff]
    %v7479 = vld [vmem:[%s8 + $0x20] sm:$0xff]
    %v7480 = vld [vmem:[%s8 + $0x28] sm:$0xff]
    %v7481 = vld [vmem:[%s8 + $0x30] sm:$0xff]
    %v7482 = vld [vmem:[%s8 + $0x38] sm:$0xff]
    %v7491 = vlaneseq
    %v7492 = vshrl.u32 %v7491, 7
    %v7493 = vsub.s32 0, %v7492
    %v7494 = vrot.slane %v7475, %v7493
    %v7495 = vlaneseq
    %v7496 = vshrl.u32 %v7495, 7
    %v7497 = vsub.s32 1, %v7496
    %v7498 = vrot.slane %v7475, %v7497
    %v7499 = vlaneseq
    %v7500 = vshrl.u32 %v7499, 7
    %v7501 = vsub.s32 2, %v7500
    %v7502 = vrot.slane %v7475, %v7501
    %v7503 = vlaneseq
    %v7504 = vshrl.u32 %v7503, 7
    %v7505 = vsub.s32 3, %v7504
    %v7506 = vrot.slane %v7475, %v7505
    %v7507 = vlaneseq
    %v7508 = vshrl.u32 %v7507, 7
    %v7509 = vsub.s32 4, %v7508
    %v7510 = vrot.slane %v7475, %v7509
    %v7511 = vlaneseq
    %v7512 = vshrl.u32 %v7511, 7
    %v7513 = vsub.s32 5, %v7512
    %v7514 = vrot.slane %v7475, %v7513
    %v7515 = vlaneseq
    %v7516 = vshrl.u32 %v7515, 7
    %v7517 = vsub.s32 6, %v7516
    %v7518 = vrot.slane %v7475, %v7517
    %v7519 = vlaneseq
    %v7520 = vshrl.u32 %v7519, 7
    %v7521 = vsub.s32 7, %v7520
    %v7522 = vrot.slane %v7475, %v7521
    %v7523 = vlaneseq
    %v7524 = vshrl.u32 %v7523, 7
    %v7525 = vsub.s32 0, %v7524
    %v7526 = vrot.slane %v7476, %v7525
    %v7527 = vlaneseq
    %v7528 = vshrl.u32 %v7527, 7
    %v7529 = vsub.s32 1, %v7528
    %v7530 = vrot.slane %v7476, %v7529
    %v7531 = vlaneseq
    %v7532 = vshrl.u32 %v7531, 7
    %v7533 = vsub.s32 2, %v7532
    %v7534 = vrot.slane %v7476, %v7533
    %v7535 = vlaneseq
    %v7536 = vshrl.u32 %v7535, 7
    %v7537 = vsub.s32 3, %v7536
    %v7538 = vrot.slane %v7476, %v7537
    %v7539 = vlaneseq
    %v7540 = vshrl.u32 %v7539, 7
    %v7541 = vsub.s32 4, %v7540
    %v7542 = vrot.slane %v7476, %v7541
    %v7543 = vlaneseq
    %v7544 = vshrl.u32 %v7543, 7
    %v7545 = vsub.s32 5, %v7544
    %v7546 = vrot.slane %v7476, %v7545
    %v7547 = vlaneseq
    %v7548 = vshrl.u32 %v7547, 7
    %v7549 = vsub.s32 6, %v7548
    %v7550 = vrot.slane %v7476, %v7549
    %v7551 = vlaneseq
    %v7552 = vshrl.u32 %v7551, 7
    %v7553 = vsub.s32 7, %v7552
    %v7554 = vrot.slane %v7476, %v7553
    %v7555 = vlaneseq
    %v7556 = vshrl.u32 %v7555, 7
    %v7557 = vsub.s32 0, %v7556
    %v7558 = vrot.slane %v7477, %v7557
    %v7559 = vlaneseq
    %v7560 = vshrl.u32 %v7559, 7
    %v7561 = vsub.s32 1, %v7560
    %v7562 = vrot.slane %v7477, %v7561
    %v7563 = vlaneseq
    %v7564 = vshrl.u32 %v7563, 7
    %v7565 = vsub.s32 2, %v7564
    %v7566 = vrot.slane %v7477, %v7565
    %v7567 = vlaneseq
    %v7568 = vshrl.u32 %v7567, 7
    %v7569 = vsub.s32 3, %v7568
    %v7570 = vrot.slane %v7477, %v7569
    %v7571 = vlaneseq
    %v7572 = vshrl.u32 %v7571, 7
    %v7573 = vsub.s32 4, %v7572
    %v7574 = vrot.slane %v7477, %v7573
    %v7575 = vlaneseq
    %v7576 = vshrl.u32 %v7575, 7
    %v7577 = vsub.s32 5, %v7576
    %v7578 = vrot.slane %v7477, %v7577
    %v7579 = vlaneseq
    %v7580 = vshrl.u32 %v7579, 7
    %v7581 = vsub.s32 6, %v7580
    %v7582 = vrot.slane %v7477, %v7581
    %v7583 = vlaneseq
    %v7584 = vshrl.u32 %v7583, 7
    %v7585 = vsub.s32 7, %v7584
    %v7586 = vrot.slane %v7477, %v7585
    %v7587 = vlaneseq
    %v7588 = vshrl.u32 %v7587, 7
    %v7589 = vsub.s32 0, %v7588
    %v7590 = vrot.slane %v7478, %v7589
    %v7591 = vlaneseq
    %v7592 = vshrl.u32 %v7591, 7
    %v7593 = vsub.s32 1, %v7592
    %v7594 = vrot.slane %v7478, %v7593
    %v7595 = vlaneseq
    %v7596 = vshrl.u32 %v7595, 7
    %v7597 = vsub.s32 2, %v7596
    %v7598 = vrot.slane %v7478, %v7597
    %v7599 = vlaneseq
    %v7600 = vshrl.u32 %v7599, 7
    %v7601 = vsub.s32 3, %v7600
    %v7602 = vrot.slane %v7478, %v7601
    %v7603 = vlaneseq
    %v7604 = vshrl.u32 %v7603, 7
    %v7605 = vsub.s32 4, %v7604
    %v7606 = vrot.slane %v7478, %v7605
    %v7607 = vlaneseq
    %v7608 = vshrl.u32 %v7607, 7
    %v7609 = vsub.s32 5, %v7608
    %v7610 = vrot.slane %v7478, %v7609
    %v7611 = vlaneseq
    %v7612 = vshrl.u32 %v7611, 7
    %v7613 = vsub.s32 6, %v7612
    %v7614 = vrot.slane %v7478, %v7613
    %v7615 = vlaneseq
    %v7616 = vshrl.u32 %v7615, 7
    %v7617 = vsub.s32 7, %v7616
    %v7618 = vrot.slane %v7478, %v7617
    %v7619 = vlaneseq
    %v7620 = vshrl.u32 %v7619, 7
    %v7621 = vsub.s32 0, %v7620
    %v7622 = vrot.slane %v7479, %v7621
    %v7623 = vlaneseq
    %v7624 = vshrl.u32 %v7623, 7
    %v7625 = vsub.s32 1, %v7624
    %v7626 = vrot.slane %v7479, %v7625
    %v7627 = vlaneseq
    %v7628 = vshrl.u32 %v7627, 7
    %v7629 = vsub.s32 2, %v7628
    %v7630 = vrot.slane %v7479, %v7629
    %v7631 = vlaneseq
    %v7632 = vshrl.u32 %v7631, 7
    %v7633 = vsub.s32 3, %v7632
    %v7634 = vrot.slane %v7479, %v7633
    %v7635 = vlaneseq
    %v7636 = vshrl.u32 %v7635, 7
    %v7637 = vsub.s32 4, %v7636
    %v7638 = vrot.slane %v7479, %v7637
    %v7639 = vlaneseq
    %v7640 = vshrl.u32 %v7639, 7
    %v7641 = vsub.s32 5, %v7640
    %v7642 = vrot.slane %v7479, %v7641
    %v7643 = vlaneseq
    %v7644 = vshrl.u32 %v7643, 7
    %v7645 = vsub.s32 6, %v7644
    %v7646 = vrot.slane %v7479, %v7645
    %v7647 = vlaneseq
    %v7648 = vshrl.u32 %v7647, 7
    %v7649 = vsub.s32 7, %v7648
    %v7650 = vrot.slane %v7479, %v7649
    %v7651 = vlaneseq
    %v7652 = vshrl.u32 %v7651, 7
    %v7653 = vsub.s32 0, %v7652
    %v7654 = vrot.slane %v7480, %v7653
    %v7655 = vlaneseq
    %v7656 = vshrl.u32 %v7655, 7
    %v7657 = vsub.s32 1, %v7656
    %v7658 = vrot.slane %v7480, %v7657
    %v7659 = vlaneseq
    %v7660 = vshrl.u32 %v7659, 7
    %v7661 = vsub.s32 2, %v7660
    %v7662 = vrot.slane %v7480, %v7661
    %v7663 = vlaneseq
    %v7664 = vshrl.u32 %v7663, 7
    %v7665 = vsub.s32 3, %v7664
    %v7666 = vrot.slane %v7480, %v7665
    %v7667 = vlaneseq
    %v7668 = vshrl.u32 %v7667, 7
    %v7669 = vsub.s32 4, %v7668
    %v7670 = vrot.slane %v7480, %v7669
    %v7671 = vlaneseq
    %v7672 = vshrl.u32 %v7671, 7
    %v7673 = vsub.s32 5, %v7672
    %v7674 = vrot.slane %v7480, %v7673
    %v7675 = vlaneseq
    %v7676 = vshrl.u32 %v7675, 7
    %v7677 = vsub.s32 6, %v7676
    %v7678 = vrot.slane %v7480, %v7677
    %v7679 = vlaneseq
    %v7680 = vshrl.u32 %v7679, 7
    %v7681 = vsub.s32 7, %v7680
    %v7682 = vrot.slane %v7480, %v7681
    %v7683 = vlaneseq
    %v7684 = vshrl.u32 %v7683, 7
    %v7685 = vsub.s32 0, %v7684
    %v7686 = vrot.slane %v7481, %v7685
    %v7687 = vlaneseq
    %v7688 = vshrl.u32 %v7687, 7
    %v7689 = vsub.s32 1, %v7688
    %v7690 = vrot.slane %v7481, %v7689
    %v7691 = vlaneseq
    %v7692 = vshrl.u32 %v7691, 7
    %v7693 = vsub.s32 2, %v7692
    %v7694 = vrot.slane %v7481, %v7693
    %v7695 = vlaneseq
    %v7696 = vshrl.u32 %v7695, 7
    %v7697 = vsub.s32 3, %v7696
    %v7698 = vrot.slane %v7481, %v7697
    %v7699 = vlaneseq
    %v7700 = vshrl.u32 %v7699, 7
    %v7701 = vsub.s32 4, %v7700
    %v7702 = vrot.slane %v7481, %v7701
    %v7703 = vlaneseq
    %v7704 = vshrl.u32 %v7703, 7
    %v7705 = vsub.s32 5, %v7704
    %v7706 = vrot.slane %v7481, %v7705
    %v7707 = vlaneseq
    %v7708 = vshrl.u32 %v7707, 7
    %v7709 = vsub.s32 6, %v7708
    %v7710 = vrot.slane %v7481, %v7709
    %v7711 = vlaneseq
    %v7712 = vshrl.u32 %v7711, 7
    %v7713 = vsub.s32 7, %v7712
    %v7714 = vrot.slane %v7481, %v7713
    %v7715 = vlaneseq
    %v7716 = vshrl.u32 %v7715, 7
    %v7717 = vsub.s32 0, %v7716
    %v7718 = vrot.slane %v7482, %v7717
    %v7719 = vlaneseq
    %v7720 = vshrl.u32 %v7719, 7
    %v7721 = vsub.s32 1, %v7720
    %v7722 = vrot.slane %v7482, %v7721
    %v7723 = vlaneseq
    %v7724 = vshrl.u32 %v7723, 7
    %v7725 = vsub.s32 2, %v7724
    %v7726 = vrot.slane %v7482, %v7725
    %v7727 = vlaneseq
    %v7728 = vshrl.u32 %v7727, 7
    %v7729 = vsub.s32 3, %v7728
    %v7730 = vrot.slane %v7482, %v7729
    %v7731 = vlaneseq
    %v7732 = vshrl.u32 %v7731, 7
    %v7733 = vsub.s32 4, %v7732
    %v7734 = vrot.slane %v7482, %v7733
    %v7735 = vlaneseq
    %v7736 = vshrl.u32 %v7735, 7
    %v7737 = vsub.s32 5, %v7736
    %v7738 = vrot.slane %v7482, %v7737
    %v7739 = vlaneseq
    %v7740 = vshrl.u32 %v7739, 7
    %v7741 = vsub.s32 6, %v7740
    %v7742 = vrot.slane %v7482, %v7741
    %v7743 = vlaneseq
    %v7744 = vshrl.u32 %v7743, 7
    %v7745 = vsub.s32 7, %v7744
    %v7746 = vrot.slane %v7482, %v7745
    %v7939 = vunpack.c.l.b16 %v7347
    %v7940 = vunpack.c.h.b16 %v7347
    %v7941 = vunpack.c.l.b16 %v7348
    %v7942 = vunpack.c.h.b16 %v7348
    %v7943 = vunpack.c.l.b16 %v7349
    %v7944 = vunpack.c.h.b16 %v7349
    %v7945 = vunpack.c.l.b16 %v7350
    %v7946 = vunpack.c.h.b16 %v7350
    %v7947 = vunpack.c.l.b16 %v7351
    %v7948 = vunpack.c.h.b16 %v7351
    %v7949 = vunpack.c.l.b16 %v7352
    %v7950 = vunpack.c.h.b16 %v7352
    %v7951 = vunpack.c.l.b16 %v7353
    %v7952 = vunpack.c.h.b16 %v7353
    %v7953 = vunpack.c.l.b16 %v7354
    %v7954 = vunpack.c.h.b16 %v7354
    %v7955 = vunpack.c.l.b16 %v7355
    %v7956 = vunpack.c.h.b16 %v7355
    %v7957 = vunpack.c.l.b16 %v7356
    %v7958 = vunpack.c.h.b16 %v7356
    %v7959 = vunpack.c.l.b16 %v7357
    %v7960 = vunpack.c.h.b16 %v7357
    %v7961 = vunpack.c.l.b16 %v7358
    %v7962 = vunpack.c.h.b16 %v7358
    %v7963 = vunpack.c.l.b16 %v7359
    %v7964 = vunpack.c.h.b16 %v7359
    %v7965 = vunpack.c.l.b16 %v7360
    %v7966 = vunpack.c.h.b16 %v7360
    %v7967 = vunpack.c.l.b16 %v7361
    %v7968 = vunpack.c.h.b16 %v7361
    %v7969 = vunpack.c.l.b16 %v7362
    %v7970 = vunpack.c.h.b16 %v7362
    %v7971 = vunpack.c.l.b16 %v7363
    %v7972 = vunpack.c.h.b16 %v7363
    %v7973 = vunpack.c.l.b16 %v7364
    %v7974 = vunpack.c.h.b16 %v7364
    %v7975 = vunpack.c.l.b16 %v7365
    %v7976 = vunpack.c.h.b16 %v7365
    %v7977 = vunpack.c.l.b16 %v7366
    %v7978 = vunpack.c.h.b16 %v7366
    %v7979 = vunpack.c.l.b16 %v7367
    %v7980 = vunpack.c.h.b16 %v7367
    %v7981 = vunpack.c.l.b16 %v7368
    %v7982 = vunpack.c.h.b16 %v7368
    %v7983 = vunpack.c.l.b16 %v7369
    %v7984 = vunpack.c.h.b16 %v7369
    %v7985 = vunpack.c.l.b16 %v7370
    %v7986 = vunpack.c.h.b16 %v7370
    %v7987 = vunpack.c.l.b16 %v7371
    %v7988 = vunpack.c.h.b16 %v7371
    %v7989 = vunpack.c.l.b16 %v7372
    %v7990 = vunpack.c.h.b16 %v7372
    %v7991 = vunpack.c.l.b16 %v7373
    %v7992 = vunpack.c.h.b16 %v7373
    %v7993 = vunpack.c.l.b16 %v7374
    %v7994 = vunpack.c.h.b16 %v7374
    %v7995 = vunpack.c.l.b16 %v7375
    %v7996 = vunpack.c.h.b16 %v7375
    %v7997 = vunpack.c.l.b16 %v7376
    %v7998 = vunpack.c.h.b16 %v7376
    %v7999 = vunpack.c.l.b16 %v7377
    %v8000 = vunpack.c.h.b16 %v7377
    %v8001 = vunpack.c.l.b16 %v7378
    %v8002 = vunpack.c.h.b16 %v7378
    %v8003 = vunpack.c.l.b16 %v7379
    %v8004 = vunpack.c.h.b16 %v7379
    %v8005 = vunpack.c.l.b16 %v7380
    %v8006 = vunpack.c.h.b16 %v7380
    %v8007 = vunpack.c.l.b16 %v7381
    %v8008 = vunpack.c.h.b16 %v7381
    %v8009 = vunpack.c.l.b16 %v7382
    %v8010 = vunpack.c.h.b16 %v7382
    %v8011 = vunpack.c.l.b16 %v7383
    %v8012 = vunpack.c.h.b16 %v7383
    %v8013 = vunpack.c.l.b16 %v7384
    %v8014 = vunpack.c.h.b16 %v7384
    %v8015 = vunpack.c.l.b16 %v7385
    %v8016 = vunpack.c.h.b16 %v7385
    %v8017 = vunpack.c.l.b16 %v7386
    %v8018 = vunpack.c.h.b16 %v7386
    %v8019 = vunpack.c.l.b16 %v7387
    %v8020 = vunpack.c.h.b16 %v7387
    %v8021 = vunpack.c.l.b16 %v7388
    %v8022 = vunpack.c.h.b16 %v7388
    %v8023 = vunpack.c.l.b16 %v7389
    %v8024 = vunpack.c.h.b16 %v7389
    %v8025 = vunpack.c.l.b16 %v7390
    %v8026 = vunpack.c.h.b16 %v7390
    %v8027 = vunpack.c.l.b16 %v7391
    %v8028 = vunpack.c.h.b16 %v7391
    %v8029 = vunpack.c.l.b16 %v7392
    %v8030 = vunpack.c.h.b16 %v7392
    %v8031 = vunpack.c.l.b16 %v7393
    %v8032 = vunpack.c.h.b16 %v7393
    %v8033 = vunpack.c.l.b16 %v7394
    %v8034 = vunpack.c.h.b16 %v7394
    %v8035 = vunpack.c.l.b16 %v7395
    %v8036 = vunpack.c.h.b16 %v7395
    %v8037 = vunpack.c.l.b16 %v7396
    %v8038 = vunpack.c.h.b16 %v7396
    %v8039 = vunpack.c.l.b16 %v7397
    %v8040 = vunpack.c.h.b16 %v7397
    %v8041 = vunpack.c.l.b16 %v7398
    %v8042 = vunpack.c.h.b16 %v7398
    %v8043 = vunpack.c.l.b16 %v7399
    %v8044 = vunpack.c.h.b16 %v7399
    %v8045 = vunpack.c.l.b16 %v7400
    %v8046 = vunpack.c.h.b16 %v7400
    %v8047 = vunpack.c.l.b16 %v7401
    %v8048 = vunpack.c.h.b16 %v7401
    %v8049 = vunpack.c.l.b16 %v7402
    %v8050 = vunpack.c.h.b16 %v7402
    %v8051 = vunpack.c.l.b16 %v7403
    %v8052 = vunpack.c.h.b16 %v7403
    %v8053 = vunpack.c.l.b16 %v7404
    %v8054 = vunpack.c.h.b16 %v7404
    %v8055 = vunpack.c.l.b16 %v7405
    %v8056 = vunpack.c.h.b16 %v7405
    %v8057 = vunpack.c.l.b16 %v7406
    %v8058 = vunpack.c.h.b16 %v7406
    %v8059 = vunpack.c.l.b16 %v7407
    %v8060 = vunpack.c.h.b16 %v7407
    %v8061 = vunpack.c.l.b16 %v7408
    %v8062 = vunpack.c.h.b16 %v7408
    %v8063 = vunpack.c.l.b16 %v7409
    %v8064 = vunpack.c.h.b16 %v7409
    %v8065 = vunpack.c.l.b16 %v7410
    %v8066 = vunpack.c.h.b16 %v7410
    %v8067 = vunpack.c.l.b16 %v7411
    %v8068 = vunpack.c.h.b16 %v7411
    %v8069 = vunpack.c.l.b16 %v7412
    %v8070 = vunpack.c.h.b16 %v7412
    %v8071 = vunpack.c.l.b16 %v7413
    %v8072 = vunpack.c.h.b16 %v7413
    %v8073 = vunpack.c.l.b16 %v7414
    %v8074 = vunpack.c.h.b16 %v7414
    %v8075 = vunpack.c.l.b16 %v7415
    %v8076 = vunpack.c.h.b16 %v7415
    %v8077 = vunpack.c.l.b16 %v7416
    %v8078 = vunpack.c.h.b16 %v7416
    %v8079 = vunpack.c.l.b16 %v7417
    %v8080 = vunpack.c.h.b16 %v7417
    %v8081 = vunpack.c.l.b16 %v7418
    %v8082 = vunpack.c.h.b16 %v7418
    %v8083 = vunpack.c.l.b16 %v7419
    %v8084 = vunpack.c.h.b16 %v7419
    %v8085 = vunpack.c.l.b16 %v7420
    %v8086 = vunpack.c.h.b16 %v7420
    %v8087 = vunpack.c.l.b16 %v7421
    %v8088 = vunpack.c.h.b16 %v7421
    %v8089 = vunpack.c.l.b16 %v7422
    %v8090 = vunpack.c.h.b16 %v7422
    %v8091 = vunpack.c.l.b16 %v7423
    %v8092 = vunpack.c.h.b16 %v7423
    %v8093 = vunpack.c.l.b16 %v7424
    %v8094 = vunpack.c.h.b16 %v7424
    %v8095 = vunpack.c.l.b16 %v7425
    %v8096 = vunpack.c.h.b16 %v7425
    %v8097 = vunpack.c.l.b16 %v7426
    %v8098 = vunpack.c.h.b16 %v7426
    %v8099 = vunpack.c.l.b16 %v7427
    %v8100 = vunpack.c.h.b16 %v7427
    %v8101 = vunpack.c.l.b16 %v7428
    %v8102 = vunpack.c.h.b16 %v7428
    %v8103 = vunpack.c.l.b16 %v7429
    %v8104 = vunpack.c.h.b16 %v7429
    %v8105 = vunpack.c.l.b16 %v7430
    %v8106 = vunpack.c.h.b16 %v7430
    %v8107 = vunpack.c.l.b16 %v7431
    %v8108 = vunpack.c.h.b16 %v7431
    %v8109 = vunpack.c.l.b16 %v7432
    %v8110 = vunpack.c.h.b16 %v7432
    %v8111 = vunpack.c.l.b16 %v7433
    %v8112 = vunpack.c.h.b16 %v7433
    %v8113 = vunpack.c.l.b16 %v7434
    %v8114 = vunpack.c.h.b16 %v7434
    %v8115 = vunpack.c.l.b16 %v7435
    %v8116 = vunpack.c.h.b16 %v7435
    %v8117 = vunpack.c.l.b16 %v7436
    %v8118 = vunpack.c.h.b16 %v7436
    %v8119 = vunpack.c.l.b16 %v7437
    %v8120 = vunpack.c.h.b16 %v7437
    %v8121 = vunpack.c.l.b16 %v7438
    %v8122 = vunpack.c.h.b16 %v7438
    %v8123 = vunpack.c.l.b16 %v7439
    %v8124 = vunpack.c.h.b16 %v7439
    %v8125 = vunpack.c.l.b16 %v7440
    %v8126 = vunpack.c.h.b16 %v7440
    %v8127 = vunpack.c.l.b16 %v7441
    %v8128 = vunpack.c.h.b16 %v7441
    %v8129 = vunpack.c.l.b16 %v7442
    %v8130 = vunpack.c.h.b16 %v7442
    %v8131 = vunpack.c.l.b16 %v7443
    %v8132 = vunpack.c.h.b16 %v7443
    %v8133 = vunpack.c.l.b16 %v7444
    %v8134 = vunpack.c.h.b16 %v7444
    %v8135 = vunpack.c.l.b16 %v7445
    %v8136 = vunpack.c.h.b16 %v7445
    %v8137 = vunpack.c.l.b16 %v7446
    %v8138 = vunpack.c.h.b16 %v7446
    %v8139 = vunpack.c.l.b16 %v7447
    %v8140 = vunpack.c.h.b16 %v7447
    %v8141 = vunpack.c.l.b16 %v7448
    %v8142 = vunpack.c.h.b16 %v7448
    %v8143 = vunpack.c.l.b16 %v7449
    %v8144 = vunpack.c.h.b16 %v7449
    %v8145 = vunpack.c.l.b16 %v7450
    %v8146 = vunpack.c.h.b16 %v7450
    %v8147 = vunpack.c.l.b16 %v7451
    %v8148 = vunpack.c.h.b16 %v7451
    %v8149 = vunpack.c.l.b16 %v7452
    %v8150 = vunpack.c.h.b16 %v7452
    %v8151 = vunpack.c.l.b16 %v7453
    %v8152 = vunpack.c.h.b16 %v7453
    %v8153 = vunpack.c.l.b16 %v7454
    %v8154 = vunpack.c.h.b16 %v7454
    %v8155 = vunpack.c.l.b16 %v7455
    %v8156 = vunpack.c.h.b16 %v7455
    %v8157 = vunpack.c.l.b16 %v7456
    %v8158 = vunpack.c.h.b16 %v7456
    %v8159 = vunpack.c.l.b16 %v7457
    %v8160 = vunpack.c.h.b16 %v7457
    %v8161 = vunpack.c.l.b16 %v7458
    %v8162 = vunpack.c.h.b16 %v7458
    %v8163 = vunpack.c.l.b16 %v7459
    %v8164 = vunpack.c.h.b16 %v7459
    %v8165 = vunpack.c.l.b16 %v7460
    %v8166 = vunpack.c.h.b16 %v7460
    %v8167 = vunpack.c.l.b16 %v7461
    %v8168 = vunpack.c.h.b16 %v7461
    %v8169 = vunpack.c.l.b16 %v7462
    %v8170 = vunpack.c.h.b16 %v7462
    %v8171 = vunpack.c.l.b16 %v7463
    %v8172 = vunpack.c.h.b16 %v7463
    %v8173 = vunpack.c.l.b16 %v7464
    %v8174 = vunpack.c.h.b16 %v7464
    %v8175 = vunpack.c.l.b16 %v7465
    %v8176 = vunpack.c.h.b16 %v7465
    %v8177 = vunpack.c.l.b16 %v7466
    %v8178 = vunpack.c.h.b16 %v7466
    %v8179 = vunpack.c.l.b16 %v7467
    %v8180 = vunpack.c.h.b16 %v7467
    %v8181 = vunpack.c.l.b16 %v7468
    %v8182 = vunpack.c.h.b16 %v7468
    %v8183 = vunpack.c.l.b16 %v7469
    %v8184 = vunpack.c.h.b16 %v7469
    %v8185 = vunpack.c.l.b16 %v7470
    %v8186 = vunpack.c.h.b16 %v7470
    %v8187 = vunpack.c.l.b16 %v7471
    %v8188 = vunpack.c.h.b16 %v7471
    %v8189 = vunpack.c.l.b16 %v7472
    %v8190 = vunpack.c.h.b16 %v7472
    %v8191 = vunpack.c.l.b16 %v7473
    %v8192 = vunpack.c.h.b16 %v7473
    %v8193 = vunpack.c.l.b16 %v7474
    %v8194 = vunpack.c.h.b16 %v7474
    %v8195 = vpack.c.b16 %v8003, %v7939
    %v8196 = vpack.c.b16 %v8004, %v7940
    %v8197 = vpack.c.b16 %v8005, %v7941
    %v8198 = vpack.c.b16 %v8006, %v7942
    %v8199 = vpack.c.b16 %v8007, %v7943
    %v8200 = vpack.c.b16 %v8008, %v7944
    %v8201 = vpack.c.b16 %v8009, %v7945
    %v8202 = vpack.c.b16 %v8010, %v7946
    %v8203 = vpack.c.b16 %v8011, %v7947
    %v8204 = vpack.c.b16 %v8012, %v7948
    %v8205 = vpack.c.b16 %v8013, %v7949
    %v8206 = vpack.c.b16 %v8014, %v7950
    %v8207 = vpack.c.b16 %v8015, %v7951
    %v8208 = vpack.c.b16 %v8016, %v7952
    %v8209 = vpack.c.b16 %v8017, %v7953
    %v8210 = vpack.c.b16 %v8018, %v7954
    %v8211 = vpack.c.b16 %v8019, %v7955
    %v8212 = vpack.c.b16 %v8020, %v7956
    %v8213 = vpack.c.b16 %v8021, %v7957
    %v8214 = vpack.c.b16 %v8022, %v7958
    %v8215 = vpack.c.b16 %v8023, %v7959
    %v8216 = vpack.c.b16 %v8024, %v7960
    %v8217 = vpack.c.b16 %v8025, %v7961
    %v8218 = vpack.c.b16 %v8026, %v7962
    %v8219 = vpack.c.b16 %v8027, %v7963
    %v8220 = vpack.c.b16 %v8028, %v7964
    %v8221 = vpack.c.b16 %v8029, %v7965
    %v8222 = vpack.c.b16 %v8030, %v7966
    %v8223 = vpack.c.b16 %v8031, %v7967
    %v8224 = vpack.c.b16 %v8032, %v7968
    %v8225 = vpack.c.b16 %v8033, %v7969
    %v8226 = vpack.c.b16 %v8034, %v7970
    %v8227 = vpack.c.b16 %v8035, %v7971
    %v8228 = vpack.c.b16 %v8036, %v7972
    %v8229 = vpack.c.b16 %v8037, %v7973
    %v8230 = vpack.c.b16 %v8038, %v7974
    %v8231 = vpack.c.b16 %v8039, %v7975
    %v8232 = vpack.c.b16 %v8040, %v7976
    %v8233 = vpack.c.b16 %v8041, %v7977
    %v8234 = vpack.c.b16 %v8042, %v7978
    %v8235 = vpack.c.b16 %v8043, %v7979
    %v8236 = vpack.c.b16 %v8044, %v7980
    %v8237 = vpack.c.b16 %v8045, %v7981
    %v8238 = vpack.c.b16 %v8046, %v7982
    %v8239 = vpack.c.b16 %v8047, %v7983
    %v8240 = vpack.c.b16 %v8048, %v7984
    %v8241 = vpack.c.b16 %v8049, %v7985
    %v8242 = vpack.c.b16 %v8050, %v7986
    %v8243 = vpack.c.b16 %v8051, %v7987
    %v8244 = vpack.c.b16 %v8052, %v7988
    %v8245 = vpack.c.b16 %v8053, %v7989
    %v8246 = vpack.c.b16 %v8054, %v7990
    %v8247 = vpack.c.b16 %v8055, %v7991
    %v8248 = vpack.c.b16 %v8056, %v7992
    %v8249 = vpack.c.b16 %v8057, %v7993
    %v8250 = vpack.c.b16 %v8058, %v7994
    %v8251 = vpack.c.b16 %v8059, %v7995
    %v8252 = vpack.c.b16 %v8060, %v7996
    %v8253 = vpack.c.b16 %v8061, %v7997
    %v8254 = vpack.c.b16 %v8062, %v7998
    %v8255 = vpack.c.b16 %v8063, %v7999
    %v8256 = vpack.c.b16 %v8064, %v8000
    %v8257 = vpack.c.b16 %v8065, %v8001
    %v8258 = vpack.c.b16 %v8066, %v8002
    %v8259 = vpack.c.b16 %v8131, %v8067
    %v8260 = vpack.c.b16 %v8132, %v8068
    %v8261 = vpack.c.b16 %v8133, %v8069
    %v8262 = vpack.c.b16 %v8134, %v8070
    %v8263 = vpack.c.b16 %v8135, %v8071
    %v8264 = vpack.c.b16 %v8136, %v8072
    %v8265 = vpack.c.b16 %v8137, %v8073
    %v8266 = vpack.c.b16 %v8138, %v8074
    %v8267 = vpack.c.b16 %v8139, %v8075
    %v8268 = vpack.c.b16 %v8140, %v8076
    %v8269 = vpack.c.b16 %v8141, %v8077
    %v8270 = vpack.c.b16 %v8142, %v8078
    %v8271 = vpack.c.b16 %v8143, %v8079
    %v8272 = vpack.c.b16 %v8144, %v8080
    %v8273 = vpack.c.b16 %v8145, %v8081
    %v8274 = vpack.c.b16 %v8146, %v8082
    %v8275 = vpack.c.b16 %v8147, %v8083
    %v8276 = vpack.c.b16 %v8148, %v8084
    %v8277 = vpack.c.b16 %v8149, %v8085
    %v8278 = vpack.c.b16 %v8150, %v8086
    %v8279 = vpack.c.b16 %v8151, %v8087
    %v8280 = vpack.c.b16 %v8152, %v8088
    %v8281 = vpack.c.b16 %v8153, %v8089
    %v8282 = vpack.c.b16 %v8154, %v8090
    %v8283 = vpack.c.b16 %v8155, %v8091
    %v8284 = vpack.c.b16 %v8156, %v8092
    %v8285 = vpack.c.b16 %v8157, %v8093
    %v8286 = vpack.c.b16 %v8158, %v8094
    %v8287 = vpack.c.b16 %v8159, %v8095
    %v8288 = vpack.c.b16 %v8160, %v8096
    %v8289 = vpack.c.b16 %v8161, %v8097
    %v8290 = vpack.c.b16 %v8162, %v8098
    %v8291 = vpack.c.b16 %v8163, %v8099
    %v8292 = vpack.c.b16 %v8164, %v8100
    %v8293 = vpack.c.b16 %v8165, %v8101
    %v8294 = vpack.c.b16 %v8166, %v8102
    %v8295 = vpack.c.b16 %v8167, %v8103
    %v8296 = vpack.c.b16 %v8168, %v8104
    %v8297 = vpack.c.b16 %v8169, %v8105
    %v8298 = vpack.c.b16 %v8170, %v8106
    %v8299 = vpack.c.b16 %v8171, %v8107
    %v8300 = vpack.c.b16 %v8172, %v8108
    %v8301 = vpack.c.b16 %v8173, %v8109
    %v8302 = vpack.c.b16 %v8174, %v8110
    %v8303 = vpack.c.b16 %v8175, %v8111
    %v8304 = vpack.c.b16 %v8176, %v8112
    %v8305 = vpack.c.b16 %v8177, %v8113
    %v8306 = vpack.c.b16 %v8178, %v8114
    %v8307 = vpack.c.b16 %v8179, %v8115
    %v8308 = vpack.c.b16 %v8180, %v8116
    %v8309 = vpack.c.b16 %v8181, %v8117
    %v8310 = vpack.c.b16 %v8182, %v8118
    %v8311 = vpack.c.b16 %v8183, %v8119
    %v8312 = vpack.c.b16 %v8184, %v8120
    %v8313 = vpack.c.b16 %v8185, %v8121
    %v8314 = vpack.c.b16 %v8186, %v8122
    %v8315 = vpack.c.b16 %v8187, %v8123
    %v8316 = vpack.c.b16 %v8188, %v8124
    %v8317 = vpack.c.b16 %v8189, %v8125
    %v8318 = vpack.c.b16 %v8190, %v8126
    %v8319 = vpack.c.b16 %v8191, %v8127
    %v8320 = vpack.c.b16 %v8192, %v8128
    %v8321 = vpack.c.b16 %v8193, %v8129
    %v8322 = vpack.c.b16 %v8194, %v8130
    %v8452 = vsel %vm937, %v7346, 0
    %8454 = vmatprep.subr.bf16.mxu0 %v8196
    %8455 = vmatpush1.bf16.msra.mxu0 %v8195
    %8456 = vmatprep.subr.bf16.mxu0 %v8260
    %8457 = vmatpush1.bf16.msra.mxu0 %v8259
    %8458 = vmatprep.subr.bf16.mxu0 0
    %8459 = vmatpush1.bf16.msra.mxu0 0
    %8460 = vmatprep.subr.bf16.mxu0 0
    %8461 = vmatpush1.bf16.msra.mxu0 0
    %8462 = vmatprep.subr.bf16.mxu0 0
    %8463 = vmatpush1.bf16.msra.mxu0 0
    %8464 = vmatprep.subr.bf16.mxu0 0
    %8465 = vmatpush1.bf16.msra.mxu0 0
    %8466 = vmatprep.subr.bf16.mxu0 0
    %8467 = vmatpush1.bf16.msra.mxu0 0
    %8468 = vmatprep.subr.bf16.mxu0 0
    %8469 = vmatpush1.bf16.msra.mxu0 0
    %8470 = vmatprep.subr.bf16.mxu0 0
    %8471 = vmatpush1.bf16.msra.mxu0 0
    %8472 = vmatprep.subr.bf16.mxu0 0
    %8473 = vmatpush1.bf16.msra.mxu0 0
    %8474 = vmatprep.subr.bf16.mxu0 0
    %8475 = vmatpush1.bf16.msra.mxu0 0
    %8476 = vmatprep.subr.bf16.mxu0 0
    %8477 = vmatpush1.bf16.msra.mxu0 0
    %8478 = vmatprep.subr.bf16.mxu0 0
    %8479 = vmatpush1.bf16.msra.mxu0 0
    %8480 = vmatprep.subr.bf16.mxu0 0
    %8481 = vmatpush1.bf16.msra.mxu0 0
    %8482 = vmatprep.subr.bf16.mxu0 0
    %8483 = vmatpush1.bf16.msra.mxu0 0
    %8484 = vmatprep.subr.bf16.mxu0 0
    %8485 = vmatpush1.bf16.msra.mxu0 0
    %8486 = vmatprep.mubr.bf16.mxu0 0
    %8487 = vmatmul.mubr.bf16.gmra.mrb[0].mxu0 %v8452
    %v8488 = vpop.f32.mrb[0].mxu0
    %v8489 = vadd.f32 %v7494, %v8488
    %v8490 = vpop.f32.mrb[0].mxu0
    %v8491 = vadd.f32 %v7498, %v8490
    %v8492 = vpop.f32.mrb[0].mxu0
    %v8493 = vpop.f32.mrb[0].mxu0
    %8494 = vdwg.mxu0
    %8495 = vmatprep.subr.bf16.mxu0 %v8198
    %8496 = vmatpush1.bf16.msra.mxu0 %v8197
    %8497 = vmatprep.subr.bf16.mxu0 %v8262
    %8498 = vmatpush1.bf16.msra.mxu0 %v8261
    %8499 = vmatprep.subr.bf16.mxu0 0
    %8500 = vmatpush1.bf16.msra.mxu0 0
    %8501 = vmatprep.subr.bf16.mxu0 0
    %8502 = vmatpush1.bf16.msra.mxu0 0
    %8503 = vmatprep.subr.bf16.mxu0 0
    %8504 = vmatpush1.bf16.msra.mxu0 0
    %8505 = vmatprep.subr.bf16.mxu0 0
    %8506 = vmatpush1.bf16.msra.mxu0 0
    %8507 = vmatprep.subr.bf16.mxu0 0
    %8508 = vmatpush1.bf16.msra.mxu0 0
    %8509 = vmatprep.subr.bf16.mxu0 0
    %8510 = vmatpush1.bf16.msra.mxu0 0
    %8511 = vmatprep.subr.bf16.mxu0 0
    %8512 = vmatpush1.bf16.msra.mxu0 0
    %8513 = vmatprep.subr.bf16.mxu0 0
    %8514 = vmatpush1.bf16.msra.mxu0 0
    %8515 = vmatprep.subr.bf16.mxu0 0
    %8516 = vmatpush1.bf16.msra.mxu0 0
    %8517 = vmatprep.subr.bf16.mxu0 0
    %8518 = vmatpush1.bf16.msra.mxu0 0
    %8519 = vmatprep.subr.bf16.mxu0 0
    %8520 = vmatpush1.bf16.msra.mxu0 0
    %8521 = vmatprep.subr.bf16.mxu0 0
    %8522 = vmatpush1.bf16.msra.mxu0 0
    %8523 = vmatprep.subr.bf16.mxu0 0
    %8524 = vmatpush1.bf16.msra.mxu0 0
    %8525 = vmatprep.subr.bf16.mxu0 0
    %8526 = vmatpush1.bf16.msra.mxu0 0
    %8527 = vmatprep.mubr.bf16.mxu0 0
    %8528 = vmatmul.mubr.bf16.gmra.mrb[0].mxu0 %v8452
    %v8529 = vpop.f32.mrb[0].mxu0
    %v8530 = vadd.f32 %v7502, %v8529
    %v8531 = vpop.f32.mrb[0].mxu0
    %v8532 = vadd.f32 %v7506, %v8531
    %v8533 = vpop.f32.mrb[0].mxu0
    %v8534 = vpop.f32.mrb[0].mxu0
    %8535 = vdwg.mxu0
    %8536 = vmatprep.subr.bf16.mxu0 %v8200
    %8537 = vmatpush1.bf16.msra.mxu0 %v8199
    %8538 = vmatprep.subr.bf16.mxu0 %v8264
    %8539 = vmatpush1.bf16.msra.mxu0 %v8263
    %8540 = vmatprep.subr.bf16.mxu0 0
    %8541 = vmatpush1.bf16.msra.mxu0 0
    %8542 = vmatprep.subr.bf16.mxu0 0
    %8543 = vmatpush1.bf16.msra.mxu0 0
    %8544 = vmatprep.subr.bf16.mxu0 0
    %8545 = vmatpush1.bf16.msra.mxu0 0
    %8546 = vmatprep.subr.bf16.mxu0 0
    %8547 = vmatpush1.bf16.msra.mxu0 0
    %8548 = vmatprep.subr.bf16.mxu0 0
    %8549 = vmatpush1.bf16.msra.mxu0 0
    %8550 = vmatprep.subr.bf16.mxu0 0
    %8551 = vmatpush1.bf16.msra.mxu0 0
    %8552 = vmatprep.subr.bf16.mxu0 0
    %8553 = vmatpush1.bf16.msra.mxu0 0
    %8554 = vmatprep.subr.bf16.mxu0 0
    %8555 = vmatpush1.bf16.msra.mxu0 0
    %8556 = vmatprep.subr.bf16.mxu0 0
    %8557 = vmatpush1.bf16.msra.mxu0 0
    %8558 = vmatprep.subr.bf16.mxu0 0
    %8559 = vmatpush1.bf16.msra.mxu0 0
    %8560 = vmatprep.subr.bf16.mxu0 0
    %8561 = vmatpush1.bf16.msra.mxu0 0
    %8562 = vmatprep.subr.bf16.mxu0 0
    %8563 = vmatpush1.bf16.msra.mxu0 0
    %8564 = vmatprep.subr.bf16.mxu0 0
    %8565 = vmatpush1.bf16.msra.mxu0 0
    %8566 = vmatprep.subr.bf16.mxu0 0
    %8567 = vmatpush1.bf16.msra.mxu0 0
    %8568 = vmatprep.mubr.bf16.mxu0 0
    %8569 = vmatmul.mubr.bf16.gmra.mrb[0].mxu0 %v8452
    %v8570 = vpop.f32.mrb[0].mxu0
    %v8571 = vadd.f32 %v7510, %v8570
    %v8572 = vpop.f32.mrb[0].mxu0
    %v8573 = vadd.f32 %v7514, %v8572
    %v8574 = vpop.f32.mrb[0].mxu0
    %v8575 = vpop.f32.mrb[0].mxu0
    %8576 = vdwg.mxu0
    %8577 = vmatprep.subr.bf16.mxu0 %v8202
    %8578 = vmatpush1.bf16.msra.mxu0 %v8201
    %8579 = vmatprep.subr.bf16.mxu0 %v8266
    %8580 = vmatpush1.bf16.msra.mxu0 %v8265
    %8581 = vmatprep.subr.bf16.mxu0 0
    %8582 = vmatpush1.bf16.msra.mxu0 0
    %8583 = vmatprep.subr.bf16.mxu0 0
    %8584 = vmatpush1.bf16.msra.mxu0 0
    %8585 = vmatprep.subr.bf16.mxu0 0
    %8586 = vmatpush1.bf16.msra.mxu0 0
    %8587 = vmatprep.subr.bf16.mxu0 0
    %8588 = vmatpush1.bf16.msra.mxu0 0
    %8589 = vmatprep.subr.bf16.mxu0 0
    %8590 = vmatpush1.bf16.msra.mxu0 0
    %8591 = vmatprep.subr.bf16.mxu0 0
    %8592 = vmatpush1.bf16.msra.mxu0 0
    %8593 = vmatprep.subr.bf16.mxu0 0
    %8594 = vmatpush1.bf16.msra.mxu0 0
    %8595 = vmatprep.subr.bf16.mxu0 0
    %8596 = vmatpush1.bf16.msra.mxu0 0
    %8597 = vmatprep.subr.bf16.mxu0 0
    %8598 = vmatpush1.bf16.msra.mxu0 0
    %8599 = vmatprep.subr.bf16.mxu0 0
    %8600 = vmatpush1.bf16.msra.mxu0 0
    %8601 = vmatprep.subr.bf16.mxu0 0
    %8602 = vmatpush1.bf16.msra.mxu0 0
    %8603 = vmatprep.subr.bf16.mxu0 0
    %8604 = vmatpush1.bf16.msra.mxu0 0
    %8605 = vmatprep.subr.bf16.mxu0 0
    %8606 = vmatpush1.bf16.msra.mxu0 0
    %8607 = vmatprep.subr.bf16.mxu0 0
    %8608 = vmatpush1.bf16.msra.mxu0 0
    %8609 = vmatprep.mubr.bf16.mxu0 0
    %8610 = vmatmul.mubr.bf16.gmra.mrb[0].mxu0 %v8452
    %v8611 = vpop.f32.mrb[0].mxu0
    %v8612 = vadd.f32 %v7518, %v8611
    %v8613 = vpop.f32.mrb[0].mxu0
    %v8614 = vadd.f32 %v7522, %v8613
    %v8615 = vpop.f32.mrb[0].mxu0
    %v8616 = vpop.f32.mrb[0].mxu0
    %8617 = vdwg.mxu0
    %8618 = vmatprep.subr.bf16.mxu0 %v8204
    %8619 = vmatpush1.bf16.msra.mxu0 %v8203
    %8620 = vmatprep.subr.bf16.mxu0 %v8268
    %8621 = vmatpush1.bf16.msra.mxu0 %v8267
    %8622 = vmatprep.subr.bf16.mxu0 0
    %8623 = vmatpush1.bf16.msra.mxu0 0
    %8624 = vmatprep.subr.bf16.mxu0 0
    %8625 = vmatpush1.bf16.msra.mxu0 0
    %8626 = vmatprep.subr.bf16.mxu0 0
    %8627 = vmatpush1.bf16.msra.mxu0 0
    %8628 = vmatprep.subr.bf16.mxu0 0
    %8629 = vmatpush1.bf16.msra.mxu0 0
    %8630 = vmatprep.subr.bf16.mxu0 0
    %8631 = vmatpush1.bf16.msra.mxu0 0
    %8632 = vmatprep.subr.bf16.mxu0 0
    %8633 = vmatpush1.bf16.msra.mxu0 0
    %8634 = vmatprep.subr.bf16.mxu0 0
    %8635 = vmatpush1.bf16.msra.mxu0 0
    %8636 = vmatprep.subr.bf16.mxu0 0
    %8637 = vmatpush1.bf16.msra.mxu0 0
    %8638 = vmatprep.subr.bf16.mxu0 0
    %8639 = vmatpush1.bf16.msra.mxu0 0
    %8640 = vmatprep.subr.bf16.mxu0 0
    %8641 = vmatpush1.bf16.msra.mxu0 0
    %8642 = vmatprep.subr.bf16.mxu0 0
    %8643 = vmatpush1.bf16.msra.mxu0 0
    %8644 = vmatprep.subr.bf16.mxu0 0
    %8645 = vmatpush1.bf16.msra.mxu0 0
    %8646 = vmatprep.subr.bf16.mxu0 0
    %8647 = vmatpush1.bf16.msra.mxu0 0
    %8648 = vmatprep.subr.bf16.mxu0 0
    %8649 = vmatpush1.bf16.msra.mxu0 0
    %8650 = vmatprep.mubr.bf16.mxu0 0
    %8651 = vmatmul.mubr.bf16.gmra.mrb[0].mxu0 %v8452
    %v8652 = vpop.f32.mrb[0].mxu0
    %v8653 = vadd.f32 %v7526, %v8652
    %v8654 = vpop.f32.mrb[0].mxu0
    %v8655 = vadd.f32 %v7530, %v8654
    %v8656 = vpop.f32.mrb[0].mxu0
    %v8657 = vpop.f32.mrb[0].mxu0
    %8658 = vdwg.mxu0
    %8659 = vmatprep.subr.bf16.mxu0 %v8206
    %8660 = vmatpush1.bf16.msra.mxu0 %v8205
    %8661 = vmatprep.subr.bf16.mxu0 %v8270
    %8662 = vmatpush1.bf16.msra.mxu0 %v8269
    %8663 = vmatprep.subr.bf16.mxu0 0
    %8664 = vmatpush1.bf16.msra.mxu0 0
    %8665 = vmatprep.subr.bf16.mxu0 0
    %8666 = vmatpush1.bf16.msra.mxu0 0
    %8667 = vmatprep.subr.bf16.mxu0 0
    %8668 = vmatpush1.bf16.msra.mxu0 0
    %8669 = vmatprep.subr.bf16.mxu0 0
    %8670 = vmatpush1.bf16.msra.mxu0 0
    %8671 = vmatprep.subr.bf16.mxu0 0
    %8672 = vmatpush1.bf16.msra.mxu0 0
    %8673 = vmatprep.subr.bf16.mxu0 0
    %8674 = vmatpush1.bf16.msra.mxu0 0
    %8675 = vmatprep.subr.bf16.mxu0 0
    %8676 = vmatpush1.bf16.msra.mxu0 0
    %8677 = vmatprep.subr.bf16.mxu0 0
    %8678 = vmatpush1.bf16.msra.mxu0 0
    %8679 = vmatprep.subr.bf16.mxu0 0
    %8680 = vmatpush1.bf16.msra.mxu0 0
    %8681 = vmatprep.subr.bf16.mxu0 0
    %8682 = vmatpush1.bf16.msra.mxu0 0
    %8683 = vmatprep.subr.bf16.mxu0 0
    %8684 = vmatpush1.bf16.msra.mxu0 0
    %8685 = vmatprep.subr.bf16.mxu0 0
    %8686 = vmatpush1.bf16.msra.mxu0 0
    %8687 = vmatprep.subr.bf16.mxu0 0
    %8688 = vmatpush1.bf16.msra.mxu0 0
    %8689 = vmatprep.subr.bf16.mxu0 0
    %8690 = vmatpush1.bf16.msra.mxu0 0
    %8691 = vmatprep.mubr.bf16.mxu0 0
    %8692 = vmatmul.mubr.bf16.gmra.mrb[0].mxu0 %v8452
    %v8693 = vpop.f32.mrb[0].mxu0
    %v8694 = vadd.f32 %v7534, %v8693
    %v8695 = vpop.f32.mrb[0].mxu0
    %v8696 = vadd.f32 %v7538, %v8695
    %v8697 = vpop.f32.mrb[0].mxu0
    %v8698 = vpop.f32.mrb[0].mxu0
    %8699 = vdwg.mxu0
    %8700 = vmatprep.subr.bf16.mxu0 %v8208
    %8701 = vmatpush1.bf16.msra.mxu0 %v8207
    %8702 = vmatprep.subr.bf16.mxu0 %v8272
    %8703 = vmatpush1.bf16.msra.mxu0 %v8271
    %8704 = vmatprep.subr.bf16.mxu0 0
    %8705 = vmatpush1.bf16.msra.mxu0 0
    %8706 = vmatprep.subr.bf16.mxu0 0
    %8707 = vmatpush1.bf16.msra.mxu0 0
    %8708 = vmatprep.subr.bf16.mxu0 0
    %8709 = vmatpush1.bf16.msra.mxu0 0
    %8710 = vmatprep.subr.bf16.mxu0 0
    %8711 = vmatpush1.bf16.msra.mxu0 0
    %8712 = vmatprep.subr.bf16.mxu0 0
    %8713 = vmatpush1.bf16.msra.mxu0 0
    %8714 = vmatprep.subr.bf16.mxu0 0
    %8715 = vmatpush1.bf16.msra.mxu0 0
    %8716 = vmatprep.subr.bf16.mxu0 0
    %8717 = vmatpush1.bf16.msra.mxu0 0
    %8718 = vmatprep.subr.bf16.mxu0 0
    %8719 = vmatpush1.bf16.msra.mxu0 0
    %8720 = vmatprep.subr.bf16.mxu0 0
    %8721 = vmatpush1.bf16.msra.mxu0 0
    %8722 = vmatprep.subr.bf16.mxu0 0
    %8723 = vmatpush1.bf16.msra.mxu0 0
    %8724 = vmatprep.subr.bf16.mxu0 0
    %8725 = vmatpush1.bf16.msra.mxu0 0
    %8726 = vmatprep.subr.bf16.mxu0 0
    %8727 = vmatpush1.bf16.msra.mxu0 0
    %8728 = vmatprep.subr.bf16.mxu0 0
    %8729 = vmatpush1.bf16.msra.mxu0 0
    %8730 = vmatprep.subr.bf16.mxu0 0
    %8731 = vmatpush1.bf16.msra.mxu0 0
    %8732 = vmatprep.mubr.bf16.mxu0 0
    %8733 = vmatmul.mubr.bf16.gmra.mrb[0].mxu0 %v8452
    %v8734 = vpop.f32.mrb[0].mxu0
    %v8735 = vadd.f32 %v7542, %v8734
    %v8736 = vpop.f32.mrb[0].mxu0
    %v8737 = vadd.f32 %v7546, %v8736
    %v8738 = vpop.f32.mrb[0].mxu0
    %v8739 = vpop.f32.mrb[0].mxu0
    %8740 = vdwg.mxu0
    %8741 = vmatprep.subr.bf16.mxu0 %v8210
    %8742 = vmatpush1.bf16.msra.mxu0 %v8209
    %8743 = vmatprep.subr.bf16.mxu0 %v8274
    %8744 = vmatpush1.bf16.msra.mxu0 %v8273
    %8745 = vmatprep.subr.bf16.mxu0 0
    %8746 = vmatpush1.bf16.msra.mxu0 0
    %8747 = vmatprep.subr.bf16.mxu0 0
    %8748 = vmatpush1.bf16.msra.mxu0 0
    %8749 = vmatprep.subr.bf16.mxu0 0
    %8750 = vmatpush1.bf16.msra.mxu0 0
    %8751 = vmatprep.subr.bf16.mxu0 0
    %8752 = vmatpush1.bf16.msra.mxu0 0
    %8753 = vmatprep.subr.bf16.mxu0 0
    %8754 = vmatpush1.bf16.msra.mxu0 0
    %8755 = vmatprep.subr.bf16.mxu0 0
    %8756 = vmatpush1.bf16.msra.mxu0 0
    %8757 = vmatprep.subr.bf16.mxu0 0
    %8758 = vmatpush1.bf16.msra.mxu0 0
    %8759 = vmatprep.subr.bf16.mxu0 0
    %8760 = vmatpush1.bf16.msra.mxu0 0
    %8761 = vmatprep.subr.bf16.mxu0 0
    %8762 = vmatpush1.bf16.msra.mxu0 0
    %8763 = vmatprep.subr.bf16.mxu0 0
    %8764 = vmatpush1.bf16.msra.mxu0 0
    %8765 = vmatprep.subr.bf16.mxu0 0
    %8766 = vmatpush1.bf16.msra.mxu0 0
    %8767 = vmatprep.subr.bf16.mxu0 0
    %8768 = vmatpush1.bf16.msra.mxu0 0
    %8769 = vmatprep.subr.bf16.mxu0 0
    %8770 = vmatpush1.bf16.msra.mxu0 0
    %8771 = vmatprep.subr.bf16.mxu0 0
    %8772 = vmatpush1.bf16.msra.mxu0 0
    %8773 = vmatprep.mubr.bf16.mxu0 0
    %8774 = vmatmul.mubr.bf16.gmra.mrb[0].mxu0 %v8452
    %v8775 = vpop.f32.mrb[0].mxu0
    %v8776 = vadd.f32 %v7550, %v8775
    %v8777 = vpop.f32.mrb[0].mxu0
    %v8778 = vadd.f32 %v7554, %v8777
    %v8779 = vpop.f32.mrb[0].mxu0
    %v8780 = vpop.f32.mrb[0].mxu0
    %8781 = vdwg.mxu0
    %8782 = vmatprep.subr.bf16.mxu0 %v8212
    %8783 = vmatpush1.bf16.msra.mxu0 %v8211
    %8784 = vmatprep.subr.bf16.mxu0 %v8276
    %8785 = vmatpush1.bf16.msra.mxu0 %v8275
    %8786 = vmatprep.subr.bf16.mxu0 0
    %8787 = vmatpush1.bf16.msra.mxu0 0
    %8788 = vmatprep.subr.bf16.mxu0 0
    %8789 = vmatpush1.bf16.msra.mxu0 0
    %8790 = vmatprep.subr.bf16.mxu0 0
    %8791 = vmatpush1.bf16.msra.mxu0 0
    %8792 = vmatprep.subr.bf16.mxu0 0
    %8793 = vmatpush1.bf16.msra.mxu0 0
    %8794 = vmatprep.subr.bf16.mxu0 0
    %8795 = vmatpush1.bf16.msra.mxu0 0
    %8796 = vmatprep.subr.bf16.mxu0 0
    %8797 = vmatpush1.bf16.msra.mxu0 0
    %8798 = vmatprep.subr.bf16.mxu0 0
    %8799 = vmatpush1.bf16.msra.mxu0 0
    %8800 = vmatprep.subr.bf16.mxu0 0
    %8801 = vmatpush1.bf16.msra.mxu0 0
    %8802 = vmatprep.subr.bf16.mxu0 0
    %8803 = vmatpush1.bf16.msra.mxu0 0
    %8804 = vmatprep.subr.bf16.mxu0 0
    %8805 = vmatpush1.bf16.msra.mxu0 0
    %8806 = vmatprep.subr.bf16.mxu0 0
    %8807 = vmatpush1.bf16.msra.mxu0 0
    %8808 = vmatprep.subr.bf16.mxu0 0
    %8809 = vmatpush1.bf16.msra.mxu0 0
    %8810 = vmatprep.subr.bf16.mxu0 0
    %8811 = vmatpush1.bf16.msra.mxu0 0
    %8812 = vmatprep.subr.bf16.mxu0 0
    %8813 = vmatpush1.bf16.msra.mxu0 0
    %8814 = vmatprep.mubr.bf16.mxu0 0
    %8815 = vmatmul.mubr.bf16.gmra.mrb[0].mxu0 %v8452
    %v8816 = vpop.f32.mrb[0].mxu0
    %v8817 = vadd.f32 %v7558, %v8816
    %v8818 = vpop.f32.mrb[0].mxu0
    %v8819 = vadd.f32 %v7562, %v8818
    %v8820 = vpop.f32.mrb[0].mxu0
    %v8821 = vpop.f32.mrb[0].mxu0
    %8822 = vdwg.mxu0
    %8823 = vmatprep.subr.bf16.mxu0 %v8214
    %8824 = vmatpush1.bf16.msra.mxu0 %v8213
    %8825 = vmatprep.subr.bf16.mxu0 %v8278
    %8826 = vmatpush1.bf16.msra.mxu0 %v8277
    %8827 = vmatprep.subr.bf16.mxu0 0
    %8828 = vmatpush1.bf16.msra.mxu0 0
    %8829 = vmatprep.subr.bf16.mxu0 0
    %8830 = vmatpush1.bf16.msra.mxu0 0
    %8831 = vmatprep.subr.bf16.mxu0 0
    %8832 = vmatpush1.bf16.msra.mxu0 0
    %8833 = vmatprep.subr.bf16.mxu0 0
    %8834 = vmatpush1.bf16.msra.mxu0 0
    %8835 = vmatprep.subr.bf16.mxu0 0
    %8836 = vmatpush1.bf16.msra.mxu0 0
    %8837 = vmatprep.subr.bf16.mxu0 0
    %8838 = vmatpush1.bf16.msra.mxu0 0
    %8839 = vmatprep.subr.bf16.mxu0 0
    %8840 = vmatpush1.bf16.msra.mxu0 0
    %8841 = vmatprep.subr.bf16.mxu0 0
    %8842 = vmatpush1.bf16.msra.mxu0 0
    %8843 = vmatprep.subr.bf16.mxu0 0
    %8844 = vmatpush1.bf16.msra.mxu0 0
    %8845 = vmatprep.subr.bf16.mxu0 0
    %8846 = vmatpush1.bf16.msra.mxu0 0
    %8847 = vmatprep.subr.bf16.mxu0 0
    %8848 = vmatpush1.bf16.msra.mxu0 0
    %8849 = vmatprep.subr.bf16.mxu0 0
    %8850 = vmatpush1.bf16.msra.mxu0 0
    %8851 = vmatprep.subr.bf16.mxu0 0
    %8852 = vmatpush1.bf16.msra.mxu0 0
    %8853 = vmatprep.subr.bf16.mxu0 0
    %8854 = vmatpush1.bf16.msra.mxu0 0
    %8855 = vmatprep.mubr.bf16.mxu0 0
    %8856 = vmatmul.mubr.bf16.gmra.mrb[0].mxu0 %v8452
    %v8857 = vpop.f32.mrb[0].mxu0
    %v8858 = vadd.f32 %v7566, %v8857
    %v8859 = vpop.f32.mrb[0].mxu0
    %v8860 = vadd.f32 %v7570, %v8859
    %v8861 = vpop.f32.mrb[0].mxu0
    %v8862 = vpop.f32.mrb[0].mxu0
    %8863 = vdwg.mxu0
    %8864 = vmatprep.subr.bf16.mxu0 %v8216
    %8865 = vmatpush1.bf16.msra.mxu0 %v8215
    %8866 = vmatprep.subr.bf16.mxu0 %v8280
    %8867 = vmatpush1.bf16.msra.mxu0 %v8279
    %8868 = vmatprep.subr.bf16.mxu0 0
    %8869 = vmatpush1.bf16.msra.mxu0 0
    %8870 = vmatprep.subr.bf16.mxu0 0
    %8871 = vmatpush1.bf16.msra.mxu0 0
    %8872 = vmatprep.subr.bf16.mxu0 0
    %8873 = vmatpush1.bf16.msra.mxu0 0
    %8874 = vmatprep.subr.bf16.mxu0 0
    %8875 = vmatpush1.bf16.msra.mxu0 0
    %8876 = vmatprep.subr.bf16.mxu0 0
    %8877 = vmatpush1.bf16.msra.mxu0 0
    %8878 = vmatprep.subr.bf16.mxu0 0
    %8879 = vmatpush1.bf16.msra.mxu0 0
    %8880 = vmatprep.subr.bf16.mxu0 0
    %8881 = vmatpush1.bf16.msra.mxu0 0
    %8882 = vmatprep.subr.bf16.mxu0 0
    %8883 = vmatpush1.bf16.msra.mxu0 0
    %8884 = vmatprep.subr.bf16.mxu0 0
    %8885 = vmatpush1.bf16.msra.mxu0 0
    %8886 = vmatprep.subr.bf16.mxu0 0
    %8887 = vmatpush1.bf16.msra.mxu0 0
    %8888 = vmatprep.subr.bf16.mxu0 0
    %8889 = vmatpush1.bf16.msra.mxu0 0
    %8890 = vmatprep.subr.bf16.mxu0 0
    %8891 = vmatpush1.bf16.msra.mxu0 0
    %8892 = vmatprep.subr.bf16.mxu0 0
    %8893 = vmatpush1.bf16.msra.mxu0 0
    %8894 = vmatprep.subr.bf16.mxu0 0
    %8895 = vmatpush1.bf16.msra.mxu0 0
    %8896 = vmatprep.mubr.bf16.mxu0 0
    %8897 = vmatmul.mubr.bf16.gmra.mrb[0].mxu0 %v8452
    %v8898 = vpop.f32.mrb[0].mxu0
    %v8899 = vadd.f32 %v7574, %v8898
    %v8900 = vpop.f32.mrb[0].mxu0
    %v8901 = vadd.f32 %v7578, %v8900
    %v8902 = vpop.f32.mrb[0].mxu0
    %v8903 = vpop.f32.mrb[0].mxu0
    %8904 = vdwg.mxu0
    %8905 = vmatprep.subr.bf16.mxu0 %v8218
    %8906 = vmatpush1.bf16.msra.mxu0 %v8217
    %8907 = vmatprep.subr.bf16.mxu0 %v8282
    %8908 = vmatpush1.bf16.msra.mxu0 %v8281
    %8909 = vmatprep.subr.bf16.mxu0 0
    %8910 = vmatpush1.bf16.msra.mxu0 0
    %8911 = vmatprep.subr.bf16.mxu0 0
    %8912 = vmatpush1.bf16.msra.mxu0 0
    %8913 = vmatprep.subr.bf16.mxu0 0
    %8914 = vmatpush1.bf16.msra.mxu0 0
    %8915 = vmatprep.subr.bf16.mxu0 0
    %8916 = vmatpush1.bf16.msra.mxu0 0
    %8917 = vmatprep.subr.bf16.mxu0 0
    %8918 = vmatpush1.bf16.msra.mxu0 0
    %8919 = vmatprep.subr.bf16.mxu0 0
    %8920 = vmatpush1.bf16.msra.mxu0 0
    %8921 = vmatprep.subr.bf16.mxu0 0
    %8922 = vmatpush1.bf16.msra.mxu0 0
    %8923 = vmatprep.subr.bf16.mxu0 0
    %8924 = vmatpush1.bf16.msra.mxu0 0
    %8925 = vmatprep.subr.bf16.mxu0 0
    %8926 = vmatpush1.bf16.msra.mxu0 0
    %8927 = vmatprep.subr.bf16.mxu0 0
    %8928 = vmatpush1.bf16.msra.mxu0 0
    %8929 = vmatprep.subr.bf16.mxu0 0
    %8930 = vmatpush1.bf16.msra.mxu0 0
    %8931 = vmatprep.subr.bf16.mxu0 0
    %8932 = vmatpush1.bf16.msra.mxu0 0
    %8933 = vmatprep.subr.bf16.mxu0 0
    %8934 = vmatpush1.bf16.msra.mxu0 0
    %8935 = vmatprep.subr.bf16.mxu0 0
    %8936 = vmatpush1.bf16.msra.mxu0 0
    %8937 = vmatprep.mubr.bf16.mxu0 0
    %8938 = vmatmul.mubr.bf16.gmra.mrb[0].mxu0 %v8452
    %v8939 = vpop.f32.mrb[0].mxu0
    %v8940 = vadd.f32 %v7582, %v8939
    %v8941 = vpop.f32.mrb[0].mxu0
    %v8942 = vadd.f32 %v7586, %v8941
    %v8943 = vpop.f32.mrb[0].mxu0
    %v8944 = vpop.f32.mrb[0].mxu0
    %8945 = vdwg.mxu0
    %8946 = vmatprep.subr.bf16.mxu0 %v8220
    %8947 = vmatpush1.bf16.msra.mxu0 %v8219
    %8948 = vmatprep.subr.bf16.mxu0 %v8284
    %8949 = vmatpush1.bf16.msra.mxu0 %v8283
    %8950 = vmatprep.subr.bf16.mxu0 0
    %8951 = vmatpush1.bf16.msra.mxu0 0
    %8952 = vmatprep.subr.bf16.mxu0 0
    %8953 = vmatpush1.bf16.msra.mxu0 0
    %8954 = vmatprep.subr.bf16.mxu0 0
    %8955 = vmatpush1.bf16.msra.mxu0 0
    %8956 = vmatprep.subr.bf16.mxu0 0
    %8957 = vmatpush1.bf16.msra.mxu0 0
    %8958 = vmatprep.subr.bf16.mxu0 0
    %8959 = vmatpush1.bf16.msra.mxu0 0
    %8960 = vmatprep.subr.bf16.mxu0 0
    %8961 = vmatpush1.bf16.msra.mxu0 0
    %8962 = vmatprep.subr.bf16.mxu0 0
    %8963 = vmatpush1.bf16.msra.mxu0 0
    %8964 = vmatprep.subr.bf16.mxu0 0
    %8965 = vmatpush1.bf16.msra.mxu0 0
    %8966 = vmatprep.subr.bf16.mxu0 0
    %8967 = vmatpush1.bf16.msra.mxu0 0
    %8968 = vmatprep.subr.bf16.mxu0 0
    %8969 = vmatpush1.bf16.msra.mxu0 0
    %8970 = vmatprep.subr.bf16.mxu0 0
    %8971 = vmatpush1.bf16.msra.mxu0 0
    %8972 = vmatprep.subr.bf16.mxu0 0
    %8973 = vmatpush1.bf16.msra.mxu0 0
    %8974 = vmatprep.subr.bf16.mxu0 0
    %8975 = vmatpush1.bf16.msra.mxu0 0
    %8976 = vmatprep.subr.bf16.mxu0 0
    %8977 = vmatpush1.bf16.msra.mxu0 0
    %8978 = vmatprep.mubr.bf16.mxu0 0
    %8979 = vmatmul.mubr.bf16.gmra.mrb[0].mxu0 %v8452
    %v8980 = vpop.f32.mrb[0].mxu0
    %v8981 = vadd.f32 %v7590, %v8980
    %v8982 = vpop.f32.mrb[0].mxu0
    %v8983 = vadd.f32 %v7594, %v8982
    %v8984 = vpop.f32.mrb[0].mxu0
    %v8985 = vpop.f32.mrb[0].mxu0
    %8986 = vdwg.mxu0
    %8987 = vmatprep.subr.bf16.mxu0 %v8222
    %8988 = vmatpush1.bf16.msra.mxu0 %v8221
    %8989 = vmatprep.subr.bf16.mxu0 %v8286
    %8990 = vmatpush1.bf16.msra.mxu0 %v8285
    %8991 = vmatprep.subr.bf16.mxu0 0
    %8992 = vmatpush1.bf16.msra.mxu0 0
    %8993 = vmatprep.subr.bf16.mxu0 0
    %8994 = vmatpush1.bf16.msra.mxu0 0
    %8995 = vmatprep.subr.bf16.mxu0 0
    %8996 = vmatpush1.bf16.msra.mxu0 0
    %8997 = vmatprep.subr.bf16.mxu0 0
    %8998 = vmatpush1.bf16.msra.mxu0 0
    %8999 = vmatprep.subr.bf16.mxu0 0
    %9000 = vmatpush1.bf16.msra.mxu0 0
    %9001 = vmatprep.subr.bf16.mxu0 0
    %9002 = vmatpush1.bf16.msra.mxu0 0
    %9003 = vmatprep.subr.bf16.mxu0 0
    %9004 = vmatpush1.bf16.msra.mxu0 0
    %9005 = vmatprep.subr.bf16.mxu0 0
    %9006 = vmatpush1.bf16.msra.mxu0 0
    %9007 = vmatprep.subr.bf16.mxu0 0
    %9008 = vmatpush1.bf16.msra.mxu0 0
    %9009 = vmatprep.subr.bf16.mxu0 0
    %9010 = vmatpush1.bf16.msra.mxu0 0
    %9011 = vmatprep.subr.bf16.mxu0 0
    %9012 = vmatpush1.bf16.msra.mxu0 0
    %9013 = vmatprep.subr.bf16.mxu0 0
    %9014 = vmatpush1.bf16.msra.mxu0 0
    %9015 = vmatprep.subr.bf16.mxu0 0
    %9016 = vmatpush1.bf16.msra.mxu0 0
    %9017 = vmatprep.subr.bf16.mxu0 0
    %9018 = vmatpush1.bf16.msra.mxu0 0
    %9019 = vmatprep.mubr.bf16.mxu0 0
    %9020 = vmatmul.mubr.bf16.gmra.mrb[0].mxu0 %v8452
    %v9021 = vpop.f32.mrb[0].mxu0
    %v9022 = vadd.f32 %v7598, %v9021
    %v9023 = vpop.f32.mrb[0].mxu0
    %v9024 = vadd.f32 %v7602, %v9023
    %v9025 = vpop.f32.mrb[0].mxu0
    %v9026 = vpop.f32.mrb[0].mxu0
    %9027 = vdwg.mxu0
    %9028 = vmatprep.subr.bf16.mxu0 %v8224
    %9029 = vmatpush1.bf16.msra.mxu0 %v8223
    %9030 = vmatprep.subr.bf16.mxu0 %v8288
    %9031 = vmatpush1.bf16.msra.mxu0 %v8287
    %9032 = vmatprep.subr.bf16.mxu0 0
    %9033 = vmatpush1.bf16.msra.mxu0 0
    %9034 = vmatprep.subr.bf16.mxu0 0
    %9035 = vmatpush1.bf16.msra.mxu0 0
    %9036 = vmatprep.subr.bf16.mxu0 0
    %9037 = vmatpush1.bf16.msra.mxu0 0
    %9038 = vmatprep.subr.bf16.mxu0 0
    %9039 = vmatpush1.bf16.msra.mxu0 0
    %9040 = vmatprep.subr.bf16.mxu0 0
    %9041 = vmatpush1.bf16.msra.mxu0 0
    %9042 = vmatprep.subr.bf16.mxu0 0
    %9043 = vmatpush1.bf16.msra.mxu0 0
    %9044 = vmatprep.subr.bf16.mxu0 0
    %9045 = vmatpush1.bf16.msra.mxu0 0
    %9046 = vmatprep.subr.bf16.mxu0 0
    %9047 = vmatpush1.bf16.msra.mxu0 0
    %9048 = vmatprep.subr.bf16.mxu0 0
    %9049 = vmatpush1.bf16.msra.mxu0 0
    %9050 = vmatprep.subr.bf16.mxu0 0
    %9051 = vmatpush1.bf16.msra.mxu0 0
    %9052 = vmatprep.subr.bf16.mxu0 0
    %9053 = vmatpush1.bf16.msra.mxu0 0
    %9054 = vmatprep.subr.bf16.mxu0 0
    %9055 = vmatpush1.bf16.msra.mxu0 0
    %9056 = vmatprep.subr.bf16.mxu0 0
    %9057 = vmatpush1.bf16.msra.mxu0 0
    %9058 = vmatprep.subr.bf16.mxu0 0
    %9059 = vmatpush1.bf16.msra.mxu0 0
    %9060 = vmatprep.mubr.bf16.mxu0 0
    %9061 = vmatmul.mubr.bf16.gmra.mrb[0].mxu0 %v8452
    %v9062 = vpop.f32.mrb[0].mxu0
    %v9063 = vadd.f32 %v7606, %v9062
    %v9064 = vpop.f32.mrb[0].mxu0
    %v9065 = vadd.f32 %v7610, %v9064
    %v9066 = vpop.f32.mrb[0].mxu0
    %v9067 = vpop.f32.mrb[0].mxu0
    %9068 = vdwg.mxu0
    %9069 = vmatprep.subr.bf16.mxu0 %v8226
    %9070 = vmatpush1.bf16.msra.mxu0 %v8225
    %9071 = vmatprep.subr.bf16.mxu0 %v8290
    %9072 = vmatpush1.bf16.msra.mxu0 %v8289
    %9073 = vmatprep.subr.bf16.mxu0 0
    %9074 = vmatpush1.bf16.msra.mxu0 0
    %9075 = vmatprep.subr.bf16.mxu0 0
    %9076 = vmatpush1.bf16.msra.mxu0 0
    %9077 = vmatprep.subr.bf16.mxu0 0
    %9078 = vmatpush1.bf16.msra.mxu0 0
    %9079 = vmatprep.subr.bf16.mxu0 0
    %9080 = vmatpush1.bf16.msra.mxu0 0
    %9081 = vmatprep.subr.bf16.mxu0 0
    %9082 = vmatpush1.bf16.msra.mxu0 0
    %9083 = vmatprep.subr.bf16.mxu0 0
    %9084 = vmatpush1.bf16.msra.mxu0 0
    %9085 = vmatprep.subr.bf16.mxu0 0
    %9086 = vmatpush1.bf16.msra.mxu0 0
    %9087 = vmatprep.subr.bf16.mxu0 0
    %9088 = vmatpush1.bf16.msra.mxu0 0
    %9089 = vmatprep.subr.bf16.mxu0 0
    %9090 = vmatpush1.bf16.msra.mxu0 0
    %9091 = vmatprep.subr.bf16.mxu0 0
    %9092 = vmatpush1.bf16.msra.mxu0 0
    %9093 = vmatprep.subr.bf16.mxu0 0
    %9094 = vmatpush1.bf16.msra.mxu0 0
    %9095 = vmatprep.subr.bf16.mxu0 0
    %9096 = vmatpush1.bf16.msra.mxu0 0
    %9097 = vmatprep.subr.bf16.mxu0 0
    %9098 = vmatpush1.bf16.msra.mxu0 0
    %9099 = vmatprep.subr.bf16.mxu0 0
    %9100 = vmatpush1.bf16.msra.mxu0 0
    %9101 = vmatprep.mubr.bf16.mxu0 0
    %9102 = vmatmul.mubr.bf16.gmra.mrb[0].mxu0 %v8452
    %v9103 = vpop.f32.mrb[0].mxu0
    %v9104 = vadd.f32 %v7614, %v9103
    %v9105 = vpop.f32.mrb[0].mxu0
    %v9106 = vadd.f32 %v7618, %v9105
    %v9107 = vpop.f32.mrb[0].mxu0
    %v9108 = vpop.f32.mrb[0].mxu0
    %9109 = vdwg.mxu0
    %9110 = vmatprep.subr.bf16.mxu0 %v8228
    %9111 = vmatpush1.bf16.msra.mxu0 %v8227
    %9112 = vmatprep.subr.bf16.mxu0 %v8292
    %9113 = vmatpush1.bf16.msra.mxu0 %v8291
    %9114 = vmatprep.subr.bf16.mxu0 0
    %9115 = vmatpush1.bf16.msra.mxu0 0
    %9116 = vmatprep.subr.bf16.mxu0 0
    %9117 = vmatpush1.bf16.msra.mxu0 0
    %9118 = vmatprep.subr.bf16.mxu0 0
    %9119 = vmatpush1.bf16.msra.mxu0 0
    %9120 = vmatprep.subr.bf16.mxu0 0
    %9121 = vmatpush1.bf16.msra.mxu0 0
    %9122 = vmatprep.subr.bf16.mxu0 0
    %9123 = vmatpush1.bf16.msra.mxu0 0
    %9124 = vmatprep.subr.bf16.mxu0 0
    %9125 = vmatpush1.bf16.msra.mxu0 0
    %9126 = vmatprep.subr.bf16.mxu0 0
    %9127 = vmatpush1.bf16.msra.mxu0 0
    %9128 = vmatprep.subr.bf16.mxu0 0
    %9129 = vmatpush1.bf16.msra.mxu0 0
    %9130 = vmatprep.subr.bf16.mxu0 0
    %9131 = vmatpush1.bf16.msra.mxu0 0
    %9132 = vmatprep.subr.bf16.mxu0 0
    %9133 = vmatpush1.bf16.msra.mxu0 0
    %9134 = vmatprep.subr.bf16.mxu0 0
    %9135 = vmatpush1.bf16.msra.mxu0 0
    %9136 = vmatprep.subr.bf16.mxu0 0
    %9137 = vmatpush1.bf16.msra.mxu0 0
    %9138 = vmatprep.subr.bf16.mxu0 0
    %9139 = vmatpush1.bf16.msra.mxu0 0
    %9140 = vmatprep.subr.bf16.mxu0 0
    %9141 = vmatpush1.bf16.msra.mxu0 0
    %9142 = vmatprep.mubr.bf16.mxu0 0
    %9143 = vmatmul.mubr.bf16.gmra.mrb[0].mxu0 %v8452
    %v9144 = vpop.f32.mrb[0].mxu0
    %v9145 = vadd.f32 %v7622, %v9144
    %v9146 = vpop.f32.mrb[0].mxu0
    %v9147 = vadd.f32 %v7626, %v9146
    %v9148 = vpop.f32.mrb[0].mxu0
    %v9149 = vpop.f32.mrb[0].mxu0
    %9150 = vdwg.mxu0
    %9151 = vmatprep.subr.bf16.mxu0 %v8230
    %9152 = vmatpush1.bf16.msra.mxu0 %v8229
    %9153 = vmatprep.subr.bf16.mxu0 %v8294
    %9154 = vmatpush1.bf16.msra.mxu0 %v8293
    %9155 = vmatprep.subr.bf16.mxu0 0
    %9156 = vmatpush1.bf16.msra.mxu0 0
    %9157 = vmatprep.subr.bf16.mxu0 0
    %9158 = vmatpush1.bf16.msra.mxu0 0
    %9159 = vmatprep.subr.bf16.mxu0 0
    %9160 = vmatpush1.bf16.msra.mxu0 0
    %9161 = vmatprep.subr.bf16.mxu0 0
    %9162 = vmatpush1.bf16.msra.mxu0 0
    %9163 = vmatprep.subr.bf16.mxu0 0
    %9164 = vmatpush1.bf16.msra.mxu0 0
    %9165 = vmatprep.subr.bf16.mxu0 0
    %9166 = vmatpush1.bf16.msra.mxu0 0
    %9167 = vmatprep.subr.bf16.mxu0 0
    %9168 = vmatpush1.bf16.msra.mxu0 0
    %9169 = vmatprep.subr.bf16.mxu0 0
    %9170 = vmatpush1.bf16.msra.mxu0 0
    %9171 = vmatprep.subr.bf16.mxu0 0
    %9172 = vmatpush1.bf16.msra.mxu0 0
    %9173 = vmatprep.subr.bf16.mxu0 0
    %9174 = vmatpush1.bf16.msra.mxu0 0
    %9175 = vmatprep.subr.bf16.mxu0 0
    %9176 = vmatpush1.bf16.msra.mxu0 0
    %9177 = vmatprep.subr.bf16.mxu0 0
    %9178 = vmatpush1.bf16.msra.mxu0 0
    %9179 = vmatprep.subr.bf16.mxu0 0
    %9180 = vmatpush1.bf16.msra.mxu0 0
    %9181 = vmatprep.subr.bf16.mxu0 0
    %9182 = vmatpush1.bf16.msra.mxu0 0
    %9183 = vmatprep.mubr.bf16.mxu0 0
    %9184 = vmatmul.mubr.bf16.gmra.mrb[0].mxu0 %v8452
    %v9185 = vpop.f32.mrb[0].mxu0
    %v9186 = vadd.f32 %v7630, %v9185
    %v9187 = vpop.f32.mrb[0].mxu0
    %v9188 = vadd.f32 %v7634, %v9187
    %v9189 = vpop.f32.mrb[0].mxu0
    %v9190 = vpop.f32.mrb[0].mxu0
    %9191 = vdwg.mxu0
    %9192 = vmatprep.subr.bf16.mxu0 %v8232
    %9193 = vmatpush1.bf16.msra.mxu0 %v8231
    %9194 = vmatprep.subr.bf16.mxu0 %v8296
    %9195 = vmatpush1.bf16.msra.mxu0 %v8295
    %9196 = vmatprep.subr.bf16.mxu0 0
    %9197 = vmatpush1.bf16.msra.mxu0 0
    %9198 = vmatprep.subr.bf16.mxu0 0
    %9199 = vmatpush1.bf16.msra.mxu0 0
    %9200 = vmatprep.subr.bf16.mxu0 0
    %9201 = vmatpush1.bf16.msra.mxu0 0
    %9202 = vmatprep.subr.bf16.mxu0 0
    %9203 = vmatpush1.bf16.msra.mxu0 0
    %9204 = vmatprep.subr.bf16.mxu0 0
    %9205 = vmatpush1.bf16.msra.mxu0 0
    %9206 = vmatprep.subr.bf16.mxu0 0
    %9207 = vmatpush1.bf16.msra.mxu0 0
    %9208 = vmatprep.subr.bf16.mxu0 0
    %9209 = vmatpush1.bf16.msra.mxu0 0
    %9210 = vmatprep.subr.bf16.mxu0 0
    %9211 = vmatpush1.bf16.msra.mxu0 0
    %9212 = vmatprep.subr.bf16.mxu0 0
    %9213 = vmatpush1.bf16.msra.mxu0 0
    %9214 = vmatprep.subr.bf16.mxu0 0
    %9215 = vmatpush1.bf16.msra.mxu0 0
    %9216 = vmatprep.subr.bf16.mxu0 0
    %9217 = vmatpush1.bf16.msra.mxu0 0
    %9218 = vmatprep.subr.bf16.mxu0 0
    %9219 = vmatpush1.bf16.msra.mxu0 0
    %9220 = vmatprep.subr.bf16.mxu0 0
    %9221 = vmatpush1.bf16.msra.mxu0 0
    %9222 = vmatprep.subr.bf16.mxu0 0
    %9223 = vmatpush1.bf16.msra.mxu0 0
    %9224 = vmatprep.mubr.bf16.mxu0 0
    %9225 = vmatmul.mubr.bf16.gmra.mrb[0].mxu0 %v8452
    %v9226 = vpop.f32.mrb[0].mxu0
    %v9227 = vadd.f32 %v7638, %v9226
    %v9228 = vpop.f32.mrb[0].mxu0
    %v9229 = vadd.f32 %v7642, %v9228
    %v9230 = vpop.f32.mrb[0].mxu0
    %v9231 = vpop.f32.mrb[0].mxu0
    %9232 = vdwg.mxu0
    %9233 = vmatprep.subr.bf16.mxu0 %v8234
    %9234 = vmatpush1.bf16.msra.mxu0 %v8233
    %9235 = vmatprep.subr.bf16.mxu0 %v8298
    %9236 = vmatpush1.bf16.msra.mxu0 %v8297
    %9237 = vmatprep.subr.bf16.mxu0 0
    %9238 = vmatpush1.bf16.msra.mxu0 0
    %9239 = vmatprep.subr.bf16.mxu0 0
    %9240 = vmatpush1.bf16.msra.mxu0 0
    %9241 = vmatprep.subr.bf16.mxu0 0
    %9242 = vmatpush1.bf16.msra.mxu0 0
    %9243 = vmatprep.subr.bf16.mxu0 0
    %9244 = vmatpush1.bf16.msra.mxu0 0
    %9245 = vmatprep.subr.bf16.mxu0 0
    %9246 = vmatpush1.bf16.msra.mxu0 0
    %9247 = vmatprep.subr.bf16.mxu0 0
    %9248 = vmatpush1.bf16.msra.mxu0 0
    %9249 = vmatprep.subr.bf16.mxu0 0
    %9250 = vmatpush1.bf16.msra.mxu0 0
    %9251 = vmatprep.subr.bf16.mxu0 0
    %9252 = vmatpush1.bf16.msra.mxu0 0
    %9253 = vmatprep.subr.bf16.mxu0 0
    %9254 = vmatpush1.bf16.msra.mxu0 0
    %9255 = vmatprep.subr.bf16.mxu0 0
    %9256 = vmatpush1.bf16.msra.mxu0 0
    %9257 = vmatprep.subr.bf16.mxu0 0
    %9258 = vmatpush1.bf16.msra.mxu0 0
    %9259 = vmatprep.subr.bf16.mxu0 0
    %9260 = vmatpush1.bf16.msra.mxu0 0
    %9261 = vmatprep.subr.bf16.mxu0 0
    %9262 = vmatpush1.bf16.msra.mxu0 0
    %9263 = vmatprep.subr.bf16.mxu0 0
    %9264 = vmatpush1.bf16.msra.mxu0 0
    %9265 = vmatprep.mubr.bf16.mxu0 0
    %9266 = vmatmul.mubr.bf16.gmra.mrb[0].mxu0 %v8452
    %v9267 = vpop.f32.mrb[0].mxu0
    %v9268 = vadd.f32 %v7646, %v9267
    %v9269 = vpop.f32.mrb[0].mxu0
    %v9270 = vadd.f32 %v7650, %v9269
    %v9271 = vpop.f32.mrb[0].mxu0
    %v9272 = vpop.f32.mrb[0].mxu0
    %9273 = vdwg.mxu0
    %9274 = vmatprep.subr.bf16.mxu0 %v8236
    %9275 = vmatpush1.bf16.msra.mxu0 %v8235
    %9276 = vmatprep.subr.bf16.mxu0 %v8300
    %9277 = vmatpush1.bf16.msra.mxu0 %v8299
    %9278 = vmatprep.subr.bf16.mxu0 0
    %9279 = vmatpush1.bf16.msra.mxu0 0
    %9280 = vmatprep.subr.bf16.mxu0 0
    %9281 = vmatpush1.bf16.msra.mxu0 0
    %9282 = vmatprep.subr.bf16.mxu0 0
    %9283 = vmatpush1.bf16.msra.mxu0 0
    %9284 = vmatprep.subr.bf16.mxu0 0
    %9285 = vmatpush1.bf16.msra.mxu0 0
    %9286 = vmatprep.subr.bf16.mxu0 0
    %9287 = vmatpush1.bf16.msra.mxu0 0
    %9288 = vmatprep.subr.bf16.mxu0 0
    %9289 = vmatpush1.bf16.msra.mxu0 0
    %9290 = vmatprep.subr.bf16.mxu0 0
    %9291 = vmatpush1.bf16.msra.mxu0 0
    %9292 = vmatprep.subr.bf16.mxu0 0
    %9293 = vmatpush1.bf16.msra.mxu0 0
    %9294 = vmatprep.subr.bf16.mxu0 0
    %9295 = vmatpush1.bf16.msra.mxu0 0
    %9296 = vmatprep.subr.bf16.mxu0 0
    %9297 = vmatpush1.bf16.msra.mxu0 0
    %9298 = vmatprep.subr.bf16.mxu0 0
    %9299 = vmatpush1.bf16.msra.mxu0 0
    %9300 = vmatprep.subr.bf16.mxu0 0
    %9301 = vmatpush1.bf16.msra.mxu0 0
    %9302 = vmatprep.subr.bf16.mxu0 0
    %9303 = vmatpush1.bf16.msra.mxu0 0
    %9304 = vmatprep.subr.bf16.mxu0 0
    %9305 = vmatpush1.bf16.msra.mxu0 0
    %9306 = vmatprep.mubr.bf16.mxu0 0
    %9307 = vmatmul.mubr.bf16.gmra.mrb[0].mxu0 %v8452
    %v9308 = vpop.f32.mrb[0].mxu0
    %v9309 = vadd.f32 %v7654, %v9308
    %v9310 = vpop.f32.mrb[0].mxu0
    %v9311 = vadd.f32 %v7658, %v9310
    %v9312 = vpop.f32.mrb[0].mxu0
    %v9313 = vpop.f32.mrb[0].mxu0
    %9314 = vdwg.mxu0
    %9315 = vmatprep.subr.bf16.mxu0 %v8238
    %9316 = vmatpush1.bf16.msra.mxu0 %v8237
    %9317 = vmatprep.subr.bf16.mxu0 %v8302
    %9318 = vmatpush1.bf16.msra.mxu0 %v8301
    %9319 = vmatprep.subr.bf16.mxu0 0
    %9320 = vmatpush1.bf16.msra.mxu0 0
    %9321 = vmatprep.subr.bf16.mxu0 0
    %9322 = vmatpush1.bf16.msra.mxu0 0
    %9323 = vmatprep.subr.bf16.mxu0 0
    %9324 = vmatpush1.bf16.msra.mxu0 0
    %9325 = vmatprep.subr.bf16.mxu0 0
    %9326 = vmatpush1.bf16.msra.mxu0 0
    %9327 = vmatprep.subr.bf16.mxu0 0
    %9328 = vmatpush1.bf16.msra.mxu0 0
    %9329 = vmatprep.subr.bf16.mxu0 0
    %9330 = vmatpush1.bf16.msra.mxu0 0
    %9331 = vmatprep.subr.bf16.mxu0 0
    %9332 = vmatpush1.bf16.msra.mxu0 0
    %9333 = vmatprep.subr.bf16.mxu0 0
    %9334 = vmatpush1.bf16.msra.mxu0 0
    %9335 = vmatprep.subr.bf16.mxu0 0
    %9336 = vmatpush1.bf16.msra.mxu0 0
    %9337 = vmatprep.subr.bf16.mxu0 0
    %9338 = vmatpush1.bf16.msra.mxu0 0
    %9339 = vmatprep.subr.bf16.mxu0 0
    %9340 = vmatpush1.bf16.msra.mxu0 0
    %9341 = vmatprep.subr.bf16.mxu0 0
    %9342 = vmatpush1.bf16.msra.mxu0 0
    %9343 = vmatprep.subr.bf16.mxu0 0
    %9344 = vmatpush1.bf16.msra.mxu0 0
    %9345 = vmatprep.subr.bf16.mxu0 0
    %9346 = vmatpush1.bf16.msra.mxu0 0
    %9347 = vmatprep.mubr.bf16.mxu0 0
    %9348 = vmatmul.mubr.bf16.gmra.mrb[0].mxu0 %v8452
    %v9349 = vpop.f32.mrb[0].mxu0
    %v9350 = vadd.f32 %v7662, %v9349
    %v9351 = vpop.f32.mrb[0].mxu0
    %v9352 = vadd.f32 %v7666, %v9351
    %v9353 = vpop.f32.mrb[0].mxu0
    %v9354 = vpop.f32.mrb[0].mxu0
    %9355 = vdwg.mxu0
    %9356 = vmatprep.subr.bf16.mxu0 %v8240
    %9357 = vmatpush1.bf16.msra.mxu0 %v8239
    %9358 = vmatprep.subr.bf16.mxu0 %v8304
    %9359 = vmatpush1.bf16.msra.mxu0 %v8303
    %9360 = vmatprep.subr.bf16.mxu0 0
    %9361 = vmatpush1.bf16.msra.mxu0 0
    %9362 = vmatprep.subr.bf16.mxu0 0
    %9363 = vmatpush1.bf16.msra.mxu0 0
    %9364 = vmatprep.subr.bf16.mxu0 0
    %9365 = vmatpush1.bf16.msra.mxu0 0
    %9366 = vmatprep.subr.bf16.mxu0 0
    %9367 = vmatpush1.bf16.msra.mxu0 0
    %9368 = vmatprep.subr.bf16.mxu0 0
    %9369 = vmatpush1.bf16.msra.mxu0 0
    %9370 = vmatprep.subr.bf16.mxu0 0
    %9371 = vmatpush1.bf16.msra.mxu0 0
    %9372 = vmatprep.subr.bf16.mxu0 0
    %9373 = vmatpush1.bf16.msra.mxu0 0
    %9374 = vmatprep.subr.bf16.mxu0 0
    %9375 = vmatpush1.bf16.msra.mxu0 0
    %9376 = vmatprep.subr.bf16.mxu0 0
    %9377 = vmatpush1.bf16.msra.mxu0 0
    %9378 = vmatprep.subr.bf16.mxu0 0
    %9379 = vmatpush1.bf16.msra.mxu0 0
    %9380 = vmatprep.subr.bf16.mxu0 0
    %9381 = vmatpush1.bf16.msra.mxu0 0
    %9382 = vmatprep.subr.bf16.mxu0 0
    %9383 = vmatpush1.bf16.msra.mxu0 0
    %9384 = vmatprep.subr.bf16.mxu0 0
    %9385 = vmatpush1.bf16.msra.mxu0 0
    %9386 = vmatprep.subr.bf16.mxu0 0
    %9387 = vmatpush1.bf16.msra.mxu0 0
    %9388 = vmatprep.mubr.bf16.mxu0 0
    %9389 = vmatmul.mubr.bf16.gmra.mrb[0].mxu0 %v8452
    %v9390 = vpop.f32.mrb[0].mxu0
    %v9391 = vadd.f32 %v7670, %v9390
    %v9392 = vpop.f32.mrb[0].mxu0
    %v9393 = vadd.f32 %v7674, %v9392
    %v9394 = vpop.f32.mrb[0].mxu0
    %v9395 = vpop.f32.mrb[0].mxu0
    %9396 = vdwg.mxu0
    %9397 = vmatprep.subr.bf16.mxu0 %v8242
    %9398 = vmatpush1.bf16.msra.mxu0 %v8241
    %9399 = vmatprep.subr.bf16.mxu0 %v8306
    %9400 = vmatpush1.bf16.msra.mxu0 %v8305
    %9401 = vmatprep.subr.bf16.mxu0 0
    %9402 = vmatpush1.bf16.msra.mxu0 0
    %9403 = vmatprep.subr.bf16.mxu0 0
    %9404 = vmatpush1.bf16.msra.mxu0 0
    %9405 = vmatprep.subr.bf16.mxu0 0
    %9406 = vmatpush1.bf16.msra.mxu0 0
    %9407 = vmatprep.subr.bf16.mxu0 0
    %9408 = vmatpush1.bf16.msra.mxu0 0
    %9409 = vmatprep.subr.bf16.mxu0 0
    %9410 = vmatpush1.bf16.msra.mxu0 0
    %9411 = vmatprep.subr.bf16.mxu0 0
    %9412 = vmatpush1.bf16.msra.mxu0 0
    %9413 = vmatprep.subr.bf16.mxu0 0
    %9414 = vmatpush1.bf16.msra.mxu0 0
    %9415 = vmatprep.subr.bf16.mxu0 0
    %9416 = vmatpush1.bf16.msra.mxu0 0
    %9417 = vmatprep.subr.bf16.mxu0 0
    %9418 = vmatpush1.bf16.msra.mxu0 0
    %9419 = vmatprep.subr.bf16.mxu0 0
    %9420 = vmatpush1.bf16.msra.mxu0 0
    %9421 = vmatprep.subr.bf16.mxu0 0
    %9422 = vmatpush1.bf16.msra.mxu0 0
    %9423 = vmatprep.subr.bf16.mxu0 0
    %9424 = vmatpush1.bf16.msra.mxu0 0
    %9425 = vmatprep.subr.bf16.mxu0 0
    %9426 = vmatpush1.bf16.msra.mxu0 0
    %9427 = vmatprep.subr.bf16.mxu0 0
    %9428 = vmatpush1.bf16.msra.mxu0 0
    %9429 = vmatprep.mubr.bf16.mxu0 0
    %9430 = vmatmul.mubr.bf16.gmra.mrb[0].mxu0 %v8452
    %v9431 = vpop.f32.mrb[0].mxu0
    %v9432 = vadd.f32 %v7678, %v9431
    %v9433 = vpop.f32.mrb[0].mxu0
    %v9434 = vadd.f32 %v7682, %v9433
    %v9435 = vpop.f32.mrb[0].mxu0
    %v9436 = vpop.f32.mrb[0].mxu0
    %9437 = vdwg.mxu0
    %9438 = vmatprep.subr.bf16.mxu0 %v8244
    %9439 = vmatpush1.bf16.msra.mxu0 %v8243
    %9440 = vmatprep.subr.bf16.mxu0 %v8308
    %9441 = vmatpush1.bf16.msra.mxu0 %v8307
    %9442 = vmatprep.subr.bf16.mxu0 0
    %9443 = vmatpush1.bf16.msra.mxu0 0
    %9444 = vmatprep.subr.bf16.mxu0 0
    %9445 = vmatpush1.bf16.msra.mxu0 0
    %9446 = vmatprep.subr.bf16.mxu0 0
    %9447 = vmatpush1.bf16.msra.mxu0 0
    %9448 = vmatprep.subr.bf16.mxu0 0
    %9449 = vmatpush1.bf16.msra.mxu0 0
    %9450 = vmatprep.subr.bf16.mxu0 0
    %9451 = vmatpush1.bf16.msra.mxu0 0
    %9452 = vmatprep.subr.bf16.mxu0 0
    %9453 = vmatpush1.bf16.msra.mxu0 0
    %9454 = vmatprep.subr.bf16.mxu0 0
    %9455 = vmatpush1.bf16.msra.mxu0 0
    %9456 = vmatprep.subr.bf16.mxu0 0
    %9457 = vmatpush1.bf16.msra.mxu0 0
    %9458 = vmatprep.subr.bf16.mxu0 0
    %9459 = vmatpush1.bf16.msra.mxu0 0
    %9460 = vmatprep.subr.bf16.mxu0 0
    %9461 = vmatpush1.bf16.msra.mxu0 0
    %9462 = vmatprep.subr.bf16.mxu0 0
    %9463 = vmatpush1.bf16.msra.mxu0 0
    %9464 = vmatprep.subr.bf16.mxu0 0
    %9465 = vmatpush1.bf16.msra.mxu0 0
    %9466 = vmatprep.subr.bf16.mxu0 0
    %9467 = vmatpush1.bf16.msra.mxu0 0
    %9468 = vmatprep.subr.bf16.mxu0 0
    %9469 = vmatpush1.bf16.msra.mxu0 0
    %9470 = vmatprep.mubr.bf16.mxu0 0
    %9471 = vmatmul.mubr.bf16.gmra.mrb[0].mxu0 %v8452
    %v9472 = vpop.f32.mrb[0].mxu0
    %v9473 = vadd.f32 %v7686, %v9472
    %v9474 = vpop.f32.mrb[0].mxu0
    %v9475 = vadd.f32 %v7690, %v9474
    %v9476 = vpop.f32.mrb[0].mxu0
    %v9477 = vpop.f32.mrb[0].mxu0
    %9478 = vdwg.mxu0
    %9479 = vmatprep.subr.bf16.mxu0 %v8246
    %9480 = vmatpush1.bf16.msra.mxu0 %v8245
    %9481 = vmatprep.subr.bf16.mxu0 %v8310
    %9482 = vmatpush1.bf16.msra.mxu0 %v8309
    %9483 = vmatprep.subr.bf16.mxu0 0
    %9484 = vmatpush1.bf16.msra.mxu0 0
    %9485 = vmatprep.subr.bf16.mxu0 0
    %9486 = vmatpush1.bf16.msra.mxu0 0
    %9487 = vmatprep.subr.bf16.mxu0 0
    %9488 = vmatpush1.bf16.msra.mxu0 0
    %9489 = vmatprep.subr.bf16.mxu0 0
    %9490 = vmatpush1.bf16.msra.mxu0 0
    %9491 = vmatprep.subr.bf16.mxu0 0
    %9492 = vmatpush1.bf16.msra.mxu0 0
    %9493 = vmatprep.subr.bf16.mxu0 0
    %9494 = vmatpush1.bf16.msra.mxu0 0
    %9495 = vmatprep.subr.bf16.mxu0 0
    %9496 = vmatpush1.bf16.msra.mxu0 0
    %9497 = vmatprep.subr.bf16.mxu0 0
    %9498 = vmatpush1.bf16.msra.mxu0 0
    %9499 = vmatprep.subr.bf16.mxu0 0
    %9500 = vmatpush1.bf16.msra.mxu0 0
    %9501 = vmatprep.subr.bf16.mxu0 0
    %9502 = vmatpush1.bf16.msra.mxu0 0
    %9503 = vmatprep.subr.bf16.mxu0 0
    %9504 = vmatpush1.bf16.msra.mxu0 0
    %9505 = vmatprep.subr.bf16.mxu0 0
    %9506 = vmatpush1.bf16.msra.mxu0 0
    %9507 = vmatprep.subr.bf16.mxu0 0
    %9508 = vmatpush1.bf16.msra.mxu0 0
    %9509 = vmatprep.subr.bf16.mxu0 0
    %9510 = vmatpush1.bf16.msra.mxu0 0
    %9511 = vmatprep.mubr.bf16.mxu0 0
    %9512 = vmatmul.mubr.bf16.gmra.mrb[0].mxu0 %v8452
    %v9513 = vpop.f32.mrb[0].mxu0
    %v9514 = vadd.f32 %v7694, %v9513
    %v9515 = vpop.f32.mrb[0].mxu0
    %v9516 = vadd.f32 %v7698, %v9515
    %v9517 = vpop.f32.mrb[0].mxu0
    %v9518 = vpop.f32.mrb[0].mxu0
    %9519 = vdwg.mxu0
    %9520 = vmatprep.subr.bf16.mxu0 %v8248
    %9521 = vmatpush1.bf16.msra.mxu0 %v8247
    %9522 = vmatprep.subr.bf16.mxu0 %v8312
    %9523 = vmatpush1.bf16.msra.mxu0 %v8311
    %9524 = vmatprep.subr.bf16.mxu0 0
    %9525 = vmatpush1.bf16.msra.mxu0 0
    %9526 = vmatprep.subr.bf16.mxu0 0
    %9527 = vmatpush1.bf16.msra.mxu0 0
    %9528 = vmatprep.subr.bf16.mxu0 0
    %9529 = vmatpush1.bf16.msra.mxu0 0
    %9530 = vmatprep.subr.bf16.mxu0 0
    %9531 = vmatpush1.bf16.msra.mxu0 0
    %9532 = vmatprep.subr.bf16.mxu0 0
    %9533 = vmatpush1.bf16.msra.mxu0 0
    %9534 = vmatprep.subr.bf16.mxu0 0
    %9535 = vmatpush1.bf16.msra.mxu0 0
    %9536 = vmatprep.subr.bf16.mxu0 0
    %9537 = vmatpush1.bf16.msra.mxu0 0
    %9538 = vmatprep.subr.bf16.mxu0 0
    %9539 = vmatpush1.bf16.msra.mxu0 0
    %9540 = vmatprep.subr.bf16.mxu0 0
    %9541 = vmatpush1.bf16.msra.mxu0 0
    %9542 = vmatprep.subr.bf16.mxu0 0
    %9543 = vmatpush1.bf16.msra.mxu0 0
    %9544 = vmatprep.subr.bf16.mxu0 0
    %9545 = vmatpush1.bf16.msra.mxu0 0
    %9546 = vmatprep.subr.bf16.mxu0 0
    %9547 = vmatpush1.bf16.msra.mxu0 0
    %9548 = vmatprep.subr.bf16.mxu0 0
    %9549 = vmatpush1.bf16.msra.mxu0 0
    %9550 = vmatprep.subr.bf16.mxu0 0
    %9551 = vmatpush1.bf16.msra.mxu0 0
    %9552 = vmatprep.mubr.bf16.mxu0 0
    %9553 = vmatmul.mubr.bf16.gmra.mrb[0].mxu0 %v8452
    %v9554 = vpop.f32.mrb[0].mxu0
    %v9555 = vadd.f32 %v7702, %v9554
    %v9556 = vpop.f32.mrb[0].mxu0
    %v9557 = vadd.f32 %v7706, %v9556
    %v9558 = vpop.f32.mrb[0].mxu0
    %v9559 = vpop.f32.mrb[0].mxu0
    %9560 = vdwg.mxu0
    %9561 = vmatprep.subr.bf16.mxu0 %v8250
    %9562 = vmatpush1.bf16.msra.mxu0 %v8249
    %9563 = vmatprep.subr.bf16.mxu0 %v8314
    %9564 = vmatpush1.bf16.msra.mxu0 %v8313
    %9565 = vmatprep.subr.bf16.mxu0 0
    %9566 = vmatpush1.bf16.msra.mxu0 0
    %9567 = vmatprep.subr.bf16.mxu0 0
    %9568 = vmatpush1.bf16.msra.mxu0 0
    %9569 = vmatprep.subr.bf16.mxu0 0
    %9570 = vmatpush1.bf16.msra.mxu0 0
    %9571 = vmatprep.subr.bf16.mxu0 0
    %9572 = vmatpush1.bf16.msra.mxu0 0
    %9573 = vmatprep.subr.bf16.mxu0 0
    %9574 = vmatpush1.bf16.msra.mxu0 0
    %9575 = vmatprep.subr.bf16.mxu0 0
    %9576 = vmatpush1.bf16.msra.mxu0 0
    %9577 = vmatprep.subr.bf16.mxu0 0
    %9578 = vmatpush1.bf16.msra.mxu0 0
    %9579 = vmatprep.subr.bf16.mxu0 0
    %9580 = vmatpush1.bf16.msra.mxu0 0
    %9581 = vmatprep.subr.bf16.mxu0 0
    %9582 = vmatpush1.bf16.msra.mxu0 0
    %9583 = vmatprep.subr.bf16.mxu0 0
    %9584 = vmatpush1.bf16.msra.mxu0 0
    %9585 = vmatprep.subr.bf16.mxu0 0
    %9586 = vmatpush1.bf16.msra.mxu0 0
    %9587 = vmatprep.subr.bf16.mxu0 0
    %9588 = vmatpush1.bf16.msra.mxu0 0
    %9589 = vmatprep.subr.bf16.mxu0 0
    %9590 = vmatpush1.bf16.msra.mxu0 0
    %9591 = vmatprep.subr.bf16.mxu0 0
    %9592 = vmatpush1.bf16.msra.mxu0 0
    %9593 = vmatprep.mubr.bf16.mxu0 0
    %9594 = vmatmul.mubr.bf16.gmra.mrb[0].mxu0 %v8452
    %v9595 = vpop.f32.mrb[0].mxu0
    %v9596 = vadd.f32 %v7710, %v9595
    %v9597 = vpop.f32.mrb[0].mxu0
    %v9598 = vadd.f32 %v7714, %v9597
    %v9599 = vpop.f32.mrb[0].mxu0
    %v9600 = vpop.f32.mrb[0].mxu0
    %9601 = vdwg.mxu0
    %9602 = vmatprep.subr.bf16.mxu0 %v8252
    %9603 = vmatpush1.bf16.msra.mxu0 %v8251
    %9604 = vmatprep.subr.bf16.mxu0 %v8316
    %9605 = vmatpush1.bf16.msra.mxu0 %v8315
    %9606 = vmatprep.subr.bf16.mxu0 0
    %9607 = vmatpush1.bf16.msra.mxu0 0
    %9608 = vmatprep.subr.bf16.mxu0 0
    %9609 = vmatpush1.bf16.msra.mxu0 0
    %9610 = vmatprep.subr.bf16.mxu0 0
    %9611 = vmatpush1.bf16.msra.mxu0 0
    %9612 = vmatprep.subr.bf16.mxu0 0
    %9613 = vmatpush1.bf16.msra.mxu0 0
    %9614 = vmatprep.subr.bf16.mxu0 0
    %9615 = vmatpush1.bf16.msra.mxu0 0
    %9616 = vmatprep.subr.bf16.mxu0 0
    %9617 = vmatpush1.bf16.msra.mxu0 0
    %9618 = vmatprep.subr.bf16.mxu0 0
    %9619 = vmatpush1.bf16.msra.mxu0 0
    %9620 = vmatprep.subr.bf16.mxu0 0
    %9621 = vmatpush1.bf16.msra.mxu0 0
    %9622 = vmatprep.subr.bf16.mxu0 0
    %9623 = vmatpush1.bf16.msra.mxu0 0
    %9624 = vmatprep.subr.bf16.mxu0 0
    %9625 = vmatpush1.bf16.msra.mxu0 0
    %9626 = vmatprep.subr.bf16.mxu0 0
    %9627 = vmatpush1.bf16.msra.mxu0 0
    %9628 = vmatprep.subr.bf16.mxu0 0
    %9629 = vmatpush1.bf16.msra.mxu0 0
    %9630 = vmatprep.subr.bf16.mxu0 0
    %9631 = vmatpush1.bf16.msra.mxu0 0
    %9632 = vmatprep.subr.bf16.mxu0 0
    %9633 = vmatpush1.bf16.msra.mxu0 0
    %9634 = vmatprep.mubr.bf16.mxu0 0
    %9635 = vmatmul.mubr.bf16.gmra.mrb[0].mxu0 %v8452
    %v9636 = vpop.f32.mrb[0].mxu0
    %v9637 = vadd.f32 %v7718, %v9636
    %v9638 = vpop.f32.mrb[0].mxu0
    %v9639 = vadd.f32 %v7722, %v9638
    %v9640 = vpop.f32.mrb[0].mxu0
    %v9641 = vpop.f32.mrb[0].mxu0
    %9642 = vdwg.mxu0
    %9643 = vmatprep.subr.bf16.mxu0 %v8254
    %9644 = vmatpush1.bf16.msra.mxu0 %v8253
    %9645 = vmatprep.subr.bf16.mxu0 %v8318
    %9646 = vmatpush1.bf16.msra.mxu0 %v8317
    %9647 = vmatprep.subr.bf16.mxu0 0
    %9648 = vmatpush1.bf16.msra.mxu0 0
    %9649 = vmatprep.subr.bf16.mxu0 0
    %9650 = vmatpush1.bf16.msra.mxu0 0
    %9651 = vmatprep.subr.bf16.mxu0 0
    %9652 = vmatpush1.bf16.msra.mxu0 0
    %9653 = vmatprep.subr.bf16.mxu0 0
    %9654 = vmatpush1.bf16.msra.mxu0 0
    %9655 = vmatprep.subr.bf16.mxu0 0
    %9656 = vmatpush1.bf16.msra.mxu0 0
    %9657 = vmatprep.subr.bf16.mxu0 0
    %9658 = vmatpush1.bf16.msra.mxu0 0
    %9659 = vmatprep.subr.bf16.mxu0 0
    %9660 = vmatpush1.bf16.msra.mxu0 0
    %9661 = vmatprep.subr.bf16.mxu0 0
    %9662 = vmatpush1.bf16.msra.mxu0 0
    %9663 = vmatprep.subr.bf16.mxu0 0
    %9664 = vmatpush1.bf16.msra.mxu0 0
    %9665 = vmatprep.subr.bf16.mxu0 0
    %9666 = vmatpush1.bf16.msra.mxu0 0
    %9667 = vmatprep.subr.bf16.mxu0 0
    %9668 = vmatpush1.bf16.msra.mxu0 0
    %9669 = vmatprep.subr.bf16.mxu0 0
    %9670 = vmatpush1.bf16.msra.mxu0 0
    %9671 = vmatprep.subr.bf16.mxu0 0
    %9672 = vmatpush1.bf16.msra.mxu0 0
    %9673 = vmatprep.subr.bf16.mxu0 0
    %9674 = vmatpush1.bf16.msra.mxu0 0
    %9675 = vmatprep.mubr.bf16.mxu0 0
    %9676 = vmatmul.mubr.bf16.gmra.mrb[0].mxu0 %v8452
    %v9677 = vpop.f32.mrb[0].mxu0
    %v9678 = vadd.f32 %v7726, %v9677
    %v9679 = vpop.f32.mrb[0].mxu0
    %v9680 = vadd.f32 %v7730, %v9679
    %v9681 = vpop.f32.mrb[0].mxu0
    %v9682 = vpop.f32.mrb[0].mxu0
    %9683 = vdwg.mxu0
    %9684 = vmatprep.subr.bf16.mxu0 %v8256
    %9685 = vmatpush1.bf16.msra.mxu0 %v8255
    %9686 = vmatprep.subr.bf16.mxu0 %v8320
    %9687 = vmatpush1.bf16.msra.mxu0 %v8319
    %9688 = vmatprep.subr.bf16.mxu0 0
    %9689 = vmatpush1.bf16.msra.mxu0 0
    %9690 = vmatprep.subr.bf16.mxu0 0
    %9691 = vmatpush1.bf16.msra.mxu0 0
    %9692 = vmatprep.subr.bf16.mxu0 0
    %9693 = vmatpush1.bf16.msra.mxu0 0
    %9694 = vmatprep.subr.bf16.mxu0 0
    %9695 = vmatpush1.bf16.msra.mxu0 0
    %9696 = vmatprep.subr.bf16.mxu0 0
    %9697 = vmatpush1.bf16.msra.mxu0 0
    %9698 = vmatprep.subr.bf16.mxu0 0
    %9699 = vmatpush1.bf16.msra.mxu0 0
    %9700 = vmatprep.subr.bf16.mxu0 0
    %9701 = vmatpush1.bf16.msra.mxu0 0
    %9702 = vmatprep.subr.bf16.mxu0 0
    %9703 = vmatpush1.bf16.msra.mxu0 0
    %9704 = vmatprep.subr.bf16.mxu0 0
    %9705 = vmatpush1.bf16.msra.mxu0 0
    %9706 = vmatprep.subr.bf16.mxu0 0
    %9707 = vmatpush1.bf16.msra.mxu0 0
    %9708 = vmatprep.subr.bf16.mxu0 0
    %9709 = vmatpush1.bf16.msra.mxu0 0
    %9710 = vmatprep.subr.bf16.mxu0 0
    %9711 = vmatpush1.bf16.msra.mxu0 0
    %9712 = vmatprep.subr.bf16.mxu0 0
    %9713 = vmatpush1.bf16.msra.mxu0 0
    %9714 = vmatprep.subr.bf16.mxu0 0
    %9715 = vmatpush1.bf16.msra.mxu0 0
    %9716 = vmatprep.mubr.bf16.mxu0 0
    %9717 = vmatmul.mubr.bf16.gmra.mrb[0].mxu0 %v8452
    %v9718 = vpop.f32.mrb[0].mxu0
    %v9719 = vadd.f32 %v7734, %v9718
    %v9720 = vpop.f32.mrb[0].mxu0
    %v9721 = vadd.f32 %v7738, %v9720
    %v9722 = vpop.f32.mrb[0].mxu0
    %v9723 = vpop.f32.mrb[0].mxu0
    %9724 = vdwg.mxu0
    %9725 = vmatprep.subr.bf16.mxu0 %v8258
    %9726 = vmatpush1.bf16.msra.mxu0 %v8257
    %9727 = vmatprep.subr.bf16.mxu0 %v8322
    %9728 = vmatpush1.bf16.msra.mxu0 %v8321
    %9729 = vmatprep.subr.bf16.mxu0 0
    %9730 = vmatpush1.bf16.msra.mxu0 0
    %9731 = vmatprep.subr.bf16.mxu0 0
    %9732 = vmatpush1.bf16.msra.mxu0 0
    %9733 = vmatprep.subr.bf16.mxu0 0
    %9734 = vmatpush1.bf16.msra.mxu0 0
    %9735 = vmatprep.subr.bf16.mxu0 0
    %9736 = vmatpush1.bf16.msra.mxu0 0
    %9737 = vmatprep.subr.bf16.mxu0 0
    %9738 = vmatpush1.bf16.msra.mxu0 0
    %9739 = vmatprep.subr.bf16.mxu0 0
    %9740 = vmatpush1.bf16.msra.mxu0 0
    %9741 = vmatprep.subr.bf16.mxu0 0
    %9742 = vmatpush1.bf16.msra.mxu0 0
    %9743 = vmatprep.subr.bf16.mxu0 0
    %9744 = vmatpush1.bf16.msra.mxu0 0
    %9745 = vmatprep.subr.bf16.mxu0 0
    %9746 = vmatpush1.bf16.msra.mxu0 0
    %9747 = vmatprep.subr.bf16.mxu0 0
    %9748 = vmatpush1.bf16.msra.mxu0 0
    %9749 = vmatprep.subr.bf16.mxu0 0
    %9750 = vmatpush1.bf16.msra.mxu0 0
    %9751 = vmatprep.subr.bf16.mxu0 0
    %9752 = vmatpush1.bf16.msra.mxu0 0
    %9753 = vmatprep.subr.bf16.mxu0 0
    %9754 = vmatpush1.bf16.msra.mxu0 0
    %9755 = vmatprep.subr.bf16.mxu0 0
    %9756 = vmatpush1.bf16.msra.mxu0 0
    %9757 = vmatprep.mubr.bf16.mxu0 0
    %9758 = vmatmul.mubr.bf16.gmra.mrb[0].mxu0 %v8452
    %v9759 = vpop.f32.mrb[0].mxu0
    %v9760 = vadd.f32 %v7742, %v9759
    %v9761 = vpop.f32.mrb[0].mxu0
    %v9762 = vadd.f32 %v7746, %v9761
    %v9763 = vpop.f32.mrb[0].mxu0
    %v9764 = vpop.f32.mrb[0].mxu0
    %9765 = vdwg.mxu0
    %v9767 = vrot.slane %v8491, 7
    %v9770 = vrot.slane %v8530, 6
    %v9773 = vrot.slane %v8532, 5
    %v9776 = vrot.slane %v8571, 4
    %v9779 = vrot.slane %v8573, 3
    %v9782 = vrot.slane %v8612, 2
    %v9785 = vrot.slane %v8614, 1
    %v9788 = vrot.slane %v8655, 7
    %v9791 = vrot.slane %v8694, 6
    %v9794 = vrot.slane %v8696, 5
    %v9797 = vrot.slane %v8735, 4
    %v9800 = vrot.slane %v8737, 3
    %v9803 = vrot.slane %v8776, 2
    %v9806 = vrot.slane %v8778, 1
    %v9808 = vsel %vm1824, %v8489, %v9767
    %v9809 = vsel %vm101, %v9808, %v9770
    %vm9810 = vcmask 1042432
    %v9811 = vsel %vm9810, %v9809, %v9773
    %vm9812 = vcmask 1043456
    %v9813 = vsel %vm9812, %v9811, %v9776
    %vm9814 = vcmask 1044480
    %v9815 = vsel %vm9814, %v9813, %v9779
    %vm9816 = vcmask 1045504
    %v9817 = vsel %vm9816, %v9815, %v9782
    %vm9818 = vcmask 1046528
    %v9819 = vsel %vm9818, %v9817, %v9785
    %v9820 = vsel %vm1824, %v8653, %v9788
    %v9821 = vsel %vm101, %v9820, %v9791
    %v9822 = vsel %vm9810, %v9821, %v9794
    %v9823 = vsel %vm9812, %v9822, %v9797
    %v9824 = vsel %vm9814, %v9823, %v9800
    %v9825 = vsel %vm9816, %v9824, %v9803
    %v9826 = vsel %vm9818, %v9825, %v9806
    %v9828 = vrot.slane %v8819, 7
    %v9831 = vrot.slane %v8858, 6
    %v9834 = vrot.slane %v8860, 5
    %v9837 = vrot.slane %v8899, 4
    %v9840 = vrot.slane %v8901, 3
    %v9843 = vrot.slane %v8940, 2
    %v9846 = vrot.slane %v8942, 1
    %v9849 = vrot.slane %v8983, 7
    %v9852 = vrot.slane %v9022, 6
    %v9855 = vrot.slane %v9024, 5
    %v9858 = vrot.slane %v9063, 4
    %v9861 = vrot.slane %v9065, 3
    %v9864 = vrot.slane %v9104, 2
    %v9867 = vrot.slane %v9106, 1
    %v9869 = vsel %vm1824, %v8817, %v9828
    %v9870 = vsel %vm101, %v9869, %v9831
    %v9871 = vsel %vm9810, %v9870, %v9834
    %v9872 = vsel %vm9812, %v9871, %v9837
    %v9873 = vsel %vm9814, %v9872, %v9840
    %v9874 = vsel %vm9816, %v9873, %v9843
    %v9875 = vsel %vm9818, %v9874, %v9846
    %v9876 = vsel %vm1824, %v8981, %v9849
    %v9877 = vsel %vm101, %v9876, %v9852
    %v9878 = vsel %vm9810, %v9877, %v9855
    %v9879 = vsel %vm9812, %v9878, %v9858
    %v9880 = vsel %vm9814, %v9879, %v9861
    %v9881 = vsel %vm9816, %v9880, %v9864
    %v9882 = vsel %vm9818, %v9881, %v9867
    %v9884 = vrot.slane %v9147, 7
    %v9887 = vrot.slane %v9186, 6
    %v9890 = vrot.slane %v9188, 5
    %v9893 = vrot.slane %v9227, 4
    %v9896 = vrot.slane %v9229, 3
    %v9899 = vrot.slane %v9268, 2
    %v9902 = vrot.slane %v9270, 1
    %v9905 = vrot.slane %v9311, 7
    %v9908 = vrot.slane %v9350, 6
    %v9911 = vrot.slane %v9352, 5
    %v9914 = vrot.slane %v9391, 4
    %v9917 = vrot.slane %v9393, 3
    %v9920 = vrot.slane %v9432, 2
    %v9923 = vrot.slane %v9434, 1
    %v9925 = vsel %vm1824, %v9145, %v9884
    %v9926 = vsel %vm101, %v9925, %v9887
    %v9927 = vsel %vm9810, %v9926, %v9890
    %v9928 = vsel %vm9812, %v9927, %v9893
    %v9929 = vsel %vm9814, %v9928, %v9896
    %v9930 = vsel %vm9816, %v9929, %v9899
    %v9931 = vsel %vm9818, %v9930, %v9902
    %v9932 = vsel %vm1824, %v9309, %v9905
    %v9933 = vsel %vm101, %v9932, %v9908
    %v9934 = vsel %vm9810, %v9933, %v9911
    %v9935 = vsel %vm9812, %v9934, %v9914
    %v9936 = vsel %vm9814, %v9935, %v9917
    %v9937 = vsel %vm9816, %v9936, %v9920
    %v9938 = vsel %vm9818, %v9937, %v9923
    %v9940 = vrot.slane %v9475, 7
    %v9943 = vrot.slane %v9514, 6
    %v9946 = vrot.slane %v9516, 5
    %v9949 = vrot.slane %v9555, 4
    %v9952 = vrot.slane %v9557, 3
    %v9955 = vrot.slane %v9596, 2
    %v9958 = vrot.slane %v9598, 1
    %v9961 = vrot.slane %v9639, 7
    %v9964 = vrot.slane %v9678, 6
    %v9967 = vrot.slane %v9680, 5
    %v9970 = vrot.slane %v9719, 4
    %v9973 = vrot.slane %v9721, 3
    %v9976 = vrot.slane %v9760, 2
    %v9979 = vrot.slane %v9762, 1
    %v9981 = vsel %vm1824, %v9473, %v9940
    %v9982 = vsel %vm101, %v9981, %v9943
    %v9983 = vsel %vm9810, %v9982, %v9946
    %v9984 = vsel %vm9812, %v9983, %v9949
    %v9985 = vsel %vm9814, %v9984, %v9952
    %v9986 = vsel %vm9816, %v9985, %v9955
    %v9987 = vsel %vm9818, %v9986, %v9958
    %v9988 = vsel %vm1824, %v9637, %v9961
    %v9989 = vsel %vm101, %v9988, %v9964
    %v9990 = vsel %vm9810, %v9989, %v9967
    %v9991 = vsel %vm9812, %v9990, %v9970
    %v9992 = vsel %vm9814, %v9991, %v9973
    %v9993 = vsel %vm9816, %v9992, %v9976
    %v9994 = vsel %vm9818, %v9993, %v9979
    %v9996 = vrot.slane %v8489, 1
    %v9998 = vrot.slane %v8530, 7
    %v10000 = vrot.slane %v8532, 6
    %v10002 = vrot.slane %v8571, 5
    %v10004 = vrot.slane %v8573, 4
    %v10006 = vrot.slane %v8612, 3
    %v10008 = vrot.slane %v8614, 2
    %v10011 = vrot.slane %v8653, 1
    %v10013 = vrot.slane %v8694, 7
    %v10015 = vrot.slane %v8696, 6
    %v10017 = vrot.slane %v8735, 5
    %v10019 = vrot.slane %v8737, 4
    %v10021 = vrot.slane %v8776, 3
    %v10023 = vrot.slane %v8778, 2
    %v10025 = vsel %vm1824, %v9996, %v8491
    %v10026 = vsel %vm101, %v10025, %v9998
    %v10027 = vsel %vm9810, %v10026, %v10000
    %v10028 = vsel %vm9812, %v10027, %v10002
    %v10029 = vsel %vm9814, %v10028, %v10004
    %v10030 = vsel %vm9816, %v10029, %v10006
    %v10031 = vsel %vm9818, %v10030, %v10008
    %v10032 = vsel %vm1824, %v10011, %v8655
    %v10033 = vsel %vm101, %v10032, %v10013
    %v10034 = vsel %vm9810, %v10033, %v10015
    %v10035 = vsel %vm9812, %v10034, %v10017
    %v10036 = vsel %vm9814, %v10035, %v10019
    %v10037 = vsel %vm9816, %v10036, %v10021
    %v10038 = vsel %vm9818, %v10037, %v10023
    %v10040 = vrot.slane %v8817, 1
    %v10042 = vrot.slane %v8858, 7
    %v10044 = vrot.slane %v8860, 6
    %v10046 = vrot.slane %v8899, 5
    %v10048 = vrot.slane %v8901, 4
    %v10050 = vrot.slane %v8940, 3
    %v10052 = vrot.slane %v8942, 2
    %v10055 = vrot.slane %v8981, 1
    %v10057 = vrot.slane %v9022, 7
    %v10059 = vrot.slane %v9024, 6
    %v10061 = vrot.slane %v9063, 5
    %v10063 = vrot.slane %v9065, 4
    %v10065 = vrot.slane %v9104, 3
    %v10067 = vrot.slane %v9106, 2
    %v10069 = vsel %vm1824, %v10040, %v8819
    %v10070 = vsel %vm101, %v10069, %v10042
    %v10071 = vsel %vm9810, %v10070, %v10044
    %v10072 = vsel %vm9812, %v10071, %v10046
    %v10073 = vsel %vm9814, %v10072, %v10048
    %v10074 = vsel %vm9816, %v10073, %v10050
    %v10075 = vsel %vm9818, %v10074, %v10052
    %v10076 = vsel %vm1824, %v10055, %v8983
    %v10077 = vsel %vm101, %v10076, %v10057
    %v10078 = vsel %vm9810, %v10077, %v10059
    %v10079 = vsel %vm9812, %v10078, %v10061
    %v10080 = vsel %vm9814, %v10079, %v10063
    %v10081 = vsel %vm9816, %v10080, %v10065
    %v10082 = vsel %vm9818, %v10081, %v10067
    %v10084 = vrot.slane %v9145, 1
    %v10086 = vrot.slane %v9186, 7
    %v10088 = vrot.slane %v9188, 6
    %v10090 = vrot.slane %v9227, 5
    %v10092 = vrot.slane %v9229, 4
    %v10094 = vrot.slane %v9268, 3
    %v10096 = vrot.slane %v9270, 2
    %v10099 = vrot.slane %v9309, 1
    %v10101 = vrot.slane %v9350, 7
    %v10103 = vrot.slane %v9352, 6
    %v10105 = vrot.slane %v9391, 5
    %v10107 = vrot.slane %v9393, 4
    %v10109 = vrot.slane %v9432, 3
    %v10111 = vrot.slane %v9434, 2
    %v10113 = vsel %vm1824, %v10084, %v9147
    %v10114 = vsel %vm101, %v10113, %v10086
    %v10115 = vsel %vm9810, %v10114, %v10088
    %v10116 = vsel %vm9812, %v10115, %v10090
    %v10117 = vsel %vm9814, %v10116, %v10092
    %v10118 = vsel %vm9816, %v10117, %v10094
    %v10119 = vsel %vm9818, %v10118, %v10096
    %v10120 = vsel %vm1824, %v10099, %v9311
    %v10121 = vsel %vm101, %v10120, %v10101
    %v10122 = vsel %vm9810, %v10121, %v10103
    %v10123 = vsel %vm9812, %v10122, %v10105
    %v10124 = vsel %vm9814, %v10123, %v10107
    %v10125 = vsel %vm9816, %v10124, %v10109
    %v10126 = vsel %vm9818, %v10125, %v10111
    %v10128 = vrot.slane %v9473, 1
    %v10130 = vrot.slane %v9514, 7
    %v10132 = vrot.slane %v9516, 6
    %v10134 = vrot.slane %v9555, 5
    %v10136 = vrot.slane %v9557, 4
    %v10138 = vrot.slane %v9596, 3
    %v10140 = vrot.slane %v9598, 2
    %v10143 = vrot.slane %v9637, 1
    %v10145 = vrot.slane %v9678, 7
    %v10147 = vrot.slane %v9680, 6
    %v10149 = vrot.slane %v9719, 5
    %v10151 = vrot.slane %v9721, 4
    %v10153 = vrot.slane %v9760, 3
    %v10155 = vrot.slane %v9762, 2
    %v10157 = vsel %vm1824, %v10128, %v9475
    %v10158 = vsel %vm101, %v10157, %v10130
    %v10159 = vsel %vm9810, %v10158, %v10132
    %v10160 = vsel %vm9812, %v10159, %v10134
    %v10161 = vsel %vm9814, %v10160, %v10136
    %v10162 = vsel %vm9816, %v10161, %v10138
    %v10163 = vsel %vm9818, %v10162, %v10140
    %v10164 = vsel %vm1824, %v10143, %v9639
    %v10165 = vsel %vm101, %v10164, %v10145
    %v10166 = vsel %vm9810, %v10165, %v10147
    %v10167 = vsel %vm9812, %v10166, %v10149
    %v10168 = vsel %vm9814, %v10167, %v10151
    %v10169 = vsel %vm9816, %v10168, %v10153
    %v10170 = vsel %vm9818, %v10169, %v10155
    %10171 = vrot.lane.b32.xlu0 %v9819, 1
    %v10172 = vpop.permute.xlu0 %10171
    %10173 = vrot.lane.b32.xlu0 %v9826, 1
    %v10174 = vpop.permute.xlu0 %10173
    %10175 = vrot.lane.b32.xlu0 %v9875, 1
    %v10176 = vpop.permute.xlu0 %10175
    %10177 = vrot.lane.b32.xlu0 %v9882, 1
    %v10178 = vpop.permute.xlu0 %10177
    %10179 = vrot.lane.b32.xlu0 %v9931, 1
    %v10180 = vpop.permute.xlu0 %10179
    %10181 = vrot.lane.b32.xlu0 %v9938, 1
    %v10182 = vpop.permute.xlu0 %10181
    %10183 = vrot.lane.b32.xlu0 %v9987, 1
    %v10184 = vpop.permute.xlu0 %10183
    %10185 = vrot.lane.b32.xlu0 %v9994, 1
    %v10186 = vpop.permute.xlu0 %10185
    %10187 = vrot.lane.b32.xlu0 %v10031, 1
    %v10188 = vpop.permute.xlu0 %10187
    %10189 = vrot.lane.b32.xlu0 %v10038, 1
    %v10190 = vpop.permute.xlu0 %10189
    %10191 = vrot.lane.b32.xlu0 %v10075, 1
    %v10192 = vpop.permute.xlu0 %10191
    %10193 = vrot.lane.b32.xlu0 %v10082, 1
    %v10194 = vpop.permute.xlu0 %10193
    %10195 = vrot.lane.b32.xlu0 %v10119, 1
    %v10196 = vpop.permute.xlu0 %10195
    %10197 = vrot.lane.b32.xlu0 %v10126, 1
    %v10198 = vpop.permute.xlu0 %10197
    %10199 = vrot.lane.b32.xlu0 %v10163, 1
    %v10200 = vpop.permute.xlu0 %10199
    %10201 = vrot.lane.b32.xlu0 %v10170, 1
    %v10202 = vpop.permute.xlu0 %10201
    %v10203 = vsel %vm71, %v10172, %v10188
    %v10204 = vsel %vm71, %v10174, %v10190
    %v10205 = vsel %vm71, %v10176, %v10192
    %v10206 = vsel %vm71, %v10178, %v10194
    %v10207 = vsel %vm71, %v10180, %v10196
    %v10208 = vsel %vm71, %v10182, %v10198
    %v10209 = vsel %vm71, %v10184, %v10200
    %v10210 = vsel %vm71, %v10186, %v10202
    %v10211 = vsel %vm71, %v10188, %v10172
    %v10212 = vsel %vm71, %v10190, %v10174
    %v10213 = vsel %vm71, %v10192, %v10176
    %v10214 = vsel %vm71, %v10194, %v10178
    %v10215 = vsel %vm71, %v10196, %v10180
    %v10216 = vsel %vm71, %v10198, %v10182
    %v10217 = vsel %vm71, %v10200, %v10184
    %v10218 = vsel %vm71, %v10202, %v10186
    %10219 = vrot.lane.b32.xlu0 %v9819, 127
    %v10220 = vpop.permute.xlu0 %10219
    %10221 = vrot.lane.b32.xlu0 %v9826, 127
    %v10222 = vpop.permute.xlu0 %10221
    %10223 = vrot.lane.b32.xlu0 %v9875, 127
    %v10224 = vpop.permute.xlu0 %10223
    %10225 = vrot.lane.b32.xlu0 %v9882, 127
    %v10226 = vpop.permute.xlu0 %10225
    %10227 = vrot.lane.b32.xlu0 %v9931, 127
    %v10228 = vpop.permute.xlu0 %10227
    %10229 = vrot.lane.b32.xlu0 %v9938, 127
    %v10230 = vpop.permute.xlu0 %10229
    %10231 = vrot.lane.b32.xlu0 %v9987, 127
    %v10232 = vpop.permute.xlu0 %10231
    %10233 = vrot.lane.b32.xlu0 %v9994, 127
    %v10234 = vpop.permute.xlu0 %10233
    %10235 = vrot.lane.b32.xlu0 %v10031, 127
    %v10236 = vpop.permute.xlu0 %10235
    %10237 = vrot.lane.b32.xlu0 %v10038, 127
    %v10238 = vpop.permute.xlu0 %10237
    %10239 = vrot.lane.b32.xlu0 %v10075, 127
    %v10240 = vpop.permute.xlu0 %10239
    %10241 = vrot.lane.b32.xlu0 %v10082, 127
    %v10242 = vpop.permute.xlu0 %10241
    %10243 = vrot.lane.b32.xlu0 %v10119, 127
    %v10244 = vpop.permute.xlu0 %10243
    %10245 = vrot.lane.b32.xlu0 %v10126, 127
    %v10246 = vpop.permute.xlu0 %10245
    %10247 = vrot.lane.b32.xlu0 %v10163, 127
    %v10248 = vpop.permute.xlu0 %10247
    %10249 = vrot.lane.b32.xlu0 %v10170, 127
    %v10250 = vpop.permute.xlu0 %10249
    %v10251 = vsel %vm84, %v10220, %v10236
    %v10252 = vsel %vm84, %v10222, %v10238
    %v10253 = vsel %vm84, %v10224, %v10240
    %v10254 = vsel %vm84, %v10226, %v10242
    %v10255 = vsel %vm84, %v10228, %v10244
    %v10256 = vsel %vm84, %v10230, %v10246
    %v10257 = vsel %vm84, %v10232, %v10248
    %v10258 = vsel %vm84, %v10234, %v10250
    %v10259 = vsel %vm84, %v10236, %v10220
    %v10260 = vsel %vm84, %v10238, %v10222
    %v10261 = vsel %vm84, %v10240, %v10224
    %v10262 = vsel %vm84, %v10242, %v10226
    %v10263 = vsel %vm84, %v10244, %v10228
    %v10264 = vsel %vm84, %v10246, %v10230
    %v10265 = vsel %vm84, %v10248, %v10232
    %v10266 = vsel %vm84, %v10250, %v10234
    %v10267 = vld [vmem:[%s9] sm:$0xff]
    %v10268 = vld [vmem:[%s9 + $0x8] sm:$0xff]
    %v10269 = vld [vmem:[%s9 + $0x10] sm:$0xff]
    %v10270 = vld [vmem:[%s9 + $0x18] sm:$0xff]
    %s10271 = scalar_lea.vmem %s9, 32
    %v10272 = vld [vmem:[%s10271] sm:$0xff]
    %v10273 = vld [vmem:[%s10271 + $0x8] sm:$0xff]
    %v10274 = vld [vmem:[%s10271 + $0x10] sm:$0xff]
    %v10275 = vld [vmem:[%s10271 + $0x18] sm:$0xff]
    %vm10276 = vcmask 523264
    %v10278 = vsel %vm10276, %v10272, 0
    %v10281 = vsel %vm10276, %v10273, 0
    %v10284 = vsel %vm10276, %v10274, 0
    %v10287 = vsel %vm10276, %v10275, 0
    %10289 = vmatprep.subr.mxu0 %v10031
    %10290 = vmatpush1.msra.mxu0 %v9819
    %10291 = vmatprep.subr.mxu0 %v10038
    %10292 = vmatpush1.msra.mxu0 %v9826
    %10293 = vmatprep.subr.mxu0 %v10075
    %10294 = vmatpush1.msra.mxu0 %v9875
    %10295 = vmatprep.subr.mxu0 %v10082
    %10296 = vmatpush1.msra.mxu0 %v9882
    %10297 = vmatprep.subr.mxu0 %v10119
    %10298 = vmatpush1.msra.mxu0 %v9931
    %10299 = vmatprep.subr.mxu0 %v10126
    %10300 = vmatpush1.msra.mxu0 %v9938
    %10301 = vmatprep.subr.mxu0 %v10163
    %10302 = vmatpush1.msra.mxu0 %v9987
    %10303 = vmatprep.subr.mxu0 %v10170
    %10304 = vmatpush1.msra.mxu0 %v9994
    %10305 = vmatprep.subr.mxu0 0.0
    %10306 = vmatpush1.msra.mxu0 0.0
    %10307 = vmatprep.subr.mxu0 0.0
    %10308 = vmatpush1.msra.mxu0 0.0
    %10309 = vmatprep.subr.mxu0 0.0
    %10310 = vmatpush1.msra.mxu0 0.0
    %10311 = vmatprep.subr.mxu0 0.0
    %10312 = vmatpush1.msra.mxu0 0.0
    %10313 = vmatprep.subr.mxu0 0.0
    %10314 = vmatpush1.msra.mxu0 0.0
    %10315 = vmatprep.subr.mxu0 0.0
    %10316 = vmatpush1.msra.mxu0 0.0
    %10317 = vmatprep.subr.mxu0 0.0
    %10318 = vmatpush1.msra.mxu0 0.0
    %10319 = vmatprep.subr.mxu0 0.0
    %10320 = vmatpush1.msra.mxu0 0.0
    %10321 = vmatprep.subr.mxu0 0.0
    %10322 = vmatpush1.msra.mxu0 0.0
    %10323 = vmatprep.subr.mxu0 0.0
    %10324 = vmatpush1.msra.mxu0 0.0
    %10325 = vmatprep.subr.mxu0 0.0
    %10326 = vmatpush1.msra.mxu0 0.0
    %10327 = vmatprep.subr.mxu0 0.0
    %10328 = vmatpush1.msra.mxu0 0.0
    %10329 = vmatprep.subr.mxu0 0.0
    %10330 = vmatpush1.msra.mxu0 0.0
    %10331 = vmatprep.subr.mxu0 0.0
    %10332 = vmatpush1.msra.mxu0 0.0
    %10333 = vmatprep.subr.mxu0 0.0
    %10334 = vmatpush1.msra.mxu0 0.0
    %10335 = vmatprep.subr.mxu0 0.0
    %10336 = vmatpush1.msra.mxu0 0.0
    %10337 = vmatprep.subr.mxu0 0.0
    %10338 = vmatpush1.msra.mxu0 0.0
    %10339 = vmatprep.subr.mxu0 0.0
    %10340 = vmatpush1.msra.mxu0 0.0
    %10341 = vmatprep.subr.mxu0 0.0
    %10342 = vmatpush1.msra.mxu0 0.0
    %10343 = vmatprep.subr.mxu0 0.0
    %10344 = vmatpush1.msra.mxu0 0.0
    %10345 = vmatprep.subr.mxu0 0.0
    %10346 = vmatpush1.msra.mxu0 0.0
    %10347 = vmatprep.subr.mxu0 0.0
    %10348 = vmatpush1.msra.mxu0 0.0
    %10349 = vmatprep.subr.mxu0 0.0
    %10350 = vmatpush1.msra.mxu0 0.0
    %10351 = vmatprep.subr.mxu0 0.0
    %10352 = vmatpush1.msra.mxu0 0.0
    %10353 = vmatprep.mubr.f32.mxu0 0.0
    %10354 = vmatmul.mubr.f32.gmra.mrb[0].mxu0 %v10278
    %v10355 = vpop.f32.mrb[0].mxu0
    %v10356 = vadd.f32 0.0, %v10355
    %v10357 = vpop.f32.mrb[0].mxu0
    %v10358 = vadd.f32 0.0, %v10357
    %10359 = vmatprep.mubr.f32.mxu0 0.0
    %10360 = vmatmul.mubr.f32.gmra.mrb[0].mxu0 %v10281
    %v10361 = vpop.f32.mrb[0].mxu0
    %v10362 = vadd.f32 0.0, %v10361
    %v10363 = vpop.f32.mrb[0].mxu0
    %v10364 = vadd.f32 0.0, %v10363
    %10365 = vmatprep.mubr.f32.mxu0 0.0
    %10366 = vmatmul.mubr.f32.gmra.mrb[0].mxu0 %v10284
    %v10367 = vpop.f32.mrb[0].mxu0
    %v10368 = vadd.f32 0.0, %v10367
    %v10369 = vpop.f32.mrb[0].mxu0
    %v10370 = vadd.f32 0.0, %v10369
    %10371 = vmatprep.mubr.f32.mxu0 0.0
    %10372 = vmatmul.mubr.f32.gmra.mrb[0].mxu0 %v10287
    %v10373 = vpop.f32.mrb[0].mxu0
    %v10374 = vadd.f32 0.0, %v10373
    %v10375 = vpop.f32.mrb[0].mxu0
    %v10376 = vadd.f32 0.0, %v10375
    %10377 = vdwg.mxu0
    %v10379 = vsel %vm10276, %v10267, 0
    %v10382 = vsel %vm10276, %v10268, 0
    %v10385 = vsel %vm10276, %v10269, 0
    %v10388 = vsel %vm10276, %v10270, 0
    %10390 = vmatprep.subr.mxu0 %v10203
    %10391 = vmatpush1.msra.mxu0 %v10211
    %10392 = vmatprep.subr.mxu0 %v10204
    %10393 = vmatpush1.msra.mxu0 %v10212
    %10394 = vmatprep.subr.mxu0 %v10205
    %10395 = vmatpush1.msra.mxu0 %v10213
    %10396 = vmatprep.subr.mxu0 %v10206
    %10397 = vmatpush1.msra.mxu0 %v10214
    %10398 = vmatprep.subr.mxu0 %v10207
    %10399 = vmatpush1.msra.mxu0 %v10215
    %10400 = vmatprep.subr.mxu0 %v10208
    %10401 = vmatpush1.msra.mxu0 %v10216
    %10402 = vmatprep.subr.mxu0 %v10209
    %10403 = vmatpush1.msra.mxu0 %v10217
    %10404 = vmatprep.subr.mxu0 %v10210
    %10405 = vmatpush1.msra.mxu0 %v10218
    %10406 = vmatprep.subr.mxu0 0.0
    %10407 = vmatpush1.msra.mxu0 0.0
    %10408 = vmatprep.subr.mxu0 0.0
    %10409 = vmatpush1.msra.mxu0 0.0
    %10410 = vmatprep.subr.mxu0 0.0
    %10411 = vmatpush1.msra.mxu0 0.0
    %10412 = vmatprep.subr.mxu0 0.0
    %10413 = vmatpush1.msra.mxu0 0.0
    %10414 = vmatprep.subr.mxu0 0.0
    %10415 = vmatpush1.msra.mxu0 0.0
    %10416 = vmatprep.subr.mxu0 0.0
    %10417 = vmatpush1.msra.mxu0 0.0
    %10418 = vmatprep.subr.mxu0 0.0
    %10419 = vmatpush1.msra.mxu0 0.0
    %10420 = vmatprep.subr.mxu0 0.0
    %10421 = vmatpush1.msra.mxu0 0.0
    %10422 = vmatprep.subr.mxu0 0.0
    %10423 = vmatpush1.msra.mxu0 0.0
    %10424 = vmatprep.subr.mxu0 0.0
    %10425 = vmatpush1.msra.mxu0 0.0
    %10426 = vmatprep.subr.mxu0 0.0
    %10427 = vmatpush1.msra.mxu0 0.0
    %10428 = vmatprep.subr.mxu0 0.0
    %10429 = vmatpush1.msra.mxu0 0.0
    %10430 = vmatprep.subr.mxu0 0.0
    %10431 = vmatpush1.msra.mxu0 0.0
    %10432 = vmatprep.subr.mxu0 0.0
    %10433 = vmatpush1.msra.mxu0 0.0
    %10434 = vmatprep.subr.mxu0 0.0
    %10435 = vmatpush1.msra.mxu0 0.0
    %10436 = vmatprep.subr.mxu0 0.0
    %10437 = vmatpush1.msra.mxu0 0.0
    %10438 = vmatprep.subr.mxu0 0.0
    %10439 = vmatpush1.msra.mxu0 0.0
    %10440 = vmatprep.subr.mxu0 0.0
    %10441 = vmatpush1.msra.mxu0 0.0
    %10442 = vmatprep.subr.mxu0 0.0
    %10443 = vmatpush1.msra.mxu0 0.0
    %10444 = vmatprep.subr.mxu0 0.0
    %10445 = vmatpush1.msra.mxu0 0.0
    %10446 = vmatprep.subr.mxu0 0.0
    %10447 = vmatpush1.msra.mxu0 0.0
    %10448 = vmatprep.subr.mxu0 0.0
    %10449 = vmatpush1.msra.mxu0 0.0
    %10450 = vmatprep.subr.mxu0 0.0
    %10451 = vmatpush1.msra.mxu0 0.0
    %10452 = vmatprep.subr.mxu0 0.0
    %10453 = vmatpush1.msra.mxu0 0.0
    %10454 = vmatprep.mubr.f32.mxu0 0.0
    %10455 = vmatmul.mubr.f32.gmra.mrb[0].mxu0 %v10379
    %v10456 = vpop.f32.mrb[0].mxu0
    %v10457 = vadd.f32 %v10356, %v10456
    %v10458 = vpop.f32.mrb[0].mxu0
    %v10459 = vadd.f32 %v10358, %v10458
    %10460 = vmatprep.mubr.f32.mxu0 0.0
    %10461 = vmatmul.mubr.f32.gmra.mrb[0].mxu0 %v10382
    %v10462 = vpop.f32.mrb[0].mxu0
    %v10463 = vadd.f32 %v10362, %v10462
    %v10464 = vpop.f32.mrb[0].mxu0
    %v10465 = vadd.f32 %v10364, %v10464
    %10466 = vmatprep.mubr.f32.mxu0 0.0
    %10467 = vmatmul.mubr.f32.gmra.mrb[0].mxu0 %v10385
    %v10468 = vpop.f32.mrb[0].mxu0
    %v10469 = vadd.f32 %v10368, %v10468
    %v10470 = vpop.f32.mrb[0].mxu0
    %v10471 = vadd.f32 %v10370, %v10470
    %10472 = vmatprep.mubr.f32.mxu0 0.0
    %10473 = vmatmul.mubr.f32.gmra.mrb[0].mxu0 %v10388
    %v10474 = vpop.f32.mrb[0].mxu0
    %v10475 = vadd.f32 %v10374, %v10474
    %v10476 = vpop.f32.mrb[0].mxu0
    %v10477 = vadd.f32 %v10376, %v10476
    %10478 = vdwg.mxu0
    %s10479 = scalar_lea.vmem %s9, 64
    %v10480 = vld [vmem:[%s10479] sm:$0xff]
    %v10481 = vld [vmem:[%s10479 + $0x8] sm:$0xff]
    %v10482 = vld [vmem:[%s10479 + $0x10] sm:$0xff]
    %v10483 = vld [vmem:[%s10479 + $0x18] sm:$0xff]
    %v10485 = vsel %vm10276, %v10480, 0
    %v10488 = vsel %vm10276, %v10481, 0
    %v10491 = vsel %vm10276, %v10482, 0
    %v10494 = vsel %vm10276, %v10483, 0
    %10496 = vmatprep.subr.mxu0 %v10259
    %10497 = vmatpush1.msra.mxu0 %v10251
    %10498 = vmatprep.subr.mxu0 %v10260
    %10499 = vmatpush1.msra.mxu0 %v10252
    %10500 = vmatprep.subr.mxu0 %v10261
    %10501 = vmatpush1.msra.mxu0 %v10253
    %10502 = vmatprep.subr.mxu0 %v10262
    %10503 = vmatpush1.msra.mxu0 %v10254
    %10504 = vmatprep.subr.mxu0 %v10263
    %10505 = vmatpush1.msra.mxu0 %v10255
    %10506 = vmatprep.subr.mxu0 %v10264
    %10507 = vmatpush1.msra.mxu0 %v10256
    %10508 = vmatprep.subr.mxu0 %v10265
    %10509 = vmatpush1.msra.mxu0 %v10257
    %10510 = vmatprep.subr.mxu0 %v10266
    %10511 = vmatpush1.msra.mxu0 %v10258
    %10512 = vmatprep.subr.mxu0 0.0
    %10513 = vmatpush1.msra.mxu0 0.0
    %10514 = vmatprep.subr.mxu0 0.0
    %10515 = vmatpush1.msra.mxu0 0.0
    %10516 = vmatprep.subr.mxu0 0.0
    %10517 = vmatpush1.msra.mxu0 0.0
    %10518 = vmatprep.subr.mxu0 0.0
    %10519 = vmatpush1.msra.mxu0 0.0
    %10520 = vmatprep.subr.mxu0 0.0
    %10521 = vmatpush1.msra.mxu0 0.0
    %10522 = vmatprep.subr.mxu0 0.0
    %10523 = vmatpush1.msra.mxu0 0.0
    %10524 = vmatprep.subr.mxu0 0.0
    %10525 = vmatpush1.msra.mxu0 0.0
    %10526 = vmatprep.subr.mxu0 0.0
    %10527 = vmatpush1.msra.mxu0 0.0
    %10528 = vmatprep.subr.mxu0 0.0
    %10529 = vmatpush1.msra.mxu0 0.0
    %10530 = vmatprep.subr.mxu0 0.0
    %10531 = vmatpush1.msra.mxu0 0.0
    %10532 = vmatprep.subr.mxu0 0.0
    %10533 = vmatpush1.msra.mxu0 0.0
    %10534 = vmatprep.subr.mxu0 0.0
    %10535 = vmatpush1.msra.mxu0 0.0
    %10536 = vmatprep.subr.mxu0 0.0
    %10537 = vmatpush1.msra.mxu0 0.0
    %10538 = vmatprep.subr.mxu0 0.0
    %10539 = vmatpush1.msra.mxu0 0.0
    %10540 = vmatprep.subr.mxu0 0.0
    %10541 = vmatpush1.msra.mxu0 0.0
    %10542 = vmatprep.subr.mxu0 0.0
    %10543 = vmatpush1.msra.mxu0 0.0
    %10544 = vmatprep.subr.mxu0 0.0
    %10545 = vmatpush1.msra.mxu0 0.0
    %10546 = vmatprep.subr.mxu0 0.0
    %10547 = vmatpush1.msra.mxu0 0.0
    %10548 = vmatprep.subr.mxu0 0.0
    %10549 = vmatpush1.msra.mxu0 0.0
    %10550 = vmatprep.subr.mxu0 0.0
    %10551 = vmatpush1.msra.mxu0 0.0
    %10552 = vmatprep.subr.mxu0 0.0
    %10553 = vmatpush1.msra.mxu0 0.0
    %10554 = vmatprep.subr.mxu0 0.0
    %10555 = vmatpush1.msra.mxu0 0.0
    %10556 = vmatprep.subr.mxu0 0.0
    %10557 = vmatpush1.msra.mxu0 0.0
    %10558 = vmatprep.subr.mxu0 0.0
    %10559 = vmatpush1.msra.mxu0 0.0
    %10560 = vmatprep.mubr.f32.mxu0 0.0
    %10561 = vmatmul.mubr.f32.gmra.mrb[0].mxu0 %v10485
    %v10562 = vpop.f32.mrb[0].mxu0
    %v10563 = vadd.f32 0.0, %v10562
    %v10564 = vpop.f32.mrb[0].mxu0
    %v10565 = vadd.f32 0.0, %v10564
    %10566 = vmatprep.mubr.f32.mxu0 0.0
    %10567 = vmatmul.mubr.f32.gmra.mrb[0].mxu0 %v10488
    %v10568 = vpop.f32.mrb[0].mxu0
    %v10569 = vadd.f32 0.0, %v10568
    %v10570 = vpop.f32.mrb[0].mxu0
    %v10571 = vadd.f32 0.0, %v10570
    %10572 = vmatprep.mubr.f32.mxu0 0.0
    %10573 = vmatmul.mubr.f32.gmra.mrb[0].mxu0 %v10491
    %v10574 = vpop.f32.mrb[0].mxu0
    %v10575 = vadd.f32 0.0, %v10574
    %v10576 = vpop.f32.mrb[0].mxu0
    %v10577 = vadd.f32 0.0, %v10576
    %10578 = vmatprep.mubr.f32.mxu0 0.0
    %10579 = vmatmul.mubr.f32.gmra.mrb[0].mxu0 %v10494
    %v10580 = vpop.f32.mrb[0].mxu0
    %v10581 = vadd.f32 0.0, %v10580
    %v10582 = vpop.f32.mrb[0].mxu0
    %v10583 = vadd.f32 0.0, %v10582
    %10584 = vdwg.mxu0
    %v10585 = vadd.f32 %v10457, %v10563
    %v10586 = vadd.f32 %v10459, %v10565
    %v10587 = vadd.f32 %v10463, %v10569
    %v10588 = vadd.f32 %v10465, %v10571
    %v10589 = vadd.f32 %v10469, %v10575
    %v10590 = vadd.f32 %v10471, %v10577
    %v10591 = vadd.f32 %v10475, %v10581
    %v10592 = vadd.f32 %v10477, %v10583
    %v10593 = vadd.f32 %v10585, %v10587
    %v10594 = vadd.f32 %v10593, %v10589
    %v10595 = vadd.f32 %v10594, %v10591
    %v10596 = vrot.slane %v10595, 4
    %v10597 = vadd.f32 %v10595, %v10596
    %v10598 = vrot.slane %v10597, 2
    %v10599 = vadd.f32 %v10597, %v10598
    %v10600 = vrot.slane %v10599, 1
    %v10601 = vadd.f32 %v10599, %v10600
    %v10602 = vadd.f32 %v10586, %v10588
    %v10603 = vadd.f32 %v10602, %v10590
    %v10604 = vadd.f32 %v10603, %v10592
    %v10605 = vrot.slane %v10604, 4
    %v10606 = vadd.f32 %v10604, %v10605
    %v10607 = vrot.slane %v10606, 2
    %v10608 = vadd.f32 %v10606, %v10607
    %v10609 = vrot.slane %v10608, 1
    %v10610 = vadd.f32 %v10608, %v10609
    %v10611 = vadd.f32 %v10601, %v10610
    %v10612 = vmul.f32 %v10611, 0.015625
    %v10613 = vlaneseq
    %v10614 = vshrl.u32 %v10613, 7
    %v10615 = vsub.s32 0, %v10614
    %v10616 = vrot.slane %v10612, %v10615
    %v10617 = vsub.f32 %v10585, %v10616
    %v10618 = vsub.f32 %v10586, %v10616
    %v10619 = vsub.f32 %v10587, %v10616
    %v10620 = vsub.f32 %v10588, %v10616
    %v10621 = vsub.f32 %v10589, %v10616
    %v10622 = vsub.f32 %v10590, %v10616
    %v10623 = vsub.f32 %v10591, %v10616
    %v10624 = vsub.f32 %v10592, %v10616
    %v10625 = vmul.f32 %v10617, %v10617
    %v10626 = vmul.f32 %v10618, %v10618
    %v10627 = vmul.f32 %v10619, %v10619
    %v10628 = vmul.f32 %v10620, %v10620
    %v10629 = vmul.f32 %v10621, %v10621
    %v10630 = vmul.f32 %v10622, %v10622
    %v10631 = vmul.f32 %v10623, %v10623
    %v10632 = vmul.f32 %v10624, %v10624
    %v10633 = vadd.f32 %v10625, %v10627
    %v10634 = vadd.f32 %v10633, %v10629
    %v10635 = vadd.f32 %v10634, %v10631
    %v10636 = vrot.slane %v10635, 4
    %v10637 = vadd.f32 %v10635, %v10636
    %v10638 = vrot.slane %v10637, 2
    %v10639 = vadd.f32 %v10637, %v10638
    %v10640 = vrot.slane %v10639, 1
    %v10641 = vadd.f32 %v10639, %v10640
    %v10642 = vadd.f32 %v10626, %v10628
    %v10643 = vadd.f32 %v10642, %v10630
    %v10644 = vadd.f32 %v10643, %v10632
    %v10645 = vrot.slane %v10644, 4
    %v10646 = vadd.f32 %v10644, %v10645
    %v10647 = vrot.slane %v10646, 2
    %v10648 = vadd.f32 %v10646, %v10647
    %v10649 = vrot.slane %v10648, 1
    %v10650 = vadd.f32 %v10648, %v10649
    %v10651 = vadd.f32 %v10641, %v10650
    %v10652 = vmul.f32 %v10651, 0.015625
    %v10653 = vadd.f32 %v10652, 1e-05
    %v10654 = vrsqrt.pop %v10653
    %v10655 = vlaneseq
    %v10656 = vshrl.u32 %v10655, 7
    %v10657 = vsub.s32 0, %v10656
    %v10658 = vrot.slane %v10654, %v10657
    %v10659 = vmul.f32 %v10617, %v10658
    %v10660 = vmul.f32 %v10618, %v10658
    %v10661 = vmul.f32 %v10619, %v10658
    %v10662 = vmul.f32 %v10620, %v10658
    %v10663 = vmul.f32 %v10621, %v10658
    %v10664 = vmul.f32 %v10622, %v10658
    %v10665 = vmul.f32 %v10623, %v10658
    %v10666 = vmul.f32 %v10624, %v10658
    %v10667 = vmax.f32 %v10659, 0.0
    %v10668 = vmax.f32 %v10660, 0.0
    %v10669 = vmax.f32 %v10661, 0.0
    %v10670 = vmax.f32 %v10662, 0.0
    %v10671 = vmax.f32 %v10663, 0.0
    %v10672 = vmax.f32 %v10664, 0.0
    %v10673 = vmax.f32 %v10665, 0.0
    %v10674 = vmax.f32 %v10666, 0.0
    %v10675 = vmul.f32 %v10667, %v57
    %v10676 = vmul.f32 %v10668, %v58
    %v10677 = vmul.f32 %v10669, %v57
    %v10678 = vmul.f32 %v10670, %v58
    %v10679 = vmul.f32 %v10671, %v57
    %v10680 = vmul.f32 %v10672, %v58
    %v10681 = vmul.f32 %v10673, %v57
    %v10682 = vmul.f32 %v10674, %v58
    %10683 = vrot.lane.b32.xlu0 %v10675, 1
    %v10684 = vpop.permute.xlu0 %10683
    %10685 = vrot.lane.b32.xlu0 %v10677, 1
    %v10686 = vpop.permute.xlu0 %10685
    %10687 = vrot.lane.b32.xlu0 %v10679, 1
    %v10688 = vpop.permute.xlu0 %10687
    %10689 = vrot.lane.b32.xlu0 %v10681, 1
    %v10690 = vpop.permute.xlu0 %10689
    %10691 = vrot.lane.b32.xlu0 %v10676, 1
    %v10692 = vpop.permute.xlu0 %10691
    %10693 = vrot.lane.b32.xlu0 %v10678, 1
    %v10694 = vpop.permute.xlu0 %10693
    %10695 = vrot.lane.b32.xlu0 %v10680, 1
    %v10696 = vpop.permute.xlu0 %10695
    %10697 = vrot.lane.b32.xlu0 %v10682, 1
    %v10698 = vpop.permute.xlu0 %10697
    %v10699 = vsel %vm71, %v10684, %v10692
    %v10700 = vsel %vm71, %v10686, %v10694
    %v10701 = vsel %vm71, %v10688, %v10696
    %v10702 = vsel %vm71, %v10690, %v10698
    %v10703 = vsel %vm71, %v10692, %v10684
    %v10704 = vsel %vm71, %v10694, %v10686
    %v10705 = vsel %vm71, %v10696, %v10688
    %v10706 = vsel %vm71, %v10698, %v10690
    %10707 = vrot.lane.b32.xlu0 %v10675, 127
    %v10708 = vpop.permute.xlu0 %10707
    %10709 = vrot.lane.b32.xlu0 %v10677, 127
    %v10710 = vpop.permute.xlu0 %10709
    %10711 = vrot.lane.b32.xlu0 %v10679, 127
    %v10712 = vpop.permute.xlu0 %10711
    %10713 = vrot.lane.b32.xlu0 %v10681, 127
    %v10714 = vpop.permute.xlu0 %10713
    %10715 = vrot.lane.b32.xlu0 %v10676, 127
    %v10716 = vpop.permute.xlu0 %10715
    %10717 = vrot.lane.b32.xlu0 %v10678, 127
    %v10718 = vpop.permute.xlu0 %10717
    %10719 = vrot.lane.b32.xlu0 %v10680, 127
    %v10720 = vpop.permute.xlu0 %10719
    %10721 = vrot.lane.b32.xlu0 %v10682, 127
    %v10722 = vpop.permute.xlu0 %10721
    %v10723 = vsel %vm84, %v10708, %v10716
    %v10724 = vsel %vm84, %v10710, %v10718
    %v10725 = vsel %vm84, %v10712, %v10720
    %v10726 = vsel %vm84, %v10714, %v10722
    %v10727 = vsel %vm84, %v10716, %v10708
    %v10728 = vsel %vm84, %v10718, %v10710
    %v10729 = vsel %vm84, %v10720, %v10712
    %v10730 = vsel %vm84, %v10722, %v10714
    %v10731 = vld [vmem:[%s10] sm:$0xff]
    %v10732 = vld [vmem:[%s10 + $0x8] sm:$0xff]
    %s10733 = scalar_lea.vmem %s10, 16
    %v10734 = vld [vmem:[%s10733] sm:$0xff]
    %v10735 = vld [vmem:[%s10733 + $0x8] sm:$0xff]
    %v10737 = vsel %vm937, %v10734, 0
    %v10740 = vsel %vm937, %v10735, 0
    %10742 = vmatprep.subr.mxu0 %v10676
    %10743 = vmatpush1.msra.mxu0 %v10675
    %10744 = vmatprep.subr.mxu0 %v10678
    %10745 = vmatpush1.msra.mxu0 %v10677
    %10746 = vmatprep.subr.mxu0 %v10680
    %10747 = vmatpush1.msra.mxu0 %v10679
    %10748 = vmatprep.subr.mxu0 %v10682
    %10749 = vmatpush1.msra.mxu0 %v10681
    %10750 = vmatprep.subr.mxu0 0.0
    %10751 = vmatpush1.msra.mxu0 0.0
    %10752 = vmatprep.subr.mxu0 0.0
    %10753 = vmatpush1.msra.mxu0 0.0
    %10754 = vmatprep.subr.mxu0 0.0
    %10755 = vmatpush1.msra.mxu0 0.0
    %10756 = vmatprep.subr.mxu0 0.0
    %10757 = vmatpush1.msra.mxu0 0.0
    %10758 = vmatprep.subr.mxu0 0.0
    %10759 = vmatpush1.msra.mxu0 0.0
    %10760 = vmatprep.subr.mxu0 0.0
    %10761 = vmatpush1.msra.mxu0 0.0
    %10762 = vmatprep.subr.mxu0 0.0
    %10763 = vmatpush1.msra.mxu0 0.0
    %10764 = vmatprep.subr.mxu0 0.0
    %10765 = vmatpush1.msra.mxu0 0.0
    %10766 = vmatprep.subr.mxu0 0.0
    %10767 = vmatpush1.msra.mxu0 0.0
    %10768 = vmatprep.subr.mxu0 0.0
    %10769 = vmatpush1.msra.mxu0 0.0
    %10770 = vmatprep.subr.mxu0 0.0
    %10771 = vmatpush1.msra.mxu0 0.0
    %10772 = vmatprep.subr.mxu0 0.0
    %10773 = vmatpush1.msra.mxu0 0.0
    %10774 = vmatprep.subr.mxu0 0.0
    %10775 = vmatpush1.msra.mxu0 0.0
    %10776 = vmatprep.subr.mxu0 0.0
    %10777 = vmatpush1.msra.mxu0 0.0
    %10778 = vmatprep.subr.mxu0 0.0
    %10779 = vmatpush1.msra.mxu0 0.0
    %10780 = vmatprep.subr.mxu0 0.0
    %10781 = vmatpush1.msra.mxu0 0.0
    %10782 = vmatprep.subr.mxu0 0.0
    %10783 = vmatpush1.msra.mxu0 0.0
    %10784 = vmatprep.subr.mxu0 0.0
    %10785 = vmatpush1.msra.mxu0 0.0
    %10786 = vmatprep.subr.mxu0 0.0
    %10787 = vmatpush1.msra.mxu0 0.0
    %10788 = vmatprep.subr.mxu0 0.0
    %10789 = vmatpush1.msra.mxu0 0.0
    %10790 = vmatprep.subr.mxu0 0.0
    %10791 = vmatpush1.msra.mxu0 0.0
    %10792 = vmatprep.subr.mxu0 0.0
    %10793 = vmatpush1.msra.mxu0 0.0
    %10794 = vmatprep.subr.mxu0 0.0
    %10795 = vmatpush1.msra.mxu0 0.0
    %10796 = vmatprep.subr.mxu0 0.0
    %10797 = vmatpush1.msra.mxu0 0.0
    %10798 = vmatprep.subr.mxu0 0.0
    %10799 = vmatpush1.msra.mxu0 0.0
    %10800 = vmatprep.subr.mxu0 0.0
    %10801 = vmatpush1.msra.mxu0 0.0
    %10802 = vmatprep.subr.mxu0 0.0
    %10803 = vmatpush1.msra.mxu0 0.0
    %10804 = vmatprep.subr.mxu0 0.0
    %10805 = vmatpush1.msra.mxu0 0.0
    %10806 = vmatprep.mubr.f32.mxu0 0.0
    %10807 = vmatmul.mubr.f32.gmra.mrb[0].mxu0 %v10737
    %v10808 = vpop.f32.mrb[0].mxu0
    %v10809 = vadd.f32 0.0, %v10808
    %v10810 = vpop.f32.mrb[0].mxu0
    %v10811 = vadd.f32 0.0, %v10810
    %10812 = vmatprep.mubr.f32.mxu0 0.0
    %10813 = vmatmul.mubr.f32.gmra.mrb[0].mxu0 %v10740
    %v10814 = vpop.f32.mrb[0].mxu0
    %v10815 = vadd.f32 0.0, %v10814
    %v10816 = vpop.f32.mrb[0].mxu0
    %v10817 = vadd.f32 0.0, %v10816
    %10818 = vdwg.mxu0
    %v10820 = vsel %vm937, %v10731, 0
    %v10823 = vsel %vm937, %v10732, 0
    %10825 = vmatprep.subr.mxu0 %v10699
    %10826 = vmatpush1.msra.mxu0 %v10703
    %10827 = vmatprep.subr.mxu0 %v10700
    %10828 = vmatpush1.msra.mxu0 %v10704
    %10829 = vmatprep.subr.mxu0 %v10701
    %10830 = vmatpush1.msra.mxu0 %v10705
    %10831 = vmatprep.subr.mxu0 %v10702
    %10832 = vmatpush1.msra.mxu0 %v10706
    %10833 = vmatprep.subr.mxu0 0.0
    %10834 = vmatpush1.msra.mxu0 0.0
    %10835 = vmatprep.subr.mxu0 0.0
    %10836 = vmatpush1.msra.mxu0 0.0
    %10837 = vmatprep.subr.mxu0 0.0
    %10838 = vmatpush1.msra.mxu0 0.0
    %10839 = vmatprep.subr.mxu0 0.0
    %10840 = vmatpush1.msra.mxu0 0.0
    %10841 = vmatprep.subr.mxu0 0.0
    %10842 = vmatpush1.msra.mxu0 0.0
    %10843 = vmatprep.subr.mxu0 0.0
    %10844 = vmatpush1.msra.mxu0 0.0
    %10845 = vmatprep.subr.mxu0 0.0
    %10846 = vmatpush1.msra.mxu0 0.0
    %10847 = vmatprep.subr.mxu0 0.0
    %10848 = vmatpush1.msra.mxu0 0.0
    %10849 = vmatprep.subr.mxu0 0.0
    %10850 = vmatpush1.msra.mxu0 0.0
    %10851 = vmatprep.subr.mxu0 0.0
    %10852 = vmatpush1.msra.mxu0 0.0
    %10853 = vmatprep.subr.mxu0 0.0
    %10854 = vmatpush1.msra.mxu0 0.0
    %10855 = vmatprep.subr.mxu0 0.0
    %10856 = vmatpush1.msra.mxu0 0.0
    %10857 = vmatprep.subr.mxu0 0.0
    %10858 = vmatpush1.msra.mxu0 0.0
    %10859 = vmatprep.subr.mxu0 0.0
    %10860 = vmatpush1.msra.mxu0 0.0
    %10861 = vmatprep.subr.mxu0 0.0
    %10862 = vmatpush1.msra.mxu0 0.0
    %10863 = vmatprep.subr.mxu0 0.0
    %10864 = vmatpush1.msra.mxu0 0.0
    %10865 = vmatprep.subr.mxu0 0.0
    %10866 = vmatpush1.msra.mxu0 0.0
    %10867 = vmatprep.subr.mxu0 0.0
    %10868 = vmatpush1.msra.mxu0 0.0
    %10869 = vmatprep.subr.mxu0 0.0
    %10870 = vmatpush1.msra.mxu0 0.0
    %10871 = vmatprep.subr.mxu0 0.0
    %10872 = vmatpush1.msra.mxu0 0.0
    %10873 = vmatprep.subr.mxu0 0.0
    %10874 = vmatpush1.msra.mxu0 0.0
    %10875 = vmatprep.subr.mxu0 0.0
    %10876 = vmatpush1.msra.mxu0 0.0
    %10877 = vmatprep.subr.mxu0 0.0
    %10878 = vmatpush1.msra.mxu0 0.0
    %10879 = vmatprep.subr.mxu0 0.0
    %10880 = vmatpush1.msra.mxu0 0.0
    %10881 = vmatprep.subr.mxu0 0.0
    %10882 = vmatpush1.msra.mxu0 0.0
    %10883 = vmatprep.subr.mxu0 0.0
    %10884 = vmatpush1.msra.mxu0 0.0
    %10885 = vmatprep.subr.mxu0 0.0
    %10886 = vmatpush1.msra.mxu0 0.0
    %10887 = vmatprep.subr.mxu0 0.0
    %10888 = vmatpush1.msra.mxu0 0.0
    %10889 = vmatprep.mubr.f32.mxu0 0.0
    %10890 = vmatmul.mubr.f32.gmra.mrb[0].mxu0 %v10820
    %v10891 = vpop.f32.mrb[0].mxu0
    %v10892 = vadd.f32 %v10809, %v10891
    %v10893 = vpop.f32.mrb[0].mxu0
    %v10894 = vadd.f32 %v10811, %v10893
    %10895 = vmatprep.mubr.f32.mxu0 0.0
    %10896 = vmatmul.mubr.f32.gmra.mrb[0].mxu0 %v10823
    %v10897 = vpop.f32.mrb[0].mxu0
    %v10898 = vadd.f32 %v10815, %v10897
    %v10899 = vpop.f32.mrb[0].mxu0
    %v10900 = vadd.f32 %v10817, %v10899
    %10901 = vdwg.mxu0
    %s10902 = scalar_lea.vmem %s10, 32
    %v10903 = vld [vmem:[%s10902] sm:$0xff]
    %v10904 = vld [vmem:[%s10902 + $0x8] sm:$0xff]
    %v10906 = vsel %vm937, %v10903, 0
    %v10909 = vsel %vm937, %v10904, 0
    %10911 = vmatprep.subr.mxu0 %v10727
    %10912 = vmatpush1.msra.mxu0 %v10723
    %10913 = vmatprep.subr.mxu0 %v10728
    %10914 = vmatpush1.msra.mxu0 %v10724
    %10915 = vmatprep.subr.mxu0 %v10729
    %10916 = vmatpush1.msra.mxu0 %v10725
    %10917 = vmatprep.subr.mxu0 %v10730
    %10918 = vmatpush1.msra.mxu0 %v10726
    %10919 = vmatprep.subr.mxu0 0.0
    %10920 = vmatpush1.msra.mxu0 0.0
    %10921 = vmatprep.subr.mxu0 0.0
    %10922 = vmatpush1.msra.mxu0 0.0
    %10923 = vmatprep.subr.mxu0 0.0
    %10924 = vmatpush1.msra.mxu0 0.0
    %10925 = vmatprep.subr.mxu0 0.0
    %10926 = vmatpush1.msra.mxu0 0.0
    %10927 = vmatprep.subr.mxu0 0.0
    %10928 = vmatpush1.msra.mxu0 0.0
    %10929 = vmatprep.subr.mxu0 0.0
    %10930 = vmatpush1.msra.mxu0 0.0
    %10931 = vmatprep.subr.mxu0 0.0
    %10932 = vmatpush1.msra.mxu0 0.0
    %10933 = vmatprep.subr.mxu0 0.0
    %10934 = vmatpush1.msra.mxu0 0.0
    %10935 = vmatprep.subr.mxu0 0.0
    %10936 = vmatpush1.msra.mxu0 0.0
    %10937 = vmatprep.subr.mxu0 0.0
    %10938 = vmatpush1.msra.mxu0 0.0
    %10939 = vmatprep.subr.mxu0 0.0
    %10940 = vmatpush1.msra.mxu0 0.0
    %10941 = vmatprep.subr.mxu0 0.0
    %10942 = vmatpush1.msra.mxu0 0.0
    %10943 = vmatprep.subr.mxu0 0.0
    %10944 = vmatpush1.msra.mxu0 0.0
    %10945 = vmatprep.subr.mxu0 0.0
    %10946 = vmatpush1.msra.mxu0 0.0
    %10947 = vmatprep.subr.mxu0 0.0
    %10948 = vmatpush1.msra.mxu0 0.0
    %10949 = vmatprep.subr.mxu0 0.0
    %10950 = vmatpush1.msra.mxu0 0.0
    %10951 = vmatprep.subr.mxu0 0.0
    %10952 = vmatpush1.msra.mxu0 0.0
    %10953 = vmatprep.subr.mxu0 0.0
    %10954 = vmatpush1.msra.mxu0 0.0
    %10955 = vmatprep.subr.mxu0 0.0
    %10956 = vmatpush1.msra.mxu0 0.0
    %10957 = vmatprep.subr.mxu0 0.0
    %10958 = vmatpush1.msra.mxu0 0.0
    %10959 = vmatprep.subr.mxu0 0.0
    %10960 = vmatpush1.msra.mxu0 0.0
    %10961 = vmatprep.subr.mxu0 0.0
    %10962 = vmatpush1.msra.mxu0 0.0
    %10963 = vmatprep.subr.mxu0 0.0
    %10964 = vmatpush1.msra.mxu0 0.0
    %10965 = vmatprep.subr.mxu0 0.0
    %10966 = vmatpush1.msra.mxu0 0.0
    %10967 = vmatprep.subr.mxu0 0.0
    %10968 = vmatpush1.msra.mxu0 0.0
    %10969 = vmatprep.subr.mxu0 0.0
    %10970 = vmatpush1.msra.mxu0 0.0
    %10971 = vmatprep.subr.mxu0 0.0
    %10972 = vmatpush1.msra.mxu0 0.0
    %10973 = vmatprep.subr.mxu0 0.0
    %10974 = vmatpush1.msra.mxu0 0.0
    %10975 = vmatprep.mubr.f32.mxu0 0.0
    %10976 = vmatmul.mubr.f32.gmra.mrb[0].mxu0 %v10906
    %v10977 = vpop.f32.mrb[0].mxu0
    %v10978 = vadd.f32 0.0, %v10977
    %v10979 = vpop.f32.mrb[0].mxu0
    %v10980 = vadd.f32 0.0, %v10979
    %10981 = vmatprep.mubr.f32.mxu0 0.0
    %10982 = vmatmul.mubr.f32.gmra.mrb[0].mxu0 %v10909
    %v10983 = vpop.f32.mrb[0].mxu0
    %v10984 = vadd.f32 0.0, %v10983
    %v10985 = vpop.f32.mrb[0].mxu0
    %v10986 = vadd.f32 0.0, %v10985
    %10987 = vdwg.mxu0
    %v10988 = vadd.f32 %v10892, %v10978
    %v10989 = vadd.f32 %v10894, %v10980
    %v10990 = vadd.f32 %v10898, %v10984
    %v10991 = vadd.f32 %v10900, %v10986
    %v10992 = vadd.f32 %v10988, %v10990
    %v10993 = vrot.slane %v10992, 4
    %v10994 = vadd.f32 %v10992, %v10993
    %v10995 = vrot.slane %v10994, 2
    %v10996 = vadd.f32 %v10994, %v10995
    %v10997 = vrot.slane %v10996, 1
    %v10998 = vadd.f32 %v10996, %v10997
    %v10999 = vadd.f32 %v10989, %v10991
    %v11000 = vrot.slane %v10999, 4
    %v11001 = vadd.f32 %v10999, %v11000
    %v11002 = vrot.slane %v11001, 2
    %v11003 = vadd.f32 %v11001, %v11002
    %v11004 = vrot.slane %v11003, 1
    %v11005 = vadd.f32 %v11003, %v11004
    %v11006 = vadd.f32 %v10998, %v11005
    %v11007 = vmul.f32 %v11006, 0.03125
    %v11008 = vlaneseq
    %v11009 = vshrl.u32 %v11008, 7
    %v11010 = vsub.s32 0, %v11009
    %v11011 = vrot.slane %v11007, %v11010
    %v11012 = vsub.f32 %v10988, %v11011
    %v11013 = vsub.f32 %v10989, %v11011
    %v11014 = vsub.f32 %v10990, %v11011
    %v11015 = vsub.f32 %v10991, %v11011
    %v11016 = vmul.f32 %v11012, %v11012
    %v11017 = vmul.f32 %v11013, %v11013
    %v11018 = vmul.f32 %v11014, %v11014
    %v11019 = vmul.f32 %v11015, %v11015
    %v11020 = vadd.f32 %v11016, %v11018
    %v11021 = vrot.slane %v11020, 4
    %v11022 = vadd.f32 %v11020, %v11021
    %v11023 = vrot.slane %v11022, 2
    %v11024 = vadd.f32 %v11022, %v11023
    %v11025 = vrot.slane %v11024, 1
    %v11026 = vadd.f32 %v11024, %v11025
    %v11027 = vadd.f32 %v11017, %v11019
    %v11028 = vrot.slane %v11027, 4
    %v11029 = vadd.f32 %v11027, %v11028
    %v11030 = vrot.slane %v11029, 2
    %v11031 = vadd.f32 %v11029, %v11030
    %v11032 = vrot.slane %v11031, 1
    %v11033 = vadd.f32 %v11031, %v11032
    %v11034 = vadd.f32 %v11026, %v11033
    %v11035 = vmul.f32 %v11034, 0.03125
    %v11036 = vadd.f32 %v11035, 1e-05
    %v11037 = vrsqrt.pop %v11036
    %v11038 = vlaneseq
    %v11039 = vshrl.u32 %v11038, 7
    %v11040 = vsub.s32 0, %v11039
    %v11041 = vrot.slane %v11037, %v11040
    %v11042 = vmul.f32 %v11012, %v11041
    %v11043 = vmul.f32 %v11013, %v11041
    %v11044 = vmul.f32 %v11014, %v11041
    %v11045 = vmul.f32 %v11015, %v11041
    %v11046 = vmax.f32 %v11042, 0.0
    %v11047 = vmax.f32 %v11043, 0.0
    %v11048 = vmax.f32 %v11044, 0.0
    %v11049 = vmax.f32 %v11045, 0.0
    %v11050 = vmul.f32 %v11046, %v57
    %v11051 = vmul.f32 %v11047, %v58
    %v11052 = vmul.f32 %v11048, %v57
    %v11053 = vmul.f32 %v11049, %v58
    %11054 = vrot.lane.b32.xlu0 %v11050, 1
    %v11055 = vpop.permute.xlu0 %11054
    %11056 = vrot.lane.b32.xlu0 %v11052, 1
    %v11057 = vpop.permute.xlu0 %11056
    %11058 = vrot.lane.b32.xlu0 %v11051, 1
    %v11059 = vpop.permute.xlu0 %11058
    %11060 = vrot.lane.b32.xlu0 %v11053, 1
    %v11061 = vpop.permute.xlu0 %11060
    %v11062 = vsel %vm71, %v11055, %v11059
    %v11063 = vsel %vm71, %v11057, %v11061
    %v11064 = vsel %vm71, %v11059, %v11055
    %v11065 = vsel %vm71, %v11061, %v11057
    %11066 = vrot.lane.b32.xlu0 %v11050, 127
    %v11067 = vpop.permute.xlu0 %11066
    %11068 = vrot.lane.b32.xlu0 %v11052, 127
    %v11069 = vpop.permute.xlu0 %11068
    %11070 = vrot.lane.b32.xlu0 %v11051, 127
    %v11071 = vpop.permute.xlu0 %11070
    %11072 = vrot.lane.b32.xlu0 %v11053, 127
    %v11073 = vpop.permute.xlu0 %11072
    %v11074 = vsel %vm84, %v11067, %v11071
    %v11075 = vsel %vm84, %v11069, %v11073
    %v11076 = vsel %vm84, %v11071, %v11067
    %v11077 = vsel %vm84, %v11073, %v11069
    %v11078 = vld [vmem:[%s11] sm:$0xff]
    %v11079 = vld [vmem:[%s11 + $0x8] sm:$0x3]
    %s11080 = scalar_lea.vmem %s11, 16
    %v11081 = vld [vmem:[%s11080] sm:$0xff]
    %v11082 = vld [vmem:[%s11080 + $0x8] sm:$0x3]
    %v11084 = vsel %vm465, %v11081, 0
    %v11087 = vsel %vm465, %v11082, 0
    %11089 = vmatprep.subr.mxu0 %v11051
    %11090 = vmatpush1.msra.mxu0 %v11050
    %11091 = vmatprep.subr.mxu0 %v11053
    %11092 = vmatpush1.msra.mxu0 %v11052
    %11093 = vmatprep.subr.mxu0 0.0
    %11094 = vmatpush1.msra.mxu0 0.0
    %11095 = vmatprep.subr.mxu0 0.0
    %11096 = vmatpush1.msra.mxu0 0.0
    %11097 = vmatprep.subr.mxu0 0.0
    %11098 = vmatpush1.msra.mxu0 0.0
    %11099 = vmatprep.subr.mxu0 0.0
    %11100 = vmatpush1.msra.mxu0 0.0
    %11101 = vmatprep.subr.mxu0 0.0
    %11102 = vmatpush1.msra.mxu0 0.0
    %11103 = vmatprep.subr.mxu0 0.0
    %11104 = vmatpush1.msra.mxu0 0.0
    %11105 = vmatprep.subr.mxu0 0.0
    %11106 = vmatpush1.msra.mxu0 0.0
    %11107 = vmatprep.subr.mxu0 0.0
    %11108 = vmatpush1.msra.mxu0 0.0
    %11109 = vmatprep.subr.mxu0 0.0
    %11110 = vmatpush1.msra.mxu0 0.0
    %11111 = vmatprep.subr.mxu0 0.0
    %11112 = vmatpush1.msra.mxu0 0.0
    %11113 = vmatprep.subr.mxu0 0.0
    %11114 = vmatpush1.msra.mxu0 0.0
    %11115 = vmatprep.subr.mxu0 0.0
    %11116 = vmatpush1.msra.mxu0 0.0
    %11117 = vmatprep.subr.mxu0 0.0
    %11118 = vmatpush1.msra.mxu0 0.0
    %11119 = vmatprep.subr.mxu0 0.0
    %11120 = vmatpush1.msra.mxu0 0.0
    %11121 = vmatprep.subr.mxu0 0.0
    %11122 = vmatpush1.msra.mxu0 0.0
    %11123 = vmatprep.subr.mxu0 0.0
    %11124 = vmatpush1.msra.mxu0 0.0
    %11125 = vmatprep.subr.mxu0 0.0
    %11126 = vmatpush1.msra.mxu0 0.0
    %11127 = vmatprep.subr.mxu0 0.0
    %11128 = vmatpush1.msra.mxu0 0.0
    %11129 = vmatprep.subr.mxu0 0.0
    %11130 = vmatpush1.msra.mxu0 0.0
    %11131 = vmatprep.subr.mxu0 0.0
    %11132 = vmatpush1.msra.mxu0 0.0
    %11133 = vmatprep.subr.mxu0 0.0
    %11134 = vmatpush1.msra.mxu0 0.0
    %11135 = vmatprep.subr.mxu0 0.0
    %11136 = vmatpush1.msra.mxu0 0.0
    %11137 = vmatprep.subr.mxu0 0.0
    %11138 = vmatpush1.msra.mxu0 0.0
    %11139 = vmatprep.subr.mxu0 0.0
    %11140 = vmatpush1.msra.mxu0 0.0
    %11141 = vmatprep.subr.mxu0 0.0
    %11142 = vmatpush1.msra.mxu0 0.0
    %11143 = vmatprep.subr.mxu0 0.0
    %11144 = vmatpush1.msra.mxu0 0.0
    %11145 = vmatprep.subr.mxu0 0.0
    %11146 = vmatpush1.msra.mxu0 0.0
    %11147 = vmatprep.subr.mxu0 0.0
    %11148 = vmatpush1.msra.mxu0 0.0
    %11149 = vmatprep.subr.mxu0 0.0
    %11150 = vmatpush1.msra.mxu0 0.0
    %11151 = vmatprep.subr.mxu0 0.0
    %11152 = vmatpush1.msra.mxu0 0.0
    %11153 = vmatprep.mubr.f32.mxu0 0.0
    %11154 = vmatmul.mubr.f32.gmra.mrb[0].mxu0 %v11084
    %v11155 = vpop.f32.mrb[0].mxu0
    %v11156 = vadd.f32 0.0, %v11155
    %v11157 = vpop.f32.mrb[0].mxu0
    %v11158 = vadd.f32 0.0, %v11157
    %11159 = vmatprep.mubr.f32.mxu0 0.0
    %11160 = vmatmul.mubr.f32.gmra.mrb[0].mxu0 %v11087
    %v11161 = vpop.f32.mrb[0].mxu0
    %v11162 = vadd.f32 0.0, %v11161
    %v11163 = vpop.f32.mrb[0].mxu0
    %v11164 = vadd.f32 0.0, %v11163
    %11165 = vdwg.mxu0
    %v11167 = vsel %vm465, %v11078, 0
    %v11170 = vsel %vm465, %v11079, 0
    %11172 = vmatprep.subr.mxu0 %v11062
    %11173 = vmatpush1.msra.mxu0 %v11064
    %11174 = vmatprep.subr.mxu0 %v11063
    %11175 = vmatpush1.msra.mxu0 %v11065
    %11176 = vmatprep.subr.mxu0 0.0
    %11177 = vmatpush1.msra.mxu0 0.0
    %11178 = vmatprep.subr.mxu0 0.0
    %11179 = vmatpush1.msra.mxu0 0.0
    %11180 = vmatprep.subr.mxu0 0.0
    %11181 = vmatpush1.msra.mxu0 0.0
    %11182 = vmatprep.subr.mxu0 0.0
    %11183 = vmatpush1.msra.mxu0 0.0
    %11184 = vmatprep.subr.mxu0 0.0
    %11185 = vmatpush1.msra.mxu0 0.0
    %11186 = vmatprep.subr.mxu0 0.0
    %11187 = vmatpush1.msra.mxu0 0.0
    %11188 = vmatprep.subr.mxu0 0.0
    %11189 = vmatpush1.msra.mxu0 0.0
    %11190 = vmatprep.subr.mxu0 0.0
    %11191 = vmatpush1.msra.mxu0 0.0
    %11192 = vmatprep.subr.mxu0 0.0
    %11193 = vmatpush1.msra.mxu0 0.0
    %11194 = vmatprep.subr.mxu0 0.0
    %11195 = vmatpush1.msra.mxu0 0.0
    %11196 = vmatprep.subr.mxu0 0.0
    %11197 = vmatpush1.msra.mxu0 0.0
    %11198 = vmatprep.subr.mxu0 0.0
    %11199 = vmatpush1.msra.mxu0 0.0
    %11200 = vmatprep.subr.mxu0 0.0
    %11201 = vmatpush1.msra.mxu0 0.0
    %11202 = vmatprep.subr.mxu0 0.0
    %11203 = vmatpush1.msra.mxu0 0.0
    %11204 = vmatprep.subr.mxu0 0.0
    %11205 = vmatpush1.msra.mxu0 0.0
    %11206 = vmatprep.subr.mxu0 0.0
    %11207 = vmatpush1.msra.mxu0 0.0
    %11208 = vmatprep.subr.mxu0 0.0
    %11209 = vmatpush1.msra.mxu0 0.0
    %11210 = vmatprep.subr.mxu0 0.0
    %11211 = vmatpush1.msra.mxu0 0.0
    %11212 = vmatprep.subr.mxu0 0.0
    %11213 = vmatpush1.msra.mxu0 0.0
    %11214 = vmatprep.subr.mxu0 0.0
    %11215 = vmatpush1.msra.mxu0 0.0
    %11216 = vmatprep.subr.mxu0 0.0
    %11217 = vmatpush1.msra.mxu0 0.0
    %11218 = vmatprep.subr.mxu0 0.0
    %11219 = vmatpush1.msra.mxu0 0.0
    %11220 = vmatprep.subr.mxu0 0.0
    %11221 = vmatpush1.msra.mxu0 0.0
    %11222 = vmatprep.subr.mxu0 0.0
    %11223 = vmatpush1.msra.mxu0 0.0
    %11224 = vmatprep.subr.mxu0 0.0
    %11225 = vmatpush1.msra.mxu0 0.0
    %11226 = vmatprep.subr.mxu0 0.0
    %11227 = vmatpush1.msra.mxu0 0.0
    %11228 = vmatprep.subr.mxu0 0.0
    %11229 = vmatpush1.msra.mxu0 0.0
    %11230 = vmatprep.subr.mxu0 0.0
    %11231 = vmatpush1.msra.mxu0 0.0
    %11232 = vmatprep.subr.mxu0 0.0
    %11233 = vmatpush1.msra.mxu0 0.0
    %11234 = vmatprep.subr.mxu0 0.0
    %11235 = vmatpush1.msra.mxu0 0.0
    %11236 = vmatprep.mubr.f32.mxu0 0.0
    %11237 = vmatmul.mubr.f32.gmra.mrb[0].mxu0 %v11167
    %v11238 = vpop.f32.mrb[0].mxu0
    %v11239 = vadd.f32 %v11156, %v11238
    %v11240 = vpop.f32.mrb[0].mxu0
    %v11241 = vadd.f32 %v11158, %v11240
    %11242 = vmatprep.mubr.f32.mxu0 0.0
    %11243 = vmatmul.mubr.f32.gmra.mrb[0].mxu0 %v11170
    %v11244 = vpop.f32.mrb[0].mxu0
    %v11245 = vadd.f32 %v11162, %v11244
    %v11246 = vpop.f32.mrb[0].mxu0
    %v11247 = vadd.f32 %v11164, %v11246
    %11248 = vdwg.mxu0
    %s11249 = scalar_lea.vmem %s11, 32
    %v11250 = vld [vmem:[%s11249] sm:$0xff]
    %v11251 = vld [vmem:[%s11249 + $0x8] sm:$0x3]
    %v11253 = vsel %vm465, %v11250, 0
    %v11256 = vsel %vm465, %v11251, 0
    %11258 = vmatprep.subr.mxu0 %v11076
    %11259 = vmatpush1.msra.mxu0 %v11074
    %11260 = vmatprep.subr.mxu0 %v11077
    %11261 = vmatpush1.msra.mxu0 %v11075
    %11262 = vmatprep.subr.mxu0 0.0
    %11263 = vmatpush1.msra.mxu0 0.0
    %11264 = vmatprep.subr.mxu0 0.0
    %11265 = vmatpush1.msra.mxu0 0.0
    %11266 = vmatprep.subr.mxu0 0.0
    %11267 = vmatpush1.msra.mxu0 0.0
    %11268 = vmatprep.subr.mxu0 0.0
    %11269 = vmatpush1.msra.mxu0 0.0
    %11270 = vmatprep.subr.mxu0 0.0
    %11271 = vmatpush1.msra.mxu0 0.0
    %11272 = vmatprep.subr.mxu0 0.0
    %11273 = vmatpush1.msra.mxu0 0.0
    %11274 = vmatprep.subr.mxu0 0.0
    %11275 = vmatpush1.msra.mxu0 0.0
    %11276 = vmatprep.subr.mxu0 0.0
    %11277 = vmatpush1.msra.mxu0 0.0
    %11278 = vmatprep.subr.mxu0 0.0
    %11279 = vmatpush1.msra.mxu0 0.0
    %11280 = vmatprep.subr.mxu0 0.0
    %11281 = vmatpush1.msra.mxu0 0.0
    %11282 = vmatprep.subr.mxu0 0.0
    %11283 = vmatpush1.msra.mxu0 0.0
    %11284 = vmatprep.subr.mxu0 0.0
    %11285 = vmatpush1.msra.mxu0 0.0
    %11286 = vmatprep.subr.mxu0 0.0
    %11287 = vmatpush1.msra.mxu0 0.0
    %11288 = vmatprep.subr.mxu0 0.0
    %11289 = vmatpush1.msra.mxu0 0.0
    %11290 = vmatprep.subr.mxu0 0.0
    %11291 = vmatpush1.msra.mxu0 0.0
    %11292 = vmatprep.subr.mxu0 0.0
    %11293 = vmatpush1.msra.mxu0 0.0
    %11294 = vmatprep.subr.mxu0 0.0
    %11295 = vmatpush1.msra.mxu0 0.0
    %11296 = vmatprep.subr.mxu0 0.0
    %11297 = vmatpush1.msra.mxu0 0.0
    %11298 = vmatprep.subr.mxu0 0.0
    %11299 = vmatpush1.msra.mxu0 0.0
    %11300 = vmatprep.subr.mxu0 0.0
    %11301 = vmatpush1.msra.mxu0 0.0
    %11302 = vmatprep.subr.mxu0 0.0
    %11303 = vmatpush1.msra.mxu0 0.0
    %11304 = vmatprep.subr.mxu0 0.0
    %11305 = vmatpush1.msra.mxu0 0.0
    %11306 = vmatprep.subr.mxu0 0.0
    %11307 = vmatpush1.msra.mxu0 0.0
    %11308 = vmatprep.subr.mxu0 0.0
    %11309 = vmatpush1.msra.mxu0 0.0
    %11310 = vmatprep.subr.mxu0 0.0
    %11311 = vmatpush1.msra.mxu0 0.0
    %11312 = vmatprep.subr.mxu0 0.0
    %11313 = vmatpush1.msra.mxu0 0.0
    %11314 = vmatprep.subr.mxu0 0.0
    %11315 = vmatpush1.msra.mxu0 0.0
    %11316 = vmatprep.subr.mxu0 0.0
    %11317 = vmatpush1.msra.mxu0 0.0
    %11318 = vmatprep.subr.mxu0 0.0
    %11319 = vmatpush1.msra.mxu0 0.0
    %11320 = vmatprep.subr.mxu0 0.0
    %11321 = vmatpush1.msra.mxu0 0.0
    %11322 = vmatprep.mubr.f32.mxu0 0.0
    %11323 = vmatmul.mubr.f32.gmra.mrb[0].mxu0 %v11253
    %v11324 = vpop.f32.mrb[0].mxu0
    %v11325 = vadd.f32 0.0, %v11324
    %v11326 = vpop.f32.mrb[0].mxu0
    %v11327 = vadd.f32 0.0, %v11326
    %11328 = vmatprep.mubr.f32.mxu0 0.0
    %11329 = vmatmul.mubr.f32.gmra.mrb[0].mxu0 %v11256
    %v11330 = vpop.f32.mrb[0].mxu0
    %v11331 = vadd.f32 0.0, %v11330
    %v11332 = vpop.f32.mrb[0].mxu0
    %v11333 = vadd.f32 0.0, %v11332
    %11334 = vdwg.mxu0
    %v11335 = vadd.f32 %v11239, %v11325
    %v11336 = vadd.f32 %v11241, %v11327
    %v11337 = vadd.f32 %v11245, %v11331
    %v11338 = vadd.f32 %v11247, %v11333
    %11339 = vst [vmem:[%s12] sm:$0xff] %v11335
    %11340 = vst [vmem:[%s12 + $0x8] sm:$0xff] %v11336
    %11341 = vst [vmem:[%s12 + $0x10] sm:$0x3] %v11337
    %11342 = vst [vmem:[%s12 + $0x18] sm:$0x3] %v11338
    %vm11343 = vcmask 254976
    %11344 = vst.msk [vmem:[#allocation2] sm:$0x3] %vm11343, %v7345
    %11345 = vst.msk [vmem:[#allocation4] sm:$0x3] %vm11343, %v7331
    %11347 = vrot.lane.b32.xlu0 %v7331, 96
    %v11348 = vpop.permute.xlu0 %11347
    %11350 = vst.msk [vmem:[#allocation6] sm:$0x3] %vm11343, %v11348
    // Predicated region
    $region50: #{vae_forward.1} parent=1 // pred_check
      _
    $region51: #{vae_forward.1} parent=1 // pred_check_branch
      %11352 = sbr.rel (0) target = $region53
    $region52: #{vae_forward.1} parent=1 // pred_region
      _
    $region53: #{vae_forward.1} parent=1 // pred_fallthru
      _
    // Predicated region
    $region54: #{vae_forward.1} parent=1 // pred_check
      _
    $region55: #{vae_forward.1} parent=1 // pred_check_branch
      %11354 = sbr.rel (0) target = $region57
    $region56: #{vae_forward.1} parent=1 // pred_region
      %s11356 = ssub.s32 32, 32
      %11357 = vsyncadd [#allocation3], %s11356
      %s11359 = sshll.u32 [#allocation2], 4
      %s11360 = int_to_ptr.vmem [resolvable:$true] %s11359
      %11362 = dma.vmem_to_hbm [thread:$0]  %s11360, 32, %s13, [#allocation3]
    $region57: #{vae_forward.1} parent=1 // pred_fallthru
      _
    // Predicated region
    $region58: #{vae_forward.1} parent=1 // pred_check
      _
    $region59: #{vae_forward.1} parent=1 // pred_check_branch
      %11364 = sbr.rel (0) target = $region61
    $region60: #{vae_forward.1} parent=1 // pred_region
      %s11366 = ssub.s32 32, 32
      %11367 = vsyncadd [#allocation5], %s11366
      %s11369 = sshll.u32 [#allocation4], 4
      %s11370 = int_to_ptr.vmem [resolvable:$true] %s11369
      %11372 = dma.vmem_to_hbm [thread:$0]  %s11370, 32, %s14, [#allocation5]
    $region61: #{vae_forward.1} parent=1 // pred_fallthru
      _
    // Predicated region
    $region62: #{vae_forward.1} parent=1 // pred_check
      _
    $region63: #{vae_forward.1} parent=1 // pred_check_branch
      %11374 = sbr.rel (0) target = $region65
    $region64: #{vae_forward.1} parent=1 // pred_region
      %s11376 = ssub.s32 32, 32
      %11377 = vsyncadd [#allocation5], %s11376
      %s11379 = sshll.u32 [#allocation6], 4
      %s11380 = int_to_ptr.vmem [resolvable:$true] %s11379
      %11382 = dma.vmem_to_hbm [thread:$0]  %s11380, 32, %s15, [#allocation5]
    $region65: #{vae_forward.1} parent=1 // pred_fallthru
      _
    // Predicated region
    $region66: #{vae_forward.1} parent=1 // pred_check
      _
    $region67: #{vae_forward.1} parent=1 // pred_check_branch
      %11384 = sbr.rel (0) target = $region69
    $region68: #{vae_forward.1} parent=1 // pred_region
      _
    $region69: #{vae_forward.1} parent=1 // pred_fallthru
      _
    // Predicated region
    $region70: #{vae_forward.1} parent=1 // pred_check
      _
    $region71: #{vae_forward.1} parent=1 // pred_check_branch
      %11386 = sbr.rel (0) target = $region73
    $region72: #{vae_forward.1} parent=1 // pred_region
      %11387 = dma.done [#allocation3], 32
    $region73: #{vae_forward.1} parent=1 // pred_fallthru
      _
    // Predicated region
    $region74: #{vae_forward.1} parent=1 // pred_check
      _
    $region75: #{vae_forward.1} parent=1 // pred_check_branch
      %11389 = sbr.rel (0) target = $region77
    $region76: #{vae_forward.1} parent=1 // pred_region
      %11390 = dma.done [#allocation5], 32
    $region77: #{vae_forward.1} parent=1 // pred_fallthru
      _
    // Predicated region
    $region78: #{vae_forward.1} parent=1 // pred_check
      _
    $region79: #{vae_forward.1} parent=1 // pred_check_branch
      %11392 = sbr.rel (0) target = $region81
    $region80: #{vae_forward.1} parent=1 // pred_region
      %11393 = dma.done [#allocation5], 32
    $region81: #{vae_forward.1} parent=1 // pred_fallthru
      _
    %11394 = vsyncpa [#allocation3], 1
    %11395 = vsyncpa [#allocation5], 1

</llo_original>
